<compile_context>
chip_gen: v5e
topology: v5e:2x2
jax: 0.10.0
libtpu: 0.0.40
codegen_flags: <defaults>
</compile_context>

<pallas_src>
import math
import functools

import numpy as np
import jax
import jax.numpy as jnp
from jax.experimental import pallas as pl
from jax.experimental.pallas import tpu as pltpu

# ----------------------------- config (small) -------------------------------
INPUT_SIZE = 16
PATCH = 2
IN_CH = 4
HIDDEN = 64
DEPTH = 2
NUM_HEADS = 4
MLP_RATIO = 4.0
NUM_CLASSES = 10
LEARN_SIGMA = True
OUT_CH = IN_CH * 2 if LEARN_SIGMA else IN_CH
FREQ = 256                      # frequency_embedding_size
HEAD_DIM = HIDDEN // NUM_HEADS
MLP_HIDDEN = int(HIDDEN * MLP_RATIO)
GRID_HW = INPUT_SIZE // PATCH
NUM_PATCHES = GRID_HW * GRID_HW
P_OUT = PATCH * PATCH * OUT_CH          # 32
PAD_OUT = 128                           # lane-dense padded output width

# dot_general dimension numbers (same patterns as the Pallas TPU flash kernels)
NT_DIMS = (((1,), (1,)), ((), ()))      # contract last dims:  A @ B^T
TN_DIMS = (((0,), (0,)), ((), ()))      # contract first dims: A^T @ B


# --------------------- sincos positional embedding (numpy) ------------------
def get_1d_sincos_pos_embed_from_grid(embed_dim, pos):
    assert embed_dim % 2 == 0
    omega = np.arange(embed_dim // 2, dtype=np.float64)
    omega /= embed_dim / 2.0
    omega = 1.0 / 10000 ** omega
    pos = pos.reshape(-1)
    out = np.einsum('m,d->md', pos, omega)
    return np.concatenate([np.sin(out), np.cos(out)], axis=1)


def get_2d_sincos_pos_embed_from_grid(embed_dim, grid):
    assert embed_dim % 2 == 0
    emb_h = get_1d_sincos_pos_embed_from_grid(embed_dim // 2, grid[0])
    emb_w = get_1d_sincos_pos_embed_from_grid(embed_dim // 2, grid[1])
    return np.concatenate([emb_h, emb_w], axis=1)


def get_2d_sincos_pos_embed(embed_dim, grid_size):
    grid_h = np.arange(grid_size, dtype=np.float32)
    grid_w = np.arange(grid_size, dtype=np.float32)
    grid = np.meshgrid(grid_w, grid_h)
    grid = np.stack(grid, axis=0).reshape([2, 1, grid_size, grid_size])
    return get_2d_sincos_pos_embed_from_grid(embed_dim, grid)


# ------------------------------ kernel helpers -------------------------------
def _mmf(a_bf16, b_bf16):
    """MXU matmul of pre-cast bf16 operands, f32 accumulation."""
    return jnp.dot(a_bf16, b_bf16, preferred_element_type=jnp.float32)


def _layernorm(x, eps=1e-6):
    mu = jnp.mean(x, axis=-1, keepdims=True)
    xc = x - mu
    var = jnp.mean(xc * xc, axis=-1, keepdims=True)
    return xc * jax.lax.rsqrt(var + eps)


def _silu(x):
    # exact sigmoid: only used on tiny (1, D) conditioning tensors that feed
    # every adaLN modulation (addresses the approx-reciprocal accuracy note).
    return x * (1.0 / (1.0 + jnp.exp(-x)))


def _gelu_tanh(x):
    c = math.sqrt(2.0 / math.pi)
    return 0.5 * x * (1.0 + jnp.tanh(c * (x + 0.044715 * x * x * x)))


# ------------------------------ fused kernel ---------------------------------
def dit_forward_kernel(patches_ref, pos_ref, tfreq_ref, yemb_ref,
                       t_w1, t_b1, t_w2, t_b2,
                       patch_w, patch_b,
                       w_ada, b_ada,
                       w_qk_t, b_qk_c,
                       w_vp, b_proj,
                       w_fc1, b_fc1, w_fc2, b_fc2,
                       w_adaf, b_adaf, w_fin, b_fin,
                       out_ref, *, n_tokens):
    T, D = n_tokens, HIDDEN
    bf16 = jnp.bfloat16

    # ---------- conditioning for THIS image (grid axis = batch) ----------
    tf = tfreq_ref[0]                                            # (1, FREQ)
    h = _silu(_mmf(tf.astype(bf16), t_w1[...]) + t_b1[...])      # (1, D)
    t_emb = _mmf(h.astype(bf16), t_w2[...]) + t_b2[...]          # (1, D)
    c = t_emb + yemb_ref[0]                                      # (1, D)
    # SiLU(c) broadcast once to (T, D), cast to bf16 once; every adaLN
    # modulation is then a single (T, D, K=D) MXU matmul (MXU is otherwise idle).
    csb = jnp.broadcast_to(_silu(c), (T, D)).astype(bf16)

    def mod(l, k):
        return _mmf(csb, w_ada[l, k]) + b_ada[l, k]              # (T, D) f32

    # ---------- patch embedding + positional embedding ----------
    x = _mmf(patches_ref[0].astype(bf16), patch_w[...]) + patch_b[...] + pos_ref[...]

    for l in range(DEPTH):
        # ---------------- attention branch (only MSA mods live here) --------
        shift_msa, scale_msa, gate_msa = mod(l, 0), mod(l, 1), mod(l, 2)
        xm = _layernorm(x) * (1.0 + scale_msa) + shift_msa       # (T, D)
        xm_bf = xm.astype(bf16)                                  # cast once, reused

        # q^T / k^T in (2D, T) layout with NO explicit transpose:
        #   qkT = [Wq^T*scale ; Wk^T] @ xm^T  via NT contraction.
        # attn scale and the qkv biases are pre-folded into w_qk_t / b_qk_c.
        qkT = jax.lax.dot_general(w_qk_t[l], xm_bf, NT_DIMS,
                                  preferred_element_type=jnp.float32) + b_qk_c[l]
        qkT_bf = qkT.astype(bf16)

        attn = None
        for hh in range(NUM_HEADS):
            lo = hh * HEAD_DIM
            qTh = qkT_bf[lo:lo + HEAD_DIM, :]            # (hd, T) sublane-aligned
            kTh = qkT_bf[D + lo:D + lo + HEAD_DIM, :]    # (hd, T)
            # s = q_h @ k_h^T without transposes (TN contraction) -> (T, T)
            s = jax.lax.dot_general(qTh, kTh, TN_DIMS,
                                    preferred_element_type=jnp.float32)
            s = s - jnp.max(s, axis=-1, keepdims=True)
            p = jnp.exp(s)
            p = p * pl.reciprocal(jnp.sum(p, axis=-1, keepdims=True), approx=True)
            # V and output projections folded offline: w_vp[l,h] = Wv_h @ Wproj_h
            vproj = _mmf(xm_bf, w_vp[l, hh]).astype(bf16)        # (T, D)
            contrib = _mmf(p.astype(bf16), vproj)                # (T, D)
            attn = contrib if attn is None else attn + contrib
        # v-bias is folded into b_proj offline (softmax rows sum to 1).
        x = x + gate_msa * (attn + b_proj[l])

        # ---------------- MLP branch (mods computed late: smaller live set) --
        shift_mlp, scale_mlp, gate_mlp = mod(l, 3), mod(l, 4), mod(l, 5)
        xm2 = _layernorm(x) * (1.0 + scale_mlp) + shift_mlp
        h1 = _gelu_tanh(_mmf(xm2.astype(bf16), w_fc1[l]) + b_fc1[l])   # (T, 4D)
        mlp = _mmf(h1.astype(bf16), w_fc2[l]) + b_fc2[l]
        x = x + gate_mlp * mlp

    # ---------------- final layer ----------------
    shift_f = _mmf(csb, w_adaf[0]) + b_adaf[0]
    scale_f = _mmf(csb, w_adaf[1]) + b_adaf[1]
    xmf = _layernorm(x) * (1.0 + scale_f) + shift_f
    # lane-dense (T, 128) store; columns >= P_OUT are zero-padded weights
    out_ref[0] = _mmf(xmf.astype(bf16), w_fin[...]) + b_fin[...]


# ------------------------------ glue (plain JAX) -----------------------------
def timestep_frequency(t, dim=FREQ, max_period=10000):
    half = dim // 2
    freqs = jnp.exp(-math.log(max_period)
                    * jnp.arange(half, dtype=jnp.float32) / half)
    args = t[:, None].astype(jnp.float32) * freqs[None]
    return jnp.concatenate([jnp.cos(args), jnp.sin(args)], axis=-1)


def _resident(a):
    """Full-array VMEM-resident BlockSpec (same block index at every grid step,
    so the weight is DMA'd once and stays resident)."""
    zeros = (0,) * a.ndim
    return pl.BlockSpec(a.shape, lambda b: zeros)


def dit_forward(params, x, t, y):
    """x: (N, C, H, W), t: (N,), y: (N,) int labels.  complete_model=True path."""
    N, C, H, W = x.shape
    p = PATCH
    hg, wg = H // p, W // p
    T = hg * wg
    Cpp = C * p * p

    # patchify NCHW -> (N, T, C*p*p); patch features in (c, ph, pw) order,
    # matching Conv2d(kernel=stride=p) weight flattening.
    patches = x.reshape(N, C, hg, p, wg, p)
    patches = jnp.transpose(patches, (0, 2, 4, 1, 3, 5)).reshape(N, T, Cpp)

    t_freq = timestep_frequency(t).reshape(N, 1, FREQ)
    y_emb = params['y_emb'][y].reshape(N, 1, HIDDEN)       # eval: no label drop

    weights = (params['t_w1'], params['t_b1'], params['t_w2'], params['t_b2'],
               params['patch_w'], params['patch_b'],
               params['w_ada'], params['b_ada'],
               params['w_qk_t'], params['b_qk_c'],
               params['w_vp'], params['b_proj'],
               params['w_fc1'], params['b_fc1'], params['w_fc2'], params['b_fc2'],
               params['w_adaf'], params['b_adaf'], params['w_fin'], params['b_fin'])

    in_specs = [
        pl.BlockSpec((1, T, Cpp), lambda b: (b, 0, 0)),        # patches: per image
        pl.BlockSpec((T, HIDDEN), lambda b: (0, 0)),           # pos: shared, untiled
        pl.BlockSpec((1, 1, FREQ), lambda b: (b, 0, 0)),       # t freq emb: per image
        pl.BlockSpec((1, 1, HIDDEN), lambda b: (b, 0, 0)),     # label emb: per image
    ] + [_resident(w) for w in weights]

    kernel = functools.partial(dit_forward_kernel, n_tokens=T)

    # TODO(synk): at production DiT sizes (D=1152, depth=28, ~1.3 GB bf16) this
    # all-resident weight plan breaks: switch to a per-layer grid axis with the
    # weight BlockSpecs indexed by layer, pipeline_mode=pl.Buffered(2-3) on the
    # weight streams, and pltpu.CompilerParams(vmem_limit_bytes=...) budgeted
    # against v7x's 64 MiB VMEM (double-buffered weight tiles count twice).
    out = pl.pallas_call(
        kernel,
        out_shape=jax.ShapeDtypeStruct((N, T, PAD_OUT), jnp.float32),
        grid=(N,),
        in_specs=in_specs,
        out_specs=pl.BlockSpec((1, T, PAD_OUT), lambda b: (b, 0, 0)),
        compiler_params=pltpu.CompilerParams(
            dimension_semantics=("parallel",)),
    )(patches, params['pos'], t_freq, y_emb, *weights)

    out_tok = out[:, :, :P_OUT]
    # unpatchify: (N, T, p*p*c) -> (N, c, H, W)
    xr = out_tok.reshape(N, hg, wg, p, p, OUT_CH)
    imgs = jnp.transpose(xr, (0, 5, 1, 3, 2, 4)).reshape(N, OUT_CH, hg * p, wg * p)
    return imgs


# ------------------------------ param init ----------------------------------
def init_params(key):
    keys = iter(jax.random.split(key, 256))

    def nrmf(shape, std=0.02):
        return jax.random.normal(next(keys), shape, dtype=jnp.float32) * std

    Cpp = IN_CH * PATCH * PATCH
    scale = HEAD_DIM ** (-0.5)
    bf16 = jnp.bfloat16

    # ----- attention weights in natural form, then folded offline -----
    w_qk_t, b_qk_c, w_vp, b_proj = [], [], [], []
    for _ in range(DEPTH):
        Wq, bq = nrmf((HIDDEN, HIDDEN)), nrmf((HIDDEN,))
        Wk, bk = nrmf((HIDDEN, HIDDEN)), nrmf((HIDDEN,))
        Wv, bv = nrmf((HIDDEN, HIDDEN)), nrmf((HIDDEN,))
        Wp, bp = nrmf((HIDDEN, HIDDEN)), nrmf((HIDDEN,))
        # attention scale folded into Wq / bq; q^T,k^T come from [Wq^T*s ; Wk^T] @ xm^T
        w_qk_t.append(jnp.concatenate([Wq.T * scale, Wk.T], axis=0))      # (2D, D)
        b_qk_c.append(jnp.concatenate([bq * scale, bk], axis=0)[:, None]) # (2D, 1)
        # per-head V & output projections folded: w_vp[h] = Wv[:, h] @ Wproj[h, :]
        w_vp.append(jnp.stack(
            [Wv[:, hh * HEAD_DIM:(hh + 1) * HEAD_DIM]
             @ Wp[hh * HEAD_DIM:(hh + 1) * HEAD_DIM, :] for hh in range(NUM_HEADS)]))
        # v-bias folded into the output-projection bias (softmax rows sum to 1)
        b_proj.append((bp + bv @ Wp)[None, :])

    # final linear, zero-padded to a lane-dense 128-wide output slab
    w_fin = jnp.zeros((HIDDEN, PAD_OUT), jnp.float32)
    w_fin = w_fin.at[:, :P_OUT].set(nrmf((HIDDEN, P_OUT)))
    b_fin = jnp.zeros((1, PAD_OUT), jnp.float32)
    b_fin = b_fin.at[:, :P_OUT].set(nrmf((1, P_OUT)))

    params = dict(
        patch_w=nrmf((Cpp, HIDDEN)).astype(bf16),
        patch_b=jnp.zeros((1, HIDDEN), jnp.float32),
        pos=jnp.asarray(get_2d_sincos_pos_embed(HIDDEN, GRID_HW), jnp.float32),
        t_w1=nrmf((FREQ, HIDDEN)).astype(bf16),
        t_b1=nrmf((1, HIDDEN)),
        t_w2=nrmf((HIDDEN, HIDDEN)).astype(bf16),
        t_b2=nrmf((1, HIDDEN)),
        # +1 row for the classifier-free-guidance null embedding
        y_emb=nrmf((NUM_CLASSES + 1, HIDDEN)),
        # adaLN weights as row-addressable column chunks (L, 6, D, D):
        # [shift_msa, scale_msa, gate_msa, shift_mlp, scale_mlp, gate_mlp]
        w_ada=nrmf((DEPTH, 6, HIDDEN, HIDDEN)).astype(bf16),
        b_ada=nrmf((DEPTH, 6, 1, HIDDEN)),
        w_qk_t=jnp.stack(w_qk_t).astype(bf16),          # (L, 2D, D)
        b_qk_c=jnp.stack(b_qk_c),                       # (L, 2D, 1) f32
        w_vp=jnp.stack(w_vp).astype(bf16),              # (L, H, D, D)
        b_proj=jnp.stack(b_proj),                       # (L, 1, D) f32
        w_fc1=nrmf((DEPTH, HIDDEN, MLP_HIDDEN)).astype(bf16),
        b_fc1=nrmf((DEPTH, 1, MLP_HIDDEN)),
        w_fc2=nrmf((DEPTH, MLP_HIDDEN, HIDDEN)).astype(bf16),
        b_fc2=nrmf((DEPTH, 1, HIDDEN)),
        w_adaf=nrmf((2, HIDDEN, HIDDEN)).astype(bf16),
        b_adaf=nrmf((2, 1, HIDDEN)),
        w_fin=w_fin.astype(bf16),
        b_fin=b_fin,
    )
    return params


# --------------------------------- main --------------------------------------
if __name__ == "__main__":
    key = jax.random.PRNGKey(0)
    kp, kx = jax.random.split(key)
    params = init_params(kp)

    x = jax.random.normal(kx, (2, IN_CH, INPUT_SIZE, INPUT_SIZE), dtype=jnp.float32)
    t = jnp.array([10.0, 500.0], dtype=jnp.float32)
    y = jnp.array([1, 3], dtype=jnp.int32)

    fwd = jax.jit(lambda xx, tt, yy: dit_forward(params, xx, tt, yy))
    out = fwd(x, t, y)
    jax.block_until_ready(out)

    assert out.shape == (2, OUT_CH, INPUT_SIZE, INPUT_SIZE), out.shape
    assert bool(jnp.all(jnp.isfinite(out)))
    print("KERNEL_OK")
</pallas_src>

<mosaic_0001>
module attributes {stable_mosaic.version = 11 : i64} {
  func.func @dit_forward_kernel(%arg0: i32, %arg1: memref<1x64x16xf32, #tpu.memory_space<vmem>>, %arg2: memref<64x64xf32, #tpu.memory_space<vmem>>, %arg3: memref<1x1x256xf32, #tpu.memory_space<vmem>>, %arg4: memref<1x1x64xf32, #tpu.memory_space<vmem>>, %arg5: memref<256x64xbf16, #tpu.memory_space<vmem>>, %arg6: memref<1x64xf32, #tpu.memory_space<vmem>>, %arg7: memref<64x64xbf16, #tpu.memory_space<vmem>>, %arg8: memref<1x64xf32, #tpu.memory_space<vmem>>, %arg9: memref<16x64xbf16, #tpu.memory_space<vmem>>, %arg10: memref<1x64xf32, #tpu.memory_space<vmem>>, %arg11: memref<2x6x64x64xbf16, #tpu.memory_space<vmem>>, %arg12: memref<2x6x1x64xf32, #tpu.memory_space<vmem>>, %arg13: memref<2x128x64xbf16, #tpu.memory_space<vmem>>, %arg14: memref<2x128x1xf32, #tpu.memory_space<vmem>>, %arg15: memref<2x4x64x64xbf16, #tpu.memory_space<vmem>>, %arg16: memref<2x1x64xf32, #tpu.memory_space<vmem>>, %arg17: memref<2x64x256xbf16, #tpu.memory_space<vmem>>, %arg18: memref<2x1x256xf32, #tpu.memory_space<vmem>>, %arg19: memref<2x256x64xbf16, #tpu.memory_space<vmem>>, %arg20: memref<2x1x64xf32, #tpu.memory_space<vmem>>, %arg21: memref<2x64x64xbf16, #tpu.memory_space<vmem>>, %arg22: memref<2x1x64xf32, #tpu.memory_space<vmem>>, %arg23: memref<64x128xbf16, #tpu.memory_space<vmem>>, %arg24: memref<1x128xf32, #tpu.memory_space<vmem>>, %arg25: memref<1x64x128xf32, #tpu.memory_space<vmem>>) attributes {dimension_semantics = [#tpu.dimension_semantics<parallel>], iteration_bounds = array<i64: 2>, scalar_prefetch = 0 : i64, scratch_operands = 0 : i64, tpu.core_type = #tpu.core_type<tc>, window_params = [{transform_indices = @transform_0, window_bounds = array<i64: 1, 64, 16>}, {pipeline_mode = #tpu.pipeline_mode<synchronous>, transform_indices = @transform_1, window_bounds = array<i64: 64, 64>}, {transform_indices = @transform_2, window_bounds = array<i64: 1, 1, 256>}, {transform_indices = @transform_3, window_bounds = array<i64: 1, 1, 64>}, {pipeline_mode = #tpu.pipeline_mode<synchronous>, transform_indices = @transform_4, window_bounds = array<i64: 256, 64>}, {pipeline_mode = #tpu.pipeline_mode<synchronous>, transform_indices = @transform_5, window_bounds = array<i64: 1, 64>}, {pipeline_mode = #tpu.pipeline_mode<synchronous>, transform_indices = @transform_6, window_bounds = array<i64: 64, 64>}, {pipeline_mode = #tpu.pipeline_mode<synchronous>, transform_indices = @transform_7, window_bounds = array<i64: 1, 64>}, {pipeline_mode = #tpu.pipeline_mode<synchronous>, transform_indices = @transform_8, window_bounds = array<i64: 16, 64>}, {pipeline_mode = #tpu.pipeline_mode<synchronous>, transform_indices = @transform_9, window_bounds = array<i64: 1, 64>}, {pipeline_mode = #tpu.pipeline_mode<synchronous>, transform_indices = @transform_10, window_bounds = array<i64: 2, 6, 64, 64>}, {pipeline_mode = #tpu.pipeline_mode<synchronous>, transform_indices = @transform_11, window_bounds = array<i64: 2, 6, 1, 64>}, {pipeline_mode = #tpu.pipeline_mode<synchronous>, transform_indices = @transform_12, window_bounds = array<i64: 2, 128, 64>}, {pipeline_mode = #tpu.pipeline_mode<synchronous>, transform_indices = @transform_13, window_bounds = array<i64: 2, 128, 1>}, {pipeline_mode = #tpu.pipeline_mode<synchronous>, transform_indices = @transform_14, window_bounds = array<i64: 2, 4, 64, 64>}, {pipeline_mode = #tpu.pipeline_mode<synchronous>, transform_indices = @transform_15, window_bounds = array<i64: 2, 1, 64>}, {pipeline_mode = #tpu.pipeline_mode<synchronous>, transform_indices = @transform_16, window_bounds = array<i64: 2, 64, 256>}, {pipeline_mode = #tpu.pipeline_mode<synchronous>, transform_indices = @transform_17, window_bounds = array<i64: 2, 1, 256>}, {pipeline_mode = #tpu.pipeline_mode<synchronous>, transform_indices = @transform_18, window_bounds = array<i64: 2, 256, 64>}, {pipeline_mode = #tpu.pipeline_mode<synchronous>, transform_indices = @transform_19, window_bounds = array<i64: 2, 1, 64>}, {pipeline_mode = #tpu.pipeline_mode<synchronous>, transform_indices = @transform_20, window_bounds = array<i64: 2, 64, 64>}, {pipeline_mode = #tpu.pipeline_mode<synchronous>, transform_indices = @transform_21, window_bounds = array<i64: 2, 1, 64>}, {pipeline_mode = #tpu.pipeline_mode<synchronous>, transform_indices = @transform_22, window_bounds = array<i64: 64, 128>}, {pipeline_mode = #tpu.pipeline_mode<synchronous>, transform_indices = @transform_23, window_bounds = array<i64: 1, 128>}, {transform_indices = @transform_24, window_bounds = array<i64: 1, 64, 128>}]} {
    %c0 = arith.constant 0 : index
    %c0_0 = arith.constant 0 : index
    %c0_1 = arith.constant 0 : index
    %0 = vector.load %arg3[%c0, %c0_0, %c0_1] : memref<1x1x256xf32, #tpu.memory_space<vmem>>, vector<1x1x256xf32>
    %1 = vector.shape_cast %0 : vector<1x1x256xf32> to vector<1x256xf32>
    %2 = arith.truncf %1 : vector<1x256xf32> to vector<1x256xbf16>
    %c0_2 = arith.constant 0 : index
    %c0_3 = arith.constant 0 : index
    %3 = vector.load %arg5[%c0_2, %c0_3] : memref<256x64xbf16, #tpu.memory_space<vmem>>, vector<256x64xbf16>
    %cst = arith.constant dense<0.000000e+00> : vector<1x64xf32>
    %4 = tpu.matmul %2, %3, %cst {dimension_numbers = #tpu.dot_dimension_numbers<[1], [0], [0], [1], [0, 0, 1, 1], [], []>} : vector<1x256xbf16>, vector<256x64xbf16>, vector<1x64xf32> -> vector<1x64xf32>
    %c0_4 = arith.constant 0 : index
    %c0_5 = arith.constant 0 : index
    %5 = vector.load %arg6[%c0_4, %c0_5] : memref<1x64xf32, #tpu.memory_space<vmem>>, vector<1x64xf32>
    %6 = arith.addf %4, %5 : vector<1x64xf32>
    %cst_6 = arith.constant 0.000000e+00 : f32
    %7 = vector.broadcast %cst_6 : f32 to vector<1x64xf32>
    %8 = arith.subf %7, %6 : vector<1x64xf32>
    %9 = math.exp %8 : vector<1x64xf32>
    %cst_7 = arith.constant 1.000000e+00 : f32
    %10 = vector.broadcast %cst_7 : f32 to vector<1x64xf32>
    %11 = arith.addf %10, %9 : vector<1x64xf32>
    %cst_8 = arith.constant 1.000000e+00 : f32
    %12 = vector.broadcast %cst_8 : f32 to vector<1x64xf32>
    %13 = arith.divf %12, %11 : vector<1x64xf32>
    %14 = arith.mulf %6, %13 : vector<1x64xf32>
    %15 = arith.truncf %14 : vector<1x64xf32> to vector<1x64xbf16>
    %c0_9 = arith.constant 0 : index
    %c0_10 = arith.constant 0 : index
    %16 = vector.load %arg7[%c0_9, %c0_10] : memref<64x64xbf16, #tpu.memory_space<vmem>>, vector<64x64xbf16>
    %cst_11 = arith.constant dense<0.000000e+00> : vector<1x64xf32>
    %17 = tpu.matmul %15, %16, %cst_11 {dimension_numbers = #tpu.dot_dimension_numbers<[1], [0], [0], [1], [0, 0, 1, 1], [], []>} : vector<1x64xbf16>, vector<64x64xbf16>, vector<1x64xf32> -> vector<1x64xf32>
    %c0_12 = arith.constant 0 : index
    %c0_13 = arith.constant 0 : index
    %18 = vector.load %arg8[%c0_12, %c0_13] : memref<1x64xf32, #tpu.memory_space<vmem>>, vector<1x64xf32>
    %19 = arith.addf %17, %18 : vector<1x64xf32>
    %c0_14 = arith.constant 0 : index
    %c0_15 = arith.constant 0 : index
    %c0_16 = arith.constant 0 : index
    %20 = vector.load %arg4[%c0_14, %c0_15, %c0_16] : memref<1x1x64xf32, #tpu.memory_space<vmem>>, vector<1x1x64xf32>
    %21 = vector.shape_cast %20 : vector<1x1x64xf32> to vector<1x64xf32>
    %22 = arith.addf %19, %21 : vector<1x64xf32>
    %cst_17 = arith.constant 0.000000e+00 : f32
    %23 = vector.broadcast %cst_17 : f32 to vector<1x64xf32>
    %24 = arith.subf %23, %22 : vector<1x64xf32>
    %25 = math.exp %24 : vector<1x64xf32>
    %cst_18 = arith.constant 1.000000e+00 : f32
    %26 = vector.broadcast %cst_18 : f32 to vector<1x64xf32>
    %27 = arith.addf %26, %25 : vector<1x64xf32>
    %cst_19 = arith.constant 1.000000e+00 : f32
    %28 = vector.broadcast %cst_19 : f32 to vector<1x64xf32>
    %29 = arith.divf %28, %27 : vector<1x64xf32>
    %30 = arith.mulf %22, %29 : vector<1x64xf32>
    %31 = vector.shape_cast %30 : vector<1x64xf32> to vector<1x64xf32>
    %32 = vector.broadcast %31 : vector<1x64xf32> to vector<64x64xf32>
    %33 = arith.truncf %32 : vector<64x64xf32> to vector<64x64xbf16>
    %c0_20 = arith.constant 0 : index
    %c0_21 = arith.constant 0 : index
    %c0_22 = arith.constant 0 : index
    %34 = vector.load %arg1[%c0_20, %c0_21, %c0_22] : memref<1x64x16xf32, #tpu.memory_space<vmem>>, vector<1x64x16xf32>
    %35 = vector.shape_cast %34 : vector<1x64x16xf32> to vector<64x16xf32>
    %36 = arith.truncf %35 : vector<64x16xf32> to vector<64x16xbf16>
    %c0_23 = arith.constant 0 : index
    %c0_24 = arith.constant 0 : index
    %37 = vector.load %arg9[%c0_23, %c0_24] : memref<16x64xbf16, #tpu.memory_space<vmem>>, vector<16x64xbf16>
    %cst_25 = arith.constant dense<0.000000e+00> : vector<64x64xf32>
    %38 = tpu.matmul %36, %37, %cst_25 {dimension_numbers = #tpu.dot_dimension_numbers<[1], [0], [0], [1], [0, 0, 1, 1], [], []>} : vector<64x16xbf16>, vector<16x64xbf16>, vector<64x64xf32> -> vector<64x64xf32>
    %c0_26 = arith.constant 0 : index
    %c0_27 = arith.constant 0 : index
    %39 = vector.load %arg10[%c0_26, %c0_27] : memref<1x64xf32, #tpu.memory_space<vmem>>, vector<1x64xf32>
    %40 = vector.broadcast %39 : vector<1x64xf32> to vector<64x64xf32>
    %41 = arith.addf %38, %40 : vector<64x64xf32>
    %c0_28 = arith.constant 0 : index
    %c0_29 = arith.constant 0 : index
    %42 = vector.load %arg2[%c0_28, %c0_29] : memref<64x64xf32, #tpu.memory_space<vmem>>, vector<64x64xf32>
    %43 = arith.addf %41, %42 : vector<64x64xf32>
    %c0_30 = arith.constant 0 : index
    %c0_31 = arith.constant 0 : index
    %c0_32 = arith.constant 0 : index
    %c0_33 = arith.constant 0 : index
    %44 = vector.load %arg11[%c0_30, %c0_31, %c0_32, %c0_33] : memref<2x6x64x64xbf16, #tpu.memory_space<vmem>>, vector<1x1x64x64xbf16>
    %45 = vector.shape_cast %44 : vector<1x1x64x64xbf16> to vector<64x64xbf16>
    %cst_34 = arith.constant dense<0.000000e+00> : vector<64x64xf32>
    %46 = tpu.matmul %33, %45, %cst_34 {dimension_numbers = #tpu.dot_dimension_numbers<[1], [0], [0], [1], [0, 0, 1, 1], [], []>} : vector<64x64xbf16>, vector<64x64xbf16>, vector<64x64xf32> -> vector<64x64xf32>
    %c0_35 = arith.constant 0 : index
    %c0_36 = arith.constant 0 : index
    %c0_37 = arith.constant 0 : index
    %c0_38 = arith.constant 0 : index
    %47 = vector.load %arg12[%c0_35, %c0_36, %c0_37, %c0_38] : memref<2x6x1x64xf32, #tpu.memory_space<vmem>>, vector<1x1x1x64xf32>
    %48 = vector.shape_cast %47 : vector<1x1x1x64xf32> to vector<1x64xf32>
    %49 = vector.broadcast %48 : vector<1x64xf32> to vector<64x64xf32>
    %50 = arith.addf %46, %49 : vector<64x64xf32>
    %c0_39 = arith.constant 0 : index
    %c1 = arith.constant 1 : index
    %c0_40 = arith.constant 0 : index
    %c0_41 = arith.constant 0 : index
    %51 = vector.load %arg11[%c0_39, %c1, %c0_40, %c0_41] : memref<2x6x64x64xbf16, #tpu.memory_space<vmem>>, vector<1x1x64x64xbf16>
    %52 = vector.shape_cast %51 : vector<1x1x64x64xbf16> to vector<64x64xbf16>
    %cst_42 = arith.constant dense<0.000000e+00> : vector<64x64xf32>
    %53 = tpu.matmul %33, %52, %cst_42 {dimension_numbers = #tpu.dot_dimension_numbers<[1], [0], [0], [1], [0, 0, 1, 1], [], []>} : vector<64x64xbf16>, vector<64x64xbf16>, vector<64x64xf32> -> vector<64x64xf32>
    %c0_43 = arith.constant 0 : index
    %c1_44 = arith.constant 1 : index
    %c0_45 = arith.constant 0 : index
    %c0_46 = arith.constant 0 : index
    %54 = vector.load %arg12[%c0_43, %c1_44, %c0_45, %c0_46] : memref<2x6x1x64xf32, #tpu.memory_space<vmem>>, vector<1x1x1x64xf32>
    %55 = vector.shape_cast %54 : vector<1x1x1x64xf32> to vector<1x64xf32>
    %56 = vector.broadcast %55 : vector<1x64xf32> to vector<64x64xf32>
    %57 = arith.addf %53, %56 : vector<64x64xf32>
    %c0_47 = arith.constant 0 : index
    %c2 = arith.constant 2 : index
    %c0_48 = arith.constant 0 : index
    %c0_49 = arith.constant 0 : index
    %58 = vector.load %arg11[%c0_47, %c2, %c0_48, %c0_49] : memref<2x6x64x64xbf16, #tpu.memory_space<vmem>>, vector<1x1x64x64xbf16>
    %59 = vector.shape_cast %58 : vector<1x1x64x64xbf16> to vector<64x64xbf16>
    %cst_50 = arith.constant dense<0.000000e+00> : vector<64x64xf32>
    %60 = tpu.matmul %33, %59, %cst_50 {dimension_numbers = #tpu.dot_dimension_numbers<[1], [0], [0], [1], [0, 0, 1, 1], [], []>} : vector<64x64xbf16>, vector<64x64xbf16>, vector<64x64xf32> -> vector<64x64xf32>
    %c0_51 = arith.constant 0 : index
    %c2_52 = arith.constant 2 : index
    %c0_53 = arith.constant 0 : index
    %c0_54 = arith.constant 0 : index
    %61 = vector.load %arg12[%c0_51, %c2_52, %c0_53, %c0_54] : memref<2x6x1x64xf32, #tpu.memory_space<vmem>>, vector<1x1x1x64xf32>
    %62 = vector.shape_cast %61 : vector<1x1x1x64xf32> to vector<1x64xf32>
    %63 = vector.broadcast %62 : vector<1x64xf32> to vector<64x64xf32>
    %64 = arith.addf %60, %63 : vector<64x64xf32>
    %cst_55 = arith.constant dense<0.000000e+00> : vector<64xf32>
    %65 = vector.multi_reduction <add>, %43, %cst_55 [1] : vector<64x64xf32> to vector<64xf32>
    %66 = vector.shape_cast %65 : vector<64xf32> to vector<64x1xf32>
    %cst_56 = arith.constant 6.400000e+01 : f32
    %67 = vector.broadcast %cst_56 : f32 to vector<64x1xf32>
    %68 = arith.divf %66, %67 : vector<64x1xf32>
    %69 = vector.broadcast %68 : vector<64x1xf32> to vector<64x64xf32>
    %70 = arith.subf %43, %69 : vector<64x64xf32>
    %71 = arith.mulf %70, %70 : vector<64x64xf32>
    %cst_57 = arith.constant dense<0.000000e+00> : vector<64xf32>
    %72 = vector.multi_reduction <add>, %71, %cst_57 [1] : vector<64x64xf32> to vector<64xf32>
    %73 = vector.shape_cast %72 : vector<64xf32> to vector<64x1xf32>
    %cst_58 = arith.constant 6.400000e+01 : f32
    %74 = vector.broadcast %cst_58 : f32 to vector<64x1xf32>
    %75 = arith.divf %73, %74 : vector<64x1xf32>
    %cst_59 = arith.constant 9.99999997E-7 : f32
    %76 = vector.broadcast %cst_59 : f32 to vector<64x1xf32>
    %77 = arith.addf %75, %76 : vector<64x1xf32>
    %78 = math.rsqrt %77 : vector<64x1xf32>
    %79 = vector.broadcast %78 : vector<64x1xf32> to vector<64x64xf32>
    %80 = arith.mulf %70, %79 : vector<64x64xf32>
    %cst_60 = arith.constant 1.000000e+00 : f32
    %81 = vector.broadcast %cst_60 : f32 to vector<64x64xf32>
    %82 = arith.addf %81, %57 : vector<64x64xf32>
    %83 = arith.mulf %80, %82 : vector<64x64xf32>
    %84 = arith.addf %83, %50 : vector<64x64xf32>
    %85 = arith.truncf %84 : vector<64x64xf32> to vector<64x64xbf16>
    %c0_61 = arith.constant 0 : index
    %c0_62 = arith.constant 0 : index
    %c0_63 = arith.constant 0 : index
    %86 = vector.load %arg13[%c0_61, %c0_62, %c0_63] : memref<2x128x64xbf16, #tpu.memory_space<vmem>>, vector<1x128x64xbf16>
    %87 = vector.shape_cast %86 : vector<1x128x64xbf16> to vector<128x64xbf16>
    %cst_64 = arith.constant dense<0.000000e+00> : vector<128x64xf32>
    %88 = tpu.matmul %87, %85, %cst_64 {dimension_numbers = #tpu.dot_dimension_numbers<[1], [1], [0], [0], [0, 0, 1, 0], [], []>} : vector<128x64xbf16>, vector<64x64xbf16>, vector<128x64xf32> -> vector<128x64xf32>
    %c0_65 = arith.constant 0 : index
    %c0_66 = arith.constant 0 : index
    %c0_67 = arith.constant 0 : index
    %89 = vector.load %arg14[%c0_65, %c0_66, %c0_67] : memref<2x128x1xf32, #tpu.memory_space<vmem>>, vector<1x128x1xf32>
    %90 = vector.shape_cast %89 : vector<1x128x1xf32> to vector<128x1xf32>
    %91 = vector.broadcast %90 : vector<128x1xf32> to vector<128x64xf32>
    %92 = arith.addf %88, %91 : vector<128x64xf32>
    %93 = arith.truncf %92 : vector<128x64xf32> to vector<128x64xbf16>
    %94 = vector.extract_strided_slice %93 {offsets = [0, 0], sizes = [16, 64], strides = [1, 1]} : vector<128x64xbf16> to vector<16x64xbf16>
    %95 = vector.extract_strided_slice %93 {offsets = [64, 0], sizes = [16, 64], strides = [1, 1]} : vector<128x64xbf16> to vector<16x64xbf16>
    %cst_68 = arith.constant dense<0.000000e+00> : vector<64x64xf32>
    %96 = tpu.matmul %94, %95, %cst_68 {dimension_numbers = #tpu.dot_dimension_numbers<[0], [0], [1], [1], [0, 1, 1, 1], [], []>} : vector<16x64xbf16>, vector<16x64xbf16>, vector<64x64xf32> -> vector<64x64xf32>
    %cst_69 = arith.constant dense<0xFF800000> : vector<64xf32>
    %97 = vector.multi_reduction <maximumf>, %96, %cst_69 [1] : vector<64x64xf32> to vector<64xf32>
    %98 = vector.shape_cast %97 : vector<64xf32> to vector<64x1xf32>
    %99 = vector.broadcast %98 : vector<64x1xf32> to vector<64x64xf32>
    %100 = arith.subf %96, %99 : vector<64x64xf32>
    %101 = math.exp %100 : vector<64x64xf32>
    %cst_70 = arith.constant dense<0.000000e+00> : vector<64xf32>
    %102 = vector.multi_reduction <add>, %101, %cst_70 [1] : vector<64x64xf32> to vector<64xf32>
    %103 = vector.shape_cast %102 : vector<64xf32> to vector<64x1xf32>
    %104 = tpu.reciprocal %103 {approx = true} : vector<64x1xf32> -> vector<64x1xf32>
    %105 = vector.broadcast %104 : vector<64x1xf32> to vector<64x64xf32>
    %106 = arith.mulf %101, %105 : vector<64x64xf32>
    %c0_71 = arith.constant 0 : index
    %c0_72 = arith.constant 0 : index
    %c0_73 = arith.constant 0 : index
    %c0_74 = arith.constant 0 : index
    %107 = vector.load %arg15[%c0_71, %c0_72, %c0_73, %c0_74] : memref<2x4x64x64xbf16, #tpu.memory_space<vmem>>, vector<1x1x64x64xbf16>
    %108 = vector.shape_cast %107 : vector<1x1x64x64xbf16> to vector<64x64xbf16>
    %cst_75 = arith.constant dense<0.000000e+00> : vector<64x64xf32>
    %109 = tpu.matmul %85, %108, %cst_75 {dimension_numbers = #tpu.dot_dimension_numbers<[1], [0], [0], [1], [0, 0, 1, 1], [], []>} : vector<64x64xbf16>, vector<64x64xbf16>, vector<64x64xf32> -> vector<64x64xf32>
    %110 = arith.truncf %109 : vector<64x64xf32> to vector<64x64xbf16>
    %111 = arith.truncf %106 : vector<64x64xf32> to vector<64x64xbf16>
    %cst_76 = arith.constant dense<0.000000e+00> : vector<64x64xf32>
    %112 = tpu.matmul %111, %110, %cst_76 {dimension_numbers = #tpu.dot_dimension_numbers<[1], [0], [0], [1], [0, 0, 1, 1], [], []>} : vector<64x64xbf16>, vector<64x64xbf16>, vector<64x64xf32> -> vector<64x64xf32>
    %113 = vector.extract_strided_slice %93 {offsets = [16, 0], sizes = [16, 64], strides = [1, 1]} : vector<128x64xbf16> to vector<16x64xbf16>
    %114 = vector.extract_strided_slice %93 {offsets = [80, 0], sizes = [16, 64], strides = [1, 1]} : vector<128x64xbf16> to vector<16x64xbf16>
    %cst_77 = arith.constant dense<0.000000e+00> : vector<64x64xf32>
    %115 = tpu.matmul %113, %114, %cst_77 {dimension_numbers = #tpu.dot_dimension_numbers<[0], [0], [1], [1], [0, 1, 1, 1], [], []>} : vector<16x64xbf16>, vector<16x64xbf16>, vector<64x64xf32> -> vector<64x64xf32>
    %cst_78 = arith.constant dense<0xFF800000> : vector<64xf32>
    %116 = vector.multi_reduction <maximumf>, %115, %cst_78 [1] : vector<64x64xf32> to vector<64xf32>
    %117 = vector.shape_cast %116 : vector<64xf32> to vector<64x1xf32>
    %118 = vector.broadcast %117 : vector<64x1xf32> to vector<64x64xf32>
    %119 = arith.subf %115, %118 : vector<64x64xf32>
    %120 = math.exp %119 : vector<64x64xf32>
    %cst_79 = arith.constant dense<0.000000e+00> : vector<64xf32>
    %121 = vector.multi_reduction <add>, %120, %cst_79 [1] : vector<64x64xf32> to vector<64xf32>
    %122 = vector.shape_cast %121 : vector<64xf32> to vector<64x1xf32>
    %123 = tpu.reciprocal %122 {approx = true} : vector<64x1xf32> -> vector<64x1xf32>
    %124 = vector.broadcast %123 : vector<64x1xf32> to vector<64x64xf32>
    %125 = arith.mulf %120, %124 : vector<64x64xf32>
    %c0_80 = arith.constant 0 : index
    %c1_81 = arith.constant 1 : index
    %c0_82 = arith.constant 0 : index
    %c0_83 = arith.constant 0 : index
    %126 = vector.load %arg15[%c0_80, %c1_81, %c0_82, %c0_83] : memref<2x4x64x64xbf16, #tpu.memory_space<vmem>>, vector<1x1x64x64xbf16>
    %127 = vector.shape_cast %126 : vector<1x1x64x64xbf16> to vector<64x64xbf16>
    %cst_84 = arith.constant dense<0.000000e+00> : vector<64x64xf32>
    %128 = tpu.matmul %85, %127, %cst_84 {dimension_numbers = #tpu.dot_dimension_numbers<[1], [0], [0], [1], [0, 0, 1, 1], [], []>} : vector<64x64xbf16>, vector<64x64xbf16>, vector<64x64xf32> -> vector<64x64xf32>
    %129 = arith.truncf %128 : vector<64x64xf32> to vector<64x64xbf16>
    %130 = arith.truncf %125 : vector<64x64xf32> to vector<64x64xbf16>
    %cst_85 = arith.constant dense<0.000000e+00> : vector<64x64xf32>
    %131 = tpu.matmul %130, %129, %cst_85 {dimension_numbers = #tpu.dot_dimension_numbers<[1], [0], [0], [1], [0, 0, 1, 1], [], []>} : vector<64x64xbf16>, vector<64x64xbf16>, vector<64x64xf32> -> vector<64x64xf32>
    %132 = arith.addf %112, %131 : vector<64x64xf32>
    %133 = vector.extract_strided_slice %93 {offsets = [32, 0], sizes = [16, 64], strides = [1, 1]} : vector<128x64xbf16> to vector<16x64xbf16>
    %134 = vector.extract_strided_slice %93 {offsets = [96, 0], sizes = [16, 64], strides = [1, 1]} : vector<128x64xbf16> to vector<16x64xbf16>
    %cst_86 = arith.constant dense<0.000000e+00> : vector<64x64xf32>
    %135 = tpu.matmul %133, %134, %cst_86 {dimension_numbers = #tpu.dot_dimension_numbers<[0], [0], [1], [1], [0, 1, 1, 1], [], []>} : vector<16x64xbf16>, vector<16x64xbf16>, vector<64x64xf32> -> vector<64x64xf32>
    %cst_87 = arith.constant dense<0xFF800000> : vector<64xf32>
    %136 = vector.multi_reduction <maximumf>, %135, %cst_87 [1] : vector<64x64xf32> to vector<64xf32>
    %137 = vector.shape_cast %136 : vector<64xf32> to vector<64x1xf32>
    %138 = vector.broadcast %137 : vector<64x1xf32> to vector<64x64xf32>
    %139 = arith.subf %135, %138 : vector<64x64xf32>
    %140 = math.exp %139 : vector<64x64xf32>
    %cst_88 = arith.constant dense<0.000000e+00> : vector<64xf32>
    %141 = vector.multi_reduction <add>, %140, %cst_88 [1] : vector<64x64xf32> to vector<64xf32>
    %142 = vector.shape_cast %141 : vector<64xf32> to vector<64x1xf32>
    %143 = tpu.reciprocal %142 {approx = true} : vector<64x1xf32> -> vector<64x1xf32>
    %144 = vector.broadcast %143 : vector<64x1xf32> to vector<64x64xf32>
    %145 = arith.mulf %140, %144 : vector<64x64xf32>
    %c0_89 = arith.constant 0 : index
    %c2_90 = arith.constant 2 : index
    %c0_91 = arith.constant 0 : index
    %c0_92 = arith.constant 0 : index
    %146 = vector.load %arg15[%c0_89, %c2_90, %c0_91, %c0_92] : memref<2x4x64x64xbf16, #tpu.memory_space<vmem>>, vector<1x1x64x64xbf16>
    %147 = vector.shape_cast %146 : vector<1x1x64x64xbf16> to vector<64x64xbf16>
    %cst_93 = arith.constant dense<0.000000e+00> : vector<64x64xf32>
    %148 = tpu.matmul %85, %147, %cst_93 {dimension_numbers = #tpu.dot_dimension_numbers<[1], [0], [0], [1], [0, 0, 1, 1], [], []>} : vector<64x64xbf16>, vector<64x64xbf16>, vector<64x64xf32> -> vector<64x64xf32>
    %149 = arith.truncf %148 : vector<64x64xf32> to vector<64x64xbf16>
    %150 = arith.truncf %145 : vector<64x64xf32> to vector<64x64xbf16>
    %cst_94 = arith.constant dense<0.000000e+00> : vector<64x64xf32>
    %151 = tpu.matmul %150, %149, %cst_94 {dimension_numbers = #tpu.dot_dimension_numbers<[1], [0], [0], [1], [0, 0, 1, 1], [], []>} : vector<64x64xbf16>, vector<64x64xbf16>, vector<64x64xf32> -> vector<64x64xf32>
    %152 = arith.addf %132, %151 : vector<64x64xf32>
    %153 = vector.extract_strided_slice %93 {offsets = [48, 0], sizes = [16, 64], strides = [1, 1]} : vector<128x64xbf16> to vector<16x64xbf16>
    %154 = vector.extract_strided_slice %93 {offsets = [112, 0], sizes = [16, 64], strides = [1, 1]} : vector<128x64xbf16> to vector<16x64xbf16>
    %cst_95 = arith.constant dense<0.000000e+00> : vector<64x64xf32>
    %155 = tpu.matmul %153, %154, %cst_95 {dimension_numbers = #tpu.dot_dimension_numbers<[0], [0], [1], [1], [0, 1, 1, 1], [], []>} : vector<16x64xbf16>, vector<16x64xbf16>, vector<64x64xf32> -> vector<64x64xf32>
    %cst_96 = arith.constant dense<0xFF800000> : vector<64xf32>
    %156 = vector.multi_reduction <maximumf>, %155, %cst_96 [1] : vector<64x64xf32> to vector<64xf32>
    %157 = vector.shape_cast %156 : vector<64xf32> to vector<64x1xf32>
    %158 = vector.broadcast %157 : vector<64x1xf32> to vector<64x64xf32>
    %159 = arith.subf %155, %158 : vector<64x64xf32>
    %160 = math.exp %159 : vector<64x64xf32>
    %cst_97 = arith.constant dense<0.000000e+00> : vector<64xf32>
    %161 = vector.multi_reduction <add>, %160, %cst_97 [1] : vector<64x64xf32> to vector<64xf32>
    %162 = vector.shape_cast %161 : vector<64xf32> to vector<64x1xf32>
    %163 = tpu.reciprocal %162 {approx = true} : vector<64x1xf32> -> vector<64x1xf32>
    %164 = vector.broadcast %163 : vector<64x1xf32> to vector<64x64xf32>
    %165 = arith.mulf %160, %164 : vector<64x64xf32>
    %c0_98 = arith.constant 0 : index
    %c3 = arith.constant 3 : index
    %c0_99 = arith.constant 0 : index
    %c0_100 = arith.constant 0 : index
    %166 = vector.load %arg15[%c0_98, %c3, %c0_99, %c0_100] : memref<2x4x64x64xbf16, #tpu.memory_space<vmem>>, vector<1x1x64x64xbf16>
    %167 = vector.shape_cast %166 : vector<1x1x64x64xbf16> to vector<64x64xbf16>
    %cst_101 = arith.constant dense<0.000000e+00> : vector<64x64xf32>
    %168 = tpu.matmul %85, %167, %cst_101 {dimension_numbers = #tpu.dot_dimension_numbers<[1], [0], [0], [1], [0, 0, 1, 1], [], []>} : vector<64x64xbf16>, vector<64x64xbf16>, vector<64x64xf32> -> vector<64x64xf32>
    %169 = arith.truncf %168 : vector<64x64xf32> to vector<64x64xbf16>
    %170 = arith.truncf %165 : vector<64x64xf32> to vector<64x64xbf16>
    %cst_102 = arith.constant dense<0.000000e+00> : vector<64x64xf32>
    %171 = tpu.matmul %170, %169, %cst_102 {dimension_numbers = #tpu.dot_dimension_numbers<[1], [0], [0], [1], [0, 0, 1, 1], [], []>} : vector<64x64xbf16>, vector<64x64xbf16>, vector<64x64xf32> -> vector<64x64xf32>
    %172 = arith.addf %152, %171 : vector<64x64xf32>
    %c0_103 = arith.constant 0 : index
    %c0_104 = arith.constant 0 : index
    %c0_105 = arith.constant 0 : index
    %173 = vector.load %arg16[%c0_103, %c0_104, %c0_105] : memref<2x1x64xf32, #tpu.memory_space<vmem>>, vector<1x1x64xf32>
    %174 = vector.shape_cast %173 : vector<1x1x64xf32> to vector<1x64xf32>
    %175 = vector.broadcast %174 : vector<1x64xf32> to vector<64x64xf32>
    %176 = arith.addf %172, %175 : vector<64x64xf32>
    %177 = arith.mulf %64, %176 : vector<64x64xf32>
    %178 = arith.addf %43, %177 : vector<64x64xf32>
    %c0_106 = arith.constant 0 : index
    %c3_107 = arith.constant 3 : index
    %c0_108 = arith.constant 0 : index
    %c0_109 = arith.constant 0 : index
    %179 = vector.load %arg11[%c0_106, %c3_107, %c0_108, %c0_109] : memref<2x6x64x64xbf16, #tpu.memory_space<vmem>>, vector<1x1x64x64xbf16>
    %180 = vector.shape_cast %179 : vector<1x1x64x64xbf16> to vector<64x64xbf16>
    %cst_110 = arith.constant dense<0.000000e+00> : vector<64x64xf32>
    %181 = tpu.matmul %33, %180, %cst_110 {dimension_numbers = #tpu.dot_dimension_numbers<[1], [0], [0], [1], [0, 0, 1, 1], [], []>} : vector<64x64xbf16>, vector<64x64xbf16>, vector<64x64xf32> -> vector<64x64xf32>
    %c0_111 = arith.constant 0 : index
    %c3_112 = arith.constant 3 : index
    %c0_113 = arith.constant 0 : index
    %c0_114 = arith.constant 0 : index
    %182 = vector.load %arg12[%c0_111, %c3_112, %c0_113, %c0_114] : memref<2x6x1x64xf32, #tpu.memory_space<vmem>>, vector<1x1x1x64xf32>
    %183 = vector.shape_cast %182 : vector<1x1x1x64xf32> to vector<1x64xf32>
    %184 = vector.broadcast %183 : vector<1x64xf32> to vector<64x64xf32>
    %185 = arith.addf %181, %184 : vector<64x64xf32>
    %c0_115 = arith.constant 0 : index
    %c4 = arith.constant 4 : index
    %c0_116 = arith.constant 0 : index
    %c0_117 = arith.constant 0 : index
    %186 = vector.load %arg11[%c0_115, %c4, %c0_116, %c0_117] : memref<2x6x64x64xbf16, #tpu.memory_space<vmem>>, vector<1x1x64x64xbf16>
    %187 = vector.shape_cast %186 : vector<1x1x64x64xbf16> to vector<64x64xbf16>
    %cst_118 = arith.constant dense<0.000000e+00> : vector<64x64xf32>
    %188 = tpu.matmul %33, %187, %cst_118 {dimension_numbers = #tpu.dot_dimension_numbers<[1], [0], [0], [1], [0, 0, 1, 1], [], []>} : vector<64x64xbf16>, vector<64x64xbf16>, vector<64x64xf32> -> vector<64x64xf32>
    %c0_119 = arith.constant 0 : index
    %c4_120 = arith.constant 4 : index
    %c0_121 = arith.constant 0 : index
    %c0_122 = arith.constant 0 : index
    %189 = vector.load %arg12[%c0_119, %c4_120, %c0_121, %c0_122] : memref<2x6x1x64xf32, #tpu.memory_space<vmem>>, vector<1x1x1x64xf32>
    %190 = vector.shape_cast %189 : vector<1x1x1x64xf32> to vector<1x64xf32>
    %191 = vector.broadcast %190 : vector<1x64xf32> to vector<64x64xf32>
    %192 = arith.addf %188, %191 : vector<64x64xf32>
    %c0_123 = arith.constant 0 : index
    %c5 = arith.constant 5 : index
    %c0_124 = arith.constant 0 : index
    %c0_125 = arith.constant 0 : index
    %193 = vector.load %arg11[%c0_123, %c5, %c0_124, %c0_125] : memref<2x6x64x64xbf16, #tpu.memory_space<vmem>>, vector<1x1x64x64xbf16>
    %194 = vector.shape_cast %193 : vector<1x1x64x64xbf16> to vector<64x64xbf16>
    %cst_126 = arith.constant dense<0.000000e+00> : vector<64x64xf32>
    %195 = tpu.matmul %33, %194, %cst_126 {dimension_numbers = #tpu.dot_dimension_numbers<[1], [0], [0], [1], [0, 0, 1, 1], [], []>} : vector<64x64xbf16>, vector<64x64xbf16>, vector<64x64xf32> -> vector<64x64xf32>
    %c0_127 = arith.constant 0 : index
    %c5_128 = arith.constant 5 : index
    %c0_129 = arith.constant 0 : index
    %c0_130 = arith.constant 0 : index
    %196 = vector.load %arg12[%c0_127, %c5_128, %c0_129, %c0_130] : memref<2x6x1x64xf32, #tpu.memory_space<vmem>>, vector<1x1x1x64xf32>
    %197 = vector.shape_cast %196 : vector<1x1x1x64xf32> to vector<1x64xf32>
    %198 = vector.broadcast %197 : vector<1x64xf32> to vector<64x64xf32>
    %199 = arith.addf %195, %198 : vector<64x64xf32>
    %cst_131 = arith.constant dense<0.000000e+00> : vector<64xf32>
    %200 = vector.multi_reduction <add>, %178, %cst_131 [1] : vector<64x64xf32> to vector<64xf32>
    %201 = vector.shape_cast %200 : vector<64xf32> to vector<64x1xf32>
    %cst_132 = arith.constant 6.400000e+01 : f32
    %202 = vector.broadcast %cst_132 : f32 to vector<64x1xf32>
    %203 = arith.divf %201, %202 : vector<64x1xf32>
    %204 = vector.broadcast %203 : vector<64x1xf32> to vector<64x64xf32>
    %205 = arith.subf %178, %204 : vector<64x64xf32>
    %206 = arith.mulf %205, %205 : vector<64x64xf32>
    %cst_133 = arith.constant dense<0.000000e+00> : vector<64xf32>
    %207 = vector.multi_reduction <add>, %206, %cst_133 [1] : vector<64x64xf32> to vector<64xf32>
    %208 = vector.shape_cast %207 : vector<64xf32> to vector<64x1xf32>
    %cst_134 = arith.constant 6.400000e+01 : f32
    %209 = vector.broadcast %cst_134 : f32 to vector<64x1xf32>
    %210 = arith.divf %208, %209 : vector<64x1xf32>
    %cst_135 = arith.constant 9.99999997E-7 : f32
    %211 = vector.broadcast %cst_135 : f32 to vector<64x1xf32>
    %212 = arith.addf %210, %211 : vector<64x1xf32>
    %213 = math.rsqrt %212 : vector<64x1xf32>
    %214 = vector.broadcast %213 : vector<64x1xf32> to vector<64x64xf32>
    %215 = arith.mulf %205, %214 : vector<64x64xf32>
    %cst_136 = arith.constant 1.000000e+00 : f32
    %216 = vector.broadcast %cst_136 : f32 to vector<64x64xf32>
    %217 = arith.addf %216, %192 : vector<64x64xf32>
    %218 = arith.mulf %215, %217 : vector<64x64xf32>
    %219 = arith.addf %218, %185 : vector<64x64xf32>
    %220 = arith.truncf %219 : vector<64x64xf32> to vector<64x64xbf16>
    %c0_137 = arith.constant 0 : index
    %c0_138 = arith.constant 0 : index
    %c0_139 = arith.constant 0 : index
    %221 = vector.load %arg17[%c0_137, %c0_138, %c0_139] : memref<2x64x256xbf16, #tpu.memory_space<vmem>>, vector<1x64x256xbf16>
    %222 = vector.shape_cast %221 : vector<1x64x256xbf16> to vector<64x256xbf16>
    %cst_140 = arith.constant dense<0.000000e+00> : vector<64x256xf32>
    %223 = tpu.matmul %220, %222, %cst_140 {dimension_numbers = #tpu.dot_dimension_numbers<[1], [0], [0], [1], [0, 0, 1, 1], [], []>} : vector<64x64xbf16>, vector<64x256xbf16>, vector<64x256xf32> -> vector<64x256xf32>
    %c0_141 = arith.constant 0 : index
    %c0_142 = arith.constant 0 : index
    %c0_143 = arith.constant 0 : index
    %224 = vector.load %arg18[%c0_141, %c0_142, %c0_143] : memref<2x1x256xf32, #tpu.memory_space<vmem>>, vector<1x1x256xf32>
    %225 = vector.shape_cast %224 : vector<1x1x256xf32> to vector<1x256xf32>
    %226 = vector.broadcast %225 : vector<1x256xf32> to vector<64x256xf32>
    %227 = arith.addf %223, %226 : vector<64x256xf32>
    %cst_144 = arith.constant 5.000000e-01 : f32
    %228 = vector.broadcast %cst_144 : f32 to vector<64x256xf32>
    %229 = arith.mulf %228, %227 : vector<64x256xf32>
    %cst_145 = arith.constant 4.471500e-02 : f32
    %230 = vector.broadcast %cst_145 : f32 to vector<64x256xf32>
    %231 = arith.mulf %230, %227 : vector<64x256xf32>
    %232 = arith.mulf %231, %227 : vector<64x256xf32>
    %233 = arith.mulf %232, %227 : vector<64x256xf32>
    %234 = arith.addf %227, %233 : vector<64x256xf32>
    %cst_146 = arith.constant 0.797884583 : f32
    %235 = vector.broadcast %cst_146 : f32 to vector<64x256xf32>
    %236 = arith.mulf %235, %234 : vector<64x256xf32>
    %237 = math.tanh %236 : vector<64x256xf32>
    %cst_147 = arith.constant 1.000000e+00 : f32
    %238 = vector.broadcast %cst_147 : f32 to vector<64x256xf32>
    %239 = arith.addf %238, %237 : vector<64x256xf32>
    %240 = arith.mulf %229, %239 : vector<64x256xf32>
    %241 = arith.truncf %240 : vector<64x256xf32> to vector<64x256xbf16>
    %c0_148 = arith.constant 0 : index
    %c0_149 = arith.constant 0 : index
    %c0_150 = arith.constant 0 : index
    %242 = vector.load %arg19[%c0_148, %c0_149, %c0_150] : memref<2x256x64xbf16, #tpu.memory_space<vmem>>, vector<1x256x64xbf16>
    %243 = vector.shape_cast %242 : vector<1x256x64xbf16> to vector<256x64xbf16>
    %cst_151 = arith.constant dense<0.000000e+00> : vector<64x64xf32>
    %244 = tpu.matmul %241, %243, %cst_151 {dimension_numbers = #tpu.dot_dimension_numbers<[1], [0], [0], [1], [0, 0, 1, 1], [], []>} : vector<64x256xbf16>, vector<256x64xbf16>, vector<64x64xf32> -> vector<64x64xf32>
    %c0_152 = arith.constant 0 : index
    %c0_153 = arith.constant 0 : index
    %c0_154 = arith.constant 0 : index
    %245 = vector.load %arg20[%c0_152, %c0_153, %c0_154] : memref<2x1x64xf32, #tpu.memory_space<vmem>>, vector<1x1x64xf32>
    %246 = vector.shape_cast %245 : vector<1x1x64xf32> to vector<1x64xf32>
    %247 = vector.broadcast %246 : vector<1x64xf32> to vector<64x64xf32>
    %248 = arith.addf %244, %247 : vector<64x64xf32>
    %249 = arith.mulf %199, %248 : vector<64x64xf32>
    %250 = arith.addf %178, %249 : vector<64x64xf32>
    %c1_155 = arith.constant 1 : index
    %c0_156 = arith.constant 0 : index
    %c0_157 = arith.constant 0 : index
    %c0_158 = arith.constant 0 : index
    %251 = vector.load %arg11[%c1_155, %c0_156, %c0_157, %c0_158] : memref<2x6x64x64xbf16, #tpu.memory_space<vmem>>, vector<1x1x64x64xbf16>
    %252 = vector.shape_cast %251 : vector<1x1x64x64xbf16> to vector<64x64xbf16>
    %cst_159 = arith.constant dense<0.000000e+00> : vector<64x64xf32>
    %253 = tpu.matmul %33, %252, %cst_159 {dimension_numbers = #tpu.dot_dimension_numbers<[1], [0], [0], [1], [0, 0, 1, 1], [], []>} : vector<64x64xbf16>, vector<64x64xbf16>, vector<64x64xf32> -> vector<64x64xf32>
    %c1_160 = arith.constant 1 : index
    %c0_161 = arith.constant 0 : index
    %c0_162 = arith.constant 0 : index
    %c0_163 = arith.constant 0 : index
    %254 = vector.load %arg12[%c1_160, %c0_161, %c0_162, %c0_163] : memref<2x6x1x64xf32, #tpu.memory_space<vmem>>, vector<1x1x1x64xf32>
    %255 = vector.shape_cast %254 : vector<1x1x1x64xf32> to vector<1x64xf32>
    %256 = vector.broadcast %255 : vector<1x64xf32> to vector<64x64xf32>
    %257 = arith.addf %253, %256 : vector<64x64xf32>
    %c1_164 = arith.constant 1 : index
    %c1_165 = arith.constant 1 : index
    %c0_166 = arith.constant 0 : index
    %c0_167 = arith.constant 0 : index
    %258 = vector.load %arg11[%c1_164, %c1_165, %c0_166, %c0_167] : memref<2x6x64x64xbf16, #tpu.memory_space<vmem>>, vector<1x1x64x64xbf16>
    %259 = vector.shape_cast %258 : vector<1x1x64x64xbf16> to vector<64x64xbf16>
    %cst_168 = arith.constant dense<0.000000e+00> : vector<64x64xf32>
    %260 = tpu.matmul %33, %259, %cst_168 {dimension_numbers = #tpu.dot_dimension_numbers<[1], [0], [0], [1], [0, 0, 1, 1], [], []>} : vector<64x64xbf16>, vector<64x64xbf16>, vector<64x64xf32> -> vector<64x64xf32>
    %c1_169 = arith.constant 1 : index
    %c1_170 = arith.constant 1 : index
    %c0_171 = arith.constant 0 : index
    %c0_172 = arith.constant 0 : index
    %261 = vector.load %arg12[%c1_169, %c1_170, %c0_171, %c0_172] : memref<2x6x1x64xf32, #tpu.memory_space<vmem>>, vector<1x1x1x64xf32>
    %262 = vector.shape_cast %261 : vector<1x1x1x64xf32> to vector<1x64xf32>
    %263 = vector.broadcast %262 : vector<1x64xf32> to vector<64x64xf32>
    %264 = arith.addf %260, %263 : vector<64x64xf32>
    %c1_173 = arith.constant 1 : index
    %c2_174 = arith.constant 2 : index
    %c0_175 = arith.constant 0 : index
    %c0_176 = arith.constant 0 : index
    %265 = vector.load %arg11[%c1_173, %c2_174, %c0_175, %c0_176] : memref<2x6x64x64xbf16, #tpu.memory_space<vmem>>, vector<1x1x64x64xbf16>
    %266 = vector.shape_cast %265 : vector<1x1x64x64xbf16> to vector<64x64xbf16>
    %cst_177 = arith.constant dense<0.000000e+00> : vector<64x64xf32>
    %267 = tpu.matmul %33, %266, %cst_177 {dimension_numbers = #tpu.dot_dimension_numbers<[1], [0], [0], [1], [0, 0, 1, 1], [], []>} : vector<64x64xbf16>, vector<64x64xbf16>, vector<64x64xf32> -> vector<64x64xf32>
    %c1_178 = arith.constant 1 : index
    %c2_179 = arith.constant 2 : index
    %c0_180 = arith.constant 0 : index
    %c0_181 = arith.constant 0 : index
    %268 = vector.load %arg12[%c1_178, %c2_179, %c0_180, %c0_181] : memref<2x6x1x64xf32, #tpu.memory_space<vmem>>, vector<1x1x1x64xf32>
    %269 = vector.shape_cast %268 : vector<1x1x1x64xf32> to vector<1x64xf32>
    %270 = vector.broadcast %269 : vector<1x64xf32> to vector<64x64xf32>
    %271 = arith.addf %267, %270 : vector<64x64xf32>
    %cst_182 = arith.constant dense<0.000000e+00> : vector<64xf32>
    %272 = vector.multi_reduction <add>, %250, %cst_182 [1] : vector<64x64xf32> to vector<64xf32>
    %273 = vector.shape_cast %272 : vector<64xf32> to vector<64x1xf32>
    %cst_183 = arith.constant 6.400000e+01 : f32
    %274 = vector.broadcast %cst_183 : f32 to vector<64x1xf32>
    %275 = arith.divf %273, %274 : vector<64x1xf32>
    %276 = vector.broadcast %275 : vector<64x1xf32> to vector<64x64xf32>
    %277 = arith.subf %250, %276 : vector<64x64xf32>
    %278 = arith.mulf %277, %277 : vector<64x64xf32>
    %cst_184 = arith.constant dense<0.000000e+00> : vector<64xf32>
    %279 = vector.multi_reduction <add>, %278, %cst_184 [1] : vector<64x64xf32> to vector<64xf32>
    %280 = vector.shape_cast %279 : vector<64xf32> to vector<64x1xf32>
    %cst_185 = arith.constant 6.400000e+01 : f32
    %281 = vector.broadcast %cst_185 : f32 to vector<64x1xf32>
    %282 = arith.divf %280, %281 : vector<64x1xf32>
    %cst_186 = arith.constant 9.99999997E-7 : f32
    %283 = vector.broadcast %cst_186 : f32 to vector<64x1xf32>
    %284 = arith.addf %282, %283 : vector<64x1xf32>
    %285 = math.rsqrt %284 : vector<64x1xf32>
    %286 = vector.broadcast %285 : vector<64x1xf32> to vector<64x64xf32>
    %287 = arith.mulf %277, %286 : vector<64x64xf32>
    %cst_187 = arith.constant 1.000000e+00 : f32
    %288 = vector.broadcast %cst_187 : f32 to vector<64x64xf32>
    %289 = arith.addf %288, %264 : vector<64x64xf32>
    %290 = arith.mulf %287, %289 : vector<64x64xf32>
    %291 = arith.addf %290, %257 : vector<64x64xf32>
    %292 = arith.truncf %291 : vector<64x64xf32> to vector<64x64xbf16>
    %c1_188 = arith.constant 1 : index
    %c0_189 = arith.constant 0 : index
    %c0_190 = arith.constant 0 : index
    %293 = vector.load %arg13[%c1_188, %c0_189, %c0_190] : memref<2x128x64xbf16, #tpu.memory_space<vmem>>, vector<1x128x64xbf16>
    %294 = vector.shape_cast %293 : vector<1x128x64xbf16> to vector<128x64xbf16>
    %cst_191 = arith.constant dense<0.000000e+00> : vector<128x64xf32>
    %295 = tpu.matmul %294, %292, %cst_191 {dimension_numbers = #tpu.dot_dimension_numbers<[1], [1], [0], [0], [0, 0, 1, 0], [], []>} : vector<128x64xbf16>, vector<64x64xbf16>, vector<128x64xf32> -> vector<128x64xf32>
    %c1_192 = arith.constant 1 : index
    %c0_193 = arith.constant 0 : index
    %c0_194 = arith.constant 0 : index
    %296 = vector.load %arg14[%c1_192, %c0_193, %c0_194] : memref<2x128x1xf32, #tpu.memory_space<vmem>>, vector<1x128x1xf32>
    %297 = vector.shape_cast %296 : vector<1x128x1xf32> to vector<128x1xf32>
    %298 = vector.broadcast %297 : vector<128x1xf32> to vector<128x64xf32>
    %299 = arith.addf %295, %298 : vector<128x64xf32>
    %300 = arith.truncf %299 : vector<128x64xf32> to vector<128x64xbf16>
    %301 = vector.extract_strided_slice %300 {offsets = [0, 0], sizes = [16, 64], strides = [1, 1]} : vector<128x64xbf16> to vector<16x64xbf16>
    %302 = vector.extract_strided_slice %300 {offsets = [64, 0], sizes = [16, 64], strides = [1, 1]} : vector<128x64xbf16> to vector<16x64xbf16>
    %cst_195 = arith.constant dense<0.000000e+00> : vector<64x64xf32>
    %303 = tpu.matmul %301, %302, %cst_195 {dimension_numbers = #tpu.dot_dimension_numbers<[0], [0], [1], [1], [0, 1, 1, 1], [], []>} : vector<16x64xbf16>, vector<16x64xbf16>, vector<64x64xf32> -> vector<64x64xf32>
    %cst_196 = arith.constant dense<0xFF800000> : vector<64xf32>
    %304 = vector.multi_reduction <maximumf>, %303, %cst_196 [1] : vector<64x64xf32> to vector<64xf32>
    %305 = vector.shape_cast %304 : vector<64xf32> to vector<64x1xf32>
    %306 = vector.broadcast %305 : vector<64x1xf32> to vector<64x64xf32>
    %307 = arith.subf %303, %306 : vector<64x64xf32>
    %308 = math.exp %307 : vector<64x64xf32>
    %cst_197 = arith.constant dense<0.000000e+00> : vector<64xf32>
    %309 = vector.multi_reduction <add>, %308, %cst_197 [1] : vector<64x64xf32> to vector<64xf32>
    %310 = vector.shape_cast %309 : vector<64xf32> to vector<64x1xf32>
    %311 = tpu.reciprocal %310 {approx = true} : vector<64x1xf32> -> vector<64x1xf32>
    %312 = vector.broadcast %311 : vector<64x1xf32> to vector<64x64xf32>
    %313 = arith.mulf %308, %312 : vector<64x64xf32>
    %c1_198 = arith.constant 1 : index
    %c0_199 = arith.constant 0 : index
    %c0_200 = arith.constant 0 : index
    %c0_201 = arith.constant 0 : index
    %314 = vector.load %arg15[%c1_198, %c0_199, %c0_200, %c0_201] : memref<2x4x64x64xbf16, #tpu.memory_space<vmem>>, vector<1x1x64x64xbf16>
    %315 = vector.shape_cast %314 : vector<1x1x64x64xbf16> to vector<64x64xbf16>
    %cst_202 = arith.constant dense<0.000000e+00> : vector<64x64xf32>
    %316 = tpu.matmul %292, %315, %cst_202 {dimension_numbers = #tpu.dot_dimension_numbers<[1], [0], [0], [1], [0, 0, 1, 1], [], []>} : vector<64x64xbf16>, vector<64x64xbf16>, vector<64x64xf32> -> vector<64x64xf32>
    %317 = arith.truncf %316 : vector<64x64xf32> to vector<64x64xbf16>
    %318 = arith.truncf %313 : vector<64x64xf32> to vector<64x64xbf16>
    %cst_203 = arith.constant dense<0.000000e+00> : vector<64x64xf32>
    %319 = tpu.matmul %318, %317, %cst_203 {dimension_numbers = #tpu.dot_dimension_numbers<[1], [0], [0], [1], [0, 0, 1, 1], [], []>} : vector<64x64xbf16>, vector<64x64xbf16>, vector<64x64xf32> -> vector<64x64xf32>
    %320 = vector.extract_strided_slice %300 {offsets = [16, 0], sizes = [16, 64], strides = [1, 1]} : vector<128x64xbf16> to vector<16x64xbf16>
    %321 = vector.extract_strided_slice %300 {offsets = [80, 0], sizes = [16, 64], strides = [1, 1]} : vector<128x64xbf16> to vector<16x64xbf16>
    %cst_204 = arith.constant dense<0.000000e+00> : vector<64x64xf32>
    %322 = tpu.matmul %320, %321, %cst_204 {dimension_numbers = #tpu.dot_dimension_numbers<[0], [0], [1], [1], [0, 1, 1, 1], [], []>} : vector<16x64xbf16>, vector<16x64xbf16>, vector<64x64xf32> -> vector<64x64xf32>
    %cst_205 = arith.constant dense<0xFF800000> : vector<64xf32>
    %323 = vector.multi_reduction <maximumf>, %322, %cst_205 [1] : vector<64x64xf32> to vector<64xf32>
    %324 = vector.shape_cast %323 : vector<64xf32> to vector<64x1xf32>
    %325 = vector.broadcast %324 : vector<64x1xf32> to vector<64x64xf32>
    %326 = arith.subf %322, %325 : vector<64x64xf32>
    %327 = math.exp %326 : vector<64x64xf32>
    %cst_206 = arith.constant dense<0.000000e+00> : vector<64xf32>
    %328 = vector.multi_reduction <add>, %327, %cst_206 [1] : vector<64x64xf32> to vector<64xf32>
    %329 = vector.shape_cast %328 : vector<64xf32> to vector<64x1xf32>
    %330 = tpu.reciprocal %329 {approx = true} : vector<64x1xf32> -> vector<64x1xf32>
    %331 = vector.broadcast %330 : vector<64x1xf32> to vector<64x64xf32>
    %332 = arith.mulf %327, %331 : vector<64x64xf32>
    %c1_207 = arith.constant 1 : index
    %c1_208 = arith.constant 1 : index
    %c0_209 = arith.constant 0 : index
    %c0_210 = arith.constant 0 : index
    %333 = vector.load %arg15[%c1_207, %c1_208, %c0_209, %c0_210] : memref<2x4x64x64xbf16, #tpu.memory_space<vmem>>, vector<1x1x64x64xbf16>
    %334 = vector.shape_cast %333 : vector<1x1x64x64xbf16> to vector<64x64xbf16>
    %cst_211 = arith.constant dense<0.000000e+00> : vector<64x64xf32>
    %335 = tpu.matmul %292, %334, %cst_211 {dimension_numbers = #tpu.dot_dimension_numbers<[1], [0], [0], [1], [0, 0, 1, 1], [], []>} : vector<64x64xbf16>, vector<64x64xbf16>, vector<64x64xf32> -> vector<64x64xf32>
    %336 = arith.truncf %335 : vector<64x64xf32> to vector<64x64xbf16>
    %337 = arith.truncf %332 : vector<64x64xf32> to vector<64x64xbf16>
    %cst_212 = arith.constant dense<0.000000e+00> : vector<64x64xf32>
    %338 = tpu.matmul %337, %336, %cst_212 {dimension_numbers = #tpu.dot_dimension_numbers<[1], [0], [0], [1], [0, 0, 1, 1], [], []>} : vector<64x64xbf16>, vector<64x64xbf16>, vector<64x64xf32> -> vector<64x64xf32>
    %339 = arith.addf %319, %338 : vector<64x64xf32>
    %340 = vector.extract_strided_slice %300 {offsets = [32, 0], sizes = [16, 64], strides = [1, 1]} : vector<128x64xbf16> to vector<16x64xbf16>
    %341 = vector.extract_strided_slice %300 {offsets = [96, 0], sizes = [16, 64], strides = [1, 1]} : vector<128x64xbf16> to vector<16x64xbf16>
    %cst_213 = arith.constant dense<0.000000e+00> : vector<64x64xf32>
    %342 = tpu.matmul %340, %341, %cst_213 {dimension_numbers = #tpu.dot_dimension_numbers<[0], [0], [1], [1], [0, 1, 1, 1], [], []>} : vector<16x64xbf16>, vector<16x64xbf16>, vector<64x64xf32> -> vector<64x64xf32>
    %cst_214 = arith.constant dense<0xFF800000> : vector<64xf32>
    %343 = vector.multi_reduction <maximumf>, %342, %cst_214 [1] : vector<64x64xf32> to vector<64xf32>
    %344 = vector.shape_cast %343 : vector<64xf32> to vector<64x1xf32>
    %345 = vector.broadcast %344 : vector<64x1xf32> to vector<64x64xf32>
    %346 = arith.subf %342, %345 : vector<64x64xf32>
    %347 = math.exp %346 : vector<64x64xf32>
    %cst_215 = arith.constant dense<0.000000e+00> : vector<64xf32>
    %348 = vector.multi_reduction <add>, %347, %cst_215 [1] : vector<64x64xf32> to vector<64xf32>
    %349 = vector.shape_cast %348 : vector<64xf32> to vector<64x1xf32>
    %350 = tpu.reciprocal %349 {approx = true} : vector<64x1xf32> -> vector<64x1xf32>
    %351 = vector.broadcast %350 : vector<64x1xf32> to vector<64x64xf32>
    %352 = arith.mulf %347, %351 : vector<64x64xf32>
    %c1_216 = arith.constant 1 : index
    %c2_217 = arith.constant 2 : index
    %c0_218 = arith.constant 0 : index
    %c0_219 = arith.constant 0 : index
    %353 = vector.load %arg15[%c1_216, %c2_217, %c0_218, %c0_219] : memref<2x4x64x64xbf16, #tpu.memory_space<vmem>>, vector<1x1x64x64xbf16>
    %354 = vector.shape_cast %353 : vector<1x1x64x64xbf16> to vector<64x64xbf16>
    %cst_220 = arith.constant dense<0.000000e+00> : vector<64x64xf32>
    %355 = tpu.matmul %292, %354, %cst_220 {dimension_numbers = #tpu.dot_dimension_numbers<[1], [0], [0], [1], [0, 0, 1, 1], [], []>} : vector<64x64xbf16>, vector<64x64xbf16>, vector<64x64xf32> -> vector<64x64xf32>
    %356 = arith.truncf %355 : vector<64x64xf32> to vector<64x64xbf16>
    %357 = arith.truncf %352 : vector<64x64xf32> to vector<64x64xbf16>
    %cst_221 = arith.constant dense<0.000000e+00> : vector<64x64xf32>
    %358 = tpu.matmul %357, %356, %cst_221 {dimension_numbers = #tpu.dot_dimension_numbers<[1], [0], [0], [1], [0, 0, 1, 1], [], []>} : vector<64x64xbf16>, vector<64x64xbf16>, vector<64x64xf32> -> vector<64x64xf32>
    %359 = arith.addf %339, %358 : vector<64x64xf32>
    %360 = vector.extract_strided_slice %300 {offsets = [48, 0], sizes = [16, 64], strides = [1, 1]} : vector<128x64xbf16> to vector<16x64xbf16>
    %361 = vector.extract_strided_slice %300 {offsets = [112, 0], sizes = [16, 64], strides = [1, 1]} : vector<128x64xbf16> to vector<16x64xbf16>
    %cst_222 = arith.constant dense<0.000000e+00> : vector<64x64xf32>
    %362 = tpu.matmul %360, %361, %cst_222 {dimension_numbers = #tpu.dot_dimension_numbers<[0], [0], [1], [1], [0, 1, 1, 1], [], []>} : vector<16x64xbf16>, vector<16x64xbf16>, vector<64x64xf32> -> vector<64x64xf32>
    %cst_223 = arith.constant dense<0xFF800000> : vector<64xf32>
    %363 = vector.multi_reduction <maximumf>, %362, %cst_223 [1] : vector<64x64xf32> to vector<64xf32>
    %364 = vector.shape_cast %363 : vector<64xf32> to vector<64x1xf32>
    %365 = vector.broadcast %364 : vector<64x1xf32> to vector<64x64xf32>
    %366 = arith.subf %362, %365 : vector<64x64xf32>
    %367 = math.exp %366 : vector<64x64xf32>
    %cst_224 = arith.constant dense<0.000000e+00> : vector<64xf32>
    %368 = vector.multi_reduction <add>, %367, %cst_224 [1] : vector<64x64xf32> to vector<64xf32>
    %369 = vector.shape_cast %368 : vector<64xf32> to vector<64x1xf32>
    %370 = tpu.reciprocal %369 {approx = true} : vector<64x1xf32> -> vector<64x1xf32>
    %371 = vector.broadcast %370 : vector<64x1xf32> to vector<64x64xf32>
    %372 = arith.mulf %367, %371 : vector<64x64xf32>
    %c1_225 = arith.constant 1 : index
    %c3_226 = arith.constant 3 : index
    %c0_227 = arith.constant 0 : index
    %c0_228 = arith.constant 0 : index
    %373 = vector.load %arg15[%c1_225, %c3_226, %c0_227, %c0_228] : memref<2x4x64x64xbf16, #tpu.memory_space<vmem>>, vector<1x1x64x64xbf16>
    %374 = vector.shape_cast %373 : vector<1x1x64x64xbf16> to vector<64x64xbf16>
    %cst_229 = arith.constant dense<0.000000e+00> : vector<64x64xf32>
    %375 = tpu.matmul %292, %374, %cst_229 {dimension_numbers = #tpu.dot_dimension_numbers<[1], [0], [0], [1], [0, 0, 1, 1], [], []>} : vector<64x64xbf16>, vector<64x64xbf16>, vector<64x64xf32> -> vector<64x64xf32>
    %376 = arith.truncf %375 : vector<64x64xf32> to vector<64x64xbf16>
    %377 = arith.truncf %372 : vector<64x64xf32> to vector<64x64xbf16>
    %cst_230 = arith.constant dense<0.000000e+00> : vector<64x64xf32>
    %378 = tpu.matmul %377, %376, %cst_230 {dimension_numbers = #tpu.dot_dimension_numbers<[1], [0], [0], [1], [0, 0, 1, 1], [], []>} : vector<64x64xbf16>, vector<64x64xbf16>, vector<64x64xf32> -> vector<64x64xf32>
    %379 = arith.addf %359, %378 : vector<64x64xf32>
    %c1_231 = arith.constant 1 : index
    %c0_232 = arith.constant 0 : index
    %c0_233 = arith.constant 0 : index
    %380 = vector.load %arg16[%c1_231, %c0_232, %c0_233] : memref<2x1x64xf32, #tpu.memory_space<vmem>>, vector<1x1x64xf32>
    %381 = vector.shape_cast %380 : vector<1x1x64xf32> to vector<1x64xf32>
    %382 = vector.broadcast %381 : vector<1x64xf32> to vector<64x64xf32>
    %383 = arith.addf %379, %382 : vector<64x64xf32>
    %384 = arith.mulf %271, %383 : vector<64x64xf32>
    %385 = arith.addf %250, %384 : vector<64x64xf32>
    %c1_234 = arith.constant 1 : index
    %c3_235 = arith.constant 3 : index
    %c0_236 = arith.constant 0 : index
    %c0_237 = arith.constant 0 : index
    %386 = vector.load %arg11[%c1_234, %c3_235, %c0_236, %c0_237] : memref<2x6x64x64xbf16, #tpu.memory_space<vmem>>, vector<1x1x64x64xbf16>
    %387 = vector.shape_cast %386 : vector<1x1x64x64xbf16> to vector<64x64xbf16>
    %cst_238 = arith.constant dense<0.000000e+00> : vector<64x64xf32>
    %388 = tpu.matmul %33, %387, %cst_238 {dimension_numbers = #tpu.dot_dimension_numbers<[1], [0], [0], [1], [0, 0, 1, 1], [], []>} : vector<64x64xbf16>, vector<64x64xbf16>, vector<64x64xf32> -> vector<64x64xf32>
    %c1_239 = arith.constant 1 : index
    %c3_240 = arith.constant 3 : index
    %c0_241 = arith.constant 0 : index
    %c0_242 = arith.constant 0 : index
    %389 = vector.load %arg12[%c1_239, %c3_240, %c0_241, %c0_242] : memref<2x6x1x64xf32, #tpu.memory_space<vmem>>, vector<1x1x1x64xf32>
    %390 = vector.shape_cast %389 : vector<1x1x1x64xf32> to vector<1x64xf32>
    %391 = vector.broadcast %390 : vector<1x64xf32> to vector<64x64xf32>
    %392 = arith.addf %388, %391 : vector<64x64xf32>
    %c1_243 = arith.constant 1 : index
    %c4_244 = arith.constant 4 : index
    %c0_245 = arith.constant 0 : index
    %c0_246 = arith.constant 0 : index
    %393 = vector.load %arg11[%c1_243, %c4_244, %c0_245, %c0_246] : memref<2x6x64x64xbf16, #tpu.memory_space<vmem>>, vector<1x1x64x64xbf16>
    %394 = vector.shape_cast %393 : vector<1x1x64x64xbf16> to vector<64x64xbf16>
    %cst_247 = arith.constant dense<0.000000e+00> : vector<64x64xf32>
    %395 = tpu.matmul %33, %394, %cst_247 {dimension_numbers = #tpu.dot_dimension_numbers<[1], [0], [0], [1], [0, 0, 1, 1], [], []>} : vector<64x64xbf16>, vector<64x64xbf16>, vector<64x64xf32> -> vector<64x64xf32>
    %c1_248 = arith.constant 1 : index
    %c4_249 = arith.constant 4 : index
    %c0_250 = arith.constant 0 : index
    %c0_251 = arith.constant 0 : index
    %396 = vector.load %arg12[%c1_248, %c4_249, %c0_250, %c0_251] : memref<2x6x1x64xf32, #tpu.memory_space<vmem>>, vector<1x1x1x64xf32>
    %397 = vector.shape_cast %396 : vector<1x1x1x64xf32> to vector<1x64xf32>
    %398 = vector.broadcast %397 : vector<1x64xf32> to vector<64x64xf32>
    %399 = arith.addf %395, %398 : vector<64x64xf32>
    %c1_252 = arith.constant 1 : index
    %c5_253 = arith.constant 5 : index
    %c0_254 = arith.constant 0 : index
    %c0_255 = arith.constant 0 : index
    %400 = vector.load %arg11[%c1_252, %c5_253, %c0_254, %c0_255] : memref<2x6x64x64xbf16, #tpu.memory_space<vmem>>, vector<1x1x64x64xbf16>
    %401 = vector.shape_cast %400 : vector<1x1x64x64xbf16> to vector<64x64xbf16>
    %cst_256 = arith.constant dense<0.000000e+00> : vector<64x64xf32>
    %402 = tpu.matmul %33, %401, %cst_256 {dimension_numbers = #tpu.dot_dimension_numbers<[1], [0], [0], [1], [0, 0, 1, 1], [], []>} : vector<64x64xbf16>, vector<64x64xbf16>, vector<64x64xf32> -> vector<64x64xf32>
    %c1_257 = arith.constant 1 : index
    %c5_258 = arith.constant 5 : index
    %c0_259 = arith.constant 0 : index
    %c0_260 = arith.constant 0 : index
    %403 = vector.load %arg12[%c1_257, %c5_258, %c0_259, %c0_260] : memref<2x6x1x64xf32, #tpu.memory_space<vmem>>, vector<1x1x1x64xf32>
    %404 = vector.shape_cast %403 : vector<1x1x1x64xf32> to vector<1x64xf32>
    %405 = vector.broadcast %404 : vector<1x64xf32> to vector<64x64xf32>
    %406 = arith.addf %402, %405 : vector<64x64xf32>
    %cst_261 = arith.constant dense<0.000000e+00> : vector<64xf32>
    %407 = vector.multi_reduction <add>, %385, %cst_261 [1] : vector<64x64xf32> to vector<64xf32>
    %408 = vector.shape_cast %407 : vector<64xf32> to vector<64x1xf32>
    %cst_262 = arith.constant 6.400000e+01 : f32
    %409 = vector.broadcast %cst_262 : f32 to vector<64x1xf32>
    %410 = arith.divf %408, %409 : vector<64x1xf32>
    %411 = vector.broadcast %410 : vector<64x1xf32> to vector<64x64xf32>
    %412 = arith.subf %385, %411 : vector<64x64xf32>
    %413 = arith.mulf %412, %412 : vector<64x64xf32>
    %cst_263 = arith.constant dense<0.000000e+00> : vector<64xf32>
    %414 = vector.multi_reduction <add>, %413, %cst_263 [1] : vector<64x64xf32> to vector<64xf32>
    %415 = vector.shape_cast %414 : vector<64xf32> to vector<64x1xf32>
    %cst_264 = arith.constant 6.400000e+01 : f32
    %416 = vector.broadcast %cst_264 : f32 to vector<64x1xf32>
    %417 = arith.divf %415, %416 : vector<64x1xf32>
    %cst_265 = arith.constant 9.99999997E-7 : f32
    %418 = vector.broadcast %cst_265 : f32 to vector<64x1xf32>
    %419 = arith.addf %417, %418 : vector<64x1xf32>
    %420 = math.rsqrt %419 : vector<64x1xf32>
    %421 = vector.broadcast %420 : vector<64x1xf32> to vector<64x64xf32>
    %422 = arith.mulf %412, %421 : vector<64x64xf32>
    %cst_266 = arith.constant 1.000000e+00 : f32
    %423 = vector.broadcast %cst_266 : f32 to vector<64x64xf32>
    %424 = arith.addf %423, %399 : vector<64x64xf32>
    %425 = arith.mulf %422, %424 : vector<64x64xf32>
    %426 = arith.addf %425, %392 : vector<64x64xf32>
    %427 = arith.truncf %426 : vector<64x64xf32> to vector<64x64xbf16>
    %c1_267 = arith.constant 1 : index
    %c0_268 = arith.constant 0 : index
    %c0_269 = arith.constant 0 : index
    %428 = vector.load %arg17[%c1_267, %c0_268, %c0_269] : memref<2x64x256xbf16, #tpu.memory_space<vmem>>, vector<1x64x256xbf16>
    %429 = vector.shape_cast %428 : vector<1x64x256xbf16> to vector<64x256xbf16>
    %cst_270 = arith.constant dense<0.000000e+00> : vector<64x256xf32>
    %430 = tpu.matmul %427, %429, %cst_270 {dimension_numbers = #tpu.dot_dimension_numbers<[1], [0], [0], [1], [0, 0, 1, 1], [], []>} : vector<64x64xbf16>, vector<64x256xbf16>, vector<64x256xf32> -> vector<64x256xf32>
    %c1_271 = arith.constant 1 : index
    %c0_272 = arith.constant 0 : index
    %c0_273 = arith.constant 0 : index
    %431 = vector.load %arg18[%c1_271, %c0_272, %c0_273] : memref<2x1x256xf32, #tpu.memory_space<vmem>>, vector<1x1x256xf32>
    %432 = vector.shape_cast %431 : vector<1x1x256xf32> to vector<1x256xf32>
    %433 = vector.broadcast %432 : vector<1x256xf32> to vector<64x256xf32>
    %434 = arith.addf %430, %433 : vector<64x256xf32>
    %cst_274 = arith.constant 5.000000e-01 : f32
    %435 = vector.broadcast %cst_274 : f32 to vector<64x256xf32>
    %436 = arith.mulf %435, %434 : vector<64x256xf32>
    %cst_275 = arith.constant 4.471500e-02 : f32
    %437 = vector.broadcast %cst_275 : f32 to vector<64x256xf32>
    %438 = arith.mulf %437, %434 : vector<64x256xf32>
    %439 = arith.mulf %438, %434 : vector<64x256xf32>
    %440 = arith.mulf %439, %434 : vector<64x256xf32>
    %441 = arith.addf %434, %440 : vector<64x256xf32>
    %cst_276 = arith.constant 0.797884583 : f32
    %442 = vector.broadcast %cst_276 : f32 to vector<64x256xf32>
    %443 = arith.mulf %442, %441 : vector<64x256xf32>
    %444 = math.tanh %443 : vector<64x256xf32>
    %cst_277 = arith.constant 1.000000e+00 : f32
    %445 = vector.broadcast %cst_277 : f32 to vector<64x256xf32>
    %446 = arith.addf %445, %444 : vector<64x256xf32>
    %447 = arith.mulf %436, %446 : vector<64x256xf32>
    %448 = arith.truncf %447 : vector<64x256xf32> to vector<64x256xbf16>
    %c1_278 = arith.constant 1 : index
    %c0_279 = arith.constant 0 : index
    %c0_280 = arith.constant 0 : index
    %449 = vector.load %arg19[%c1_278, %c0_279, %c0_280] : memref<2x256x64xbf16, #tpu.memory_space<vmem>>, vector<1x256x64xbf16>
    %450 = vector.shape_cast %449 : vector<1x256x64xbf16> to vector<256x64xbf16>
    %cst_281 = arith.constant dense<0.000000e+00> : vector<64x64xf32>
    %451 = tpu.matmul %448, %450, %cst_281 {dimension_numbers = #tpu.dot_dimension_numbers<[1], [0], [0], [1], [0, 0, 1, 1], [], []>} : vector<64x256xbf16>, vector<256x64xbf16>, vector<64x64xf32> -> vector<64x64xf32>
    %c1_282 = arith.constant 1 : index
    %c0_283 = arith.constant 0 : index
    %c0_284 = arith.constant 0 : index
    %452 = vector.load %arg20[%c1_282, %c0_283, %c0_284] : memref<2x1x64xf32, #tpu.memory_space<vmem>>, vector<1x1x64xf32>
    %453 = vector.shape_cast %452 : vector<1x1x64xf32> to vector<1x64xf32>
    %454 = vector.broadcast %453 : vector<1x64xf32> to vector<64x64xf32>
    %455 = arith.addf %451, %454 : vector<64x64xf32>
    %456 = arith.mulf %406, %455 : vector<64x64xf32>
    %457 = arith.addf %385, %456 : vector<64x64xf32>
    %c0_285 = arith.constant 0 : index
    %c0_286 = arith.constant 0 : index
    %c0_287 = arith.constant 0 : index
    %458 = vector.load %arg21[%c0_285, %c0_286, %c0_287] : memref<2x64x64xbf16, #tpu.memory_space<vmem>>, vector<1x64x64xbf16>
    %459 = vector.shape_cast %458 : vector<1x64x64xbf16> to vector<64x64xbf16>
    %cst_288 = arith.constant dense<0.000000e+00> : vector<64x64xf32>
    %460 = tpu.matmul %33, %459, %cst_288 {dimension_numbers = #tpu.dot_dimension_numbers<[1], [0], [0], [1], [0, 0, 1, 1], [], []>} : vector<64x64xbf16>, vector<64x64xbf16>, vector<64x64xf32> -> vector<64x64xf32>
    %c0_289 = arith.constant 0 : index
    %c0_290 = arith.constant 0 : index
    %c0_291 = arith.constant 0 : index
    %461 = vector.load %arg22[%c0_289, %c0_290, %c0_291] : memref<2x1x64xf32, #tpu.memory_space<vmem>>, vector<1x1x64xf32>
    %462 = vector.shape_cast %461 : vector<1x1x64xf32> to vector<1x64xf32>
    %463 = vector.broadcast %462 : vector<1x64xf32> to vector<64x64xf32>
    %464 = arith.addf %460, %463 : vector<64x64xf32>
    %c1_292 = arith.constant 1 : index
    %c0_293 = arith.constant 0 : index
    %c0_294 = arith.constant 0 : index
    %465 = vector.load %arg21[%c1_292, %c0_293, %c0_294] : memref<2x64x64xbf16, #tpu.memory_space<vmem>>, vector<1x64x64xbf16>
    %466 = vector.shape_cast %465 : vector<1x64x64xbf16> to vector<64x64xbf16>
    %cst_295 = arith.constant dense<0.000000e+00> : vector<64x64xf32>
    %467 = tpu.matmul %33, %466, %cst_295 {dimension_numbers = #tpu.dot_dimension_numbers<[1], [0], [0], [1], [0, 0, 1, 1], [], []>} : vector<64x64xbf16>, vector<64x64xbf16>, vector<64x64xf32> -> vector<64x64xf32>
    %c1_296 = arith.constant 1 : index
    %c0_297 = arith.constant 0 : index
    %c0_298 = arith.constant 0 : index
    %468 = vector.load %arg22[%c1_296, %c0_297, %c0_298] : memref<2x1x64xf32, #tpu.memory_space<vmem>>, vector<1x1x64xf32>
    %469 = vector.shape_cast %468 : vector<1x1x64xf32> to vector<1x64xf32>
    %470 = vector.broadcast %469 : vector<1x64xf32> to vector<64x64xf32>
    %471 = arith.addf %467, %470 : vector<64x64xf32>
    %cst_299 = arith.constant dense<0.000000e+00> : vector<64xf32>
    %472 = vector.multi_reduction <add>, %457, %cst_299 [1] : vector<64x64xf32> to vector<64xf32>
    %473 = vector.shape_cast %472 : vector<64xf32> to vector<64x1xf32>
    %cst_300 = arith.constant 6.400000e+01 : f32
    %474 = vector.broadcast %cst_300 : f32 to vector<64x1xf32>
    %475 = arith.divf %473, %474 : vector<64x1xf32>
    %476 = vector.broadcast %475 : vector<64x1xf32> to vector<64x64xf32>
    %477 = arith.subf %457, %476 : vector<64x64xf32>
    %478 = arith.mulf %477, %477 : vector<64x64xf32>
    %cst_301 = arith.constant dense<0.000000e+00> : vector<64xf32>
    %479 = vector.multi_reduction <add>, %478, %cst_301 [1] : vector<64x64xf32> to vector<64xf32>
    %480 = vector.shape_cast %479 : vector<64xf32> to vector<64x1xf32>
    %cst_302 = arith.constant 6.400000e+01 : f32
    %481 = vector.broadcast %cst_302 : f32 to vector<64x1xf32>
    %482 = arith.divf %480, %481 : vector<64x1xf32>
    %cst_303 = arith.constant 9.99999997E-7 : f32
    %483 = vector.broadcast %cst_303 : f32 to vector<64x1xf32>
    %484 = arith.addf %482, %483 : vector<64x1xf32>
    %485 = math.rsqrt %484 : vector<64x1xf32>
    %486 = vector.broadcast %485 : vector<64x1xf32> to vector<64x64xf32>
    %487 = arith.mulf %477, %486 : vector<64x64xf32>
    %cst_304 = arith.constant 1.000000e+00 : f32
    %488 = vector.broadcast %cst_304 : f32 to vector<64x64xf32>
    %489 = arith.addf %488, %471 : vector<64x64xf32>
    %490 = arith.mulf %487, %489 : vector<64x64xf32>
    %491 = arith.addf %490, %464 : vector<64x64xf32>
    %492 = arith.truncf %491 : vector<64x64xf32> to vector<64x64xbf16>
    %c0_305 = arith.constant 0 : index
    %c0_306 = arith.constant 0 : index
    %493 = vector.load %arg23[%c0_305, %c0_306] : memref<64x128xbf16, #tpu.memory_space<vmem>>, vector<64x128xbf16>
    %cst_307 = arith.constant dense<0.000000e+00> : vector<64x128xf32>
    %494 = tpu.matmul %492, %493, %cst_307 {dimension_numbers = #tpu.dot_dimension_numbers<[1], [0], [0], [1], [0, 0, 1, 1], [], []>} : vector<64x64xbf16>, vector<64x128xbf16>, vector<64x128xf32> -> vector<64x128xf32>
    %c0_308 = arith.constant 0 : index
    %c0_309 = arith.constant 0 : index
    %495 = vector.load %arg24[%c0_308, %c0_309] : memref<1x128xf32, #tpu.memory_space<vmem>>, vector<1x128xf32>
    %496 = vector.broadcast %495 : vector<1x128xf32> to vector<64x128xf32>
    %497 = arith.addf %494, %496 : vector<64x128xf32>
    %c0_310 = arith.constant 0 : index
    %c0_311 = arith.constant 0 : index
    %c0_312 = arith.constant 0 : index
    %498 = vector.load %arg25[%c0_310, %c0_311, %c0_312] : memref<1x64x128xf32, #tpu.memory_space<vmem>>, vector<1x64x128xf32>
    %499 = vector.shape_cast %498 : vector<1x64x128xf32> to vector<64x128xf32>
    %500 = vector.shape_cast %497 : vector<64x128xf32> to vector<1x64x128xf32>
    tpu.vector_store %arg25[%c0_310, %c0_311, %c0_312], %500 {strides = array<i32>} : memref<1x64x128xf32, #tpu.memory_space<vmem>>, vector<1x64x128xf32>,
    return
  }
  func.func @transform_0(%arg0: i32) -> (i32, i32, i32) {
    %c0_i32 = arith.constant 0 : i32
    %c0_i32_0 = arith.constant 0 : i32
    %c0_i32_1 = arith.constant 0 : i32
    return %arg0, %c0_i32, %c0_i32_0 : i32, i32, i32
  }
  func.func @transform_1(%arg0: i32) -> (i32, i32) {
    %c0_i32 = arith.constant 0 : i32
    %c0_i32_0 = arith.constant 0 : i32
    %c0_i32_1 = arith.constant 0 : i32
    return %c0_i32, %c0_i32_0 : i32, i32
  }
  func.func @transform_2(%arg0: i32) -> (i32, i32, i32) {
    %c0_i32 = arith.constant 0 : i32
    %c0_i32_0 = arith.constant 0 : i32
    %c0_i32_1 = arith.constant 0 : i32
    return %arg0, %c0_i32, %c0_i32_0 : i32, i32, i32
  }
  func.func @transform_3(%arg0: i32) -> (i32, i32, i32) {
    %c0_i32 = arith.constant 0 : i32
    %c0_i32_0 = arith.constant 0 : i32
    %c0_i32_1 = arith.constant 0 : i32
    return %arg0, %c0_i32, %c0_i32_0 : i32, i32, i32
  }
  func.func @transform_4(%arg0: i32) -> (i32, i32) {
    %c0_i32 = arith.constant 0 : i32
    %c0_i32_0 = arith.constant 0 : i32
    %c0_i32_1 = arith.constant 0 : i32
    return %c0_i32, %c0_i32_0 : i32, i32
  }
  func.func @transform_5(%arg0: i32) -> (i32, i32) {
    %c0_i32 = arith.constant 0 : i32
    %c0_i32_0 = arith.constant 0 : i32
    %c0_i32_1 = arith.constant 0 : i32
    return %c0_i32, %c0_i32_0 : i32, i32
  }
  func.func @transform_6(%arg0: i32) -> (i32, i32) {
    %c0_i32 = arith.constant 0 : i32
    %c0_i32_0 = arith.constant 0 : i32
    %c0_i32_1 = arith.constant 0 : i32
    return %c0_i32, %c0_i32_0 : i32, i32
  }
  func.func @transform_7(%arg0: i32) -> (i32, i32) {
    %c0_i32 = arith.constant 0 : i32
    %c0_i32_0 = arith.constant 0 : i32
    %c0_i32_1 = arith.constant 0 : i32
    return %c0_i32, %c0_i32_0 : i32, i32
  }
  func.func @transform_8(%arg0: i32) -> (i32, i32) {
    %c0_i32 = arith.constant 0 : i32
    %c0_i32_0 = arith.constant 0 : i32
    %c0_i32_1 = arith.constant 0 : i32
    return %c0_i32, %c0_i32_0 : i32, i32
  }
  func.func @transform_9(%arg0: i32) -> (i32, i32) {
    %c0_i32 = arith.constant 0 : i32
    %c0_i32_0 = arith.constant 0 : i32
    %c0_i32_1 = arith.constant 0 : i32
    return %c0_i32, %c0_i32_0 : i32, i32
  }
  func.func @transform_10(%arg0: i32) -> (i32, i32, i32, i32) {
    %c0_i32 = arith.constant 0 : i32
    %c0_i32_0 = arith.constant 0 : i32
    %c0_i32_1 = arith.constant 0 : i32
    %c0_i32_2 = arith.constant 0 : i32
    %c0_i32_3 = arith.constant 0 : i32
    return %c0_i32, %c0_i32_0, %c0_i32_1, %c0_i32_2 : i32, i32, i32, i32
  }
  func.func @transform_11(%arg0: i32) -> (i32, i32, i32, i32) {
    %c0_i32 = arith.constant 0 : i32
    %c0_i32_0 = arith.constant 0 : i32
    %c0_i32_1 = arith.constant 0 : i32
    %c0_i32_2 = arith.constant 0 : i32
    %c0_i32_3 = arith.constant 0 : i32
    return %c0_i32, %c0_i32_0, %c0_i32_1, %c0_i32_2 : i32, i32, i32, i32
  }
  func.func @transform_12(%arg0: i32) -> (i32, i32, i32) {
    %c0_i32 = arith.constant 0 : i32
    %c0_i32_0 = arith.constant 0 : i32
    %c0_i32_1 = arith.constant 0 : i32
    %c0_i32_2 = arith.constant 0 : i32
    return %c0_i32, %c0_i32_0, %c0_i32_1 : i32, i32, i32
  }
  func.func @transform_13(%arg0: i32) -> (i32, i32, i32) {
    %c0_i32 = arith.constant 0 : i32
    %c0_i32_0 = arith.constant 0 : i32
    %c0_i32_1 = arith.constant 0 : i32
    %c0_i32_2 = arith.constant 0 : i32
    return %c0_i32, %c0_i32_0, %c0_i32_1 : i32, i32, i32
  }
  func.func @transform_14(%arg0: i32) -> (i32, i32, i32, i32) {
    %c0_i32 = arith.constant 0 : i32
    %c0_i32_0 = arith.constant 0 : i32
    %c0_i32_1 = arith.constant 0 : i32
    %c0_i32_2 = arith.constant 0 : i32
    %c0_i32_3 = arith.constant 0 : i32
    return %c0_i32, %c0_i32_0, %c0_i32_1, %c0_i32_2 : i32, i32, i32, i32
  }
  func.func @transform_15(%arg0: i32) -> (i32, i32, i32) {
    %c0_i32 = arith.constant 0 : i32
    %c0_i32_0 = arith.constant 0 : i32
    %c0_i32_1 = arith.constant 0 : i32
    %c0_i32_2 = arith.constant 0 : i32
    return %c0_i32, %c0_i32_0, %c0_i32_1 : i32, i32, i32
  }
  func.func @transform_16(%arg0: i32) -> (i32, i32, i32) {
    %c0_i32 = arith.constant 0 : i32
    %c0_i32_0 = arith.constant 0 : i32
    %c0_i32_1 = arith.constant 0 : i32
    %c0_i32_2 = arith.constant 0 : i32
    return %c0_i32, %c0_i32_0, %c0_i32_1 : i32, i32, i32
  }
  func.func @transform_17(%arg0: i32) -> (i32, i32, i32) {
    %c0_i32 = arith.constant 0 : i32
    %c0_i32_0 = arith.constant 0 : i32
    %c0_i32_1 = arith.constant 0 : i32
    %c0_i32_2 = arith.constant 0 : i32
    return %c0_i32, %c0_i32_0, %c0_i32_1 : i32, i32, i32
  }
  func.func @transform_18(%arg0: i32) -> (i32, i32, i32) {
    %c0_i32 = arith.constant 0 : i32
    %c0_i32_0 = arith.constant 0 : i32
    %c0_i32_1 = arith.constant 0 : i32
    %c0_i32_2 = arith.constant 0 : i32
    return %c0_i32, %c0_i32_0, %c0_i32_1 : i32, i32, i32
  }
  func.func @transform_19(%arg0: i32) -> (i32, i32, i32) {
    %c0_i32 = arith.constant 0 : i32
    %c0_i32_0 = arith.constant 0 : i32
    %c0_i32_1 = arith.constant 0 : i32
    %c0_i32_2 = arith.constant 0 : i32
    return %c0_i32, %c0_i32_0, %c0_i32_1 : i32, i32, i32
  }
  func.func @transform_20(%arg0: i32) -> (i32, i32, i32) {
    %c0_i32 = arith.constant 0 : i32
    %c0_i32_0 = arith.constant 0 : i32
    %c0_i32_1 = arith.constant 0 : i32
    %c0_i32_2 = arith.constant 0 : i32
    return %c0_i32, %c0_i32_0, %c0_i32_1 : i32, i32, i32
  }
  func.func @transform_21(%arg0: i32) -> (i32, i32, i32) {
    %c0_i32 = arith.constant 0 : i32
    %c0_i32_0 = arith.constant 0 : i32
    %c0_i32_1 = arith.constant 0 : i32
    %c0_i32_2 = arith.constant 0 : i32
    return %c0_i32, %c0_i32_0, %c0_i32_1 : i32, i32, i32
  }
  func.func @transform_22(%arg0: i32) -> (i32, i32) {
    %c0_i32 = arith.constant 0 : i32
    %c0_i32_0 = arith.constant 0 : i32
    %c0_i32_1 = arith.constant 0 : i32
    return %c0_i32, %c0_i32_0 : i32, i32
  }
  func.func @transform_23(%arg0: i32) -> (i32, i32) {
    %c0_i32 = arith.constant 0 : i32
    %c0_i32_0 = arith.constant 0 : i32
    %c0_i32_1 = arith.constant 0 : i32
    return %c0_i32, %c0_i32_0 : i32, i32
  }
  func.func @transform_24(%arg0: i32) -> (i32, i32, i32) {
    %c0_i32 = arith.constant 0 : i32
    %c0_i32_0 = arith.constant 0 : i32
    %c0_i32_1 = arith.constant 0 : i32
    return %arg0, %c0_i32, %c0_i32_0 : i32, i32, i32
  }
}

</mosaic_0001>

<llo_original>
// kernel: _lambda_.1
$region0: #{_lambda_.1}
  #allocation0 [shape = 'u32[]', space=smem, size = 0x4, offset = 0x4, fixed_abs, tag = 'smem constant byte address 0x4 - core index']
  #allocation1 [shape = 'u32[72,128]{1,0:T(1,128)}', space=vmem, size = 0x9000, scoped, tag = 'internal scratch']
  %s0 = inlined_call_operand.vmem [shape: f32[2,64,16], index: 0, kind: input, shape index: {}]
  %s1 = inlined_call_operand.vmem [shape: f32[64,64], index: 1, kind: input, shape index: {}]
  %s2 = inlined_call_operand.vmem [shape: f32[2,1,256], index: 2, kind: input, shape index: {}]
  %s3 = inlined_call_operand.vmem [shape: f32[2,1,64], index: 3, kind: input, shape index: {}]
  %s4 = inlined_call_operand.vmem [shape: bf16[256,64], index: 4, kind: input, shape index: {}]
  %s5 = inlined_call_operand.vmem [shape: f32[1,64], index: 5, kind: input, shape index: {}]
  %s6 = inlined_call_operand.vmem [shape: bf16[64,64], index: 6, kind: input, shape index: {}]
  %s7 = inlined_call_operand.vmem [shape: f32[1,64], index: 7, kind: input, shape index: {}]
  %s8 = inlined_call_operand.vmem [shape: bf16[16,64], index: 8, kind: input, shape index: {}]
  %s9 = inlined_call_operand.vmem [shape: f32[1,64], index: 9, kind: input, shape index: {}]
  %s10 = inlined_call_operand.vmem [shape: bf16[2,6,64,64], index: 10, kind: input, shape index: {}]
  %s11 = inlined_call_operand.vmem [shape: f32[2,6,1,64], index: 11, kind: input, shape index: {}]
  %s12 = inlined_call_operand.vmem [shape: bf16[2,128,64], index: 12, kind: input, shape index: {}]
  %s13 = inlined_call_operand.vmem [shape: f32[2,128,1], index: 13, kind: input, shape index: {}]
  %s14 = inlined_call_operand.vmem [shape: bf16[2,4,64,64], index: 14, kind: input, shape index: {}]
  %s15 = inlined_call_operand.vmem [shape: f32[2,1,64], index: 15, kind: input, shape index: {}]
  %s16 = inlined_call_operand.vmem [shape: bf16[2,64,256], index: 16, kind: input, shape index: {}]
  %s17 = inlined_call_operand.vmem [shape: f32[2,1,256], index: 17, kind: input, shape index: {}]
  %s18 = inlined_call_operand.vmem [shape: bf16[2,256,64], index: 18, kind: input, shape index: {}]
  %s19 = inlined_call_operand.vmem [shape: f32[2,1,64], index: 19, kind: input, shape index: {}]
  %s20 = inlined_call_operand.vmem [shape: bf16[2,64,64], index: 20, kind: input, shape index: {}]
  %s21 = inlined_call_operand.vmem [shape: f32[2,1,64], index: 21, kind: input, shape index: {}]
  %s22 = inlined_call_operand.vmem [shape: bf16[64,128], index: 22, kind: input, shape index: {}]
  %s23 = inlined_call_operand.vmem [shape: f32[1,128], index: 23, kind: input, shape index: {}]
  %s24 = inlined_call_operand.vmem [shape: f32[2,64,128], index: 24, kind: output, shape index: {}]
  %s25 = sld [smem:[#allocation0]]
  $region129: #{_lambda_.1} parent=0
    _
  %s27 = ssub.s32 1, %s25
  %s28 = scalar_select 0, %s27, %s25
  loop: start=0, step=1, limit=4
  $region2: #{_lambda_.1} parent=0 // loop_pre_header
    _
  $region3: #{_lambda_.1} parent=0 // loop_header
    %s30 = sphi 0, %s34
    %p31 = scmp.ge.s32.totalorder %s30, 4
    %s40 = sphi 0, %s42
    %s43 = sphi 0, %s40
    %s44 = sphi 0, %s43
    %s60 = sphi 0, %s44
    %s64 = sphi 0, %s64
    %s66 = sphi 0, %s64
    %s67 = sphi 0, %s66
    %s81 = sphi 0, %s67
    %s87 = sphi 0, %s89
    %s90 = sphi 0, %s87
    %s91 = sphi 0, %s90
    %s107 = sphi 0, %s91
    %s113 = sphi 0, %s115
    %s116 = sphi 0, %s113
    %s117 = sphi 0, %s116
    %s133 = sphi 0, %s117
    %s137 = sphi 0, %s137
    %s139 = sphi 0, %s137
    %s140 = sphi 0, %s139
    %s154 = sphi 0, %s140
    %s158 = sphi 0, %s158
    %s160 = sphi 0, %s158
    %s161 = sphi 0, %s160
    %s175 = sphi 0, %s161
    %s179 = sphi 0, %s179
    %s181 = sphi 0, %s179
    %s182 = sphi 0, %s181
    %s196 = sphi 0, %s182
    %s200 = sphi 0, %s200
    %s202 = sphi 0, %s200
    %s203 = sphi 0, %s202
    %s217 = sphi 0, %s203
    %s221 = sphi 0, %s221
    %s223 = sphi 0, %s221
    %s224 = sphi 0, %s223
    %s238 = sphi 0, %s224
    %s242 = sphi 0, %s242
    %s244 = sphi 0, %s242
    %s245 = sphi 0, %s244
    %s259 = sphi 0, %s245
    %s263 = sphi 0, %s263
    %s265 = sphi 0, %s263
    %s266 = sphi 0, %s265
    %s280 = sphi 0, %s266
    %s284 = sphi 0, %s284
    %s286 = sphi 0, %s284
    %s287 = sphi 0, %s286
    %s301 = sphi 0, %s287
    %s305 = sphi 0, %s305
    %s307 = sphi 0, %s305
    %s308 = sphi 0, %s307
    %s322 = sphi 0, %s308
    %s326 = sphi 0, %s326
    %s328 = sphi 0, %s326
    %s329 = sphi 0, %s328
    %s343 = sphi 0, %s329
    %s347 = sphi 0, %s347
    %s349 = sphi 0, %s347
    %s350 = sphi 0, %s349
    %s364 = sphi 0, %s350
    %s368 = sphi 0, %s368
    %s370 = sphi 0, %s368
    %s371 = sphi 0, %s370
    %s385 = sphi 0, %s371
    %s389 = sphi 0, %s389
    %s391 = sphi 0, %s389
    %s392 = sphi 0, %s391
    %s406 = sphi 0, %s392
    %s410 = sphi 0, %s410
    %s412 = sphi 0, %s410
    %s413 = sphi 0, %s412
    %s427 = sphi 0, %s413
    %s431 = sphi 0, %s431
    %s433 = sphi 0, %s431
    %s434 = sphi 0, %s433
    %s448 = sphi 0, %s434
    %s452 = sphi 0, %s452
    %s454 = sphi 0, %s452
    %s455 = sphi 0, %s454
    %s469 = sphi 0, %s455
    %s473 = sphi 0, %s473
    %s475 = sphi 0, %s473
    %s476 = sphi 0, %s475
    %s490 = sphi 0, %s476
    %s494 = sphi 0, %s494
    %s496 = sphi 0, %s494
    %s497 = sphi 0, %s496
    %s511 = sphi 0, %s497
    %s515 = sphi 0, %s515
    %s517 = sphi 0, %s515
    %s518 = sphi 0, %s517
    %s532 = sphi 0, %s518
    %s536 = sphi 0, %s536
    %s538 = sphi 0, %s536
    %s539 = sphi 0, %s538
    %s553 = sphi 0, %s539
    %s559 = sphi 0, %s561
    %s562 = sphi 0, %s559
    %s563 = sphi 0, %s562
    %s579 = sphi 0, %s563
  $region4: #{_lambda_.1} parent=0 // loop_header_branch
    %33 = sbr.rel (%p31) target = $region8
  $region5: #{_lambda_.1} parent=0 // loop_body
    %s35 = ssub.s32 %s30, 1
    %s36 = ssub.s32 %s30, 2
    %s37 = sadd.s32 %s30, 1
    %s38 = ssub.s32 %s30, %s37
    %p39 = scmp.eq.s32.totalorder %s38, 0
    %s41 = sadd.s32 %s40, 1
    %s42 = scalar_select %p39, %s40, %s41
    %p45 = pneg %p39
    %p46 = scmp.eq.s32.totalorder %s30, 1
    %p47 = por %p45, %p46
    %p48 = scmp.ne.s32.totalorder %s40, %s43
    %p49 = scmp.eq.s32.totalorder %s30, 0
    %p50 = por %p48, %p49
    %p51 = scmp.ne.s32.totalorder %s40, %s43
    %p52 = scmp.eq.s32.totalorder %s35, 1
    %p53 = por %p51, %p52
    %p54 = scmp.ne.s32.totalorder %s43, %s44
    %p55 = scmp.eq.s32.totalorder %s35, 0
    %p56 = por %p54, %p55
    %p57 = scmp.ne.s32.totalorder %s43, %s44
    %p58 = scmp.eq.s32.totalorder %s36, 1
    %p59 = por %p57, %p58
    %p61 = scmp.ne.s32.totalorder %s44, %s60
    %p62 = scmp.eq.s32.totalorder %s36, 0
    %p63 = por %p61, %p62
    %s65 = sadd.s32 %s64, 1
    %p68 = scmp.eq.s32.totalorder %s30, 1
    %p69 = scmp.ne.s32.totalorder %s64, %s66
    %p70 = scmp.eq.s32.totalorder %s30, 0
    %p71 = por %p69, %p70
    %p72 = scmp.ne.s32.totalorder %s64, %s66
    %p73 = scmp.eq.s32.totalorder %s35, 1
    %p74 = por %p72, %p73
    %p75 = scmp.ne.s32.totalorder %s66, %s67
    %p76 = scmp.eq.s32.totalorder %s35, 0
    %p77 = por %p75, %p76
    %p78 = scmp.ne.s32.totalorder %s66, %s67
    %p79 = scmp.eq.s32.totalorder %s36, 1
    %p80 = por %p78, %p79
    %p82 = scmp.ne.s32.totalorder %s67, %s81
    %p83 = scmp.eq.s32.totalorder %s36, 0
    %p84 = por %p82, %p83
    %s85 = ssub.s32 %s30, %s37
    %p86 = scmp.eq.s32.totalorder %s85, 0
    %s88 = sadd.s32 %s87, 1
    %s89 = scalar_select %p86, %s87, %s88
    %p92 = pneg %p86
    %p93 = scmp.eq.s32.totalorder %s30, 1
    %p94 = por %p92, %p93
    %p95 = scmp.ne.s32.totalorder %s87, %s90
    %p96 = scmp.eq.s32.totalorder %s30, 0
    %p97 = por %p95, %p96
    %p98 = scmp.ne.s32.totalorder %s87, %s90
    %p99 = scmp.eq.s32.totalorder %s35, 1
    %p100 = por %p98, %p99
    %p101 = scmp.ne.s32.totalorder %s90, %s91
    %p102 = scmp.eq.s32.totalorder %s35, 0
    %p103 = por %p101, %p102
    %p104 = scmp.ne.s32.totalorder %s90, %s91
    %p105 = scmp.eq.s32.totalorder %s36, 1
    %p106 = por %p104, %p105
    %p108 = scmp.ne.s32.totalorder %s91, %s107
    %p109 = scmp.eq.s32.totalorder %s36, 0
    %p110 = por %p108, %p109
    %s111 = ssub.s32 %s30, %s37
    %p112 = scmp.eq.s32.totalorder %s111, 0
    %s114 = sadd.s32 %s113, 1
    %s115 = scalar_select %p112, %s113, %s114
    %p118 = pneg %p112
    %p119 = scmp.eq.s32.totalorder %s30, 1
    %p120 = por %p118, %p119
    %p121 = scmp.ne.s32.totalorder %s113, %s116
    %p122 = scmp.eq.s32.totalorder %s30, 0
    %p123 = por %p121, %p122
    %p124 = scmp.ne.s32.totalorder %s113, %s116
    %p125 = scmp.eq.s32.totalorder %s35, 1
    %p126 = por %p124, %p125
    %p127 = scmp.ne.s32.totalorder %s116, %s117
    %p128 = scmp.eq.s32.totalorder %s35, 0
    %p129 = por %p127, %p128
    %p130 = scmp.ne.s32.totalorder %s116, %s117
    %p131 = scmp.eq.s32.totalorder %s36, 1
    %p132 = por %p130, %p131
    %p134 = scmp.ne.s32.totalorder %s117, %s133
    %p135 = scmp.eq.s32.totalorder %s36, 0
    %p136 = por %p134, %p135
    %s138 = sadd.s32 %s137, 1
    %p141 = scmp.eq.s32.totalorder %s30, 1
    %p142 = scmp.ne.s32.totalorder %s137, %s139
    %p143 = scmp.eq.s32.totalorder %s30, 0
    %p144 = por %p142, %p143
    %p145 = scmp.ne.s32.totalorder %s137, %s139
    %p146 = scmp.eq.s32.totalorder %s35, 1
    %p147 = por %p145, %p146
    %p148 = scmp.ne.s32.totalorder %s139, %s140
    %p149 = scmp.eq.s32.totalorder %s35, 0
    %p150 = por %p148, %p149
    %p151 = scmp.ne.s32.totalorder %s139, %s140
    %p152 = scmp.eq.s32.totalorder %s36, 1
    %p153 = por %p151, %p152
    %p155 = scmp.ne.s32.totalorder %s140, %s154
    %p156 = scmp.eq.s32.totalorder %s36, 0
    %p157 = por %p155, %p156
    %s159 = sadd.s32 %s158, 1
    %p162 = scmp.eq.s32.totalorder %s30, 1
    %p163 = scmp.ne.s32.totalorder %s158, %s160
    %p164 = scmp.eq.s32.totalorder %s30, 0
    %p165 = por %p163, %p164
    %p166 = scmp.ne.s32.totalorder %s158, %s160
    %p167 = scmp.eq.s32.totalorder %s35, 1
    %p168 = por %p166, %p167
    %p169 = scmp.ne.s32.totalorder %s160, %s161
    %p170 = scmp.eq.s32.totalorder %s35, 0
    %p171 = por %p169, %p170
    %p172 = scmp.ne.s32.totalorder %s160, %s161
    %p173 = scmp.eq.s32.totalorder %s36, 1
    %p174 = por %p172, %p173
    %p176 = scmp.ne.s32.totalorder %s161, %s175
    %p177 = scmp.eq.s32.totalorder %s36, 0
    %p178 = por %p176, %p177
    %s180 = sadd.s32 %s179, 1
    %p183 = scmp.eq.s32.totalorder %s30, 1
    %p184 = scmp.ne.s32.totalorder %s179, %s181
    %p185 = scmp.eq.s32.totalorder %s30, 0
    %p186 = por %p184, %p185
    %p187 = scmp.ne.s32.totalorder %s179, %s181
    %p188 = scmp.eq.s32.totalorder %s35, 1
    %p189 = por %p187, %p188
    %p190 = scmp.ne.s32.totalorder %s181, %s182
    %p191 = scmp.eq.s32.totalorder %s35, 0
    %p192 = por %p190, %p191
    %p193 = scmp.ne.s32.totalorder %s181, %s182
    %p194 = scmp.eq.s32.totalorder %s36, 1
    %p195 = por %p193, %p194
    %p197 = scmp.ne.s32.totalorder %s182, %s196
    %p198 = scmp.eq.s32.totalorder %s36, 0
    %p199 = por %p197, %p198
    %s201 = sadd.s32 %s200, 1
    %p204 = scmp.eq.s32.totalorder %s30, 1
    %p205 = scmp.ne.s32.totalorder %s200, %s202
    %p206 = scmp.eq.s32.totalorder %s30, 0
    %p207 = por %p205, %p206
    %p208 = scmp.ne.s32.totalorder %s200, %s202
    %p209 = scmp.eq.s32.totalorder %s35, 1
    %p210 = por %p208, %p209
    %p211 = scmp.ne.s32.totalorder %s202, %s203
    %p212 = scmp.eq.s32.totalorder %s35, 0
    %p213 = por %p211, %p212
    %p214 = scmp.ne.s32.totalorder %s202, %s203
    %p215 = scmp.eq.s32.totalorder %s36, 1
    %p216 = por %p214, %p215
    %p218 = scmp.ne.s32.totalorder %s203, %s217
    %p219 = scmp.eq.s32.totalorder %s36, 0
    %p220 = por %p218, %p219
    %s222 = sadd.s32 %s221, 1
    %p225 = scmp.eq.s32.totalorder %s30, 1
    %p226 = scmp.ne.s32.totalorder %s221, %s223
    %p227 = scmp.eq.s32.totalorder %s30, 0
    %p228 = por %p226, %p227
    %p229 = scmp.ne.s32.totalorder %s221, %s223
    %p230 = scmp.eq.s32.totalorder %s35, 1
    %p231 = por %p229, %p230
    %p232 = scmp.ne.s32.totalorder %s223, %s224
    %p233 = scmp.eq.s32.totalorder %s35, 0
    %p234 = por %p232, %p233
    %p235 = scmp.ne.s32.totalorder %s223, %s224
    %p236 = scmp.eq.s32.totalorder %s36, 1
    %p237 = por %p235, %p236
    %p239 = scmp.ne.s32.totalorder %s224, %s238
    %p240 = scmp.eq.s32.totalorder %s36, 0
    %p241 = por %p239, %p240
    %s243 = sadd.s32 %s242, 1
    %p246 = scmp.eq.s32.totalorder %s30, 1
    %p247 = scmp.ne.s32.totalorder %s242, %s244
    %p248 = scmp.eq.s32.totalorder %s30, 0
    %p249 = por %p247, %p248
    %p250 = scmp.ne.s32.totalorder %s242, %s244
    %p251 = scmp.eq.s32.totalorder %s35, 1
    %p252 = por %p250, %p251
    %p253 = scmp.ne.s32.totalorder %s244, %s245
    %p254 = scmp.eq.s32.totalorder %s35, 0
    %p255 = por %p253, %p254
    %p256 = scmp.ne.s32.totalorder %s244, %s245
    %p257 = scmp.eq.s32.totalorder %s36, 1
    %p258 = por %p256, %p257
    %p260 = scmp.ne.s32.totalorder %s245, %s259
    %p261 = scmp.eq.s32.totalorder %s36, 0
    %p262 = por %p260, %p261
    %s264 = sadd.s32 %s263, 1
    %p267 = scmp.eq.s32.totalorder %s30, 1
    %p268 = scmp.ne.s32.totalorder %s263, %s265
    %p269 = scmp.eq.s32.totalorder %s30, 0
    %p270 = por %p268, %p269
    %p271 = scmp.ne.s32.totalorder %s263, %s265
    %p272 = scmp.eq.s32.totalorder %s35, 1
    %p273 = por %p271, %p272
    %p274 = scmp.ne.s32.totalorder %s265, %s266
    %p275 = scmp.eq.s32.totalorder %s35, 0
    %p276 = por %p274, %p275
    %p277 = scmp.ne.s32.totalorder %s265, %s266
    %p278 = scmp.eq.s32.totalorder %s36, 1
    %p279 = por %p277, %p278
    %p281 = scmp.ne.s32.totalorder %s266, %s280
    %p282 = scmp.eq.s32.totalorder %s36, 0
    %p283 = por %p281, %p282
    %s285 = sadd.s32 %s284, 1
    %p288 = scmp.eq.s32.totalorder %s30, 1
    %p289 = scmp.ne.s32.totalorder %s284, %s286
    %p290 = scmp.eq.s32.totalorder %s30, 0
    %p291 = por %p289, %p290
    %p292 = scmp.ne.s32.totalorder %s284, %s286
    %p293 = scmp.eq.s32.totalorder %s35, 1
    %p294 = por %p292, %p293
    %p295 = scmp.ne.s32.totalorder %s286, %s287
    %p296 = scmp.eq.s32.totalorder %s35, 0
    %p297 = por %p295, %p296
    %p298 = scmp.ne.s32.totalorder %s286, %s287
    %p299 = scmp.eq.s32.totalorder %s36, 1
    %p300 = por %p298, %p299
    %p302 = scmp.ne.s32.totalorder %s287, %s301
    %p303 = scmp.eq.s32.totalorder %s36, 0
    %p304 = por %p302, %p303
    %s306 = sadd.s32 %s305, 1
    %p309 = scmp.eq.s32.totalorder %s30, 1
    %p310 = scmp.ne.s32.totalorder %s305, %s307
    %p311 = scmp.eq.s32.totalorder %s30, 0
    %p312 = por %p310, %p311
    %p313 = scmp.ne.s32.totalorder %s305, %s307
    %p314 = scmp.eq.s32.totalorder %s35, 1
    %p315 = por %p313, %p314
    %p316 = scmp.ne.s32.totalorder %s307, %s308
    %p317 = scmp.eq.s32.totalorder %s35, 0
    %p318 = por %p316, %p317
    %p319 = scmp.ne.s32.totalorder %s307, %s308
    %p320 = scmp.eq.s32.totalorder %s36, 1
    %p321 = por %p319, %p320
    %p323 = scmp.ne.s32.totalorder %s308, %s322
    %p324 = scmp.eq.s32.totalorder %s36, 0
    %p325 = por %p323, %p324
    %s327 = sadd.s32 %s326, 1
    %p330 = scmp.eq.s32.totalorder %s30, 1
    %p331 = scmp.ne.s32.totalorder %s326, %s328
    %p332 = scmp.eq.s32.totalorder %s30, 0
    %p333 = por %p331, %p332
    %p334 = scmp.ne.s32.totalorder %s326, %s328
    %p335 = scmp.eq.s32.totalorder %s35, 1
    %p336 = por %p334, %p335
    %p337 = scmp.ne.s32.totalorder %s328, %s329
    %p338 = scmp.eq.s32.totalorder %s35, 0
    %p339 = por %p337, %p338
    %p340 = scmp.ne.s32.totalorder %s328, %s329
    %p341 = scmp.eq.s32.totalorder %s36, 1
    %p342 = por %p340, %p341
    %p344 = scmp.ne.s32.totalorder %s329, %s343
    %p345 = scmp.eq.s32.totalorder %s36, 0
    %p346 = por %p344, %p345
    %s348 = sadd.s32 %s347, 1
    %p351 = scmp.eq.s32.totalorder %s30, 1
    %p352 = scmp.ne.s32.totalorder %s347, %s349
    %p353 = scmp.eq.s32.totalorder %s30, 0
    %p354 = por %p352, %p353
    %p355 = scmp.ne.s32.totalorder %s347, %s349
    %p356 = scmp.eq.s32.totalorder %s35, 1
    %p357 = por %p355, %p356
    %p358 = scmp.ne.s32.totalorder %s349, %s350
    %p359 = scmp.eq.s32.totalorder %s35, 0
    %p360 = por %p358, %p359
    %p361 = scmp.ne.s32.totalorder %s349, %s350
    %p362 = scmp.eq.s32.totalorder %s36, 1
    %p363 = por %p361, %p362
    %p365 = scmp.ne.s32.totalorder %s350, %s364
    %p366 = scmp.eq.s32.totalorder %s36, 0
    %p367 = por %p365, %p366
    %s369 = sadd.s32 %s368, 1
    %p372 = scmp.eq.s32.totalorder %s30, 1
    %p373 = scmp.ne.s32.totalorder %s368, %s370
    %p374 = scmp.eq.s32.totalorder %s30, 0
    %p375 = por %p373, %p374
    %p376 = scmp.ne.s32.totalorder %s368, %s370
    %p377 = scmp.eq.s32.totalorder %s35, 1
    %p378 = por %p376, %p377
    %p379 = scmp.ne.s32.totalorder %s370, %s371
    %p380 = scmp.eq.s32.totalorder %s35, 0
    %p381 = por %p379, %p380
    %p382 = scmp.ne.s32.totalorder %s370, %s371
    %p383 = scmp.eq.s32.totalorder %s36, 1
    %p384 = por %p382, %p383
    %p386 = scmp.ne.s32.totalorder %s371, %s385
    %p387 = scmp.eq.s32.totalorder %s36, 0
    %p388 = por %p386, %p387
    %s390 = sadd.s32 %s389, 1
    %p393 = scmp.eq.s32.totalorder %s30, 1
    %p394 = scmp.ne.s32.totalorder %s389, %s391
    %p395 = scmp.eq.s32.totalorder %s30, 0
    %p396 = por %p394, %p395
    %p397 = scmp.ne.s32.totalorder %s389, %s391
    %p398 = scmp.eq.s32.totalorder %s35, 1
    %p399 = por %p397, %p398
    %p400 = scmp.ne.s32.totalorder %s391, %s392
    %p401 = scmp.eq.s32.totalorder %s35, 0
    %p402 = por %p400, %p401
    %p403 = scmp.ne.s32.totalorder %s391, %s392
    %p404 = scmp.eq.s32.totalorder %s36, 1
    %p405 = por %p403, %p404
    %p407 = scmp.ne.s32.totalorder %s392, %s406
    %p408 = scmp.eq.s32.totalorder %s36, 0
    %p409 = por %p407, %p408
    %s411 = sadd.s32 %s410, 1
    %p414 = scmp.eq.s32.totalorder %s30, 1
    %p415 = scmp.ne.s32.totalorder %s410, %s412
    %p416 = scmp.eq.s32.totalorder %s30, 0
    %p417 = por %p415, %p416
    %p418 = scmp.ne.s32.totalorder %s410, %s412
    %p419 = scmp.eq.s32.totalorder %s35, 1
    %p420 = por %p418, %p419
    %p421 = scmp.ne.s32.totalorder %s412, %s413
    %p422 = scmp.eq.s32.totalorder %s35, 0
    %p423 = por %p421, %p422
    %p424 = scmp.ne.s32.totalorder %s412, %s413
    %p425 = scmp.eq.s32.totalorder %s36, 1
    %p426 = por %p424, %p425
    %p428 = scmp.ne.s32.totalorder %s413, %s427
    %p429 = scmp.eq.s32.totalorder %s36, 0
    %p430 = por %p428, %p429
    %s432 = sadd.s32 %s431, 1
    %p435 = scmp.eq.s32.totalorder %s30, 1
    %p436 = scmp.ne.s32.totalorder %s431, %s433
    %p437 = scmp.eq.s32.totalorder %s30, 0
    %p438 = por %p436, %p437
    %p439 = scmp.ne.s32.totalorder %s431, %s433
    %p440 = scmp.eq.s32.totalorder %s35, 1
    %p441 = por %p439, %p440
    %p442 = scmp.ne.s32.totalorder %s433, %s434
    %p443 = scmp.eq.s32.totalorder %s35, 0
    %p444 = por %p442, %p443
    %p445 = scmp.ne.s32.totalorder %s433, %s434
    %p446 = scmp.eq.s32.totalorder %s36, 1
    %p447 = por %p445, %p446
    %p449 = scmp.ne.s32.totalorder %s434, %s448
    %p450 = scmp.eq.s32.totalorder %s36, 0
    %p451 = por %p449, %p450
    %s453 = sadd.s32 %s452, 1
    %p456 = scmp.eq.s32.totalorder %s30, 1
    %p457 = scmp.ne.s32.totalorder %s452, %s454
    %p458 = scmp.eq.s32.totalorder %s30, 0
    %p459 = por %p457, %p458
    %p460 = scmp.ne.s32.totalorder %s452, %s454
    %p461 = scmp.eq.s32.totalorder %s35, 1
    %p462 = por %p460, %p461
    %p463 = scmp.ne.s32.totalorder %s454, %s455
    %p464 = scmp.eq.s32.totalorder %s35, 0
    %p465 = por %p463, %p464
    %p466 = scmp.ne.s32.totalorder %s454, %s455
    %p467 = scmp.eq.s32.totalorder %s36, 1
    %p468 = por %p466, %p467
    %p470 = scmp.ne.s32.totalorder %s455, %s469
    %p471 = scmp.eq.s32.totalorder %s36, 0
    %p472 = por %p470, %p471
    %s474 = sadd.s32 %s473, 1
    %p477 = scmp.eq.s32.totalorder %s30, 1
    %p478 = scmp.ne.s32.totalorder %s473, %s475
    %p479 = scmp.eq.s32.totalorder %s30, 0
    %p480 = por %p478, %p479
    %p481 = scmp.ne.s32.totalorder %s473, %s475
    %p482 = scmp.eq.s32.totalorder %s35, 1
    %p483 = por %p481, %p482
    %p484 = scmp.ne.s32.totalorder %s475, %s476
    %p485 = scmp.eq.s32.totalorder %s35, 0
    %p486 = por %p484, %p485
    %p487 = scmp.ne.s32.totalorder %s475, %s476
    %p488 = scmp.eq.s32.totalorder %s36, 1
    %p489 = por %p487, %p488
    %p491 = scmp.ne.s32.totalorder %s476, %s490
    %p492 = scmp.eq.s32.totalorder %s36, 0
    %p493 = por %p491, %p492
    %s495 = sadd.s32 %s494, 1
    %p498 = scmp.eq.s32.totalorder %s30, 1
    %p499 = scmp.ne.s32.totalorder %s494, %s496
    %p500 = scmp.eq.s32.totalorder %s30, 0
    %p501 = por %p499, %p500
    %p502 = scmp.ne.s32.totalorder %s494, %s496
    %p503 = scmp.eq.s32.totalorder %s35, 1
    %p504 = por %p502, %p503
    %p505 = scmp.ne.s32.totalorder %s496, %s497
    %p506 = scmp.eq.s32.totalorder %s35, 0
    %p507 = por %p505, %p506
    %p508 = scmp.ne.s32.totalorder %s496, %s497
    %p509 = scmp.eq.s32.totalorder %s36, 1
    %p510 = por %p508, %p509
    %p512 = scmp.ne.s32.totalorder %s497, %s511
    %p513 = scmp.eq.s32.totalorder %s36, 0
    %p514 = por %p512, %p513
    %s516 = sadd.s32 %s515, 1
    %p519 = scmp.eq.s32.totalorder %s30, 1
    %p520 = scmp.ne.s32.totalorder %s515, %s517
    %p521 = scmp.eq.s32.totalorder %s30, 0
    %p522 = por %p520, %p521
    %p523 = scmp.ne.s32.totalorder %s515, %s517
    %p524 = scmp.eq.s32.totalorder %s35, 1
    %p525 = por %p523, %p524
    %p526 = scmp.ne.s32.totalorder %s517, %s518
    %p527 = scmp.eq.s32.totalorder %s35, 0
    %p528 = por %p526, %p527
    %p529 = scmp.ne.s32.totalorder %s517, %s518
    %p530 = scmp.eq.s32.totalorder %s36, 1
    %p531 = por %p529, %p530
    %p533 = scmp.ne.s32.totalorder %s518, %s532
    %p534 = scmp.eq.s32.totalorder %s36, 0
    %p535 = por %p533, %p534
    %s537 = sadd.s32 %s536, 1
    %p540 = scmp.eq.s32.totalorder %s30, 1
    %p541 = scmp.ne.s32.totalorder %s536, %s538
    %p542 = scmp.eq.s32.totalorder %s30, 0
    %p543 = por %p541, %p542
    %p544 = scmp.ne.s32.totalorder %s536, %s538
    %p545 = scmp.eq.s32.totalorder %s35, 1
    %p546 = por %p544, %p545
    %p547 = scmp.ne.s32.totalorder %s538, %s539
    %p548 = scmp.eq.s32.totalorder %s35, 0
    %p549 = por %p547, %p548
    %p550 = scmp.ne.s32.totalorder %s538, %s539
    %p551 = scmp.eq.s32.totalorder %s36, 1
    %p552 = por %p550, %p551
    %p554 = scmp.ne.s32.totalorder %s539, %s553
    %p555 = scmp.eq.s32.totalorder %s36, 0
    %p556 = por %p554, %p555
    %s557 = ssub.s32 %s30, %s37
    %p558 = scmp.eq.s32.totalorder %s557, 0
    %s560 = sadd.s32 %s559, 1
    %s561 = scalar_select %p558, %s559, %s560
    %p564 = pneg %p558
    %p565 = scmp.eq.s32.totalorder %s30, 1
    %p566 = por %p564, %p565
    %p567 = scmp.ne.s32.totalorder %s559, %s562
    %p568 = scmp.eq.s32.totalorder %s30, 0
    %p569 = por %p567, %p568
    %p570 = scmp.ne.s32.totalorder %s559, %s562
    %p571 = scmp.eq.s32.totalorder %s35, 1
    %p572 = por %p570, %p571
    %p573 = scmp.ne.s32.totalorder %s562, %s563
    %p574 = scmp.eq.s32.totalorder %s35, 0
    %p575 = por %p573, %p574
    %p576 = scmp.ne.s32.totalorder %s562, %s563
    %p577 = scmp.eq.s32.totalorder %s36, 1
    %p578 = por %p576, %p577
    %p580 = scmp.ne.s32.totalorder %s563, %s579
    %p581 = scmp.eq.s32.totalorder %s36, 0
    %p582 = por %p580, %p581
    %p583 = scmp.le.s32.totalorder 1, %s30
    %p584 = scmp.lt.s32.totalorder %s30, 3
    %p585 = pnand %p583, %p584
    %p586 = pneg %p585
    // Predicated region
    $region9: #{_lambda_.1} parent=5 // pred_check
      _
    $region10: #{_lambda_.1} parent=5 // pred_check_branch
      %588 = sbr.rel (%p585) target = $region12
    $region11: #{_lambda_.1} parent=5 // pred_region
      %s589 = ssub.s32 %s30, 1
      // Predicated region
      $region13: #{_lambda_.1} parent=11 // pred_check
        %p590 = pneg %p77
      $region14: #{_lambda_.1} parent=11 // pred_check_branch
        %592 = sbr.rel (%p590) target = $region16
      $region15: #{_lambda_.1} parent=11 // pred_region
        _
      $region16: #{_lambda_.1} parent=11 // pred_fallthru
        _
      // Predicated region
      $region17: #{_lambda_.1} parent=11 // pred_check
        %p593 = pneg %p150
      $region18: #{_lambda_.1} parent=11 // pred_check_branch
        %595 = sbr.rel (%p593) target = $region20
      $region19: #{_lambda_.1} parent=11 // pred_region
        _
      $region20: #{_lambda_.1} parent=11 // pred_fallthru
        _
      // Predicated region
      $region21: #{_lambda_.1} parent=11 // pred_check
        %p596 = pneg %p171
      $region22: #{_lambda_.1} parent=11 // pred_check_branch
        %598 = sbr.rel (%p596) target = $region24
      $region23: #{_lambda_.1} parent=11 // pred_region
        _
      $region24: #{_lambda_.1} parent=11 // pred_fallthru
        _
      // Predicated region
      $region25: #{_lambda_.1} parent=11 // pred_check
        %p599 = pneg %p192
      $region26: #{_lambda_.1} parent=11 // pred_check_branch
        %601 = sbr.rel (%p599) target = $region28
      $region27: #{_lambda_.1} parent=11 // pred_region
        _
      $region28: #{_lambda_.1} parent=11 // pred_fallthru
        _
      // Predicated region
      $region29: #{_lambda_.1} parent=11 // pred_check
        %p602 = pneg %p213
      $region30: #{_lambda_.1} parent=11 // pred_check_branch
        %604 = sbr.rel (%p602) target = $region32
      $region31: #{_lambda_.1} parent=11 // pred_region
        _
      $region32: #{_lambda_.1} parent=11 // pred_fallthru
        _
      // Predicated region
      $region33: #{_lambda_.1} parent=11 // pred_check
        %p605 = pneg %p234
      $region34: #{_lambda_.1} parent=11 // pred_check_branch
        %607 = sbr.rel (%p605) target = $region36
      $region35: #{_lambda_.1} parent=11 // pred_region
        _
      $region36: #{_lambda_.1} parent=11 // pred_fallthru
        _
      // Predicated region
      $region37: #{_lambda_.1} parent=11 // pred_check
        %p608 = pneg %p255
      $region38: #{_lambda_.1} parent=11 // pred_check_branch
        %610 = sbr.rel (%p608) target = $region40
      $region39: #{_lambda_.1} parent=11 // pred_region
        _
      $region40: #{_lambda_.1} parent=11 // pred_fallthru
        _
      // Predicated region
      $region41: #{_lambda_.1} parent=11 // pred_check
        %p611 = pneg %p276
      $region42: #{_lambda_.1} parent=11 // pred_check_branch
        %613 = sbr.rel (%p611) target = $region44
      $region43: #{_lambda_.1} parent=11 // pred_region
        _
      $region44: #{_lambda_.1} parent=11 // pred_fallthru
        _
      // Predicated region
      $region45: #{_lambda_.1} parent=11 // pred_check
        %p614 = pneg %p297
      $region46: #{_lambda_.1} parent=11 // pred_check_branch
        %616 = sbr.rel (%p614) target = $region48
      $region47: #{_lambda_.1} parent=11 // pred_region
        _
      $region48: #{_lambda_.1} parent=11 // pred_fallthru
        _
      // Predicated region
      $region49: #{_lambda_.1} parent=11 // pred_check
        %p617 = pneg %p318
      $region50: #{_lambda_.1} parent=11 // pred_check_branch
        %619 = sbr.rel (%p617) target = $region52
      $region51: #{_lambda_.1} parent=11 // pred_region
        _
      $region52: #{_lambda_.1} parent=11 // pred_fallthru
        _
      // Predicated region
      $region53: #{_lambda_.1} parent=11 // pred_check
        %p620 = pneg %p339
      $region54: #{_lambda_.1} parent=11 // pred_check_branch
        %622 = sbr.rel (%p620) target = $region56
      $region55: #{_lambda_.1} parent=11 // pred_region
        _
      $region56: #{_lambda_.1} parent=11 // pred_fallthru
        _
      // Predicated region
      $region57: #{_lambda_.1} parent=11 // pred_check
        %p623 = pneg %p360
      $region58: #{_lambda_.1} parent=11 // pred_check_branch
        %625 = sbr.rel (%p623) target = $region60
      $region59: #{_lambda_.1} parent=11 // pred_region
        _
      $region60: #{_lambda_.1} parent=11 // pred_fallthru
        _
      // Predicated region
      $region61: #{_lambda_.1} parent=11 // pred_check
        %p626 = pneg %p381
      $region62: #{_lambda_.1} parent=11 // pred_check_branch
        %628 = sbr.rel (%p626) target = $region64
      $region63: #{_lambda_.1} parent=11 // pred_region
        _
      $region64: #{_lambda_.1} parent=11 // pred_fallthru
        _
      // Predicated region
      $region65: #{_lambda_.1} parent=11 // pred_check
        %p629 = pneg %p402
      $region66: #{_lambda_.1} parent=11 // pred_check_branch
        %631 = sbr.rel (%p629) target = $region68
      $region67: #{_lambda_.1} parent=11 // pred_region
        _
      $region68: #{_lambda_.1} parent=11 // pred_fallthru
        _
      // Predicated region
      $region69: #{_lambda_.1} parent=11 // pred_check
        %p632 = pneg %p423
      $region70: #{_lambda_.1} parent=11 // pred_check_branch
        %634 = sbr.rel (%p632) target = $region72
      $region71: #{_lambda_.1} parent=11 // pred_region
        _
      $region72: #{_lambda_.1} parent=11 // pred_fallthru
        _
      // Predicated region
      $region73: #{_lambda_.1} parent=11 // pred_check
        %p635 = pneg %p444
      $region74: #{_lambda_.1} parent=11 // pred_check_branch
        %637 = sbr.rel (%p635) target = $region76
      $region75: #{_lambda_.1} parent=11 // pred_region
        _
      $region76: #{_lambda_.1} parent=11 // pred_fallthru
        _
      // Predicated region
      $region77: #{_lambda_.1} parent=11 // pred_check
        %p638 = pneg %p465
      $region78: #{_lambda_.1} parent=11 // pred_check_branch
        %640 = sbr.rel (%p638) target = $region80
      $region79: #{_lambda_.1} parent=11 // pred_region
        _
      $region80: #{_lambda_.1} parent=11 // pred_fallthru
        _
      // Predicated region
      $region81: #{_lambda_.1} parent=11 // pred_check
        %p641 = pneg %p486
      $region82: #{_lambda_.1} parent=11 // pred_check_branch
        %643 = sbr.rel (%p641) target = $region84
      $region83: #{_lambda_.1} parent=11 // pred_region
        _
      $region84: #{_lambda_.1} parent=11 // pred_fallthru
        _
      // Predicated region
      $region85: #{_lambda_.1} parent=11 // pred_check
        %p644 = pneg %p507
      $region86: #{_lambda_.1} parent=11 // pred_check_branch
        %646 = sbr.rel (%p644) target = $region88
      $region87: #{_lambda_.1} parent=11 // pred_region
        _
      $region88: #{_lambda_.1} parent=11 // pred_fallthru
        _
      // Predicated region
      $region89: #{_lambda_.1} parent=11 // pred_check
        %p647 = pneg %p528
      $region90: #{_lambda_.1} parent=11 // pred_check_branch
        %649 = sbr.rel (%p647) target = $region92
      $region91: #{_lambda_.1} parent=11 // pred_region
        _
      $region92: #{_lambda_.1} parent=11 // pred_fallthru
        _
      // Predicated region
      $region93: #{_lambda_.1} parent=11 // pred_check
        %p650 = pneg %p549
      $region94: #{_lambda_.1} parent=11 // pred_check_branch
        %652 = sbr.rel (%p650) target = $region96
      $region95: #{_lambda_.1} parent=11 // pred_region
        _
      $region96: #{_lambda_.1} parent=11 // pred_fallthru
        _
    $region12: #{_lambda_.1} parent=5 // pred_fallthru
      _
    %p653 = scmp.lt.s32.totalorder %s30, 2
    // Predicated region
    $region97: #{_lambda_.1} parent=5 // pred_check
      %p654 = pneg %p653
    $region98: #{_lambda_.1} parent=5 // pred_check_branch
      %656 = sbr.rel (%p654) target = $region100
    $region99: #{_lambda_.1} parent=5 // pred_region
      // Predicated region
      $region101: #{_lambda_.1} parent=99 // pred_check
        %p657 = pneg %p50
      $region102: #{_lambda_.1} parent=99 // pred_check_branch
        %659 = sbr.rel (%p657) target = $region104
      $region103: #{_lambda_.1} parent=99 // pred_region
        %p660 = scmp.lt.s32.totalorder %s30, 1
        %s661 = scalar_select %p660, %s30, 1
        %s662 = smul.addr %s661, 8
        %s663 = smul.addr %s662, 8
        %s664 = scalar_lea.vmem %s0, %s663
      $region104: #{_lambda_.1} parent=99 // pred_fallthru
        _
      // Predicated region
      $region105: #{_lambda_.1} parent=99 // pred_check
        %p665 = pneg %p97
      $region106: #{_lambda_.1} parent=99 // pred_check_branch
        %667 = sbr.rel (%p665) target = $region108
      $region107: #{_lambda_.1} parent=99 // pred_region
        %p668 = scmp.lt.s32.totalorder %s30, 1
        %s669 = scalar_select %p668, %s30, 1
        %s670 = smul.addr %s669, 2
        %s671 = scalar_lea.vmem %s2, %s670
      $region108: #{_lambda_.1} parent=99 // pred_fallthru
        _
      // Predicated region
      $region109: #{_lambda_.1} parent=99 // pred_check
        %p672 = pneg %p123
      $region110: #{_lambda_.1} parent=99 // pred_check_branch
        %674 = sbr.rel (%p672) target = $region112
      $region111: #{_lambda_.1} parent=99 // pred_region
        %p675 = scmp.lt.s32.totalorder %s30, 1
        %s676 = scalar_select %p675, %s30, 1
        %s677 = scalar_lea.vmem %s3, %s676
      $region112: #{_lambda_.1} parent=99 // pred_fallthru
        _
    $region100: #{_lambda_.1} parent=5 // pred_fallthru
      _
    %p678 = scmp.le.s32.totalorder 1, %s30
    %p679 = scmp.lt.s32.totalorder %s30, 3
    %p680 = pnand %p678, %p679
    %p681 = pneg %p680
    // Predicated region
    $region113: #{_lambda_.1} parent=5 // pred_check
      _
    $region114: #{_lambda_.1} parent=5 // pred_check_branch
      %683 = sbr.rel (%p680) target = $region116
    $region115: #{_lambda_.1} parent=5 // pred_region
      %s684 = ssub.s32 %s30, 1
      %p685 = scmp.lt.s32.totalorder %s35, 1
      %s686 = scalar_select %p685, %s35, 1
      %s687 = smul.addr %s686, 8
      %s688 = smul.addr %s687, 8
      %s689 = scalar_lea.vmem %s0, %s688
      %p690 = pneg %p56
      %p691 = pneg %p53
      %p692 = pneg %p77
      %p693 = pneg %p74
      %p694 = scmp.lt.s32.totalorder %s35, 1
      %s695 = scalar_select %p694, %s35, 1
      %s696 = smul.addr %s695, 2
      %s697 = scalar_lea.vmem %s2, %s696
      %p698 = pneg %p103
      %p699 = pneg %p100
      %p700 = scmp.lt.s32.totalorder %s35, 1
      %s701 = scalar_select %p700, %s35, 1
      %s702 = scalar_lea.vmem %s3, %s701
      %p703 = pneg %p129
      %p704 = pneg %p126
      %p705 = pneg %p150
      %p706 = pneg %p147
      %p707 = pneg %p171
      %p708 = pneg %p168
      %p709 = pneg %p192
      %p710 = pneg %p189
      %p711 = pneg %p213
      %p712 = pneg %p210
      %p713 = pneg %p234
      %p714 = pneg %p231
      %p715 = pneg %p255
      %p716 = pneg %p252
      %p717 = pneg %p276
      %p718 = pneg %p273
      %p719 = pneg %p297
      %p720 = pneg %p294
      %p721 = pneg %p318
      %p722 = pneg %p315
      %p723 = pneg %p339
      %p724 = pneg %p336
      %p725 = pneg %p360
      %p726 = pneg %p357
      %p727 = pneg %p381
      %p728 = pneg %p378
      %p729 = pneg %p402
      %p730 = pneg %p399
      %p731 = pneg %p423
      %p732 = pneg %p420
      %p733 = pneg %p444
      %p734 = pneg %p441
      %p735 = pneg %p465
      %p736 = pneg %p462
      %p737 = pneg %p486
      %p738 = pneg %p483
      %p739 = pneg %p507
      %p740 = pneg %p504
      %p741 = pneg %p528
      %p742 = pneg %p525
      %p743 = pneg %p549
      %p744 = pneg %p546
      %p745 = pneg %p575
      %p746 = pneg %p572
      %p747 = scmp.lt.s32.totalorder %s35, 1
      %s748 = scalar_select %p747, %s35, 1
      %s749 = smul.addr %s748, 8
      %s750 = smul.addr %s749, 8
      %s751 = scalar_lea.vmem %s24, %s750
      %p752 = scmp.lt.s32.totalorder %s35, 1
      %s753 = scalar_select %p752, %s35, 1
      %s754 = smul.addr %s753, 8
      %s755 = smul.addr %s754, 8
      %s756 = scalar_lea.vmem %s0, %s755
      %p757 = scmp.lt.s32.totalorder %s35, 1
      %s758 = scalar_select %p757, %s35, 1
      %s759 = smul.addr %s758, 2
      %s760 = scalar_lea.vmem %s2, %s759
      %p761 = scmp.lt.s32.totalorder %s35, 1
      %s762 = scalar_select %p761, %s35, 1
      %s763 = scalar_lea.vmem %s3, %s762
      %p764 = scmp.lt.s32.totalorder %s35, 1
      %s765 = scalar_select %p764, %s35, 1
      %s766 = smul.addr %s765, 8
      %s767 = smul.addr %s766, 8
      %s768 = scalar_lea.vmem %s24, %s767
      %v770 = vld [vmem:[%s760] sm:$0x3]
      %v772 = vperm.slane %v770, 0
      %v773 = vperm.slane %v770, 1
      %v776 = vpack.c.bf16 %v772, %v772
      %v777 = vpack.c.bf16 %v773, %v773
      %v778 = vld [vmem:[%s4] sm:$0xf]
      %v779 = vld [vmem:[%s4 + $0x4] sm:$0xf]
      %v780 = vld [vmem:[%s4 + $0x8] sm:$0xf]
      %v781 = vld [vmem:[%s4 + $0xc] sm:$0xf]
      %v782 = vld [vmem:[%s4 + $0x10] sm:$0xf]
      %v783 = vld [vmem:[%s4 + $0x14] sm:$0xf]
      %v784 = vld [vmem:[%s4 + $0x18] sm:$0xf]
      %v785 = vld [vmem:[%s4 + $0x1c] sm:$0xf]
      %v786 = vld [vmem:[%s4 + $0x20] sm:$0xf]
      %v787 = vld [vmem:[%s4 + $0x24] sm:$0xf]
      %v788 = vld [vmem:[%s4 + $0x28] sm:$0xf]
      %v789 = vld [vmem:[%s4 + $0x2c] sm:$0xf]
      %v790 = vld [vmem:[%s4 + $0x30] sm:$0xf]
      %v791 = vld [vmem:[%s4 + $0x34] sm:$0xf]
      %v792 = vld [vmem:[%s4 + $0x38] sm:$0xf]
      %v793 = vld [vmem:[%s4 + $0x3c] sm:$0xf]
      %v794 = vld [vmem:[%s4 + $0x40] sm:$0xf]
      %v795 = vld [vmem:[%s4 + $0x44] sm:$0xf]
      %v796 = vld [vmem:[%s4 + $0x48] sm:$0xf]
      %v797 = vld [vmem:[%s4 + $0x4c] sm:$0xf]
      %v798 = vld [vmem:[%s4 + $0x50] sm:$0xf]
      %v799 = vld [vmem:[%s4 + $0x54] sm:$0xf]
      %v800 = vld [vmem:[%s4 + $0x58] sm:$0xf]
      %v801 = vld [vmem:[%s4 + $0x5c] sm:$0xf]
      %v802 = vld [vmem:[%s4 + $0x60] sm:$0xf]
      %v803 = vld [vmem:[%s4 + $0x64] sm:$0xf]
      %v804 = vld [vmem:[%s4 + $0x68] sm:$0xf]
      %v805 = vld [vmem:[%s4 + $0x6c] sm:$0xf]
      %v806 = vld [vmem:[%s4 + $0x70] sm:$0xf]
      %v807 = vld [vmem:[%s4 + $0x74] sm:$0xf]
      %v808 = vld [vmem:[%s4 + $0x78] sm:$0xf]
      %v809 = vld [vmem:[%s4 + $0x7c] sm:$0xf]
      %v810 = vld [vmem:[%s5] sm:$0x1]
      %v843 = vunpack.c.l.b16 %v778
      %v844 = vunpack.c.l.b16 %v779
      %v845 = vunpack.c.l.b16 %v780
      %v846 = vunpack.c.l.b16 %v781
      %v847 = vunpack.c.l.b16 %v782
      %v848 = vunpack.c.l.b16 %v783
      %v849 = vunpack.c.l.b16 %v784
      %v850 = vunpack.c.l.b16 %v785
      %v851 = vunpack.c.l.b16 %v786
      %v852 = vunpack.c.l.b16 %v787
      %v853 = vunpack.c.l.b16 %v788
      %v854 = vunpack.c.l.b16 %v789
      %v855 = vunpack.c.l.b16 %v790
      %v856 = vunpack.c.l.b16 %v791
      %v857 = vunpack.c.l.b16 %v792
      %v858 = vunpack.c.l.b16 %v793
      %v859 = vunpack.c.l.b16 %v794
      %v860 = vunpack.c.l.b16 %v795
      %v861 = vunpack.c.l.b16 %v796
      %v862 = vunpack.c.l.b16 %v797
      %v863 = vunpack.c.l.b16 %v798
      %v864 = vunpack.c.l.b16 %v799
      %v865 = vunpack.c.l.b16 %v800
      %v866 = vunpack.c.l.b16 %v801
      %v867 = vunpack.c.l.b16 %v802
      %v868 = vunpack.c.l.b16 %v803
      %v869 = vunpack.c.l.b16 %v804
      %v870 = vunpack.c.l.b16 %v805
      %v871 = vunpack.c.l.b16 %v806
      %v872 = vunpack.c.l.b16 %v807
      %v873 = vunpack.c.l.b16 %v808
      %v874 = vunpack.c.l.b16 %v809
      %v875 = vpack.c.b16 %v844, %v843
      %v876 = vpack.c.b16 %v846, %v845
      %v877 = vpack.c.b16 %v848, %v847
      %v878 = vpack.c.b16 %v850, %v849
      %v879 = vpack.c.b16 %v852, %v851
      %v880 = vpack.c.b16 %v854, %v853
      %v881 = vpack.c.b16 %v856, %v855
      %v882 = vpack.c.b16 %v858, %v857
      %v883 = vpack.c.b16 %v860, %v859
      %v884 = vpack.c.b16 %v862, %v861
      %v885 = vpack.c.b16 %v864, %v863
      %v886 = vpack.c.b16 %v866, %v865
      %v887 = vpack.c.b16 %v868, %v867
      %v888 = vpack.c.b16 %v870, %v869
      %v889 = vpack.c.b16 %v872, %v871
      %v890 = vpack.c.b16 %v874, %v873
      %907 = vmatpush.bf16.msra.mxu0 %v882
      %908 = vmatpush.bf16.msra.mxu0 %v881
      %909 = vmatpush.bf16.msra.mxu0 %v880
      %910 = vmatpush.bf16.msra.mxu0 %v879
      %911 = vmatpush.bf16.msra.mxu0 %v878
      %912 = vmatpush.bf16.msra.mxu0 %v877
      %913 = vmatpush.bf16.msra.mxu0 %v876
      %914 = vmatpush.bf16.msra.mxu0 %v875
      %915 = vmatmul.bf16.gmra.mxu0 %v776
      %v916 = vpop.f32.mrf.mxu0
      %v917 = vadd.f32 %v810, %v916
      %v918 = vpop.f32.mrf.mxu0
      %919 = vdwg.mxu0
      %920 = vmatpush.bf16.msra.mxu0 %v890
      %921 = vmatpush.bf16.msra.mxu0 %v889
      %922 = vmatpush.bf16.msra.mxu0 %v888
      %923 = vmatpush.bf16.msra.mxu0 %v887
      %924 = vmatpush.bf16.msra.mxu0 %v886
      %925 = vmatpush.bf16.msra.mxu0 %v885
      %926 = vmatpush.bf16.msra.mxu0 %v884
      %927 = vmatpush.bf16.msra.mxu0 %v883
      %928 = vmatmul.bf16.gmra.mxu0 %v777
      %v929 = vpop.f32.mrf.mxu0
      %v930 = vadd.f32 %v917, %v929
      %v931 = vpop.f32.mrf.mxu0
      %932 = vdwg.mxu0
      %v933 = vsub.f32 0.0, %v930
      %v934 = vmul.f32 %v933, 1.442695
      %v935 = vpow.pop %v934
      %v936 = vadd.f32 %v935, 1.0
      %v937 = vrcp.pop %v936
      %v938 = vmul.f32 %v936, %v937
      %v939 = vsub.f32 1.0, %v938
      %v940 = vmul.f32 %v937, %v939
      %v941 = vadd.f32 %v937, %v940
      %vm942 = vweird.f32 %v936
      %vm943 = vweird.f32 %v937
      %vm944 = vmor %vm942, %vm943
      %v945 = vsel %vm944, %v937, %v941
      %v946 = vand.u32 2147483647, %v936
      %vm947 = vcmp.eq.f32.partialorder %v946, 8.507059e+37
      %v948 = vand.u32 %v936, 2147483648
      %v949 = vor.u32 1.1754944e-38, %v948
      %v950 = vsel %vm947, %v949, %v945
      %v951 = vmul.f32 1.0, %v950
      %v952 = vmul.f32 %v930, %v951
      %v953 = vpack.c.bf16 %v952, %v952
      %v954 = vld [vmem:[%s6] sm:$0xf]
      %v955 = vld [vmem:[%s6 + $0x4] sm:$0xf]
      %v956 = vld [vmem:[%s6 + $0x8] sm:$0xf]
      %v957 = vld [vmem:[%s6 + $0xc] sm:$0xf]
      %v958 = vld [vmem:[%s6 + $0x10] sm:$0xf]
      %v959 = vld [vmem:[%s6 + $0x14] sm:$0xf]
      %v960 = vld [vmem:[%s6 + $0x18] sm:$0xf]
      %v961 = vld [vmem:[%s6 + $0x1c] sm:$0xf]
      %v962 = vld [vmem:[%s7] sm:$0x1]
      %v971 = vunpack.c.l.b16 %v954
      %v972 = vunpack.c.l.b16 %v955
      %v973 = vunpack.c.l.b16 %v956
      %v974 = vunpack.c.l.b16 %v957
      %v975 = vunpack.c.l.b16 %v958
      %v976 = vunpack.c.l.b16 %v959
      %v977 = vunpack.c.l.b16 %v960
      %v978 = vunpack.c.l.b16 %v961
      %v979 = vpack.c.b16 %v972, %v971
      %v980 = vpack.c.b16 %v974, %v973
      %v981 = vpack.c.b16 %v976, %v975
      %v982 = vpack.c.b16 %v978, %v977
      %vm987 = vcmask 523264
      %v989 = vsel %vm987, %v953, 0
      %991 = vmatpush.bf16.msra.mxu0 0
      %992 = vmatpush.bf16.msra.mxu0 0
      %993 = vmatpush.bf16.msra.mxu0 0
      %994 = vmatpush.bf16.msra.mxu0 0
      %995 = vmatpush.bf16.msra.mxu0 %v982
      %996 = vmatpush.bf16.msra.mxu0 %v981
      %997 = vmatpush.bf16.msra.mxu0 %v980
      %998 = vmatpush.bf16.msra.mxu0 %v979
      %999 = vmatmul.bf16.gmra.mxu0 %v989
      %v1000 = vpop.f32.mrf.mxu0
      %v1001 = vadd.f32 %v962, %v1000
      %v1002 = vpop.f32.mrf.mxu0
      %1003 = vdwg.mxu0
      %v1004 = vld [vmem:[%s763] sm:$0x1]
      %v1005 = vadd.f32 %v1001, %v1004
      %v1006 = vsub.f32 0.0, %v1005
      %v1007 = vmul.f32 %v1006, 1.442695
      %v1008 = vpow.pop %v1007
      %v1009 = vadd.f32 %v1008, 1.0
      %v1010 = vrcp.pop %v1009
      %v1011 = vmul.f32 %v1009, %v1010
      %v1012 = vsub.f32 1.0, %v1011
      %v1013 = vmul.f32 %v1010, %v1012
      %v1014 = vadd.f32 %v1010, %v1013
      %vm1015 = vweird.f32 %v1009
      %vm1016 = vweird.f32 %v1010
      %vm1017 = vmor %vm1015, %vm1016
      %v1018 = vsel %vm1017, %v1010, %v1014
      %v1019 = vand.u32 2147483647, %v1009
      %vm1020 = vcmp.eq.f32.partialorder %v1019, 8.507059e+37
      %v1021 = vand.u32 %v1009, 2147483648
      %v1022 = vor.u32 1.1754944e-38, %v1021
      %v1023 = vsel %vm1020, %v1022, %v1018
      %v1024 = vmul.f32 1.0, %v1023
      %v1025 = vmul.f32 %v1005, %v1024
      %v1026 = vperm.slane %v1025, 0
      %v1027 = vpack.c.bf16 %v1026, %v1026
      %v1028 = vld [vmem:[%s756] sm:$0xff]
      %v1029 = vld [vmem:[%s756 + $0x8] sm:$0xff]
      %v1030 = vld [vmem:[%s756 + $0x10] sm:$0xff]
      %v1031 = vld [vmem:[%s756 + $0x18] sm:$0xff]
      %v1032 = vld [vmem:[%s756 + $0x20] sm:$0xff]
      %v1033 = vld [vmem:[%s756 + $0x28] sm:$0xff]
      %v1034 = vld [vmem:[%s756 + $0x30] sm:$0xff]
      %v1035 = vld [vmem:[%s756 + $0x38] sm:$0xff]
      %v1036 = vpack.c.bf16 %v1029, %v1028
      %v1037 = vpack.c.bf16 %v1031, %v1030
      %v1038 = vpack.c.bf16 %v1033, %v1032
      %v1039 = vpack.c.bf16 %v1035, %v1034
      %v1040 = vld [vmem:[%s8] sm:$0xf]
      %v1041 = vld [vmem:[%s8 + $0x4] sm:$0xf]
      %v1042 = vld [vmem:[%s9] sm:$0x1]
      %v1044 = vperm.slane %v1042, 0
      %v1048 = vunpack.c.l.b16 %v1040
      %v1049 = vunpack.c.l.b16 %v1041
      %v1050 = vpack.c.b16 %v1049, %v1048
      %vm1052 = vcmask 130048
      %v1054 = vsel %vm1052, %v1036, 0
      %v1057 = vsel %vm1052, %v1037, 0
      %v1060 = vsel %vm1052, %v1038, 0
      %v1063 = vsel %vm1052, %v1039, 0
      %1065 = vmatpush.bf16.msra.mxu0 0
      %1066 = vmatpush.bf16.msra.mxu0 0
      %1067 = vmatpush.bf16.msra.mxu0 0
      %1068 = vmatpush.bf16.msra.mxu0 0
      %1069 = vmatpush.bf16.msra.mxu0 0
      %1070 = vmatpush.bf16.msra.mxu0 0
      %1071 = vmatpush.bf16.msra.mxu0 0
      %1072 = vmatpush.bf16.msra.mxu0 %v1050
      %1073 = vmatmul.bf16.gmra.mxu0 %v1054
      %v1074 = vpop.f32.mrf.mxu0
      %v1075 = vadd.f32 %v1044, %v1074
      %v1076 = vpop.f32.mrf.mxu0
      %v1077 = vadd.f32 %v1044, %v1076
      %1078 = vmatmul.bf16.gmra.mxu0 %v1057
      %v1079 = vpop.f32.mrf.mxu0
      %v1080 = vadd.f32 %v1044, %v1079
      %v1081 = vpop.f32.mrf.mxu0
      %v1082 = vadd.f32 %v1044, %v1081
      %1083 = vmatmul.bf16.gmra.mxu0 %v1060
      %v1084 = vpop.f32.mrf.mxu0
      %v1085 = vadd.f32 %v1044, %v1084
      %v1086 = vpop.f32.mrf.mxu0
      %v1087 = vadd.f32 %v1044, %v1086
      %1088 = vmatmul.bf16.gmra.mxu0 %v1063
      %v1089 = vpop.f32.mrf.mxu0
      %v1090 = vadd.f32 %v1044, %v1089
      %v1091 = vpop.f32.mrf.mxu0
      %v1092 = vadd.f32 %v1044, %v1091
      %1093 = vdwg.mxu0
      %v1094 = vld [vmem:[%s1] sm:$0xff]
      %v1095 = vld [vmem:[%s1 + $0x8] sm:$0xff]
      %v1096 = vld [vmem:[%s1 + $0x10] sm:$0xff]
      %v1097 = vld [vmem:[%s1 + $0x18] sm:$0xff]
      %v1098 = vld [vmem:[%s1 + $0x20] sm:$0xff]
      %v1099 = vld [vmem:[%s1 + $0x28] sm:$0xff]
      %v1100 = vld [vmem:[%s1 + $0x30] sm:$0xff]
      %v1101 = vld [vmem:[%s1 + $0x38] sm:$0xff]
      %v1102 = vadd.f32 %v1075, %v1094
      %v1103 = vadd.f32 %v1077, %v1095
      %v1104 = vadd.f32 %v1080, %v1096
      %v1105 = vadd.f32 %v1082, %v1097
      %v1106 = vadd.f32 %v1085, %v1098
      %v1107 = vadd.f32 %v1087, %v1099
      %v1108 = vadd.f32 %v1090, %v1100
      %v1109 = vadd.f32 %v1092, %v1101
      %v1110 = vld [vmem:[%s10] sm:$0xf]
      %v1111 = vld [vmem:[%s10 + $0x4] sm:$0xf]
      %v1112 = vld [vmem:[%s10 + $0x8] sm:$0xf]
      %v1113 = vld [vmem:[%s10 + $0xc] sm:$0xf]
      %v1114 = vld [vmem:[%s10 + $0x10] sm:$0xf]
      %v1115 = vld [vmem:[%s10 + $0x14] sm:$0xf]
      %v1116 = vld [vmem:[%s10 + $0x18] sm:$0xf]
      %v1117 = vld [vmem:[%s10 + $0x1c] sm:$0xf]
      %v1118 = vld [vmem:[%s11] sm:$0x1]
      %v1120 = vperm.slane %v1118, 0
      %v1130 = vunpack.c.l.b16 %v1110
      %v1131 = vunpack.c.l.b16 %v1111
      %v1132 = vunpack.c.l.b16 %v1112
      %v1133 = vunpack.c.l.b16 %v1113
      %v1134 = vunpack.c.l.b16 %v1114
      %v1135 = vunpack.c.l.b16 %v1115
      %v1136 = vunpack.c.l.b16 %v1116
      %v1137 = vunpack.c.l.b16 %v1117
      %v1138 = vpack.c.b16 %v1131, %v1130
      %v1139 = vpack.c.b16 %v1133, %v1132
      %v1140 = vpack.c.b16 %v1135, %v1134
      %v1141 = vpack.c.b16 %v1137, %v1136
      %v1147 = vsel %vm987, %v1027, 0
      %1149 = vmatpush.bf16.msra.mxu0 0
      %1150 = vmatpush.bf16.msra.mxu0 0
      %1151 = vmatpush.bf16.msra.mxu0 0
      %1152 = vmatpush.bf16.msra.mxu0 0
      %1153 = vmatpush.bf16.msra.mxu0 %v1141
      %1154 = vmatpush.bf16.msra.mxu0 %v1140
      %1155 = vmatpush.bf16.msra.mxu0 %v1139
      %1156 = vmatpush.bf16.msra.mxu0 %v1138
      %1157 = vmatmul.bf16.gmra.mxu0 %v1147
      %v1158 = vpop.f32.mrf.mxu0
      %v1159 = vadd.f32 %v1120, %v1158
      %v1160 = vpop.f32.mrf.mxu0
      %v1161 = vadd.f32 %v1120, %v1160
      %1162 = vmatmul.bf16.gmra.mxu0 %v1147
      %v1163 = vpop.f32.mrf.mxu0
      %v1164 = vadd.f32 %v1120, %v1163
      %v1165 = vpop.f32.mrf.mxu0
      %v1166 = vadd.f32 %v1120, %v1165
      %1167 = vmatmul.bf16.gmra.mxu0 %v1147
      %v1168 = vpop.f32.mrf.mxu0
      %v1169 = vadd.f32 %v1120, %v1168
      %v1170 = vpop.f32.mrf.mxu0
      %v1171 = vadd.f32 %v1120, %v1170
      %1172 = vmatmul.bf16.gmra.mxu0 %v1147
      %v1173 = vpop.f32.mrf.mxu0
      %v1174 = vadd.f32 %v1120, %v1173
      %v1175 = vpop.f32.mrf.mxu0
      %v1176 = vadd.f32 %v1120, %v1175
      %1177 = vdwg.mxu0
      %s1178 = scalar_lea.vmem %s10, 32
      %v1179 = vld [vmem:[%s1178] sm:$0xf]
      %v1180 = vld [vmem:[%s1178 + $0x4] sm:$0xf]
      %v1181 = vld [vmem:[%s1178 + $0x8] sm:$0xf]
      %v1182 = vld [vmem:[%s1178 + $0xc] sm:$0xf]
      %v1183 = vld [vmem:[%s1178 + $0x10] sm:$0xf]
      %v1184 = vld [vmem:[%s1178 + $0x14] sm:$0xf]
      %v1185 = vld [vmem:[%s1178 + $0x18] sm:$0xf]
      %v1186 = vld [vmem:[%s1178 + $0x1c] sm:$0xf]
      %s1187 = scalar_lea.vmem %s11, 1
      %v1188 = vld [vmem:[%s1187] sm:$0x1]
      %v1190 = vperm.slane %v1188, 0
      %v1200 = vunpack.c.l.b16 %v1179
      %v1201 = vunpack.c.l.b16 %v1180
      %v1202 = vunpack.c.l.b16 %v1181
      %v1203 = vunpack.c.l.b16 %v1182
      %v1204 = vunpack.c.l.b16 %v1183
      %v1205 = vunpack.c.l.b16 %v1184
      %v1206 = vunpack.c.l.b16 %v1185
      %v1207 = vunpack.c.l.b16 %v1186
      %v1208 = vpack.c.b16 %v1201, %v1200
      %v1209 = vpack.c.b16 %v1203, %v1202
      %v1210 = vpack.c.b16 %v1205, %v1204
      %v1211 = vpack.c.b16 %v1207, %v1206
      %1216 = vmatpush.bf16.msra.mxu0 0
      %1217 = vmatpush.bf16.msra.mxu0 0
      %1218 = vmatpush.bf16.msra.mxu0 0
      %1219 = vmatpush.bf16.msra.mxu0 0
      %1220 = vmatpush.bf16.msra.mxu0 %v1211
      %1221 = vmatpush.bf16.msra.mxu0 %v1210
      %1222 = vmatpush.bf16.msra.mxu0 %v1209
      %1223 = vmatpush.bf16.msra.mxu0 %v1208
      %1224 = vmatmul.bf16.gmra.mxu0 %v1147
      %v1225 = vpop.f32.mrf.mxu0
      %v1226 = vadd.f32 %v1190, %v1225
      %v1227 = vpop.f32.mrf.mxu0
      %v1228 = vadd.f32 %v1190, %v1227
      %1229 = vmatmul.bf16.gmra.mxu0 %v1147
      %v1230 = vpop.f32.mrf.mxu0
      %v1231 = vadd.f32 %v1190, %v1230
      %v1232 = vpop.f32.mrf.mxu0
      %v1233 = vadd.f32 %v1190, %v1232
      %1234 = vmatmul.bf16.gmra.mxu0 %v1147
      %v1235 = vpop.f32.mrf.mxu0
      %v1236 = vadd.f32 %v1190, %v1235
      %v1237 = vpop.f32.mrf.mxu0
      %v1238 = vadd.f32 %v1190, %v1237
      %1239 = vmatmul.bf16.gmra.mxu0 %v1147
      %v1240 = vpop.f32.mrf.mxu0
      %v1241 = vadd.f32 %v1190, %v1240
      %v1242 = vpop.f32.mrf.mxu0
      %v1243 = vadd.f32 %v1190, %v1242
      %1244 = vdwg.mxu0
      %s1245 = scalar_lea.vmem %s10, 64
      %v1246 = vld [vmem:[%s1245] sm:$0xf]
      %v1247 = vld [vmem:[%s1245 + $0x4] sm:$0xf]
      %v1248 = vld [vmem:[%s1245 + $0x8] sm:$0xf]
      %v1249 = vld [vmem:[%s1245 + $0xc] sm:$0xf]
      %v1250 = vld [vmem:[%s1245 + $0x10] sm:$0xf]
      %v1251 = vld [vmem:[%s1245 + $0x14] sm:$0xf]
      %v1252 = vld [vmem:[%s1245 + $0x18] sm:$0xf]
      %v1253 = vld [vmem:[%s1245 + $0x1c] sm:$0xf]
      %s1254 = scalar_lea.vmem %s11, 2
      %v1255 = vld [vmem:[%s1254] sm:$0x1]
      %v1257 = vperm.slane %v1255, 0
      %v1267 = vunpack.c.l.b16 %v1246
      %v1268 = vunpack.c.l.b16 %v1247
      %v1269 = vunpack.c.l.b16 %v1248
      %v1270 = vunpack.c.l.b16 %v1249
      %v1271 = vunpack.c.l.b16 %v1250
      %v1272 = vunpack.c.l.b16 %v1251
      %v1273 = vunpack.c.l.b16 %v1252
      %v1274 = vunpack.c.l.b16 %v1253
      %v1275 = vpack.c.b16 %v1268, %v1267
      %v1276 = vpack.c.b16 %v1270, %v1269
      %v1277 = vpack.c.b16 %v1272, %v1271
      %v1278 = vpack.c.b16 %v1274, %v1273
      %1283 = vmatpush.bf16.msra.mxu0 0
      %1284 = vmatpush.bf16.msra.mxu0 0
      %1285 = vmatpush.bf16.msra.mxu0 0
      %1286 = vmatpush.bf16.msra.mxu0 0
      %1287 = vmatpush.bf16.msra.mxu0 %v1278
      %1288 = vmatpush.bf16.msra.mxu0 %v1277
      %1289 = vmatpush.bf16.msra.mxu0 %v1276
      %1290 = vmatpush.bf16.msra.mxu0 %v1275
      %1291 = vmatmul.bf16.gmra.mxu0 %v1147
      %v1292 = vpop.f32.mrf.mxu0
      %v1293 = vadd.f32 %v1257, %v1292
      %v1294 = vpop.f32.mrf.mxu0
      %v1295 = vadd.f32 %v1257, %v1294
      %1296 = vmatmul.bf16.gmra.mxu0 %v1147
      %v1297 = vpop.f32.mrf.mxu0
      %v1298 = vadd.f32 %v1257, %v1297
      %v1299 = vpop.f32.mrf.mxu0
      %v1300 = vadd.f32 %v1257, %v1299
      %1301 = vmatmul.bf16.gmra.mxu0 %v1147
      %v1302 = vpop.f32.mrf.mxu0
      %v1303 = vadd.f32 %v1257, %v1302
      %v1304 = vpop.f32.mrf.mxu0
      %v1305 = vadd.f32 %v1257, %v1304
      %1306 = vmatmul.bf16.gmra.mxu0 %v1147
      %v1307 = vpop.f32.mrf.mxu0
      %v1308 = vadd.f32 %v1257, %v1307
      %v1309 = vpop.f32.mrf.mxu0
      %v1310 = vadd.f32 %v1257, %v1309
      %1311 = vdwg.mxu0
      %v1312 = vsel %vm987, %v1102, 0.0
      %1313 = vadd.xlane.f32.xlu0 %v1312
      %v1314 = vpop.xlane.xlu0 %1313
      %v1315 = vsel %vm987, %v1103, 0.0
      %1316 = vadd.xlane.f32.xlu0 %v1315
      %v1317 = vpop.xlane.xlu0 %1316
      %v1318 = vsel %vm987, %v1104, 0.0
      %1319 = vadd.xlane.f32.xlu0 %v1318
      %v1320 = vpop.xlane.xlu0 %1319
      %v1321 = vsel %vm987, %v1105, 0.0
      %1322 = vadd.xlane.f32.xlu0 %v1321
      %v1323 = vpop.xlane.xlu0 %1322
      %v1324 = vsel %vm987, %v1106, 0.0
      %1325 = vadd.xlane.f32.xlu0 %v1324
      %v1326 = vpop.xlane.xlu0 %1325
      %v1327 = vsel %vm987, %v1107, 0.0
      %1328 = vadd.xlane.f32.xlu0 %v1327
      %v1329 = vpop.xlane.xlu0 %1328
      %v1330 = vsel %vm987, %v1108, 0.0
      %1331 = vadd.xlane.f32.xlu0 %v1330
      %v1332 = vpop.xlane.xlu0 %1331
      %v1333 = vsel %vm987, %v1109, 0.0
      %1334 = vadd.xlane.f32.xlu0 %v1333
      %v1335 = vpop.xlane.xlu0 %1334
      %v1336 = vrcp.pop 64.0
      %v1337 = vmul.f32 64.0, %v1336
      %v1338 = vsub.f32 1.0, %v1337
      %v1339 = vmul.f32 %v1336, %v1338
      %v1340 = vadd.f32 %v1336, %v1339
      %vm1341 = vweird.f32 %v1336
      %v1342 = vsel %vm1341, %v1336, %v1340
      %v1343 = vmul.f32 %v1314, %v1342
      %v1344 = vmul.f32 %v1317, %v1342
      %v1345 = vmul.f32 %v1320, %v1342
      %v1346 = vmul.f32 %v1323, %v1342
      %v1347 = vmul.f32 %v1326, %v1342
      %v1348 = vmul.f32 %v1329, %v1342
      %v1349 = vmul.f32 %v1332, %v1342
      %v1350 = vmul.f32 %v1335, %v1342
      %v1351 = vsub.f32 %v1102, %v1343
      %v1352 = vsub.f32 %v1103, %v1344
      %v1353 = vsub.f32 %v1104, %v1345
      %v1354 = vsub.f32 %v1105, %v1346
      %v1355 = vsub.f32 %v1106, %v1347
      %v1356 = vsub.f32 %v1107, %v1348
      %v1357 = vsub.f32 %v1108, %v1349
      %v1358 = vsub.f32 %v1109, %v1350
      %v1359 = vmul.f32 %v1351, %v1351
      %v1360 = vmul.f32 %v1352, %v1352
      %v1361 = vmul.f32 %v1353, %v1353
      %v1362 = vmul.f32 %v1354, %v1354
      %v1363 = vmul.f32 %v1355, %v1355
      %v1364 = vmul.f32 %v1356, %v1356
      %v1365 = vmul.f32 %v1357, %v1357
      %v1366 = vmul.f32 %v1358, %v1358
      %v1367 = vsel %vm987, %v1359, 0.0
      %1368 = vadd.xlane.f32.xlu0 %v1367
      %v1369 = vpop.xlane.xlu0 %1368
      %v1370 = vsel %vm987, %v1360, 0.0
      %1371 = vadd.xlane.f32.xlu0 %v1370
      %v1372 = vpop.xlane.xlu0 %1371
      %v1373 = vsel %vm987, %v1361, 0.0
      %1374 = vadd.xlane.f32.xlu0 %v1373
      %v1375 = vpop.xlane.xlu0 %1374
      %v1376 = vsel %vm987, %v1362, 0.0
      %1377 = vadd.xlane.f32.xlu0 %v1376
      %v1378 = vpop.xlane.xlu0 %1377
      %v1379 = vsel %vm987, %v1363, 0.0
      %1380 = vadd.xlane.f32.xlu0 %v1379
      %v1381 = vpop.xlane.xlu0 %1380
      %v1382 = vsel %vm987, %v1364, 0.0
      %1383 = vadd.xlane.f32.xlu0 %v1382
      %v1384 = vpop.xlane.xlu0 %1383
      %v1385 = vsel %vm987, %v1365, 0.0
      %1386 = vadd.xlane.f32.xlu0 %v1385
      %v1387 = vpop.xlane.xlu0 %1386
      %v1388 = vsel %vm987, %v1366, 0.0
      %1389 = vadd.xlane.f32.xlu0 %v1388
      %v1390 = vpop.xlane.xlu0 %1389
      %v1391 = vmul.f32 %v1369, %v1342
      %v1392 = vmul.f32 %v1372, %v1342
      %v1393 = vmul.f32 %v1375, %v1342
      %v1394 = vmul.f32 %v1378, %v1342
      %v1395 = vmul.f32 %v1381, %v1342
      %v1396 = vmul.f32 %v1384, %v1342
      %v1397 = vmul.f32 %v1387, %v1342
      %v1398 = vmul.f32 %v1390, %v1342
      %v1399 = vadd.f32 %v1391, 1e-06
      %v1400 = vadd.f32 %v1392, 1e-06
      %v1401 = vadd.f32 %v1393, 1e-06
      %v1402 = vadd.f32 %v1394, 1e-06
      %v1403 = vadd.f32 %v1395, 1e-06
      %v1404 = vadd.f32 %v1396, 1e-06
      %v1405 = vadd.f32 %v1397, 1e-06
      %v1406 = vadd.f32 %v1398, 1e-06
      %v1407 = vrsqrt.pop %v1399
      %v1408 = vmul.f32 %v1407, %v1399
      %v1409 = vmul.f32 %v1408, %v1407
      %v1410 = vmul.f32 0.5, %v1409
      %v1411 = vsub.f32 1.5, %v1410
      %v1412 = vmul.f32 %v1407, %v1411
      %vm1413 = vweird.f32 %v1399
      %vm1414 = vweird.f32 %v1407
      %vm1415 = vmor %vm1413, %vm1414
      %v1416 = vsel %vm1415, %v1407, %v1412
      %v1417 = vrsqrt.pop %v1400
      %v1418 = vmul.f32 %v1417, %v1400
      %v1419 = vmul.f32 %v1418, %v1417
      %v1420 = vmul.f32 0.5, %v1419
      %v1421 = vsub.f32 1.5, %v1420
      %v1422 = vmul.f32 %v1417, %v1421
      %vm1423 = vweird.f32 %v1400
      %vm1424 = vweird.f32 %v1417
      %vm1425 = vmor %vm1423, %vm1424
      %v1426 = vsel %vm1425, %v1417, %v1422
      %v1427 = vrsqrt.pop %v1401
      %v1428 = vmul.f32 %v1427, %v1401
      %v1429 = vmul.f32 %v1428, %v1427
      %v1430 = vmul.f32 0.5, %v1429
      %v1431 = vsub.f32 1.5, %v1430
      %v1432 = vmul.f32 %v1427, %v1431
      %vm1433 = vweird.f32 %v1401
      %vm1434 = vweird.f32 %v1427
      %vm1435 = vmor %vm1433, %vm1434
      %v1436 = vsel %vm1435, %v1427, %v1432
      %v1437 = vrsqrt.pop %v1402
      %v1438 = vmul.f32 %v1437, %v1402
      %v1439 = vmul.f32 %v1438, %v1437
      %v1440 = vmul.f32 0.5, %v1439
      %v1441 = vsub.f32 1.5, %v1440
      %v1442 = vmul.f32 %v1437, %v1441
      %vm1443 = vweird.f32 %v1402
      %vm1444 = vweird.f32 %v1437
      %vm1445 = vmor %vm1443, %vm1444
      %v1446 = vsel %vm1445, %v1437, %v1442
      %v1447 = vrsqrt.pop %v1403
      %v1448 = vmul.f32 %v1447, %v1403
      %v1449 = vmul.f32 %v1448, %v1447
      %v1450 = vmul.f32 0.5, %v1449
      %v1451 = vsub.f32 1.5, %v1450
      %v1452 = vmul.f32 %v1447, %v1451
      %vm1453 = vweird.f32 %v1403
      %vm1454 = vweird.f32 %v1447
      %vm1455 = vmor %vm1453, %vm1454
      %v1456 = vsel %vm1455, %v1447, %v1452
      %v1457 = vrsqrt.pop %v1404
      %v1458 = vmul.f32 %v1457, %v1404
      %v1459 = vmul.f32 %v1458, %v1457
      %v1460 = vmul.f32 0.5, %v1459
      %v1461 = vsub.f32 1.5, %v1460
      %v1462 = vmul.f32 %v1457, %v1461
      %vm1463 = vweird.f32 %v1404
      %vm1464 = vweird.f32 %v1457
      %vm1465 = vmor %vm1463, %vm1464
      %v1466 = vsel %vm1465, %v1457, %v1462
      %v1467 = vrsqrt.pop %v1405
      %v1468 = vmul.f32 %v1467, %v1405
      %v1469 = vmul.f32 %v1468, %v1467
      %v1470 = vmul.f32 0.5, %v1469
      %v1471 = vsub.f32 1.5, %v1470
      %v1472 = vmul.f32 %v1467, %v1471
      %vm1473 = vweird.f32 %v1405
      %vm1474 = vweird.f32 %v1467
      %vm1475 = vmor %vm1473, %vm1474
      %v1476 = vsel %vm1475, %v1467, %v1472
      %v1477 = vrsqrt.pop %v1406
      %v1478 = vmul.f32 %v1477, %v1406
      %v1479 = vmul.f32 %v1478, %v1477
      %v1480 = vmul.f32 0.5, %v1479
      %v1481 = vsub.f32 1.5, %v1480
      %v1482 = vmul.f32 %v1477, %v1481
      %vm1483 = vweird.f32 %v1406
      %vm1484 = vweird.f32 %v1477
      %vm1485 = vmor %vm1483, %vm1484
      %v1486 = vsel %vm1485, %v1477, %v1482
      %v1487 = vmul.f32 %v1351, %v1416
      %v1488 = vmul.f32 %v1352, %v1426
      %v1489 = vmul.f32 %v1353, %v1436
      %v1490 = vmul.f32 %v1354, %v1446
      %v1491 = vmul.f32 %v1355, %v1456
      %v1492 = vmul.f32 %v1356, %v1466
      %v1493 = vmul.f32 %v1357, %v1476
      %v1494 = vmul.f32 %v1358, %v1486
      %v1495 = vadd.f32 %v1226, 1.0
      %v1496 = vadd.f32 %v1228, 1.0
      %v1497 = vadd.f32 %v1231, 1.0
      %v1498 = vadd.f32 %v1233, 1.0
      %v1499 = vadd.f32 %v1236, 1.0
      %v1500 = vadd.f32 %v1238, 1.0
      %v1501 = vadd.f32 %v1241, 1.0
      %v1502 = vadd.f32 %v1243, 1.0
      %v1503 = vmul.f32 %v1487, %v1495
      %v1504 = vmul.f32 %v1488, %v1496
      %v1505 = vmul.f32 %v1489, %v1497
      %v1506 = vmul.f32 %v1490, %v1498
      %v1507 = vmul.f32 %v1491, %v1499
      %v1508 = vmul.f32 %v1492, %v1500
      %v1509 = vmul.f32 %v1493, %v1501
      %v1510 = vmul.f32 %v1494, %v1502
      %v1511 = vadd.f32 %v1503, %v1159
      %v1512 = vadd.f32 %v1504, %v1161
      %v1513 = vadd.f32 %v1505, %v1164
      %v1514 = vadd.f32 %v1506, %v1166
      %v1515 = vadd.f32 %v1507, %v1169
      %v1516 = vadd.f32 %v1508, %v1171
      %v1517 = vadd.f32 %v1509, %v1174
      %v1518 = vadd.f32 %v1510, %v1176
      %v1519 = vpack.c.bf16 %v1512, %v1511
      %v1520 = vpack.c.bf16 %v1514, %v1513
      %v1521 = vpack.c.bf16 %v1516, %v1515
      %v1522 = vpack.c.bf16 %v1518, %v1517
      %v1523 = vld [vmem:[%s12] sm:$0xf]
      %v1524 = vld [vmem:[%s12 + $0x4] sm:$0xf]
      %v1525 = vld [vmem:[%s12 + $0x8] sm:$0xf]
      %v1526 = vld [vmem:[%s12 + $0xc] sm:$0xf]
      %v1527 = vld [vmem:[%s12 + $0x10] sm:$0xf]
      %v1528 = vld [vmem:[%s12 + $0x14] sm:$0xf]
      %v1529 = vld [vmem:[%s12 + $0x18] sm:$0xf]
      %v1530 = vld [vmem:[%s12 + $0x1c] sm:$0xf]
      %v1531 = vld [vmem:[%s12 + $0x20] sm:$0xf]
      %v1532 = vld [vmem:[%s12 + $0x24] sm:$0xf]
      %v1533 = vld [vmem:[%s12 + $0x28] sm:$0xf]
      %v1534 = vld [vmem:[%s12 + $0x2c] sm:$0xf]
      %v1535 = vld [vmem:[%s12 + $0x30] sm:$0xf]
      %v1536 = vld [vmem:[%s12 + $0x34] sm:$0xf]
      %v1537 = vld [vmem:[%s12 + $0x38] sm:$0xf]
      %v1538 = vld [vmem:[%s12 + $0x3c] sm:$0xf]
      %v1539 = vld [vmem:[%s13] sm:$0xff]
      %v1540 = vld [vmem:[%s13 + $0x8] sm:$0xff]
      %v1541 = vld [vmem:[%s13 + $0x10] sm:$0xff]
      %v1542 = vld [vmem:[%s13 + $0x18] sm:$0xff]
      %v1543 = vld [vmem:[%s13 + $0x20] sm:$0xff]
      %v1544 = vld [vmem:[%s13 + $0x28] sm:$0xff]
      %v1545 = vld [vmem:[%s13 + $0x30] sm:$0xff]
      %v1546 = vld [vmem:[%s13 + $0x38] sm:$0xff]
      %v1547 = vld [vmem:[%s13 + $0x40] sm:$0xff]
      %v1548 = vld [vmem:[%s13 + $0x48] sm:$0xff]
      %v1549 = vld [vmem:[%s13 + $0x50] sm:$0xff]
      %v1550 = vld [vmem:[%s13 + $0x58] sm:$0xff]
      %v1551 = vld [vmem:[%s13 + $0x60] sm:$0xff]
      %v1552 = vld [vmem:[%s13 + $0x68] sm:$0xff]
      %v1553 = vld [vmem:[%s13 + $0x70] sm:$0xff]
      %v1554 = vld [vmem:[%s13 + $0x78] sm:$0xff]
      %1556 = vset.pattern.permute.xlu0 0
      %1557 = vperm.xlu0 %1556, %v1539
      %v1558 = vpop.permute.xlu0 %1557
      %1561 = vset.pattern.permute.xlu0 0
      %1562 = vperm.xlu0 %1561, %v1540
      %v1563 = vpop.permute.xlu0 %1562
      %1566 = vset.pattern.permute.xlu0 0
      %1567 = vperm.xlu0 %1566, %v1541
      %v1568 = vpop.permute.xlu0 %1567
      %1571 = vset.pattern.permute.xlu0 0
      %1572 = vperm.xlu0 %1571, %v1542
      %v1573 = vpop.permute.xlu0 %1572
      %1576 = vset.pattern.permute.xlu0 0
      %1577 = vperm.xlu0 %1576, %v1543
      %v1578 = vpop.permute.xlu0 %1577
      %1581 = vset.pattern.permute.xlu0 0
      %1582 = vperm.xlu0 %1581, %v1544
      %v1583 = vpop.permute.xlu0 %1582
      %1586 = vset.pattern.permute.xlu0 0
      %1587 = vperm.xlu0 %1586, %v1545
      %v1588 = vpop.permute.xlu0 %1587
      %1591 = vset.pattern.permute.xlu0 0
      %1592 = vperm.xlu0 %1591, %v1546
      %v1593 = vpop.permute.xlu0 %1592
      %1596 = vset.pattern.permute.xlu0 0
      %1597 = vperm.xlu0 %1596, %v1547
      %v1598 = vpop.permute.xlu0 %1597
      %1601 = vset.pattern.permute.xlu0 0
      %1602 = vperm.xlu0 %1601, %v1548
      %v1603 = vpop.permute.xlu0 %1602
      %1606 = vset.pattern.permute.xlu0 0
      %1607 = vperm.xlu0 %1606, %v1549
      %v1608 = vpop.permute.xlu0 %1607
      %1611 = vset.pattern.permute.xlu0 0
      %1612 = vperm.xlu0 %1611, %v1550
      %v1613 = vpop.permute.xlu0 %1612
      %1616 = vset.pattern.permute.xlu0 0
      %1617 = vperm.xlu0 %1616, %v1551
      %v1618 = vpop.permute.xlu0 %1617
      %1621 = vset.pattern.permute.xlu0 0
      %1622 = vperm.xlu0 %1621, %v1552
      %v1623 = vpop.permute.xlu0 %1622
      %1626 = vset.pattern.permute.xlu0 0
      %1627 = vperm.xlu0 %1626, %v1553
      %v1628 = vpop.permute.xlu0 %1627
      %1631 = vset.pattern.permute.xlu0 0
      %1632 = vperm.xlu0 %1631, %v1554
      %v1633 = vpop.permute.xlu0 %1632
      %v1651 = vunpack.c.l.b16 %v1523
      %v1652 = vunpack.c.l.b16 %v1524
      %v1653 = vunpack.c.l.b16 %v1525
      %v1654 = vunpack.c.l.b16 %v1526
      %v1655 = vunpack.c.l.b16 %v1527
      %v1656 = vunpack.c.l.b16 %v1528
      %v1657 = vunpack.c.l.b16 %v1529
      %v1658 = vunpack.c.l.b16 %v1530
      %v1659 = vunpack.c.l.b16 %v1531
      %v1660 = vunpack.c.l.b16 %v1532
      %v1661 = vunpack.c.l.b16 %v1533
      %v1662 = vunpack.c.l.b16 %v1534
      %v1663 = vunpack.c.l.b16 %v1535
      %v1664 = vunpack.c.l.b16 %v1536
      %v1665 = vunpack.c.l.b16 %v1537
      %v1666 = vunpack.c.l.b16 %v1538
      %v1667 = vpack.c.b16 %v1652, %v1651
      %v1668 = vpack.c.b16 %v1654, %v1653
      %v1669 = vpack.c.b16 %v1656, %v1655
      %v1670 = vpack.c.b16 %v1658, %v1657
      %v1671 = vpack.c.b16 %v1660, %v1659
      %v1672 = vpack.c.b16 %v1662, %v1661
      %v1673 = vpack.c.b16 %v1664, %v1663
      %v1674 = vpack.c.b16 %v1666, %v1665
      %v1676 = vsel %vm987, %v1667, 0
      %v1679 = vsel %vm987, %v1668, 0
      %v1682 = vsel %vm987, %v1669, 0
      %v1685 = vsel %vm987, %v1670, 0
      %v1688 = vsel %vm987, %v1671, 0
      %v1691 = vsel %vm987, %v1672, 0
      %v1694 = vsel %vm987, %v1673, 0
      %v1697 = vsel %vm987, %v1674, 0
      %v1700 = vsel %vm987, %v1519, 0
      %v1703 = vsel %vm987, %v1520, 0
      %v1706 = vsel %vm987, %v1521, 0
      %v1709 = vsel %vm987, %v1522, 0
      %1711 = vmatpush.bf16.xpose.msra.mxu0 0
      %1712 = vmatpush.bf16.xpose.msra.mxu0 0
      %1713 = vmatpush.bf16.xpose.msra.mxu0 0
      %1714 = vmatpush.bf16.xpose.msra.mxu0 0
      %1715 = vmatpush.bf16.xpose.msra.mxu0 %v1709
      %1716 = vmatpush.bf16.xpose.msra.mxu0 %v1706
      %1717 = vmatpush.bf16.xpose.msra.mxu0 %v1703
      %1718 = vmatpush.bf16.xpose.msra.mxu0 %v1700
      %1719 = vmatmul.bf16.gmra.mxu0 %v1676
      %v1720 = vpop.f32.mrf.mxu0
      %v1721 = vadd.f32 %v1558, %v1720
      %v1722 = vpop.f32.mrf.mxu0
      %v1723 = vadd.f32 %v1563, %v1722
      %1724 = vmatmul.bf16.gmra.mxu0 %v1679
      %v1725 = vpop.f32.mrf.mxu0
      %v1726 = vadd.f32 %v1568, %v1725
      %v1727 = vpop.f32.mrf.mxu0
      %v1728 = vadd.f32 %v1573, %v1727
      %1729 = vmatmul.bf16.gmra.mxu0 %v1682
      %v1730 = vpop.f32.mrf.mxu0
      %v1731 = vadd.f32 %v1578, %v1730
      %v1732 = vpop.f32.mrf.mxu0
      %v1733 = vadd.f32 %v1583, %v1732
      %1734 = vmatmul.bf16.gmra.mxu0 %v1685
      %v1735 = vpop.f32.mrf.mxu0
      %v1736 = vadd.f32 %v1588, %v1735
      %v1737 = vpop.f32.mrf.mxu0
      %v1738 = vadd.f32 %v1593, %v1737
      %1739 = vmatmul.bf16.gmra.mxu0 %v1688
      %v1740 = vpop.f32.mrf.mxu0
      %v1741 = vadd.f32 %v1598, %v1740
      %v1742 = vpop.f32.mrf.mxu0
      %v1743 = vadd.f32 %v1603, %v1742
      %1744 = vmatmul.bf16.gmra.mxu0 %v1691
      %v1745 = vpop.f32.mrf.mxu0
      %v1746 = vadd.f32 %v1608, %v1745
      %v1747 = vpop.f32.mrf.mxu0
      %v1748 = vadd.f32 %v1613, %v1747
      %1749 = vmatmul.bf16.gmra.mxu0 %v1694
      %v1750 = vpop.f32.mrf.mxu0
      %v1751 = vadd.f32 %v1618, %v1750
      %v1752 = vpop.f32.mrf.mxu0
      %v1753 = vadd.f32 %v1623, %v1752
      %1754 = vmatmul.bf16.gmra.mxu0 %v1697
      %v1755 = vpop.f32.mrf.mxu0
      %v1756 = vadd.f32 %v1628, %v1755
      %v1757 = vpop.f32.mrf.mxu0
      %v1758 = vadd.f32 %v1633, %v1757
      %1759 = vdwg.mxu0
      %v1760 = vpack.c.bf16 %v1721, %v1721
      %v1761 = vpack.c.bf16 %v1723, %v1723
      %v1762 = vpack.c.bf16 %v1726, %v1726
      %v1763 = vpack.c.bf16 %v1728, %v1728
      %v1764 = vpack.c.bf16 %v1731, %v1731
      %v1765 = vpack.c.bf16 %v1733, %v1733
      %v1766 = vpack.c.bf16 %v1736, %v1736
      %v1767 = vpack.c.bf16 %v1738, %v1738
      %v1768 = vpack.c.bf16 %v1741, %v1741
      %v1769 = vpack.c.bf16 %v1743, %v1743
      %v1770 = vpack.c.bf16 %v1746, %v1746
      %v1771 = vpack.c.bf16 %v1748, %v1748
      %v1772 = vpack.c.bf16 %v1751, %v1751
      %v1773 = vpack.c.bf16 %v1753, %v1753
      %v1774 = vpack.c.bf16 %v1756, %v1756
      %v1775 = vpack.c.bf16 %v1758, %v1758
      %v1778 = vunpack.c.l.b16 %v1760
      %v1779 = vunpack.c.l.b16 %v1761
      %v1780 = vpack.c.b16 %v1779, %v1778
      %1782 = vxpose.xlu0.c.b16.start [1/8] %v1780, 128
      %1783 = vxpose.xlu0.c.b16.cont [2/8] 0, 128
      %1784 = vxpose.xlu0.c.b16.cont [3/8] 0, 128
      %1785 = vxpose.xlu0.c.b16.cont [4/8] 0, 128
      %1786 = vxpose.xlu0.c.b16.cont [5/8] 0, 128
      %1787 = vxpose.xlu0.c.b16.cont [6/8] 0, 128
      %1788 = vxpose.xlu0.c.b16.cont [7/8] 0, 128
      %1789 = vxpose.xlu0.c.b16.end [8/8] 0, 128
      %v1790 = vpop.trf.xlu0
      %v1791 = vpop.trf.xlu0
      %v1792 = vpop.trf.xlu0
      %v1793 = vpop.trf.xlu0
      %v1794 = vpop.trf.xlu0
      %v1795 = vpop.trf.xlu0
      %v1796 = vpop.trf.xlu0
      %v1797 = vpop.trf.xlu0
      %v1800 = vunpack.c.l.b16 %v1768
      %v1801 = vunpack.c.l.b16 %v1769
      %v1802 = vpack.c.b16 %v1801, %v1800
      %v1805 = vsel %vm1052, %v1790, 0
      %v1808 = vsel %vm1052, %v1791, 0
      %v1811 = vsel %vm1052, %v1792, 0
      %v1814 = vsel %vm1052, %v1793, 0
      %1816 = vmatpush.bf16.msra.mxu0 0
      %1817 = vmatpush.bf16.msra.mxu0 0
      %1818 = vmatpush.bf16.msra.mxu0 0
      %1819 = vmatpush.bf16.msra.mxu0 0
      %1820 = vmatpush.bf16.msra.mxu0 0
      %1821 = vmatpush.bf16.msra.mxu0 0
      %1822 = vmatpush.bf16.msra.mxu0 0
      %1823 = vmatpush.bf16.msra.mxu0 %v1802
      %1824 = vmatmul.bf16.gmra.mxu0 %v1805
      %v1825 = vpop.f32.mrf.mxu0
      %v1826 = vadd.f32 0.0, %v1825
      %v1827 = vpop.f32.mrf.mxu0
      %v1828 = vadd.f32 0.0, %v1827
      %1829 = vmatmul.bf16.gmra.mxu0 %v1808
      %v1830 = vpop.f32.mrf.mxu0
      %v1831 = vadd.f32 0.0, %v1830
      %v1832 = vpop.f32.mrf.mxu0
      %v1833 = vadd.f32 0.0, %v1832
      %1834 = vmatmul.bf16.gmra.mxu0 %v1811
      %v1835 = vpop.f32.mrf.mxu0
      %v1836 = vadd.f32 0.0, %v1835
      %v1837 = vpop.f32.mrf.mxu0
      %v1838 = vadd.f32 0.0, %v1837
      %1839 = vmatmul.bf16.gmra.mxu0 %v1814
      %v1840 = vpop.f32.mrf.mxu0
      %v1841 = vadd.f32 0.0, %v1840
      %v1842 = vpop.f32.mrf.mxu0
      %v1843 = vadd.f32 0.0, %v1842
      %1844 = vdwg.mxu0
      %v1845 = vsel %vm987, %v1826, -inf
      %1846 = vmax.xlane.f32.xlu0 %v1845
      %v1847 = vpop.xlane.xlu0 %1846
      %v1848 = vsel %vm987, %v1828, -inf
      %1849 = vmax.xlane.f32.xlu0 %v1848
      %v1850 = vpop.xlane.xlu0 %1849
      %v1851 = vsel %vm987, %v1831, -inf
      %1852 = vmax.xlane.f32.xlu0 %v1851
      %v1853 = vpop.xlane.xlu0 %1852
      %v1854 = vsel %vm987, %v1833, -inf
      %1855 = vmax.xlane.f32.xlu0 %v1854
      %v1856 = vpop.xlane.xlu0 %1855
      %v1857 = vsel %vm987, %v1836, -inf
      %1858 = vmax.xlane.f32.xlu0 %v1857
      %v1859 = vpop.xlane.xlu0 %1858
      %v1860 = vsel %vm987, %v1838, -inf
      %1861 = vmax.xlane.f32.xlu0 %v1860
      %v1862 = vpop.xlane.xlu0 %1861
      %v1863 = vsel %vm987, %v1841, -inf
      %1864 = vmax.xlane.f32.xlu0 %v1863
      %v1865 = vpop.xlane.xlu0 %1864
      %v1866 = vsel %vm987, %v1843, -inf
      %1867 = vmax.xlane.f32.xlu0 %v1866
      %v1868 = vpop.xlane.xlu0 %1867
      %v1869 = vsub.f32 %v1826, %v1847
      %v1870 = vsub.f32 %v1828, %v1850
      %v1871 = vsub.f32 %v1831, %v1853
      %v1872 = vsub.f32 %v1833, %v1856
      %v1873 = vsub.f32 %v1836, %v1859
      %v1874 = vsub.f32 %v1838, %v1862
      %v1875 = vsub.f32 %v1841, %v1865
      %v1876 = vsub.f32 %v1843, %v1868
      %v1877 = vmul.f32 %v1869, 1.442695
      %v1878 = vpow.pop %v1877
      %v1879 = vmul.f32 %v1870, 1.442695
      %v1880 = vpow.pop %v1879
      %v1881 = vmul.f32 %v1871, 1.442695
      %v1882 = vpow.pop %v1881
      %v1883 = vmul.f32 %v1872, 1.442695
      %v1884 = vpow.pop %v1883
      %v1885 = vmul.f32 %v1873, 1.442695
      %v1886 = vpow.pop %v1885
      %v1887 = vmul.f32 %v1874, 1.442695
      %v1888 = vpow.pop %v1887
      %v1889 = vmul.f32 %v1875, 1.442695
      %v1890 = vpow.pop %v1889
      %v1891 = vmul.f32 %v1876, 1.442695
      %v1892 = vpow.pop %v1891
      %v1893 = vsel %vm987, %v1878, 0.0
      %1894 = vadd.xlane.f32.xlu0 %v1893
      %v1895 = vpop.xlane.xlu0 %1894
      %v1896 = vsel %vm987, %v1880, 0.0
      %1897 = vadd.xlane.f32.xlu0 %v1896
      %v1898 = vpop.xlane.xlu0 %1897
      %v1899 = vsel %vm987, %v1882, 0.0
      %1900 = vadd.xlane.f32.xlu0 %v1899
      %v1901 = vpop.xlane.xlu0 %1900
      %v1902 = vsel %vm987, %v1884, 0.0
      %1903 = vadd.xlane.f32.xlu0 %v1902
      %v1904 = vpop.xlane.xlu0 %1903
      %v1905 = vsel %vm987, %v1886, 0.0
      %1906 = vadd.xlane.f32.xlu0 %v1905
      %v1907 = vpop.xlane.xlu0 %1906
      %v1908 = vsel %vm987, %v1888, 0.0
      %1909 = vadd.xlane.f32.xlu0 %v1908
      %v1910 = vpop.xlane.xlu0 %1909
      %v1911 = vsel %vm987, %v1890, 0.0
      %1912 = vadd.xlane.f32.xlu0 %v1911
      %v1913 = vpop.xlane.xlu0 %1912
      %v1914 = vsel %vm987, %v1892, 0.0
      %1915 = vadd.xlane.f32.xlu0 %v1914
      %v1916 = vpop.xlane.xlu0 %1915
      %v1917 = vrcp.pop %v1895
      %v1918 = vrcp.pop %v1898
      %v1919 = vrcp.pop %v1901
      %v1920 = vrcp.pop %v1904
      %v1921 = vrcp.pop %v1907
      %v1922 = vrcp.pop %v1910
      %v1923 = vrcp.pop %v1913
      %v1924 = vrcp.pop %v1916
      %v1925 = vmul.f32 %v1878, %v1917
      %v1926 = vmul.f32 %v1880, %v1918
      %v1927 = vmul.f32 %v1882, %v1919
      %v1928 = vmul.f32 %v1884, %v1920
      %v1929 = vmul.f32 %v1886, %v1921
      %v1930 = vmul.f32 %v1888, %v1922
      %v1931 = vmul.f32 %v1890, %v1923
      %v1932 = vmul.f32 %v1892, %v1924
      %v1933 = vld [vmem:[%s14] sm:$0xf]
      %v1934 = vld [vmem:[%s14 + $0x4] sm:$0xf]
      %v1935 = vld [vmem:[%s14 + $0x8] sm:$0xf]
      %v1936 = vld [vmem:[%s14 + $0xc] sm:$0xf]
      %v1937 = vld [vmem:[%s14 + $0x10] sm:$0xf]
      %v1938 = vld [vmem:[%s14 + $0x14] sm:$0xf]
      %v1939 = vld [vmem:[%s14 + $0x18] sm:$0xf]
      %v1940 = vld [vmem:[%s14 + $0x1c] sm:$0xf]
      %v1949 = vunpack.c.l.b16 %v1933
      %v1950 = vunpack.c.l.b16 %v1934
      %v1951 = vunpack.c.l.b16 %v1935
      %v1952 = vunpack.c.l.b16 %v1936
      %v1953 = vunpack.c.l.b16 %v1937
      %v1954 = vunpack.c.l.b16 %v1938
      %v1955 = vunpack.c.l.b16 %v1939
      %v1956 = vunpack.c.l.b16 %v1940
      %v1957 = vpack.c.b16 %v1950, %v1949
      %v1958 = vpack.c.b16 %v1952, %v1951
      %v1959 = vpack.c.b16 %v1954, %v1953
      %v1960 = vpack.c.b16 %v1956, %v1955
      %1965 = vmatpush.bf16.msra.mxu0 0
      %1966 = vmatpush.bf16.msra.mxu0 0
      %1967 = vmatpush.bf16.msra.mxu0 0
      %1968 = vmatpush.bf16.msra.mxu0 0
      %1969 = vmatpush.bf16.msra.mxu0 %v1960
      %1970 = vmatpush.bf16.msra.mxu0 %v1959
      %1971 = vmatpush.bf16.msra.mxu0 %v1958
      %1972 = vmatpush.bf16.msra.mxu0 %v1957
      %1973 = vmatmul.bf16.gmra.mxu0 %v1700
      %v1974 = vpop.f32.mrf.mxu0
      %v1975 = vadd.f32 0.0, %v1974
      %v1976 = vpop.f32.mrf.mxu0
      %v1977 = vadd.f32 0.0, %v1976
      %1978 = vmatmul.bf16.gmra.mxu0 %v1703
      %v1979 = vpop.f32.mrf.mxu0
      %v1980 = vadd.f32 0.0, %v1979
      %v1981 = vpop.f32.mrf.mxu0
      %v1982 = vadd.f32 0.0, %v1981
      %1983 = vmatmul.bf16.gmra.mxu0 %v1706
      %v1984 = vpop.f32.mrf.mxu0
      %v1985 = vadd.f32 0.0, %v1984
      %v1986 = vpop.f32.mrf.mxu0
      %v1987 = vadd.f32 0.0, %v1986
      %1988 = vmatmul.bf16.gmra.mxu0 %v1709
      %v1989 = vpop.f32.mrf.mxu0
      %v1990 = vadd.f32 0.0, %v1989
      %v1991 = vpop.f32.mrf.mxu0
      %v1992 = vadd.f32 0.0, %v1991
      %1993 = vdwg.mxu0
      %v1994 = vpack.c.bf16 %v1977, %v1975
      %v1995 = vpack.c.bf16 %v1982, %v1980
      %v1996 = vpack.c.bf16 %v1987, %v1985
      %v1997 = vpack.c.bf16 %v1992, %v1990
      %v1998 = vpack.c.bf16 %v1926, %v1925
      %v1999 = vpack.c.bf16 %v1928, %v1927
      %v2000 = vpack.c.bf16 %v1930, %v1929
      %v2001 = vpack.c.bf16 %v1932, %v1931
      %v2004 = vunpack.c.l.b16 %v1762
      %v2005 = vunpack.c.l.b16 %v1763
      %v2006 = vpack.c.b16 %v2005, %v2004
      %2008 = vxpose.xlu0.c.b16.start [1/8] %v2006, 128
      %2009 = vxpose.xlu0.c.b16.cont [2/8] 0, 128
      %2010 = vxpose.xlu0.c.b16.cont [3/8] 0, 128
      %2011 = vxpose.xlu0.c.b16.cont [4/8] 0, 128
      %2012 = vxpose.xlu0.c.b16.cont [5/8] 0, 128
      %2013 = vxpose.xlu0.c.b16.cont [6/8] 0, 128
      %2014 = vxpose.xlu0.c.b16.cont [7/8] 0, 128
      %2015 = vxpose.xlu0.c.b16.end [8/8] 0, 128
      %v2016 = vpop.trf.xlu0
      %v2017 = vpop.trf.xlu0
      %v2018 = vpop.trf.xlu0
      %v2019 = vpop.trf.xlu0
      %v2020 = vpop.trf.xlu0
      %v2021 = vpop.trf.xlu0
      %v2022 = vpop.trf.xlu0
      %v2023 = vpop.trf.xlu0
      %v2026 = vunpack.c.l.b16 %v1770
      %v2027 = vunpack.c.l.b16 %v1771
      %v2028 = vpack.c.b16 %v2027, %v2026
      %v2031 = vsel %vm1052, %v2016, 0
      %v2034 = vsel %vm1052, %v2017, 0
      %v2037 = vsel %vm1052, %v2018, 0
      %v2040 = vsel %vm1052, %v2019, 0
      %2042 = vmatpush.bf16.msra.mxu0 0
      %2043 = vmatpush.bf16.msra.mxu0 0
      %2044 = vmatpush.bf16.msra.mxu0 0
      %2045 = vmatpush.bf16.msra.mxu0 0
      %2046 = vmatpush.bf16.msra.mxu0 0
      %2047 = vmatpush.bf16.msra.mxu0 0
      %2048 = vmatpush.bf16.msra.mxu0 0
      %2049 = vmatpush.bf16.msra.mxu0 %v2028
      %2050 = vmatmul.bf16.gmra.mxu0 %v2031
      %v2051 = vpop.f32.mrf.mxu0
      %v2052 = vadd.f32 0.0, %v2051
      %v2053 = vpop.f32.mrf.mxu0
      %v2054 = vadd.f32 0.0, %v2053
      %2055 = vmatmul.bf16.gmra.mxu0 %v2034
      %v2056 = vpop.f32.mrf.mxu0
      %v2057 = vadd.f32 0.0, %v2056
      %v2058 = vpop.f32.mrf.mxu0
      %v2059 = vadd.f32 0.0, %v2058
      %2060 = vmatmul.bf16.gmra.mxu0 %v2037
      %v2061 = vpop.f32.mrf.mxu0
      %v2062 = vadd.f32 0.0, %v2061
      %v2063 = vpop.f32.mrf.mxu0
      %v2064 = vadd.f32 0.0, %v2063
      %2065 = vmatmul.bf16.gmra.mxu0 %v2040
      %v2066 = vpop.f32.mrf.mxu0
      %v2067 = vadd.f32 0.0, %v2066
      %v2068 = vpop.f32.mrf.mxu0
      %v2069 = vadd.f32 0.0, %v2068
      %2070 = vdwg.mxu0
      %v2071 = vsel %vm987, %v2052, -inf
      %2072 = vmax.xlane.f32.xlu0 %v2071
      %v2073 = vpop.xlane.xlu0 %2072
      %v2074 = vsel %vm987, %v2054, -inf
      %2075 = vmax.xlane.f32.xlu0 %v2074
      %v2076 = vpop.xlane.xlu0 %2075
      %v2077 = vsel %vm987, %v2057, -inf
      %2078 = vmax.xlane.f32.xlu0 %v2077
      %v2079 = vpop.xlane.xlu0 %2078
      %v2080 = vsel %vm987, %v2059, -inf
      %2081 = vmax.xlane.f32.xlu0 %v2080
      %v2082 = vpop.xlane.xlu0 %2081
      %v2083 = vsel %vm987, %v2062, -inf
      %2084 = vmax.xlane.f32.xlu0 %v2083
      %v2085 = vpop.xlane.xlu0 %2084
      %v2086 = vsel %vm987, %v2064, -inf
      %2087 = vmax.xlane.f32.xlu0 %v2086
      %v2088 = vpop.xlane.xlu0 %2087
      %v2089 = vsel %vm987, %v2067, -inf
      %2090 = vmax.xlane.f32.xlu0 %v2089
      %v2091 = vpop.xlane.xlu0 %2090
      %v2092 = vsel %vm987, %v2069, -inf
      %2093 = vmax.xlane.f32.xlu0 %v2092
      %v2094 = vpop.xlane.xlu0 %2093
      %v2095 = vsub.f32 %v2052, %v2073
      %v2096 = vsub.f32 %v2054, %v2076
      %v2097 = vsub.f32 %v2057, %v2079
      %v2098 = vsub.f32 %v2059, %v2082
      %v2099 = vsub.f32 %v2062, %v2085
      %v2100 = vsub.f32 %v2064, %v2088
      %v2101 = vsub.f32 %v2067, %v2091
      %v2102 = vsub.f32 %v2069, %v2094
      %v2103 = vmul.f32 %v2095, 1.442695
      %v2104 = vpow.pop %v2103
      %v2105 = vmul.f32 %v2096, 1.442695
      %v2106 = vpow.pop %v2105
      %v2107 = vmul.f32 %v2097, 1.442695
      %v2108 = vpow.pop %v2107
      %v2109 = vmul.f32 %v2098, 1.442695
      %v2110 = vpow.pop %v2109
      %v2111 = vmul.f32 %v2099, 1.442695
      %v2112 = vpow.pop %v2111
      %v2113 = vmul.f32 %v2100, 1.442695
      %v2114 = vpow.pop %v2113
      %v2115 = vmul.f32 %v2101, 1.442695
      %v2116 = vpow.pop %v2115
      %v2117 = vmul.f32 %v2102, 1.442695
      %v2118 = vpow.pop %v2117
      %v2119 = vsel %vm987, %v2104, 0.0
      %2120 = vadd.xlane.f32.xlu0 %v2119
      %v2121 = vpop.xlane.xlu0 %2120
      %v2122 = vsel %vm987, %v2106, 0.0
      %2123 = vadd.xlane.f32.xlu0 %v2122
      %v2124 = vpop.xlane.xlu0 %2123
      %v2125 = vsel %vm987, %v2108, 0.0
      %2126 = vadd.xlane.f32.xlu0 %v2125
      %v2127 = vpop.xlane.xlu0 %2126
      %v2128 = vsel %vm987, %v2110, 0.0
      %2129 = vadd.xlane.f32.xlu0 %v2128
      %v2130 = vpop.xlane.xlu0 %2129
      %v2131 = vsel %vm987, %v2112, 0.0
      %2132 = vadd.xlane.f32.xlu0 %v2131
      %v2133 = vpop.xlane.xlu0 %2132
      %v2134 = vsel %vm987, %v2114, 0.0
      %2135 = vadd.xlane.f32.xlu0 %v2134
      %v2136 = vpop.xlane.xlu0 %2135
      %v2137 = vsel %vm987, %v2116, 0.0
      %2138 = vadd.xlane.f32.xlu0 %v2137
      %v2139 = vpop.xlane.xlu0 %2138
      %v2140 = vsel %vm987, %v2118, 0.0
      %2141 = vadd.xlane.f32.xlu0 %v2140
      %v2142 = vpop.xlane.xlu0 %2141
      %v2143 = vrcp.pop %v2121
      %v2144 = vrcp.pop %v2124
      %v2145 = vrcp.pop %v2127
      %v2146 = vrcp.pop %v2130
      %v2147 = vrcp.pop %v2133
      %v2148 = vrcp.pop %v2136
      %v2149 = vrcp.pop %v2139
      %v2150 = vrcp.pop %v2142
      %v2151 = vmul.f32 %v2104, %v2143
      %v2152 = vmul.f32 %v2106, %v2144
      %v2153 = vmul.f32 %v2108, %v2145
      %v2154 = vmul.f32 %v2110, %v2146
      %v2155 = vmul.f32 %v2112, %v2147
      %v2156 = vmul.f32 %v2114, %v2148
      %v2157 = vmul.f32 %v2116, %v2149
      %v2158 = vmul.f32 %v2118, %v2150
      %s2159 = scalar_lea.vmem %s14, 32
      %v2160 = vld [vmem:[%s2159] sm:$0xf]
      %v2161 = vld [vmem:[%s2159 + $0x4] sm:$0xf]
      %v2162 = vld [vmem:[%s2159 + $0x8] sm:$0xf]
      %v2163 = vld [vmem:[%s2159 + $0xc] sm:$0xf]
      %v2164 = vld [vmem:[%s2159 + $0x10] sm:$0xf]
      %v2165 = vld [vmem:[%s2159 + $0x14] sm:$0xf]
      %v2166 = vld [vmem:[%s2159 + $0x18] sm:$0xf]
      %v2167 = vld [vmem:[%s2159 + $0x1c] sm:$0xf]
      %v2176 = vunpack.c.l.b16 %v2160
      %v2177 = vunpack.c.l.b16 %v2161
      %v2178 = vunpack.c.l.b16 %v2162
      %v2179 = vunpack.c.l.b16 %v2163
      %v2180 = vunpack.c.l.b16 %v2164
      %v2181 = vunpack.c.l.b16 %v2165
      %v2182 = vunpack.c.l.b16 %v2166
      %v2183 = vunpack.c.l.b16 %v2167
      %v2184 = vpack.c.b16 %v2177, %v2176
      %v2185 = vpack.c.b16 %v2179, %v2178
      %v2186 = vpack.c.b16 %v2181, %v2180
      %v2187 = vpack.c.b16 %v2183, %v2182
      %2192 = vmatpush.bf16.msra.mxu0 0
      %2193 = vmatpush.bf16.msra.mxu0 0
      %2194 = vmatpush.bf16.msra.mxu0 0
      %2195 = vmatpush.bf16.msra.mxu0 0
      %2196 = vmatpush.bf16.msra.mxu0 %v2187
      %2197 = vmatpush.bf16.msra.mxu0 %v2186
      %2198 = vmatpush.bf16.msra.mxu0 %v2185
      %2199 = vmatpush.bf16.msra.mxu0 %v2184
      %2200 = vmatmul.bf16.gmra.mxu0 %v1700
      %v2201 = vpop.f32.mrf.mxu0
      %v2202 = vadd.f32 0.0, %v2201
      %v2203 = vpop.f32.mrf.mxu0
      %v2204 = vadd.f32 0.0, %v2203
      %2205 = vmatmul.bf16.gmra.mxu0 %v1703
      %v2206 = vpop.f32.mrf.mxu0
      %v2207 = vadd.f32 0.0, %v2206
      %v2208 = vpop.f32.mrf.mxu0
      %v2209 = vadd.f32 0.0, %v2208
      %2210 = vmatmul.bf16.gmra.mxu0 %v1706
      %v2211 = vpop.f32.mrf.mxu0
      %v2212 = vadd.f32 0.0, %v2211
      %v2213 = vpop.f32.mrf.mxu0
      %v2214 = vadd.f32 0.0, %v2213
      %2215 = vmatmul.bf16.gmra.mxu0 %v1709
      %v2216 = vpop.f32.mrf.mxu0
      %v2217 = vadd.f32 0.0, %v2216
      %v2218 = vpop.f32.mrf.mxu0
      %v2219 = vadd.f32 0.0, %v2218
      %2220 = vdwg.mxu0
      %v2221 = vpack.c.bf16 %v2204, %v2202
      %v2222 = vpack.c.bf16 %v2209, %v2207
      %v2223 = vpack.c.bf16 %v2214, %v2212
      %v2224 = vpack.c.bf16 %v2219, %v2217
      %v2225 = vpack.c.bf16 %v2152, %v2151
      %v2226 = vpack.c.bf16 %v2154, %v2153
      %v2227 = vpack.c.bf16 %v2156, %v2155
      %v2228 = vpack.c.bf16 %v2158, %v2157
      %v2230 = vsel %vm987, %v2225, 0
      %v2233 = vsel %vm987, %v2226, 0
      %v2236 = vsel %vm987, %v2227, 0
      %v2239 = vsel %vm987, %v2228, 0
      %2241 = vmatpush.bf16.msra.mxu0 0
      %2242 = vmatpush.bf16.msra.mxu0 0
      %2243 = vmatpush.bf16.msra.mxu0 0
      %2244 = vmatpush.bf16.msra.mxu0 0
      %2245 = vmatpush.bf16.msra.mxu0 %v2224
      %2246 = vmatpush.bf16.msra.mxu0 %v2223
      %2247 = vmatpush.bf16.msra.mxu0 %v2222
      %2248 = vmatpush.bf16.msra.mxu0 %v2221
      %2249 = vmatmul.bf16.gmra.mxu0 %v2230
      %v2250 = vpop.f32.mrf.mxu0
      %v2251 = vadd.f32 0.0, %v2250
      %v2252 = vpop.f32.mrf.mxu0
      %v2253 = vadd.f32 0.0, %v2252
      %2254 = vmatmul.bf16.gmra.mxu0 %v2233
      %v2255 = vpop.f32.mrf.mxu0
      %v2256 = vadd.f32 0.0, %v2255
      %v2257 = vpop.f32.mrf.mxu0
      %v2258 = vadd.f32 0.0, %v2257
      %2259 = vmatmul.bf16.gmra.mxu0 %v2236
      %v2260 = vpop.f32.mrf.mxu0
      %v2261 = vadd.f32 0.0, %v2260
      %v2262 = vpop.f32.mrf.mxu0
      %v2263 = vadd.f32 0.0, %v2262
      %2264 = vmatmul.bf16.gmra.mxu0 %v2239
      %v2265 = vpop.f32.mrf.mxu0
      %v2266 = vadd.f32 0.0, %v2265
      %v2267 = vpop.f32.mrf.mxu0
      %v2268 = vadd.f32 0.0, %v2267
      %2269 = vdwg.mxu0
      %v2271 = vsel %vm987, %v1998, 0
      %v2274 = vsel %vm987, %v1999, 0
      %v2277 = vsel %vm987, %v2000, 0
      %v2280 = vsel %vm987, %v2001, 0
      %2282 = vmatpush.bf16.msra.mxu0 0
      %2283 = vmatpush.bf16.msra.mxu0 0
      %2284 = vmatpush.bf16.msra.mxu0 0
      %2285 = vmatpush.bf16.msra.mxu0 0
      %2286 = vmatpush.bf16.msra.mxu0 %v1997
      %2287 = vmatpush.bf16.msra.mxu0 %v1996
      %2288 = vmatpush.bf16.msra.mxu0 %v1995
      %2289 = vmatpush.bf16.msra.mxu0 %v1994
      %2290 = vmatmul.bf16.gmra.mxu0 %v2271
      %v2291 = vpop.f32.mrf.mxu0
      %v2292 = vadd.f32 %v2251, %v2291
      %v2293 = vpop.f32.mrf.mxu0
      %v2294 = vadd.f32 %v2253, %v2293
      %2295 = vmatmul.bf16.gmra.mxu0 %v2274
      %v2296 = vpop.f32.mrf.mxu0
      %v2297 = vadd.f32 %v2256, %v2296
      %v2298 = vpop.f32.mrf.mxu0
      %v2299 = vadd.f32 %v2258, %v2298
      %2300 = vmatmul.bf16.gmra.mxu0 %v2277
      %v2301 = vpop.f32.mrf.mxu0
      %v2302 = vadd.f32 %v2261, %v2301
      %v2303 = vpop.f32.mrf.mxu0
      %v2304 = vadd.f32 %v2263, %v2303
      %2305 = vmatmul.bf16.gmra.mxu0 %v2280
      %v2306 = vpop.f32.mrf.mxu0
      %v2307 = vadd.f32 %v2266, %v2306
      %v2308 = vpop.f32.mrf.mxu0
      %v2309 = vadd.f32 %v2268, %v2308
      %2310 = vdwg.mxu0
      %v2313 = vunpack.c.l.b16 %v1764
      %v2314 = vunpack.c.l.b16 %v1765
      %v2315 = vpack.c.b16 %v2314, %v2313
      %2317 = vxpose.xlu0.c.b16.start [1/8] %v2315, 128
      %2318 = vxpose.xlu0.c.b16.cont [2/8] 0, 128
      %2319 = vxpose.xlu0.c.b16.cont [3/8] 0, 128
      %2320 = vxpose.xlu0.c.b16.cont [4/8] 0, 128
      %2321 = vxpose.xlu0.c.b16.cont [5/8] 0, 128
      %2322 = vxpose.xlu0.c.b16.cont [6/8] 0, 128
      %2323 = vxpose.xlu0.c.b16.cont [7/8] 0, 128
      %2324 = vxpose.xlu0.c.b16.end [8/8] 0, 128
      %v2325 = vpop.trf.xlu0
      %v2326 = vpop.trf.xlu0
      %v2327 = vpop.trf.xlu0
      %v2328 = vpop.trf.xlu0
      %v2329 = vpop.trf.xlu0
      %v2330 = vpop.trf.xlu0
      %v2331 = vpop.trf.xlu0
      %v2332 = vpop.trf.xlu0
      %v2335 = vunpack.c.l.b16 %v1772
      %v2336 = vunpack.c.l.b16 %v1773
      %v2337 = vpack.c.b16 %v2336, %v2335
      %v2340 = vsel %vm1052, %v2325, 0
      %v2343 = vsel %vm1052, %v2326, 0
      %v2346 = vsel %vm1052, %v2327, 0
      %v2349 = vsel %vm1052, %v2328, 0
      %2351 = vmatpush.bf16.msra.mxu0 0
      %2352 = vmatpush.bf16.msra.mxu0 0
      %2353 = vmatpush.bf16.msra.mxu0 0
      %2354 = vmatpush.bf16.msra.mxu0 0
      %2355 = vmatpush.bf16.msra.mxu0 0
      %2356 = vmatpush.bf16.msra.mxu0 0
      %2357 = vmatpush.bf16.msra.mxu0 0
      %2358 = vmatpush.bf16.msra.mxu0 %v2337
      %2359 = vmatmul.bf16.gmra.mxu0 %v2340
      %v2360 = vpop.f32.mrf.mxu0
      %v2361 = vadd.f32 0.0, %v2360
      %v2362 = vpop.f32.mrf.mxu0
      %v2363 = vadd.f32 0.0, %v2362
      %2364 = vmatmul.bf16.gmra.mxu0 %v2343
      %v2365 = vpop.f32.mrf.mxu0
      %v2366 = vadd.f32 0.0, %v2365
      %v2367 = vpop.f32.mrf.mxu0
      %v2368 = vadd.f32 0.0, %v2367
      %2369 = vmatmul.bf16.gmra.mxu0 %v2346
      %v2370 = vpop.f32.mrf.mxu0
      %v2371 = vadd.f32 0.0, %v2370
      %v2372 = vpop.f32.mrf.mxu0
      %v2373 = vadd.f32 0.0, %v2372
      %2374 = vmatmul.bf16.gmra.mxu0 %v2349
      %v2375 = vpop.f32.mrf.mxu0
      %v2376 = vadd.f32 0.0, %v2375
      %v2377 = vpop.f32.mrf.mxu0
      %v2378 = vadd.f32 0.0, %v2377
      %2379 = vdwg.mxu0
      %v2380 = vsel %vm987, %v2361, -inf
      %2381 = vmax.xlane.f32.xlu0 %v2380
      %v2382 = vpop.xlane.xlu0 %2381
      %v2383 = vsel %vm987, %v2363, -inf
      %2384 = vmax.xlane.f32.xlu0 %v2383
      %v2385 = vpop.xlane.xlu0 %2384
      %v2386 = vsel %vm987, %v2366, -inf
      %2387 = vmax.xlane.f32.xlu0 %v2386
      %v2388 = vpop.xlane.xlu0 %2387
      %v2389 = vsel %vm987, %v2368, -inf
      %2390 = vmax.xlane.f32.xlu0 %v2389
      %v2391 = vpop.xlane.xlu0 %2390
      %v2392 = vsel %vm987, %v2371, -inf
      %2393 = vmax.xlane.f32.xlu0 %v2392
      %v2394 = vpop.xlane.xlu0 %2393
      %v2395 = vsel %vm987, %v2373, -inf
      %2396 = vmax.xlane.f32.xlu0 %v2395
      %v2397 = vpop.xlane.xlu0 %2396
      %v2398 = vsel %vm987, %v2376, -inf
      %2399 = vmax.xlane.f32.xlu0 %v2398
      %v2400 = vpop.xlane.xlu0 %2399
      %v2401 = vsel %vm987, %v2378, -inf
      %2402 = vmax.xlane.f32.xlu0 %v2401
      %v2403 = vpop.xlane.xlu0 %2402
      %v2404 = vsub.f32 %v2361, %v2382
      %v2405 = vsub.f32 %v2363, %v2385
      %v2406 = vsub.f32 %v2366, %v2388
      %v2407 = vsub.f32 %v2368, %v2391
      %v2408 = vsub.f32 %v2371, %v2394
      %v2409 = vsub.f32 %v2373, %v2397
      %v2410 = vsub.f32 %v2376, %v2400
      %v2411 = vsub.f32 %v2378, %v2403
      %v2412 = vmul.f32 %v2404, 1.442695
      %v2413 = vpow.pop %v2412
      %v2414 = vmul.f32 %v2405, 1.442695
      %v2415 = vpow.pop %v2414
      %v2416 = vmul.f32 %v2406, 1.442695
      %v2417 = vpow.pop %v2416
      %v2418 = vmul.f32 %v2407, 1.442695
      %v2419 = vpow.pop %v2418
      %v2420 = vmul.f32 %v2408, 1.442695
      %v2421 = vpow.pop %v2420
      %v2422 = vmul.f32 %v2409, 1.442695
      %v2423 = vpow.pop %v2422
      %v2424 = vmul.f32 %v2410, 1.442695
      %v2425 = vpow.pop %v2424
      %v2426 = vmul.f32 %v2411, 1.442695
      %v2427 = vpow.pop %v2426
      %v2428 = vsel %vm987, %v2413, 0.0
      %2429 = vadd.xlane.f32.xlu0 %v2428
      %v2430 = vpop.xlane.xlu0 %2429
      %v2431 = vsel %vm987, %v2415, 0.0
      %2432 = vadd.xlane.f32.xlu0 %v2431
      %v2433 = vpop.xlane.xlu0 %2432
      %v2434 = vsel %vm987, %v2417, 0.0
      %2435 = vadd.xlane.f32.xlu0 %v2434
      %v2436 = vpop.xlane.xlu0 %2435
      %v2437 = vsel %vm987, %v2419, 0.0
      %2438 = vadd.xlane.f32.xlu0 %v2437
      %v2439 = vpop.xlane.xlu0 %2438
      %v2440 = vsel %vm987, %v2421, 0.0
      %2441 = vadd.xlane.f32.xlu0 %v2440
      %v2442 = vpop.xlane.xlu0 %2441
      %v2443 = vsel %vm987, %v2423, 0.0
      %2444 = vadd.xlane.f32.xlu0 %v2443
      %v2445 = vpop.xlane.xlu0 %2444
      %v2446 = vsel %vm987, %v2425, 0.0
      %2447 = vadd.xlane.f32.xlu0 %v2446
      %v2448 = vpop.xlane.xlu0 %2447
      %v2449 = vsel %vm987, %v2427, 0.0
      %2450 = vadd.xlane.f32.xlu0 %v2449
      %v2451 = vpop.xlane.xlu0 %2450
      %v2452 = vrcp.pop %v2430
      %v2453 = vrcp.pop %v2433
      %v2454 = vrcp.pop %v2436
      %v2455 = vrcp.pop %v2439
      %v2456 = vrcp.pop %v2442
      %v2457 = vrcp.pop %v2445
      %v2458 = vrcp.pop %v2448
      %v2459 = vrcp.pop %v2451
      %v2460 = vmul.f32 %v2413, %v2452
      %v2461 = vmul.f32 %v2415, %v2453
      %v2462 = vmul.f32 %v2417, %v2454
      %v2463 = vmul.f32 %v2419, %v2455
      %v2464 = vmul.f32 %v2421, %v2456
      %v2465 = vmul.f32 %v2423, %v2457
      %v2466 = vmul.f32 %v2425, %v2458
      %v2467 = vmul.f32 %v2427, %v2459
      %s2468 = scalar_lea.vmem %s14, 64
      %v2469 = vld [vmem:[%s2468] sm:$0xf]
      %v2470 = vld [vmem:[%s2468 + $0x4] sm:$0xf]
      %v2471 = vld [vmem:[%s2468 + $0x8] sm:$0xf]
      %v2472 = vld [vmem:[%s2468 + $0xc] sm:$0xf]
      %v2473 = vld [vmem:[%s2468 + $0x10] sm:$0xf]
      %v2474 = vld [vmem:[%s2468 + $0x14] sm:$0xf]
      %v2475 = vld [vmem:[%s2468 + $0x18] sm:$0xf]
      %v2476 = vld [vmem:[%s2468 + $0x1c] sm:$0xf]
      %v2485 = vunpack.c.l.b16 %v2469
      %v2486 = vunpack.c.l.b16 %v2470
      %v2487 = vunpack.c.l.b16 %v2471
      %v2488 = vunpack.c.l.b16 %v2472
      %v2489 = vunpack.c.l.b16 %v2473
      %v2490 = vunpack.c.l.b16 %v2474
      %v2491 = vunpack.c.l.b16 %v2475
      %v2492 = vunpack.c.l.b16 %v2476
      %v2493 = vpack.c.b16 %v2486, %v2485
      %v2494 = vpack.c.b16 %v2488, %v2487
      %v2495 = vpack.c.b16 %v2490, %v2489
      %v2496 = vpack.c.b16 %v2492, %v2491
      %2501 = vmatpush.bf16.msra.mxu0 0
      %2502 = vmatpush.bf16.msra.mxu0 0
      %2503 = vmatpush.bf16.msra.mxu0 0
      %2504 = vmatpush.bf16.msra.mxu0 0
      %2505 = vmatpush.bf16.msra.mxu0 %v2496
      %2506 = vmatpush.bf16.msra.mxu0 %v2495
      %2507 = vmatpush.bf16.msra.mxu0 %v2494
      %2508 = vmatpush.bf16.msra.mxu0 %v2493
      %2509 = vmatmul.bf16.gmra.mxu0 %v1700
      %v2510 = vpop.f32.mrf.mxu0
      %v2511 = vadd.f32 0.0, %v2510
      %v2512 = vpop.f32.mrf.mxu0
      %v2513 = vadd.f32 0.0, %v2512
      %2514 = vmatmul.bf16.gmra.mxu0 %v1703
      %v2515 = vpop.f32.mrf.mxu0
      %v2516 = vadd.f32 0.0, %v2515
      %v2517 = vpop.f32.mrf.mxu0
      %v2518 = vadd.f32 0.0, %v2517
      %2519 = vmatmul.bf16.gmra.mxu0 %v1706
      %v2520 = vpop.f32.mrf.mxu0
      %v2521 = vadd.f32 0.0, %v2520
      %v2522 = vpop.f32.mrf.mxu0
      %v2523 = vadd.f32 0.0, %v2522
      %2524 = vmatmul.bf16.gmra.mxu0 %v1709
      %v2525 = vpop.f32.mrf.mxu0
      %v2526 = vadd.f32 0.0, %v2525
      %v2527 = vpop.f32.mrf.mxu0
      %v2528 = vadd.f32 0.0, %v2527
      %2529 = vdwg.mxu0
      %v2530 = vpack.c.bf16 %v2513, %v2511
      %v2531 = vpack.c.bf16 %v2518, %v2516
      %v2532 = vpack.c.bf16 %v2523, %v2521
      %v2533 = vpack.c.bf16 %v2528, %v2526
      %v2534 = vpack.c.bf16 %v2461, %v2460
      %v2535 = vpack.c.bf16 %v2463, %v2462
      %v2536 = vpack.c.bf16 %v2465, %v2464
      %v2537 = vpack.c.bf16 %v2467, %v2466
      %v2539 = vsel %vm987, %v2534, 0
      %v2542 = vsel %vm987, %v2535, 0
      %v2545 = vsel %vm987, %v2536, 0
      %v2548 = vsel %vm987, %v2537, 0
      %2550 = vmatpush.bf16.msra.mxu0 0
      %2551 = vmatpush.bf16.msra.mxu0 0
      %2552 = vmatpush.bf16.msra.mxu0 0
      %2553 = vmatpush.bf16.msra.mxu0 0
      %2554 = vmatpush.bf16.msra.mxu0 %v2533
      %2555 = vmatpush.bf16.msra.mxu0 %v2532
      %2556 = vmatpush.bf16.msra.mxu0 %v2531
      %2557 = vmatpush.bf16.msra.mxu0 %v2530
      %2558 = vmatmul.bf16.gmra.mxu0 %v2539
      %v2559 = vpop.f32.mrf.mxu0
      %v2560 = vadd.f32 0.0, %v2559
      %v2561 = vpop.f32.mrf.mxu0
      %v2562 = vadd.f32 0.0, %v2561
      %2563 = vmatmul.bf16.gmra.mxu0 %v2542
      %v2564 = vpop.f32.mrf.mxu0
      %v2565 = vadd.f32 0.0, %v2564
      %v2566 = vpop.f32.mrf.mxu0
      %v2567 = vadd.f32 0.0, %v2566
      %2568 = vmatmul.bf16.gmra.mxu0 %v2545
      %v2569 = vpop.f32.mrf.mxu0
      %v2570 = vadd.f32 0.0, %v2569
      %v2571 = vpop.f32.mrf.mxu0
      %v2572 = vadd.f32 0.0, %v2571
      %2573 = vmatmul.bf16.gmra.mxu0 %v2548
      %v2574 = vpop.f32.mrf.mxu0
      %v2575 = vadd.f32 0.0, %v2574
      %v2576 = vpop.f32.mrf.mxu0
      %v2577 = vadd.f32 0.0, %v2576
      %2578 = vdwg.mxu0
      %v2579 = vadd.f32 %v2292, %v2560
      %v2580 = vadd.f32 %v2294, %v2562
      %v2581 = vadd.f32 %v2297, %v2565
      %v2582 = vadd.f32 %v2299, %v2567
      %v2583 = vadd.f32 %v2302, %v2570
      %v2584 = vadd.f32 %v2304, %v2572
      %v2585 = vadd.f32 %v2307, %v2575
      %v2586 = vadd.f32 %v2309, %v2577
      %v2589 = vunpack.c.l.b16 %v1766
      %v2590 = vunpack.c.l.b16 %v1767
      %v2591 = vpack.c.b16 %v2590, %v2589
      %2593 = vxpose.xlu0.c.b16.start [1/8] %v2591, 128
      %2594 = vxpose.xlu0.c.b16.cont [2/8] 0, 128
      %2595 = vxpose.xlu0.c.b16.cont [3/8] 0, 128
      %2596 = vxpose.xlu0.c.b16.cont [4/8] 0, 128
      %2597 = vxpose.xlu0.c.b16.cont [5/8] 0, 128
      %2598 = vxpose.xlu0.c.b16.cont [6/8] 0, 128
      %2599 = vxpose.xlu0.c.b16.cont [7/8] 0, 128
      %2600 = vxpose.xlu0.c.b16.end [8/8] 0, 128
      %v2601 = vpop.trf.xlu0
      %v2602 = vpop.trf.xlu0
      %v2603 = vpop.trf.xlu0
      %v2604 = vpop.trf.xlu0
      %v2605 = vpop.trf.xlu0
      %v2606 = vpop.trf.xlu0
      %v2607 = vpop.trf.xlu0
      %v2608 = vpop.trf.xlu0
      %v2611 = vunpack.c.l.b16 %v1774
      %v2612 = vunpack.c.l.b16 %v1775
      %v2613 = vpack.c.b16 %v2612, %v2611
      %v2616 = vsel %vm1052, %v2601, 0
      %v2619 = vsel %vm1052, %v2602, 0
      %v2622 = vsel %vm1052, %v2603, 0
      %v2625 = vsel %vm1052, %v2604, 0
      %2627 = vmatpush.bf16.msra.mxu0 0
      %2628 = vmatpush.bf16.msra.mxu0 0
      %2629 = vmatpush.bf16.msra.mxu0 0
      %2630 = vmatpush.bf16.msra.mxu0 0
      %2631 = vmatpush.bf16.msra.mxu0 0
      %2632 = vmatpush.bf16.msra.mxu0 0
      %2633 = vmatpush.bf16.msra.mxu0 0
      %2634 = vmatpush.bf16.msra.mxu0 %v2613
      %2635 = vmatmul.bf16.gmra.mxu0 %v2616
      %v2636 = vpop.f32.mrf.mxu0
      %v2637 = vadd.f32 0.0, %v2636
      %v2638 = vpop.f32.mrf.mxu0
      %v2639 = vadd.f32 0.0, %v2638
      %2640 = vmatmul.bf16.gmra.mxu0 %v2619
      %v2641 = vpop.f32.mrf.mxu0
      %v2642 = vadd.f32 0.0, %v2641
      %v2643 = vpop.f32.mrf.mxu0
      %v2644 = vadd.f32 0.0, %v2643
      %2645 = vmatmul.bf16.gmra.mxu0 %v2622
      %v2646 = vpop.f32.mrf.mxu0
      %v2647 = vadd.f32 0.0, %v2646
      %v2648 = vpop.f32.mrf.mxu0
      %v2649 = vadd.f32 0.0, %v2648
      %2650 = vmatmul.bf16.gmra.mxu0 %v2625
      %v2651 = vpop.f32.mrf.mxu0
      %v2652 = vadd.f32 0.0, %v2651
      %v2653 = vpop.f32.mrf.mxu0
      %v2654 = vadd.f32 0.0, %v2653
      %2655 = vdwg.mxu0
      %v2656 = vsel %vm987, %v2637, -inf
      %2657 = vmax.xlane.f32.xlu0 %v2656
      %v2658 = vpop.xlane.xlu0 %2657
      %v2659 = vsel %vm987, %v2639, -inf
      %2660 = vmax.xlane.f32.xlu0 %v2659
      %v2661 = vpop.xlane.xlu0 %2660
      %v2662 = vsel %vm987, %v2642, -inf
      %2663 = vmax.xlane.f32.xlu0 %v2662
      %v2664 = vpop.xlane.xlu0 %2663
      %v2665 = vsel %vm987, %v2644, -inf
      %2666 = vmax.xlane.f32.xlu0 %v2665
      %v2667 = vpop.xlane.xlu0 %2666
      %v2668 = vsel %vm987, %v2647, -inf
      %2669 = vmax.xlane.f32.xlu0 %v2668
      %v2670 = vpop.xlane.xlu0 %2669
      %v2671 = vsel %vm987, %v2649, -inf
      %2672 = vmax.xlane.f32.xlu0 %v2671
      %v2673 = vpop.xlane.xlu0 %2672
      %v2674 = vsel %vm987, %v2652, -inf
      %2675 = vmax.xlane.f32.xlu0 %v2674
      %v2676 = vpop.xlane.xlu0 %2675
      %v2677 = vsel %vm987, %v2654, -inf
      %2678 = vmax.xlane.f32.xlu0 %v2677
      %v2679 = vpop.xlane.xlu0 %2678
      %v2680 = vsub.f32 %v2637, %v2658
      %v2681 = vsub.f32 %v2639, %v2661
      %v2682 = vsub.f32 %v2642, %v2664
      %v2683 = vsub.f32 %v2644, %v2667
      %v2684 = vsub.f32 %v2647, %v2670
      %v2685 = vsub.f32 %v2649, %v2673
      %v2686 = vsub.f32 %v2652, %v2676
      %v2687 = vsub.f32 %v2654, %v2679
      %v2688 = vmul.f32 %v2680, 1.442695
      %v2689 = vpow.pop %v2688
      %v2690 = vmul.f32 %v2681, 1.442695
      %v2691 = vpow.pop %v2690
      %v2692 = vmul.f32 %v2682, 1.442695
      %v2693 = vpow.pop %v2692
      %v2694 = vmul.f32 %v2683, 1.442695
      %v2695 = vpow.pop %v2694
      %v2696 = vmul.f32 %v2684, 1.442695
      %v2697 = vpow.pop %v2696
      %v2698 = vmul.f32 %v2685, 1.442695
      %v2699 = vpow.pop %v2698
      %v2700 = vmul.f32 %v2686, 1.442695
      %v2701 = vpow.pop %v2700
      %v2702 = vmul.f32 %v2687, 1.442695
      %v2703 = vpow.pop %v2702
      %v2704 = vsel %vm987, %v2689, 0.0
      %2705 = vadd.xlane.f32.xlu0 %v2704
      %v2706 = vpop.xlane.xlu0 %2705
      %v2707 = vsel %vm987, %v2691, 0.0
      %2708 = vadd.xlane.f32.xlu0 %v2707
      %v2709 = vpop.xlane.xlu0 %2708
      %v2710 = vsel %vm987, %v2693, 0.0
      %2711 = vadd.xlane.f32.xlu0 %v2710
      %v2712 = vpop.xlane.xlu0 %2711
      %v2713 = vsel %vm987, %v2695, 0.0
      %2714 = vadd.xlane.f32.xlu0 %v2713
      %v2715 = vpop.xlane.xlu0 %2714
      %v2716 = vsel %vm987, %v2697, 0.0
      %2717 = vadd.xlane.f32.xlu0 %v2716
      %v2718 = vpop.xlane.xlu0 %2717
      %v2719 = vsel %vm987, %v2699, 0.0
      %2720 = vadd.xlane.f32.xlu0 %v2719
      %v2721 = vpop.xlane.xlu0 %2720
      %v2722 = vsel %vm987, %v2701, 0.0
      %2723 = vadd.xlane.f32.xlu0 %v2722
      %v2724 = vpop.xlane.xlu0 %2723
      %v2725 = vsel %vm987, %v2703, 0.0
      %2726 = vadd.xlane.f32.xlu0 %v2725
      %v2727 = vpop.xlane.xlu0 %2726
      %v2728 = vrcp.pop %v2706
      %v2729 = vrcp.pop %v2709
      %v2730 = vrcp.pop %v2712
      %v2731 = vrcp.pop %v2715
      %v2732 = vrcp.pop %v2718
      %v2733 = vrcp.pop %v2721
      %v2734 = vrcp.pop %v2724
      %v2735 = vrcp.pop %v2727
      %v2736 = vmul.f32 %v2689, %v2728
      %v2737 = vmul.f32 %v2691, %v2729
      %v2738 = vmul.f32 %v2693, %v2730
      %v2739 = vmul.f32 %v2695, %v2731
      %v2740 = vmul.f32 %v2697, %v2732
      %v2741 = vmul.f32 %v2699, %v2733
      %v2742 = vmul.f32 %v2701, %v2734
      %v2743 = vmul.f32 %v2703, %v2735
      %s2744 = scalar_lea.vmem %s14, 96
      %v2745 = vld [vmem:[%s2744] sm:$0xf]
      %v2746 = vld [vmem:[%s2744 + $0x4] sm:$0xf]
      %v2747 = vld [vmem:[%s2744 + $0x8] sm:$0xf]
      %v2748 = vld [vmem:[%s2744 + $0xc] sm:$0xf]
      %v2749 = vld [vmem:[%s2744 + $0x10] sm:$0xf]
      %v2750 = vld [vmem:[%s2744 + $0x14] sm:$0xf]
      %v2751 = vld [vmem:[%s2744 + $0x18] sm:$0xf]
      %v2752 = vld [vmem:[%s2744 + $0x1c] sm:$0xf]
      %v2761 = vunpack.c.l.b16 %v2745
      %v2762 = vunpack.c.l.b16 %v2746
      %v2763 = vunpack.c.l.b16 %v2747
      %v2764 = vunpack.c.l.b16 %v2748
      %v2765 = vunpack.c.l.b16 %v2749
      %v2766 = vunpack.c.l.b16 %v2750
      %v2767 = vunpack.c.l.b16 %v2751
      %v2768 = vunpack.c.l.b16 %v2752
      %v2769 = vpack.c.b16 %v2762, %v2761
      %v2770 = vpack.c.b16 %v2764, %v2763
      %v2771 = vpack.c.b16 %v2766, %v2765
      %v2772 = vpack.c.b16 %v2768, %v2767
      %2777 = vmatpush.bf16.msra.mxu0 0
      %2778 = vmatpush.bf16.msra.mxu0 0
      %2779 = vmatpush.bf16.msra.mxu0 0
      %2780 = vmatpush.bf16.msra.mxu0 0
      %2781 = vmatpush.bf16.msra.mxu0 %v2772
      %2782 = vmatpush.bf16.msra.mxu0 %v2771
      %2783 = vmatpush.bf16.msra.mxu0 %v2770
      %2784 = vmatpush.bf16.msra.mxu0 %v2769
      %2785 = vmatmul.bf16.gmra.mxu0 %v1700
      %v2786 = vpop.f32.mrf.mxu0
      %v2787 = vadd.f32 0.0, %v2786
      %v2788 = vpop.f32.mrf.mxu0
      %v2789 = vadd.f32 0.0, %v2788
      %2790 = vmatmul.bf16.gmra.mxu0 %v1703
      %v2791 = vpop.f32.mrf.mxu0
      %v2792 = vadd.f32 0.0, %v2791
      %v2793 = vpop.f32.mrf.mxu0
      %v2794 = vadd.f32 0.0, %v2793
      %2795 = vmatmul.bf16.gmra.mxu0 %v1706
      %v2796 = vpop.f32.mrf.mxu0
      %v2797 = vadd.f32 0.0, %v2796
      %v2798 = vpop.f32.mrf.mxu0
      %v2799 = vadd.f32 0.0, %v2798
      %2800 = vmatmul.bf16.gmra.mxu0 %v1709
      %v2801 = vpop.f32.mrf.mxu0
      %v2802 = vadd.f32 0.0, %v2801
      %v2803 = vpop.f32.mrf.mxu0
      %v2804 = vadd.f32 0.0, %v2803
      %2805 = vdwg.mxu0
      %v2806 = vpack.c.bf16 %v2789, %v2787
      %v2807 = vpack.c.bf16 %v2794, %v2792
      %v2808 = vpack.c.bf16 %v2799, %v2797
      %v2809 = vpack.c.bf16 %v2804, %v2802
      %v2810 = vpack.c.bf16 %v2737, %v2736
      %v2811 = vpack.c.bf16 %v2739, %v2738
      %v2812 = vpack.c.bf16 %v2741, %v2740
      %v2813 = vpack.c.bf16 %v2743, %v2742
      %v2815 = vsel %vm987, %v2810, 0
      %v2818 = vsel %vm987, %v2811, 0
      %v2821 = vsel %vm987, %v2812, 0
      %v2824 = vsel %vm987, %v2813, 0
      %2826 = vmatpush.bf16.msra.mxu0 0
      %2827 = vmatpush.bf16.msra.mxu0 0
      %2828 = vmatpush.bf16.msra.mxu0 0
      %2829 = vmatpush.bf16.msra.mxu0 0
      %2830 = vmatpush.bf16.msra.mxu0 %v2809
      %2831 = vmatpush.bf16.msra.mxu0 %v2808
      %2832 = vmatpush.bf16.msra.mxu0 %v2807
      %2833 = vmatpush.bf16.msra.mxu0 %v2806
      %2834 = vmatmul.bf16.gmra.mxu0 %v2815
      %v2835 = vpop.f32.mrf.mxu0
      %v2836 = vadd.f32 0.0, %v2835
      %v2837 = vpop.f32.mrf.mxu0
      %v2838 = vadd.f32 0.0, %v2837
      %2839 = vmatmul.bf16.gmra.mxu0 %v2818
      %v2840 = vpop.f32.mrf.mxu0
      %v2841 = vadd.f32 0.0, %v2840
      %v2842 = vpop.f32.mrf.mxu0
      %v2843 = vadd.f32 0.0, %v2842
      %2844 = vmatmul.bf16.gmra.mxu0 %v2821
      %v2845 = vpop.f32.mrf.mxu0
      %v2846 = vadd.f32 0.0, %v2845
      %v2847 = vpop.f32.mrf.mxu0
      %v2848 = vadd.f32 0.0, %v2847
      %2849 = vmatmul.bf16.gmra.mxu0 %v2824
      %v2850 = vpop.f32.mrf.mxu0
      %v2851 = vadd.f32 0.0, %v2850
      %v2852 = vpop.f32.mrf.mxu0
      %v2853 = vadd.f32 0.0, %v2852
      %2854 = vdwg.mxu0
      %v2855 = vadd.f32 %v2579, %v2836
      %v2856 = vadd.f32 %v2580, %v2838
      %v2857 = vadd.f32 %v2581, %v2841
      %v2858 = vadd.f32 %v2582, %v2843
      %v2859 = vadd.f32 %v2583, %v2846
      %v2860 = vadd.f32 %v2584, %v2848
      %v2861 = vadd.f32 %v2585, %v2851
      %v2862 = vadd.f32 %v2586, %v2853
      %v2863 = vld [vmem:[%s15] sm:$0x1]
      %v2865 = vperm.slane %v2863, 0
      %v2867 = vadd.f32 %v2855, %v2865
      %v2868 = vadd.f32 %v2856, %v2865
      %v2869 = vadd.f32 %v2857, %v2865
      %v2870 = vadd.f32 %v2858, %v2865
      %v2871 = vadd.f32 %v2859, %v2865
      %v2872 = vadd.f32 %v2860, %v2865
      %v2873 = vadd.f32 %v2861, %v2865
      %v2874 = vadd.f32 %v2862, %v2865
      %v2875 = vmul.f32 %v1293, %v2867
      %v2876 = vmul.f32 %v1295, %v2868
      %v2877 = vmul.f32 %v1298, %v2869
      %v2878 = vmul.f32 %v1300, %v2870
      %v2879 = vmul.f32 %v1303, %v2871
      %v2880 = vmul.f32 %v1305, %v2872
      %v2881 = vmul.f32 %v1308, %v2873
      %v2882 = vmul.f32 %v1310, %v2874
      %v2883 = vadd.f32 %v1102, %v2875
      %v2884 = vadd.f32 %v1103, %v2876
      %v2885 = vadd.f32 %v1104, %v2877
      %v2886 = vadd.f32 %v1105, %v2878
      %v2887 = vadd.f32 %v1106, %v2879
      %v2888 = vadd.f32 %v1107, %v2880
      %v2889 = vadd.f32 %v1108, %v2881
      %v2890 = vadd.f32 %v1109, %v2882
      %s2891 = scalar_lea.vmem %s10, 96
      %v2892 = vld [vmem:[%s2891] sm:$0xf]
      %v2893 = vld [vmem:[%s2891 + $0x4] sm:$0xf]
      %v2894 = vld [vmem:[%s2891 + $0x8] sm:$0xf]
      %v2895 = vld [vmem:[%s2891 + $0xc] sm:$0xf]
      %v2896 = vld [vmem:[%s2891 + $0x10] sm:$0xf]
      %v2897 = vld [vmem:[%s2891 + $0x14] sm:$0xf]
      %v2898 = vld [vmem:[%s2891 + $0x18] sm:$0xf]
      %v2899 = vld [vmem:[%s2891 + $0x1c] sm:$0xf]
      %s2900 = scalar_lea.vmem %s11, 3
      %v2901 = vld [vmem:[%s2900] sm:$0x1]
      %v2903 = vperm.slane %v2901, 0
      %v2913 = vunpack.c.l.b16 %v2892
      %v2914 = vunpack.c.l.b16 %v2893
      %v2915 = vunpack.c.l.b16 %v2894
      %v2916 = vunpack.c.l.b16 %v2895
      %v2917 = vunpack.c.l.b16 %v2896
      %v2918 = vunpack.c.l.b16 %v2897
      %v2919 = vunpack.c.l.b16 %v2898
      %v2920 = vunpack.c.l.b16 %v2899
      %v2921 = vpack.c.b16 %v2914, %v2913
      %v2922 = vpack.c.b16 %v2916, %v2915
      %v2923 = vpack.c.b16 %v2918, %v2917
      %v2924 = vpack.c.b16 %v2920, %v2919
      %2929 = vmatpush.bf16.msra.mxu0 0
      %2930 = vmatpush.bf16.msra.mxu0 0
      %2931 = vmatpush.bf16.msra.mxu0 0
      %2932 = vmatpush.bf16.msra.mxu0 0
      %2933 = vmatpush.bf16.msra.mxu0 %v2924
      %2934 = vmatpush.bf16.msra.mxu0 %v2923
      %2935 = vmatpush.bf16.msra.mxu0 %v2922
      %2936 = vmatpush.bf16.msra.mxu0 %v2921
      %2937 = vmatmul.bf16.gmra.mxu0 %v1147
      %v2938 = vpop.f32.mrf.mxu0
      %v2939 = vadd.f32 %v2903, %v2938
      %v2940 = vpop.f32.mrf.mxu0
      %v2941 = vadd.f32 %v2903, %v2940
      %2942 = vmatmul.bf16.gmra.mxu0 %v1147
      %v2943 = vpop.f32.mrf.mxu0
      %v2944 = vadd.f32 %v2903, %v2943
      %v2945 = vpop.f32.mrf.mxu0
      %v2946 = vadd.f32 %v2903, %v2945
      %2947 = vmatmul.bf16.gmra.mxu0 %v1147
      %v2948 = vpop.f32.mrf.mxu0
      %v2949 = vadd.f32 %v2903, %v2948
      %v2950 = vpop.f32.mrf.mxu0
      %v2951 = vadd.f32 %v2903, %v2950
      %2952 = vmatmul.bf16.gmra.mxu0 %v1147
      %v2953 = vpop.f32.mrf.mxu0
      %v2954 = vadd.f32 %v2903, %v2953
      %v2955 = vpop.f32.mrf.mxu0
      %v2956 = vadd.f32 %v2903, %v2955
      %2957 = vdwg.mxu0
      %s2958 = scalar_lea.vmem %s10, 128
      %v2959 = vld [vmem:[%s2958] sm:$0xf]
      %v2960 = vld [vmem:[%s2958 + $0x4] sm:$0xf]
      %v2961 = vld [vmem:[%s2958 + $0x8] sm:$0xf]
      %v2962 = vld [vmem:[%s2958 + $0xc] sm:$0xf]
      %v2963 = vld [vmem:[%s2958 + $0x10] sm:$0xf]
      %v2964 = vld [vmem:[%s2958 + $0x14] sm:$0xf]
      %v2965 = vld [vmem:[%s2958 + $0x18] sm:$0xf]
      %v2966 = vld [vmem:[%s2958 + $0x1c] sm:$0xf]
      %s2967 = scalar_lea.vmem %s11, 4
      %v2968 = vld [vmem:[%s2967] sm:$0x1]
      %v2970 = vperm.slane %v2968, 0
      %v2980 = vunpack.c.l.b16 %v2959
      %v2981 = vunpack.c.l.b16 %v2960
      %v2982 = vunpack.c.l.b16 %v2961
      %v2983 = vunpack.c.l.b16 %v2962
      %v2984 = vunpack.c.l.b16 %v2963
      %v2985 = vunpack.c.l.b16 %v2964
      %v2986 = vunpack.c.l.b16 %v2965
      %v2987 = vunpack.c.l.b16 %v2966
      %v2988 = vpack.c.b16 %v2981, %v2980
      %v2989 = vpack.c.b16 %v2983, %v2982
      %v2990 = vpack.c.b16 %v2985, %v2984
      %v2991 = vpack.c.b16 %v2987, %v2986
      %2996 = vmatpush.bf16.msra.mxu0 0
      %2997 = vmatpush.bf16.msra.mxu0 0
      %2998 = vmatpush.bf16.msra.mxu0 0
      %2999 = vmatpush.bf16.msra.mxu0 0
      %3000 = vmatpush.bf16.msra.mxu0 %v2991
      %3001 = vmatpush.bf16.msra.mxu0 %v2990
      %3002 = vmatpush.bf16.msra.mxu0 %v2989
      %3003 = vmatpush.bf16.msra.mxu0 %v2988
      %3004 = vmatmul.bf16.gmra.mxu0 %v1147
      %v3005 = vpop.f32.mrf.mxu0
      %v3006 = vadd.f32 %v2970, %v3005
      %v3007 = vpop.f32.mrf.mxu0
      %v3008 = vadd.f32 %v2970, %v3007
      %3009 = vmatmul.bf16.gmra.mxu0 %v1147
      %v3010 = vpop.f32.mrf.mxu0
      %v3011 = vadd.f32 %v2970, %v3010
      %v3012 = vpop.f32.mrf.mxu0
      %v3013 = vadd.f32 %v2970, %v3012
      %3014 = vmatmul.bf16.gmra.mxu0 %v1147
      %v3015 = vpop.f32.mrf.mxu0
      %v3016 = vadd.f32 %v2970, %v3015
      %v3017 = vpop.f32.mrf.mxu0
      %v3018 = vadd.f32 %v2970, %v3017
      %3019 = vmatmul.bf16.gmra.mxu0 %v1147
      %v3020 = vpop.f32.mrf.mxu0
      %v3021 = vadd.f32 %v2970, %v3020
      %v3022 = vpop.f32.mrf.mxu0
      %v3023 = vadd.f32 %v2970, %v3022
      %3024 = vdwg.mxu0
      %s3025 = scalar_lea.vmem %s10, 160
      %v3026 = vld [vmem:[%s3025] sm:$0xf]
      %v3027 = vld [vmem:[%s3025 + $0x4] sm:$0xf]
      %v3028 = vld [vmem:[%s3025 + $0x8] sm:$0xf]
      %v3029 = vld [vmem:[%s3025 + $0xc] sm:$0xf]
      %v3030 = vld [vmem:[%s3025 + $0x10] sm:$0xf]
      %v3031 = vld [vmem:[%s3025 + $0x14] sm:$0xf]
      %v3032 = vld [vmem:[%s3025 + $0x18] sm:$0xf]
      %v3033 = vld [vmem:[%s3025 + $0x1c] sm:$0xf]
      %s3034 = scalar_lea.vmem %s11, 5
      %v3035 = vld [vmem:[%s3034] sm:$0x1]
      %v3037 = vperm.slane %v3035, 0
      %v3047 = vunpack.c.l.b16 %v3026
      %v3048 = vunpack.c.l.b16 %v3027
      %v3049 = vunpack.c.l.b16 %v3028
      %v3050 = vunpack.c.l.b16 %v3029
      %v3051 = vunpack.c.l.b16 %v3030
      %v3052 = vunpack.c.l.b16 %v3031
      %v3053 = vunpack.c.l.b16 %v3032
      %v3054 = vunpack.c.l.b16 %v3033
      %v3055 = vpack.c.b16 %v3048, %v3047
      %v3056 = vpack.c.b16 %v3050, %v3049
      %v3057 = vpack.c.b16 %v3052, %v3051
      %v3058 = vpack.c.b16 %v3054, %v3053
      %3063 = vmatpush.bf16.msra.mxu0 0
      %3064 = vmatpush.bf16.msra.mxu0 0
      %3065 = vmatpush.bf16.msra.mxu0 0
      %3066 = vmatpush.bf16.msra.mxu0 0
      %3067 = vmatpush.bf16.msra.mxu0 %v3058
      %3068 = vmatpush.bf16.msra.mxu0 %v3057
      %3069 = vmatpush.bf16.msra.mxu0 %v3056
      %3070 = vmatpush.bf16.msra.mxu0 %v3055
      %3071 = vmatmul.bf16.gmra.mxu0 %v1147
      %v3072 = vpop.f32.mrf.mxu0
      %v3073 = vadd.f32 %v3037, %v3072
      %v3074 = vpop.f32.mrf.mxu0
      %v3075 = vadd.f32 %v3037, %v3074
      %3076 = vmatmul.bf16.gmra.mxu0 %v1147
      %v3077 = vpop.f32.mrf.mxu0
      %v3078 = vadd.f32 %v3037, %v3077
      %v3079 = vpop.f32.mrf.mxu0
      %v3080 = vadd.f32 %v3037, %v3079
      %3081 = vmatmul.bf16.gmra.mxu0 %v1147
      %v3082 = vpop.f32.mrf.mxu0
      %v3083 = vadd.f32 %v3037, %v3082
      %v3084 = vpop.f32.mrf.mxu0
      %v3085 = vadd.f32 %v3037, %v3084
      %3086 = vmatmul.bf16.gmra.mxu0 %v1147
      %v3087 = vpop.f32.mrf.mxu0
      %v3088 = vadd.f32 %v3037, %v3087
      %v3089 = vpop.f32.mrf.mxu0
      %v3090 = vadd.f32 %v3037, %v3089
      %3091 = vdwg.mxu0
      %v3092 = vsel %vm987, %v2883, 0.0
      %3093 = vadd.xlane.f32.xlu0 %v3092
      %v3094 = vpop.xlane.xlu0 %3093
      %v3095 = vsel %vm987, %v2884, 0.0
      %3096 = vadd.xlane.f32.xlu0 %v3095
      %v3097 = vpop.xlane.xlu0 %3096
      %v3098 = vsel %vm987, %v2885, 0.0
      %3099 = vadd.xlane.f32.xlu0 %v3098
      %v3100 = vpop.xlane.xlu0 %3099
      %v3101 = vsel %vm987, %v2886, 0.0
      %3102 = vadd.xlane.f32.xlu0 %v3101
      %v3103 = vpop.xlane.xlu0 %3102
      %v3104 = vsel %vm987, %v2887, 0.0
      %3105 = vadd.xlane.f32.xlu0 %v3104
      %v3106 = vpop.xlane.xlu0 %3105
      %v3107 = vsel %vm987, %v2888, 0.0
      %3108 = vadd.xlane.f32.xlu0 %v3107
      %v3109 = vpop.xlane.xlu0 %3108
      %v3110 = vsel %vm987, %v2889, 0.0
      %3111 = vadd.xlane.f32.xlu0 %v3110
      %v3112 = vpop.xlane.xlu0 %3111
      %v3113 = vsel %vm987, %v2890, 0.0
      %3114 = vadd.xlane.f32.xlu0 %v3113
      %v3115 = vpop.xlane.xlu0 %3114
      %v3116 = vmul.f32 %v3094, %v1342
      %v3117 = vmul.f32 %v3097, %v1342
      %v3118 = vmul.f32 %v3100, %v1342
      %v3119 = vmul.f32 %v3103, %v1342
      %v3120 = vmul.f32 %v3106, %v1342
      %v3121 = vmul.f32 %v3109, %v1342
      %v3122 = vmul.f32 %v3112, %v1342
      %v3123 = vmul.f32 %v3115, %v1342
      %v3124 = vsub.f32 %v2883, %v3116
      %v3125 = vsub.f32 %v2884, %v3117
      %v3126 = vsub.f32 %v2885, %v3118
      %v3127 = vsub.f32 %v2886, %v3119
      %v3128 = vsub.f32 %v2887, %v3120
      %v3129 = vsub.f32 %v2888, %v3121
      %v3130 = vsub.f32 %v2889, %v3122
      %v3131 = vsub.f32 %v2890, %v3123
      %v3132 = vmul.f32 %v3124, %v3124
      %v3133 = vmul.f32 %v3125, %v3125
      %v3134 = vmul.f32 %v3126, %v3126
      %v3135 = vmul.f32 %v3127, %v3127
      %v3136 = vmul.f32 %v3128, %v3128
      %v3137 = vmul.f32 %v3129, %v3129
      %v3138 = vmul.f32 %v3130, %v3130
      %v3139 = vmul.f32 %v3131, %v3131
      %v3140 = vsel %vm987, %v3132, 0.0
      %3141 = vadd.xlane.f32.xlu0 %v3140
      %v3142 = vpop.xlane.xlu0 %3141
      %v3143 = vsel %vm987, %v3133, 0.0
      %3144 = vadd.xlane.f32.xlu0 %v3143
      %v3145 = vpop.xlane.xlu0 %3144
      %v3146 = vsel %vm987, %v3134, 0.0
      %3147 = vadd.xlane.f32.xlu0 %v3146
      %v3148 = vpop.xlane.xlu0 %3147
      %v3149 = vsel %vm987, %v3135, 0.0
      %3150 = vadd.xlane.f32.xlu0 %v3149
      %v3151 = vpop.xlane.xlu0 %3150
      %v3152 = vsel %vm987, %v3136, 0.0
      %3153 = vadd.xlane.f32.xlu0 %v3152
      %v3154 = vpop.xlane.xlu0 %3153
      %v3155 = vsel %vm987, %v3137, 0.0
      %3156 = vadd.xlane.f32.xlu0 %v3155
      %v3157 = vpop.xlane.xlu0 %3156
      %v3158 = vsel %vm987, %v3138, 0.0
      %3159 = vadd.xlane.f32.xlu0 %v3158
      %v3160 = vpop.xlane.xlu0 %3159
      %v3161 = vsel %vm987, %v3139, 0.0
      %3162 = vadd.xlane.f32.xlu0 %v3161
      %v3163 = vpop.xlane.xlu0 %3162
      %v3164 = vmul.f32 %v3142, %v1342
      %v3165 = vmul.f32 %v3145, %v1342
      %v3166 = vmul.f32 %v3148, %v1342
      %v3167 = vmul.f32 %v3151, %v1342
      %v3168 = vmul.f32 %v3154, %v1342
      %v3169 = vmul.f32 %v3157, %v1342
      %v3170 = vmul.f32 %v3160, %v1342
      %v3171 = vmul.f32 %v3163, %v1342
      %v3172 = vadd.f32 %v3164, 1e-06
      %v3173 = vadd.f32 %v3165, 1e-06
      %v3174 = vadd.f32 %v3166, 1e-06
      %v3175 = vadd.f32 %v3167, 1e-06
      %v3176 = vadd.f32 %v3168, 1e-06
      %v3177 = vadd.f32 %v3169, 1e-06
      %v3178 = vadd.f32 %v3170, 1e-06
      %v3179 = vadd.f32 %v3171, 1e-06
      %v3180 = vrsqrt.pop %v3172
      %v3181 = vmul.f32 %v3180, %v3172
      %v3182 = vmul.f32 %v3181, %v3180
      %v3183 = vmul.f32 0.5, %v3182
      %v3184 = vsub.f32 1.5, %v3183
      %v3185 = vmul.f32 %v3180, %v3184
      %vm3186 = vweird.f32 %v3172
      %vm3187 = vweird.f32 %v3180
      %vm3188 = vmor %vm3186, %vm3187
      %v3189 = vsel %vm3188, %v3180, %v3185
      %v3190 = vrsqrt.pop %v3173
      %v3191 = vmul.f32 %v3190, %v3173
      %v3192 = vmul.f32 %v3191, %v3190
      %v3193 = vmul.f32 0.5, %v3192
      %v3194 = vsub.f32 1.5, %v3193
      %v3195 = vmul.f32 %v3190, %v3194
      %vm3196 = vweird.f32 %v3173
      %vm3197 = vweird.f32 %v3190
      %vm3198 = vmor %vm3196, %vm3197
      %v3199 = vsel %vm3198, %v3190, %v3195
      %v3200 = vrsqrt.pop %v3174
      %v3201 = vmul.f32 %v3200, %v3174
      %v3202 = vmul.f32 %v3201, %v3200
      %v3203 = vmul.f32 0.5, %v3202
      %v3204 = vsub.f32 1.5, %v3203
      %v3205 = vmul.f32 %v3200, %v3204
      %vm3206 = vweird.f32 %v3174
      %vm3207 = vweird.f32 %v3200
      %vm3208 = vmor %vm3206, %vm3207
      %v3209 = vsel %vm3208, %v3200, %v3205
      %v3210 = vrsqrt.pop %v3175
      %v3211 = vmul.f32 %v3210, %v3175
      %v3212 = vmul.f32 %v3211, %v3210
      %v3213 = vmul.f32 0.5, %v3212
      %v3214 = vsub.f32 1.5, %v3213
      %v3215 = vmul.f32 %v3210, %v3214
      %vm3216 = vweird.f32 %v3175
      %vm3217 = vweird.f32 %v3210
      %vm3218 = vmor %vm3216, %vm3217
      %v3219 = vsel %vm3218, %v3210, %v3215
      %v3220 = vrsqrt.pop %v3176
      %v3221 = vmul.f32 %v3220, %v3176
      %v3222 = vmul.f32 %v3221, %v3220
      %v3223 = vmul.f32 0.5, %v3222
      %v3224 = vsub.f32 1.5, %v3223
      %v3225 = vmul.f32 %v3220, %v3224
      %vm3226 = vweird.f32 %v3176
      %vm3227 = vweird.f32 %v3220
      %vm3228 = vmor %vm3226, %vm3227
      %v3229 = vsel %vm3228, %v3220, %v3225
      %v3230 = vrsqrt.pop %v3177
      %v3231 = vmul.f32 %v3230, %v3177
      %v3232 = vmul.f32 %v3231, %v3230
      %v3233 = vmul.f32 0.5, %v3232
      %v3234 = vsub.f32 1.5, %v3233
      %v3235 = vmul.f32 %v3230, %v3234
      %vm3236 = vweird.f32 %v3177
      %vm3237 = vweird.f32 %v3230
      %vm3238 = vmor %vm3236, %vm3237
      %v3239 = vsel %vm3238, %v3230, %v3235
      %v3240 = vrsqrt.pop %v3178
      %v3241 = vmul.f32 %v3240, %v3178
      %v3242 = vmul.f32 %v3241, %v3240
      %v3243 = vmul.f32 0.5, %v3242
      %v3244 = vsub.f32 1.5, %v3243
      %v3245 = vmul.f32 %v3240, %v3244
      %vm3246 = vweird.f32 %v3178
      %vm3247 = vweird.f32 %v3240
      %vm3248 = vmor %vm3246, %vm3247
      %v3249 = vsel %vm3248, %v3240, %v3245
      %v3250 = vrsqrt.pop %v3179
      %v3251 = vmul.f32 %v3250, %v3179
      %v3252 = vmul.f32 %v3251, %v3250
      %v3253 = vmul.f32 0.5, %v3252
      %v3254 = vsub.f32 1.5, %v3253
      %v3255 = vmul.f32 %v3250, %v3254
      %vm3256 = vweird.f32 %v3179
      %vm3257 = vweird.f32 %v3250
      %vm3258 = vmor %vm3256, %vm3257
      %v3259 = vsel %vm3258, %v3250, %v3255
      %v3260 = vmul.f32 %v3124, %v3189
      %v3261 = vmul.f32 %v3125, %v3199
      %v3262 = vmul.f32 %v3126, %v3209
      %v3263 = vmul.f32 %v3127, %v3219
      %v3264 = vmul.f32 %v3128, %v3229
      %v3265 = vmul.f32 %v3129, %v3239
      %v3266 = vmul.f32 %v3130, %v3249
      %v3267 = vmul.f32 %v3131, %v3259
      %v3268 = vadd.f32 %v3006, 1.0
      %v3269 = vadd.f32 %v3008, 1.0
      %v3270 = vadd.f32 %v3011, 1.0
      %v3271 = vadd.f32 %v3013, 1.0
      %v3272 = vadd.f32 %v3016, 1.0
      %v3273 = vadd.f32 %v3018, 1.0
      %v3274 = vadd.f32 %v3021, 1.0
      %v3275 = vadd.f32 %v3023, 1.0
      %v3276 = vmul.f32 %v3260, %v3268
      %v3277 = vmul.f32 %v3261, %v3269
      %v3278 = vmul.f32 %v3262, %v3270
      %v3279 = vmul.f32 %v3263, %v3271
      %v3280 = vmul.f32 %v3264, %v3272
      %v3281 = vmul.f32 %v3265, %v3273
      %v3282 = vmul.f32 %v3266, %v3274
      %v3283 = vmul.f32 %v3267, %v3275
      %v3284 = vadd.f32 %v3276, %v2939
      %v3285 = vadd.f32 %v3277, %v2941
      %v3286 = vadd.f32 %v3278, %v2944
      %v3287 = vadd.f32 %v3279, %v2946
      %v3288 = vadd.f32 %v3280, %v2949
      %v3289 = vadd.f32 %v3281, %v2951
      %v3290 = vadd.f32 %v3282, %v2954
      %v3291 = vadd.f32 %v3283, %v2956
      %v3292 = vpack.c.bf16 %v3285, %v3284
      %v3293 = vpack.c.bf16 %v3287, %v3286
      %v3294 = vpack.c.bf16 %v3289, %v3288
      %v3295 = vpack.c.bf16 %v3291, %v3290
      %v3296 = vld [vmem:[%s16] sm:$0xff]
      %v3297 = vld [vmem:[%s16 + $0x8] sm:$0xff]
      %v3298 = vld [vmem:[%s16 + $0x10] sm:$0xff]
      %v3299 = vld [vmem:[%s16 + $0x18] sm:$0xff]
      %v3300 = vld [vmem:[%s16 + $0x20] sm:$0xff]
      %v3301 = vld [vmem:[%s16 + $0x28] sm:$0xff]
      %v3302 = vld [vmem:[%s16 + $0x30] sm:$0xff]
      %v3303 = vld [vmem:[%s16 + $0x38] sm:$0xff]
      %v3304 = vld [vmem:[%s17] sm:$0x3]
      %v3306 = vperm.slane %v3304, 0
      %v3307 = vperm.slane %v3304, 1
      %v3318 = vunpack.c.l.b16 %v3296
      %v3319 = vunpack.c.h.b16 %v3296
      %v3320 = vunpack.c.l.b16 %v3297
      %v3321 = vunpack.c.h.b16 %v3297
      %v3322 = vunpack.c.l.b16 %v3298
      %v3323 = vunpack.c.h.b16 %v3298
      %v3324 = vunpack.c.l.b16 %v3299
      %v3325 = vunpack.c.h.b16 %v3299
      %v3326 = vunpack.c.l.b16 %v3300
      %v3327 = vunpack.c.h.b16 %v3300
      %v3328 = vunpack.c.l.b16 %v3301
      %v3329 = vunpack.c.h.b16 %v3301
      %v3330 = vunpack.c.l.b16 %v3302
      %v3331 = vunpack.c.h.b16 %v3302
      %v3332 = vunpack.c.l.b16 %v3303
      %v3333 = vunpack.c.h.b16 %v3303
      %v3334 = vpack.c.b16 %v3320, %v3318
      %v3335 = vpack.c.b16 %v3321, %v3319
      %v3336 = vpack.c.b16 %v3324, %v3322
      %v3337 = vpack.c.b16 %v3325, %v3323
      %v3338 = vpack.c.b16 %v3328, %v3326
      %v3339 = vpack.c.b16 %v3329, %v3327
      %v3340 = vpack.c.b16 %v3332, %v3330
      %v3341 = vpack.c.b16 %v3333, %v3331
      %v3351 = vsel %vm987, %v3292, 0
      %v3354 = vsel %vm987, %v3293, 0
      %v3357 = vsel %vm987, %v3294, 0
      %v3360 = vsel %vm987, %v3295, 0
      %3362 = vmatpush.bf16.msra.mxu0 0
      %3363 = vmatpush.bf16.msra.mxu0 0
      %3364 = vmatpush.bf16.msra.mxu0 0
      %3365 = vmatpush.bf16.msra.mxu0 0
      %3366 = vmatpush.bf16.msra.mxu0 %v3340
      %3367 = vmatpush.bf16.msra.mxu0 %v3338
      %3368 = vmatpush.bf16.msra.mxu0 %v3336
      %3369 = vmatpush.bf16.msra.mxu0 %v3334
      %3370 = vmatmul.bf16.gmra.mxu0 %v3351
      %v3371 = vpop.f32.mrf.mxu0
      %v3372 = vadd.f32 %v3306, %v3371
      %v3373 = vpop.f32.mrf.mxu0
      %v3374 = vadd.f32 %v3306, %v3373
      %3375 = vmatmul.bf16.gmra.mxu0 %v3354
      %v3376 = vpop.f32.mrf.mxu0
      %v3377 = vadd.f32 %v3306, %v3376
      %v3378 = vpop.f32.mrf.mxu0
      %v3379 = vadd.f32 %v3306, %v3378
      %3380 = vmatmul.bf16.gmra.mxu0 %v3357
      %v3381 = vpop.f32.mrf.mxu0
      %v3382 = vadd.f32 %v3306, %v3381
      %v3383 = vpop.f32.mrf.mxu0
      %v3384 = vadd.f32 %v3306, %v3383
      %3385 = vmatmul.bf16.gmra.mxu0 %v3360
      %v3386 = vpop.f32.mrf.mxu0
      %v3387 = vadd.f32 %v3306, %v3386
      %v3388 = vpop.f32.mrf.mxu0
      %v3389 = vadd.f32 %v3306, %v3388
      %3390 = vdwg.mxu0
      %3391 = vmatpush.bf16.msra.mxu0 0
      %3392 = vmatpush.bf16.msra.mxu0 0
      %3393 = vmatpush.bf16.msra.mxu0 0
      %3394 = vmatpush.bf16.msra.mxu0 0
      %3395 = vmatpush.bf16.msra.mxu0 %v3341
      %3396 = vmatpush.bf16.msra.mxu0 %v3339
      %3397 = vmatpush.bf16.msra.mxu0 %v3337
      %3398 = vmatpush.bf16.msra.mxu0 %v3335
      %3399 = vmatmul.bf16.gmra.mxu0 %v3351
      %v3400 = vpop.f32.mrf.mxu0
      %v3401 = vadd.f32 %v3307, %v3400
      %v3402 = vpop.f32.mrf.mxu0
      %v3403 = vadd.f32 %v3307, %v3402
      %3404 = vmatmul.bf16.gmra.mxu0 %v3354
      %v3405 = vpop.f32.mrf.mxu0
      %v3406 = vadd.f32 %v3307, %v3405
      %v3407 = vpop.f32.mrf.mxu0
      %v3408 = vadd.f32 %v3307, %v3407
      %3409 = vmatmul.bf16.gmra.mxu0 %v3357
      %v3410 = vpop.f32.mrf.mxu0
      %v3411 = vadd.f32 %v3307, %v3410
      %v3412 = vpop.f32.mrf.mxu0
      %v3413 = vadd.f32 %v3307, %v3412
      %3414 = vmatmul.bf16.gmra.mxu0 %v3360
      %v3415 = vpop.f32.mrf.mxu0
      %v3416 = vadd.f32 %v3307, %v3415
      %v3417 = vpop.f32.mrf.mxu0
      %v3418 = vadd.f32 %v3307, %v3417
      %3419 = vdwg.mxu0
      %v3420 = vmul.f32 %v3372, 0.5
      %v3421 = vmul.f32 %v3401, 0.5
      %v3422 = vmul.f32 %v3374, 0.5
      %v3423 = vmul.f32 %v3403, 0.5
      %v3424 = vmul.f32 %v3377, 0.5
      %v3425 = vmul.f32 %v3406, 0.5
      %v3426 = vmul.f32 %v3379, 0.5
      %v3427 = vmul.f32 %v3408, 0.5
      %v3428 = vmul.f32 %v3382, 0.5
      %v3429 = vmul.f32 %v3411, 0.5
      %v3430 = vmul.f32 %v3384, 0.5
      %v3431 = vmul.f32 %v3413, 0.5
      %v3432 = vmul.f32 %v3387, 0.5
      %v3433 = vmul.f32 %v3416, 0.5
      %v3434 = vmul.f32 %v3389, 0.5
      %v3435 = vmul.f32 %v3418, 0.5
      %v3436 = vmul.f32 %v3372, 0.044715
      %v3437 = vmul.f32 %v3401, 0.044715
      %v3438 = vmul.f32 %v3374, 0.044715
      %v3439 = vmul.f32 %v3403, 0.044715
      %v3440 = vmul.f32 %v3377, 0.044715
      %v3441 = vmul.f32 %v3406, 0.044715
      %v3442 = vmul.f32 %v3379, 0.044715
      %v3443 = vmul.f32 %v3408, 0.044715
      %v3444 = vmul.f32 %v3382, 0.044715
      %v3445 = vmul.f32 %v3411, 0.044715
      %v3446 = vmul.f32 %v3384, 0.044715
      %v3447 = vmul.f32 %v3413, 0.044715
      %v3448 = vmul.f32 %v3387, 0.044715
      %v3449 = vmul.f32 %v3416, 0.044715
      %v3450 = vmul.f32 %v3389, 0.044715
      %v3451 = vmul.f32 %v3418, 0.044715
      %v3452 = vmul.f32 %v3436, %v3372
      %v3453 = vmul.f32 %v3437, %v3401
      %v3454 = vmul.f32 %v3438, %v3374
      %v3455 = vmul.f32 %v3439, %v3403
      %v3456 = vmul.f32 %v3440, %v3377
      %v3457 = vmul.f32 %v3441, %v3406
      %v3458 = vmul.f32 %v3442, %v3379
      %v3459 = vmul.f32 %v3443, %v3408
      %v3460 = vmul.f32 %v3444, %v3382
      %v3461 = vmul.f32 %v3445, %v3411
      %v3462 = vmul.f32 %v3446, %v3384
      %v3463 = vmul.f32 %v3447, %v3413
      %v3464 = vmul.f32 %v3448, %v3387
      %v3465 = vmul.f32 %v3449, %v3416
      %v3466 = vmul.f32 %v3450, %v3389
      %v3467 = vmul.f32 %v3451, %v3418
      %v3468 = vmul.f32 %v3452, %v3372
      %v3469 = vmul.f32 %v3453, %v3401
      %v3470 = vmul.f32 %v3454, %v3374
      %v3471 = vmul.f32 %v3455, %v3403
      %v3472 = vmul.f32 %v3456, %v3377
      %v3473 = vmul.f32 %v3457, %v3406
      %v3474 = vmul.f32 %v3458, %v3379
      %v3475 = vmul.f32 %v3459, %v3408
      %v3476 = vmul.f32 %v3460, %v3382
      %v3477 = vmul.f32 %v3461, %v3411
      %v3478 = vmul.f32 %v3462, %v3384
      %v3479 = vmul.f32 %v3463, %v3413
      %v3480 = vmul.f32 %v3464, %v3387
      %v3481 = vmul.f32 %v3465, %v3416
      %v3482 = vmul.f32 %v3466, %v3389
      %v3483 = vmul.f32 %v3467, %v3418
      %v3484 = vadd.f32 %v3372, %v3468
      %v3485 = vadd.f32 %v3401, %v3469
      %v3486 = vadd.f32 %v3374, %v3470
      %v3487 = vadd.f32 %v3403, %v3471
      %v3488 = vadd.f32 %v3377, %v3472
      %v3489 = vadd.f32 %v3406, %v3473
      %v3490 = vadd.f32 %v3379, %v3474
      %v3491 = vadd.f32 %v3408, %v3475
      %v3492 = vadd.f32 %v3382, %v3476
      %v3493 = vadd.f32 %v3411, %v3477
      %v3494 = vadd.f32 %v3384, %v3478
      %v3495 = vadd.f32 %v3413, %v3479
      %v3496 = vadd.f32 %v3387, %v3480
      %v3497 = vadd.f32 %v3416, %v3481
      %v3498 = vadd.f32 %v3389, %v3482
      %v3499 = vadd.f32 %v3418, %v3483
      %v3500 = vmul.f32 %v3484, 0.7978846
      %v3501 = vmul.f32 %v3485, 0.7978846
      %v3502 = vmul.f32 %v3486, 0.7978846
      %v3503 = vmul.f32 %v3487, 0.7978846
      %v3504 = vmul.f32 %v3488, 0.7978846
      %v3505 = vmul.f32 %v3489, 0.7978846
      %v3506 = vmul.f32 %v3490, 0.7978846
      %v3507 = vmul.f32 %v3491, 0.7978846
      %v3508 = vmul.f32 %v3492, 0.7978846
      %v3509 = vmul.f32 %v3493, 0.7978846
      %v3510 = vmul.f32 %v3494, 0.7978846
      %v3511 = vmul.f32 %v3495, 0.7978846
      %v3512 = vmul.f32 %v3496, 0.7978846
      %v3513 = vmul.f32 %v3497, 0.7978846
      %v3514 = vmul.f32 %v3498, 0.7978846
      %v3515 = vmul.f32 %v3499, 0.7978846
      %v3516 = vtanh.pop %v3500
      %v3517 = vtanh.pop %v3501
      %v3518 = vtanh.pop %v3502
      %v3519 = vtanh.pop %v3503
      %v3520 = vtanh.pop %v3504
      %v3521 = vtanh.pop %v3505
      %v3522 = vtanh.pop %v3506
      %v3523 = vtanh.pop %v3507
      %v3524 = vtanh.pop %v3508
      %v3525 = vtanh.pop %v3509
      %v3526 = vtanh.pop %v3510
      %v3527 = vtanh.pop %v3511
      %v3528 = vtanh.pop %v3512
      %v3529 = vtanh.pop %v3513
      %v3530 = vtanh.pop %v3514
      %v3531 = vtanh.pop %v3515
      %v3532 = vadd.f32 %v3516, 1.0
      %v3533 = vadd.f32 %v3517, 1.0
      %v3534 = vadd.f32 %v3518, 1.0
      %v3535 = vadd.f32 %v3519, 1.0
      %v3536 = vadd.f32 %v3520, 1.0
      %v3537 = vadd.f32 %v3521, 1.0
      %v3538 = vadd.f32 %v3522, 1.0
      %v3539 = vadd.f32 %v3523, 1.0
      %v3540 = vadd.f32 %v3524, 1.0
      %v3541 = vadd.f32 %v3525, 1.0
      %v3542 = vadd.f32 %v3526, 1.0
      %v3543 = vadd.f32 %v3527, 1.0
      %v3544 = vadd.f32 %v3528, 1.0
      %v3545 = vadd.f32 %v3529, 1.0
      %v3546 = vadd.f32 %v3530, 1.0
      %v3547 = vadd.f32 %v3531, 1.0
      %v3548 = vmul.f32 %v3420, %v3532
      %v3549 = vmul.f32 %v3421, %v3533
      %v3550 = vmul.f32 %v3422, %v3534
      %v3551 = vmul.f32 %v3423, %v3535
      %v3552 = vmul.f32 %v3424, %v3536
      %v3553 = vmul.f32 %v3425, %v3537
      %v3554 = vmul.f32 %v3426, %v3538
      %v3555 = vmul.f32 %v3427, %v3539
      %v3556 = vmul.f32 %v3428, %v3540
      %v3557 = vmul.f32 %v3429, %v3541
      %v3558 = vmul.f32 %v3430, %v3542
      %v3559 = vmul.f32 %v3431, %v3543
      %v3560 = vmul.f32 %v3432, %v3544
      %v3561 = vmul.f32 %v3433, %v3545
      %v3562 = vmul.f32 %v3434, %v3546
      %v3563 = vmul.f32 %v3435, %v3547
      %v3564 = vpack.c.bf16 %v3550, %v3548
      %v3565 = vpack.c.bf16 %v3551, %v3549
      %v3566 = vpack.c.bf16 %v3554, %v3552
      %v3567 = vpack.c.bf16 %v3555, %v3553
      %v3568 = vpack.c.bf16 %v3558, %v3556
      %v3569 = vpack.c.bf16 %v3559, %v3557
      %v3570 = vpack.c.bf16 %v3562, %v3560
      %v3571 = vpack.c.bf16 %v3563, %v3561
      %v3572 = vld [vmem:[%s18] sm:$0xf]
      %v3573 = vld [vmem:[%s18 + $0x4] sm:$0xf]
      %v3574 = vld [vmem:[%s18 + $0x8] sm:$0xf]
      %v3575 = vld [vmem:[%s18 + $0xc] sm:$0xf]
      %v3576 = vld [vmem:[%s18 + $0x10] sm:$0xf]
      %v3577 = vld [vmem:[%s18 + $0x14] sm:$0xf]
      %v3578 = vld [vmem:[%s18 + $0x18] sm:$0xf]
      %v3579 = vld [vmem:[%s18 + $0x1c] sm:$0xf]
      %v3580 = vld [vmem:[%s18 + $0x20] sm:$0xf]
      %v3581 = vld [vmem:[%s18 + $0x24] sm:$0xf]
      %v3582 = vld [vmem:[%s18 + $0x28] sm:$0xf]
      %v3583 = vld [vmem:[%s18 + $0x2c] sm:$0xf]
      %v3584 = vld [vmem:[%s18 + $0x30] sm:$0xf]
      %v3585 = vld [vmem:[%s18 + $0x34] sm:$0xf]
      %v3586 = vld [vmem:[%s18 + $0x38] sm:$0xf]
      %v3587 = vld [vmem:[%s18 + $0x3c] sm:$0xf]
      %v3588 = vld [vmem:[%s18 + $0x40] sm:$0xf]
      %v3589 = vld [vmem:[%s18 + $0x44] sm:$0xf]
      %v3590 = vld [vmem:[%s18 + $0x48] sm:$0xf]
      %v3591 = vld [vmem:[%s18 + $0x4c] sm:$0xf]
      %v3592 = vld [vmem:[%s18 + $0x50] sm:$0xf]
      %v3593 = vld [vmem:[%s18 + $0x54] sm:$0xf]
      %v3594 = vld [vmem:[%s18 + $0x58] sm:$0xf]
      %v3595 = vld [vmem:[%s18 + $0x5c] sm:$0xf]
      %v3596 = vld [vmem:[%s18 + $0x60] sm:$0xf]
      %v3597 = vld [vmem:[%s18 + $0x64] sm:$0xf]
      %v3598 = vld [vmem:[%s18 + $0x68] sm:$0xf]
      %v3599 = vld [vmem:[%s18 + $0x6c] sm:$0xf]
      %v3600 = vld [vmem:[%s18 + $0x70] sm:$0xf]
      %v3601 = vld [vmem:[%s18 + $0x74] sm:$0xf]
      %v3602 = vld [vmem:[%s18 + $0x78] sm:$0xf]
      %v3603 = vld [vmem:[%s18 + $0x7c] sm:$0xf]
      %v3604 = vld [vmem:[%s19] sm:$0x1]
      %v3606 = vperm.slane %v3604, 0
      %v3640 = vunpack.c.l.b16 %v3572
      %v3641 = vunpack.c.l.b16 %v3573
      %v3642 = vunpack.c.l.b16 %v3574
      %v3643 = vunpack.c.l.b16 %v3575
      %v3644 = vunpack.c.l.b16 %v3576
      %v3645 = vunpack.c.l.b16 %v3577
      %v3646 = vunpack.c.l.b16 %v3578
      %v3647 = vunpack.c.l.b16 %v3579
      %v3648 = vunpack.c.l.b16 %v3580
      %v3649 = vunpack.c.l.b16 %v3581
      %v3650 = vunpack.c.l.b16 %v3582
      %v3651 = vunpack.c.l.b16 %v3583
      %v3652 = vunpack.c.l.b16 %v3584
      %v3653 = vunpack.c.l.b16 %v3585
      %v3654 = vunpack.c.l.b16 %v3586
      %v3655 = vunpack.c.l.b16 %v3587
      %v3656 = vunpack.c.l.b16 %v3588
      %v3657 = vunpack.c.l.b16 %v3589
      %v3658 = vunpack.c.l.b16 %v3590
      %v3659 = vunpack.c.l.b16 %v3591
      %v3660 = vunpack.c.l.b16 %v3592
      %v3661 = vunpack.c.l.b16 %v3593
      %v3662 = vunpack.c.l.b16 %v3594
      %v3663 = vunpack.c.l.b16 %v3595
      %v3664 = vunpack.c.l.b16 %v3596
      %v3665 = vunpack.c.l.b16 %v3597
      %v3666 = vunpack.c.l.b16 %v3598
      %v3667 = vunpack.c.l.b16 %v3599
      %v3668 = vunpack.c.l.b16 %v3600
      %v3669 = vunpack.c.l.b16 %v3601
      %v3670 = vunpack.c.l.b16 %v3602
      %v3671 = vunpack.c.l.b16 %v3603
      %v3672 = vpack.c.b16 %v3641, %v3640
      %v3673 = vpack.c.b16 %v3643, %v3642
      %v3674 = vpack.c.b16 %v3645, %v3644
      %v3675 = vpack.c.b16 %v3647, %v3646
      %v3676 = vpack.c.b16 %v3649, %v3648
      %v3677 = vpack.c.b16 %v3651, %v3650
      %v3678 = vpack.c.b16 %v3653, %v3652
      %v3679 = vpack.c.b16 %v3655, %v3654
      %v3680 = vpack.c.b16 %v3657, %v3656
      %v3681 = vpack.c.b16 %v3659, %v3658
      %v3682 = vpack.c.b16 %v3661, %v3660
      %v3683 = vpack.c.b16 %v3663, %v3662
      %v3684 = vpack.c.b16 %v3665, %v3664
      %v3685 = vpack.c.b16 %v3667, %v3666
      %v3686 = vpack.c.b16 %v3669, %v3668
      %v3687 = vpack.c.b16 %v3671, %v3670
      %3704 = vmatpush.bf16.msra.mxu0 %v3679
      %3705 = vmatpush.bf16.msra.mxu0 %v3678
      %3706 = vmatpush.bf16.msra.mxu0 %v3677
      %3707 = vmatpush.bf16.msra.mxu0 %v3676
      %3708 = vmatpush.bf16.msra.mxu0 %v3675
      %3709 = vmatpush.bf16.msra.mxu0 %v3674
      %3710 = vmatpush.bf16.msra.mxu0 %v3673
      %3711 = vmatpush.bf16.msra.mxu0 %v3672
      %3712 = vmatmul.bf16.gmra.mxu0 %v3564
      %v3713 = vpop.f32.mrf.mxu0
      %v3714 = vadd.f32 %v3606, %v3713
      %v3715 = vpop.f32.mrf.mxu0
      %v3716 = vadd.f32 %v3606, %v3715
      %3717 = vmatmul.bf16.gmra.mxu0 %v3566
      %v3718 = vpop.f32.mrf.mxu0
      %v3719 = vadd.f32 %v3606, %v3718
      %v3720 = vpop.f32.mrf.mxu0
      %v3721 = vadd.f32 %v3606, %v3720
      %3722 = vmatmul.bf16.gmra.mxu0 %v3568
      %v3723 = vpop.f32.mrf.mxu0
      %v3724 = vadd.f32 %v3606, %v3723
      %v3725 = vpop.f32.mrf.mxu0
      %v3726 = vadd.f32 %v3606, %v3725
      %3727 = vmatmul.bf16.gmra.mxu0 %v3570
      %v3728 = vpop.f32.mrf.mxu0
      %v3729 = vadd.f32 %v3606, %v3728
      %v3730 = vpop.f32.mrf.mxu0
      %v3731 = vadd.f32 %v3606, %v3730
      %3732 = vdwg.mxu0
      %3733 = vmatpush.bf16.msra.mxu0 %v3687
      %3734 = vmatpush.bf16.msra.mxu0 %v3686
      %3735 = vmatpush.bf16.msra.mxu0 %v3685
      %3736 = vmatpush.bf16.msra.mxu0 %v3684
      %3737 = vmatpush.bf16.msra.mxu0 %v3683
      %3738 = vmatpush.bf16.msra.mxu0 %v3682
      %3739 = vmatpush.bf16.msra.mxu0 %v3681
      %3740 = vmatpush.bf16.msra.mxu0 %v3680
      %3741 = vmatmul.bf16.gmra.mxu0 %v3565
      %v3742 = vpop.f32.mrf.mxu0
      %v3743 = vadd.f32 %v3714, %v3742
      %v3744 = vpop.f32.mrf.mxu0
      %v3745 = vadd.f32 %v3716, %v3744
      %3746 = vmatmul.bf16.gmra.mxu0 %v3567
      %v3747 = vpop.f32.mrf.mxu0
      %v3748 = vadd.f32 %v3719, %v3747
      %v3749 = vpop.f32.mrf.mxu0
      %v3750 = vadd.f32 %v3721, %v3749
      %3751 = vmatmul.bf16.gmra.mxu0 %v3569
      %v3752 = vpop.f32.mrf.mxu0
      %v3753 = vadd.f32 %v3724, %v3752
      %v3754 = vpop.f32.mrf.mxu0
      %v3755 = vadd.f32 %v3726, %v3754
      %3756 = vmatmul.bf16.gmra.mxu0 %v3571
      %v3757 = vpop.f32.mrf.mxu0
      %v3758 = vadd.f32 %v3729, %v3757
      %v3759 = vpop.f32.mrf.mxu0
      %v3760 = vadd.f32 %v3731, %v3759
      %3761 = vdwg.mxu0
      %v3762 = vmul.f32 %v3073, %v3743
      %v3763 = vmul.f32 %v3075, %v3745
      %v3764 = vmul.f32 %v3078, %v3748
      %v3765 = vmul.f32 %v3080, %v3750
      %v3766 = vmul.f32 %v3083, %v3753
      %v3767 = vmul.f32 %v3085, %v3755
      %v3768 = vmul.f32 %v3088, %v3758
      %v3769 = vmul.f32 %v3090, %v3760
      %v3770 = vadd.f32 %v2883, %v3762
      %v3771 = vadd.f32 %v2884, %v3763
      %v3772 = vadd.f32 %v2885, %v3764
      %v3773 = vadd.f32 %v2886, %v3765
      %v3774 = vadd.f32 %v2887, %v3766
      %v3775 = vadd.f32 %v2888, %v3767
      %v3776 = vadd.f32 %v2889, %v3768
      %v3777 = vadd.f32 %v2890, %v3769
      %s3778 = scalar_lea.vmem %s10, 192
      %v3779 = vld [vmem:[%s3778] sm:$0xf]
      %v3780 = vld [vmem:[%s3778 + $0x4] sm:$0xf]
      %v3781 = vld [vmem:[%s3778 + $0x8] sm:$0xf]
      %v3782 = vld [vmem:[%s3778 + $0xc] sm:$0xf]
      %v3783 = vld [vmem:[%s3778 + $0x10] sm:$0xf]
      %v3784 = vld [vmem:[%s3778 + $0x14] sm:$0xf]
      %v3785 = vld [vmem:[%s3778 + $0x18] sm:$0xf]
      %v3786 = vld [vmem:[%s3778 + $0x1c] sm:$0xf]
      %s3787 = scalar_lea.vmem %s11, 6
      %v3788 = vld [vmem:[%s3787] sm:$0x1]
      %v3790 = vperm.slane %v3788, 0
      %v3800 = vunpack.c.l.b16 %v3779
      %v3801 = vunpack.c.l.b16 %v3780
      %v3802 = vunpack.c.l.b16 %v3781
      %v3803 = vunpack.c.l.b16 %v3782
      %v3804 = vunpack.c.l.b16 %v3783
      %v3805 = vunpack.c.l.b16 %v3784
      %v3806 = vunpack.c.l.b16 %v3785
      %v3807 = vunpack.c.l.b16 %v3786
      %v3808 = vpack.c.b16 %v3801, %v3800
      %v3809 = vpack.c.b16 %v3803, %v3802
      %v3810 = vpack.c.b16 %v3805, %v3804
      %v3811 = vpack.c.b16 %v3807, %v3806
      %3816 = vmatpush.bf16.msra.mxu0 0
      %3817 = vmatpush.bf16.msra.mxu0 0
      %3818 = vmatpush.bf16.msra.mxu0 0
      %3819 = vmatpush.bf16.msra.mxu0 0
      %3820 = vmatpush.bf16.msra.mxu0 %v3811
      %3821 = vmatpush.bf16.msra.mxu0 %v3810
      %3822 = vmatpush.bf16.msra.mxu0 %v3809
      %3823 = vmatpush.bf16.msra.mxu0 %v3808
      %3824 = vmatmul.bf16.gmra.mxu0 %v1147
      %v3825 = vpop.f32.mrf.mxu0
      %v3826 = vadd.f32 %v3790, %v3825
      %v3827 = vpop.f32.mrf.mxu0
      %v3828 = vadd.f32 %v3790, %v3827
      %3829 = vmatmul.bf16.gmra.mxu0 %v1147
      %v3830 = vpop.f32.mrf.mxu0
      %v3831 = vadd.f32 %v3790, %v3830
      %v3832 = vpop.f32.mrf.mxu0
      %v3833 = vadd.f32 %v3790, %v3832
      %3834 = vmatmul.bf16.gmra.mxu0 %v1147
      %v3835 = vpop.f32.mrf.mxu0
      %v3836 = vadd.f32 %v3790, %v3835
      %v3837 = vpop.f32.mrf.mxu0
      %v3838 = vadd.f32 %v3790, %v3837
      %3839 = vmatmul.bf16.gmra.mxu0 %v1147
      %v3840 = vpop.f32.mrf.mxu0
      %v3841 = vadd.f32 %v3790, %v3840
      %v3842 = vpop.f32.mrf.mxu0
      %v3843 = vadd.f32 %v3790, %v3842
      %3844 = vdwg.mxu0
      %s3845 = scalar_lea.vmem %s10, 224
      %v3846 = vld [vmem:[%s3845] sm:$0xf]
      %v3847 = vld [vmem:[%s3845 + $0x4] sm:$0xf]
      %v3848 = vld [vmem:[%s3845 + $0x8] sm:$0xf]
      %v3849 = vld [vmem:[%s3845 + $0xc] sm:$0xf]
      %v3850 = vld [vmem:[%s3845 + $0x10] sm:$0xf]
      %v3851 = vld [vmem:[%s3845 + $0x14] sm:$0xf]
      %v3852 = vld [vmem:[%s3845 + $0x18] sm:$0xf]
      %v3853 = vld [vmem:[%s3845 + $0x1c] sm:$0xf]
      %s3854 = scalar_lea.vmem %s11, 7
      %v3855 = vld [vmem:[%s3854] sm:$0x1]
      %v3857 = vperm.slane %v3855, 0
      %v3867 = vunpack.c.l.b16 %v3846
      %v3868 = vunpack.c.l.b16 %v3847
      %v3869 = vunpack.c.l.b16 %v3848
      %v3870 = vunpack.c.l.b16 %v3849
      %v3871 = vunpack.c.l.b16 %v3850
      %v3872 = vunpack.c.l.b16 %v3851
      %v3873 = vunpack.c.l.b16 %v3852
      %v3874 = vunpack.c.l.b16 %v3853
      %v3875 = vpack.c.b16 %v3868, %v3867
      %v3876 = vpack.c.b16 %v3870, %v3869
      %v3877 = vpack.c.b16 %v3872, %v3871
      %v3878 = vpack.c.b16 %v3874, %v3873
      %3883 = vmatpush.bf16.msra.mxu0 0
      %3884 = vmatpush.bf16.msra.mxu0 0
      %3885 = vmatpush.bf16.msra.mxu0 0
      %3886 = vmatpush.bf16.msra.mxu0 0
      %3887 = vmatpush.bf16.msra.mxu0 %v3878
      %3888 = vmatpush.bf16.msra.mxu0 %v3877
      %3889 = vmatpush.bf16.msra.mxu0 %v3876
      %3890 = vmatpush.bf16.msra.mxu0 %v3875
      %3891 = vmatmul.bf16.gmra.mxu0 %v1147
      %v3892 = vpop.f32.mrf.mxu0
      %v3893 = vadd.f32 %v3857, %v3892
      %v3894 = vpop.f32.mrf.mxu0
      %v3895 = vadd.f32 %v3857, %v3894
      %3896 = vmatmul.bf16.gmra.mxu0 %v1147
      %v3897 = vpop.f32.mrf.mxu0
      %v3898 = vadd.f32 %v3857, %v3897
      %v3899 = vpop.f32.mrf.mxu0
      %v3900 = vadd.f32 %v3857, %v3899
      %3901 = vmatmul.bf16.gmra.mxu0 %v1147
      %v3902 = vpop.f32.mrf.mxu0
      %v3903 = vadd.f32 %v3857, %v3902
      %v3904 = vpop.f32.mrf.mxu0
      %v3905 = vadd.f32 %v3857, %v3904
      %3906 = vmatmul.bf16.gmra.mxu0 %v1147
      %v3907 = vpop.f32.mrf.mxu0
      %v3908 = vadd.f32 %v3857, %v3907
      %v3909 = vpop.f32.mrf.mxu0
      %v3910 = vadd.f32 %v3857, %v3909
      %3911 = vdwg.mxu0
      %s3912 = scalar_lea.vmem %s10, 256
      %v3913 = vld [vmem:[%s3912] sm:$0xf]
      %v3914 = vld [vmem:[%s3912 + $0x4] sm:$0xf]
      %v3915 = vld [vmem:[%s3912 + $0x8] sm:$0xf]
      %v3916 = vld [vmem:[%s3912 + $0xc] sm:$0xf]
      %v3917 = vld [vmem:[%s3912 + $0x10] sm:$0xf]
      %v3918 = vld [vmem:[%s3912 + $0x14] sm:$0xf]
      %v3919 = vld [vmem:[%s3912 + $0x18] sm:$0xf]
      %v3920 = vld [vmem:[%s3912 + $0x1c] sm:$0xf]
      %s3921 = scalar_lea.vmem %s11, 8
      %v3922 = vld [vmem:[%s3921] sm:$0x1]
      %v3924 = vperm.slane %v3922, 0
      %v3934 = vunpack.c.l.b16 %v3913
      %v3935 = vunpack.c.l.b16 %v3914
      %v3936 = vunpack.c.l.b16 %v3915
      %v3937 = vunpack.c.l.b16 %v3916
      %v3938 = vunpack.c.l.b16 %v3917
      %v3939 = vunpack.c.l.b16 %v3918
      %v3940 = vunpack.c.l.b16 %v3919
      %v3941 = vunpack.c.l.b16 %v3920
      %v3942 = vpack.c.b16 %v3935, %v3934
      %v3943 = vpack.c.b16 %v3937, %v3936
      %v3944 = vpack.c.b16 %v3939, %v3938
      %v3945 = vpack.c.b16 %v3941, %v3940
      %3950 = vmatpush.bf16.msra.mxu0 0
      %3951 = vmatpush.bf16.msra.mxu0 0
      %3952 = vmatpush.bf16.msra.mxu0 0
      %3953 = vmatpush.bf16.msra.mxu0 0
      %3954 = vmatpush.bf16.msra.mxu0 %v3945
      %3955 = vmatpush.bf16.msra.mxu0 %v3944
      %3956 = vmatpush.bf16.msra.mxu0 %v3943
      %3957 = vmatpush.bf16.msra.mxu0 %v3942
      %3958 = vmatmul.bf16.gmra.mxu0 %v1147
      %v3959 = vpop.f32.mrf.mxu0
      %v3960 = vadd.f32 %v3924, %v3959
      %v3961 = vpop.f32.mrf.mxu0
      %v3962 = vadd.f32 %v3924, %v3961
      %3963 = vmatmul.bf16.gmra.mxu0 %v1147
      %v3964 = vpop.f32.mrf.mxu0
      %v3965 = vadd.f32 %v3924, %v3964
      %v3966 = vpop.f32.mrf.mxu0
      %v3967 = vadd.f32 %v3924, %v3966
      %3968 = vmatmul.bf16.gmra.mxu0 %v1147
      %v3969 = vpop.f32.mrf.mxu0
      %v3970 = vadd.f32 %v3924, %v3969
      %v3971 = vpop.f32.mrf.mxu0
      %v3972 = vadd.f32 %v3924, %v3971
      %3973 = vmatmul.bf16.gmra.mxu0 %v1147
      %v3974 = vpop.f32.mrf.mxu0
      %v3975 = vadd.f32 %v3924, %v3974
      %v3976 = vpop.f32.mrf.mxu0
      %v3977 = vadd.f32 %v3924, %v3976
      %3978 = vdwg.mxu0
      %v3979 = vsel %vm987, %v3770, 0.0
      %3980 = vadd.xlane.f32.xlu0 %v3979
      %v3981 = vpop.xlane.xlu0 %3980
      %v3982 = vsel %vm987, %v3771, 0.0
      %3983 = vadd.xlane.f32.xlu0 %v3982
      %v3984 = vpop.xlane.xlu0 %3983
      %v3985 = vsel %vm987, %v3772, 0.0
      %3986 = vadd.xlane.f32.xlu0 %v3985
      %v3987 = vpop.xlane.xlu0 %3986
      %v3988 = vsel %vm987, %v3773, 0.0
      %3989 = vadd.xlane.f32.xlu0 %v3988
      %v3990 = vpop.xlane.xlu0 %3989
      %v3991 = vsel %vm987, %v3774, 0.0
      %3992 = vadd.xlane.f32.xlu0 %v3991
      %v3993 = vpop.xlane.xlu0 %3992
      %v3994 = vsel %vm987, %v3775, 0.0
      %3995 = vadd.xlane.f32.xlu0 %v3994
      %v3996 = vpop.xlane.xlu0 %3995
      %v3997 = vsel %vm987, %v3776, 0.0
      %3998 = vadd.xlane.f32.xlu0 %v3997
      %v3999 = vpop.xlane.xlu0 %3998
      %v4000 = vsel %vm987, %v3777, 0.0
      %4001 = vadd.xlane.f32.xlu0 %v4000
      %v4002 = vpop.xlane.xlu0 %4001
      %v4003 = vmul.f32 %v3981, %v1342
      %v4004 = vmul.f32 %v3984, %v1342
      %v4005 = vmul.f32 %v3987, %v1342
      %v4006 = vmul.f32 %v3990, %v1342
      %v4007 = vmul.f32 %v3993, %v1342
      %v4008 = vmul.f32 %v3996, %v1342
      %v4009 = vmul.f32 %v3999, %v1342
      %v4010 = vmul.f32 %v4002, %v1342
      %v4011 = vsub.f32 %v3770, %v4003
      %v4012 = vsub.f32 %v3771, %v4004
      %v4013 = vsub.f32 %v3772, %v4005
      %v4014 = vsub.f32 %v3773, %v4006
      %v4015 = vsub.f32 %v3774, %v4007
      %v4016 = vsub.f32 %v3775, %v4008
      %v4017 = vsub.f32 %v3776, %v4009
      %v4018 = vsub.f32 %v3777, %v4010
      %v4019 = vmul.f32 %v4011, %v4011
      %v4020 = vmul.f32 %v4012, %v4012
      %v4021 = vmul.f32 %v4013, %v4013
      %v4022 = vmul.f32 %v4014, %v4014
      %v4023 = vmul.f32 %v4015, %v4015
      %v4024 = vmul.f32 %v4016, %v4016
      %v4025 = vmul.f32 %v4017, %v4017
      %v4026 = vmul.f32 %v4018, %v4018
      %v4027 = vsel %vm987, %v4019, 0.0
      %4028 = vadd.xlane.f32.xlu0 %v4027
      %v4029 = vpop.xlane.xlu0 %4028
      %v4030 = vsel %vm987, %v4020, 0.0
      %4031 = vadd.xlane.f32.xlu0 %v4030
      %v4032 = vpop.xlane.xlu0 %4031
      %v4033 = vsel %vm987, %v4021, 0.0
      %4034 = vadd.xlane.f32.xlu0 %v4033
      %v4035 = vpop.xlane.xlu0 %4034
      %v4036 = vsel %vm987, %v4022, 0.0
      %4037 = vadd.xlane.f32.xlu0 %v4036
      %v4038 = vpop.xlane.xlu0 %4037
      %v4039 = vsel %vm987, %v4023, 0.0
      %4040 = vadd.xlane.f32.xlu0 %v4039
      %v4041 = vpop.xlane.xlu0 %4040
      %v4042 = vsel %vm987, %v4024, 0.0
      %4043 = vadd.xlane.f32.xlu0 %v4042
      %v4044 = vpop.xlane.xlu0 %4043
      %v4045 = vsel %vm987, %v4025, 0.0
      %4046 = vadd.xlane.f32.xlu0 %v4045
      %v4047 = vpop.xlane.xlu0 %4046
      %v4048 = vsel %vm987, %v4026, 0.0
      %4049 = vadd.xlane.f32.xlu0 %v4048
      %v4050 = vpop.xlane.xlu0 %4049
      %v4051 = vmul.f32 %v4029, %v1342
      %v4052 = vmul.f32 %v4032, %v1342
      %v4053 = vmul.f32 %v4035, %v1342
      %v4054 = vmul.f32 %v4038, %v1342
      %v4055 = vmul.f32 %v4041, %v1342
      %v4056 = vmul.f32 %v4044, %v1342
      %v4057 = vmul.f32 %v4047, %v1342
      %v4058 = vmul.f32 %v4050, %v1342
      %v4059 = vadd.f32 %v4051, 1e-06
      %v4060 = vadd.f32 %v4052, 1e-06
      %v4061 = vadd.f32 %v4053, 1e-06
      %v4062 = vadd.f32 %v4054, 1e-06
      %v4063 = vadd.f32 %v4055, 1e-06
      %v4064 = vadd.f32 %v4056, 1e-06
      %v4065 = vadd.f32 %v4057, 1e-06
      %v4066 = vadd.f32 %v4058, 1e-06
      %v4067 = vrsqrt.pop %v4059
      %v4068 = vmul.f32 %v4067, %v4059
      %v4069 = vmul.f32 %v4068, %v4067
      %v4070 = vmul.f32 0.5, %v4069
      %v4071 = vsub.f32 1.5, %v4070
      %v4072 = vmul.f32 %v4067, %v4071
      %vm4073 = vweird.f32 %v4059
      %vm4074 = vweird.f32 %v4067
      %vm4075 = vmor %vm4073, %vm4074
      %v4076 = vsel %vm4075, %v4067, %v4072
      %v4077 = vrsqrt.pop %v4060
      %v4078 = vmul.f32 %v4077, %v4060
      %v4079 = vmul.f32 %v4078, %v4077
      %v4080 = vmul.f32 0.5, %v4079
      %v4081 = vsub.f32 1.5, %v4080
      %v4082 = vmul.f32 %v4077, %v4081
      %vm4083 = vweird.f32 %v4060
      %vm4084 = vweird.f32 %v4077
      %vm4085 = vmor %vm4083, %vm4084
      %v4086 = vsel %vm4085, %v4077, %v4082
      %v4087 = vrsqrt.pop %v4061
      %v4088 = vmul.f32 %v4087, %v4061
      %v4089 = vmul.f32 %v4088, %v4087
      %v4090 = vmul.f32 0.5, %v4089
      %v4091 = vsub.f32 1.5, %v4090
      %v4092 = vmul.f32 %v4087, %v4091
      %vm4093 = vweird.f32 %v4061
      %vm4094 = vweird.f32 %v4087
      %vm4095 = vmor %vm4093, %vm4094
      %v4096 = vsel %vm4095, %v4087, %v4092
      %v4097 = vrsqrt.pop %v4062
      %v4098 = vmul.f32 %v4097, %v4062
      %v4099 = vmul.f32 %v4098, %v4097
      %v4100 = vmul.f32 0.5, %v4099
      %v4101 = vsub.f32 1.5, %v4100
      %v4102 = vmul.f32 %v4097, %v4101
      %vm4103 = vweird.f32 %v4062
      %vm4104 = vweird.f32 %v4097
      %vm4105 = vmor %vm4103, %vm4104
      %v4106 = vsel %vm4105, %v4097, %v4102
      %v4107 = vrsqrt.pop %v4063
      %v4108 = vmul.f32 %v4107, %v4063
      %v4109 = vmul.f32 %v4108, %v4107
      %v4110 = vmul.f32 0.5, %v4109
      %v4111 = vsub.f32 1.5, %v4110
      %v4112 = vmul.f32 %v4107, %v4111
      %vm4113 = vweird.f32 %v4063
      %vm4114 = vweird.f32 %v4107
      %vm4115 = vmor %vm4113, %vm4114
      %v4116 = vsel %vm4115, %v4107, %v4112
      %v4117 = vrsqrt.pop %v4064
      %v4118 = vmul.f32 %v4117, %v4064
      %v4119 = vmul.f32 %v4118, %v4117
      %v4120 = vmul.f32 0.5, %v4119
      %v4121 = vsub.f32 1.5, %v4120
      %v4122 = vmul.f32 %v4117, %v4121
      %vm4123 = vweird.f32 %v4064
      %vm4124 = vweird.f32 %v4117
      %vm4125 = vmor %vm4123, %vm4124
      %v4126 = vsel %vm4125, %v4117, %v4122
      %v4127 = vrsqrt.pop %v4065
      %v4128 = vmul.f32 %v4127, %v4065
      %v4129 = vmul.f32 %v4128, %v4127
      %v4130 = vmul.f32 0.5, %v4129
      %v4131 = vsub.f32 1.5, %v4130
      %v4132 = vmul.f32 %v4127, %v4131
      %vm4133 = vweird.f32 %v4065
      %vm4134 = vweird.f32 %v4127
      %vm4135 = vmor %vm4133, %vm4134
      %v4136 = vsel %vm4135, %v4127, %v4132
      %v4137 = vrsqrt.pop %v4066
      %v4138 = vmul.f32 %v4137, %v4066
      %v4139 = vmul.f32 %v4138, %v4137
      %v4140 = vmul.f32 0.5, %v4139
      %v4141 = vsub.f32 1.5, %v4140
      %v4142 = vmul.f32 %v4137, %v4141
      %vm4143 = vweird.f32 %v4066
      %vm4144 = vweird.f32 %v4137
      %vm4145 = vmor %vm4143, %vm4144
      %v4146 = vsel %vm4145, %v4137, %v4142
      %v4147 = vmul.f32 %v4011, %v4076
      %v4148 = vmul.f32 %v4012, %v4086
      %v4149 = vmul.f32 %v4013, %v4096
      %v4150 = vmul.f32 %v4014, %v4106
      %v4151 = vmul.f32 %v4015, %v4116
      %v4152 = vmul.f32 %v4016, %v4126
      %v4153 = vmul.f32 %v4017, %v4136
      %v4154 = vmul.f32 %v4018, %v4146
      %v4155 = vadd.f32 %v3893, 1.0
      %v4156 = vadd.f32 %v3895, 1.0
      %v4157 = vadd.f32 %v3898, 1.0
      %v4158 = vadd.f32 %v3900, 1.0
      %v4159 = vadd.f32 %v3903, 1.0
      %v4160 = vadd.f32 %v3905, 1.0
      %v4161 = vadd.f32 %v3908, 1.0
      %v4162 = vadd.f32 %v3910, 1.0
      %v4163 = vmul.f32 %v4147, %v4155
      %v4164 = vmul.f32 %v4148, %v4156
      %v4165 = vmul.f32 %v4149, %v4157
      %v4166 = vmul.f32 %v4150, %v4158
      %v4167 = vmul.f32 %v4151, %v4159
      %v4168 = vmul.f32 %v4152, %v4160
      %v4169 = vmul.f32 %v4153, %v4161
      %v4170 = vmul.f32 %v4154, %v4162
      %v4171 = vadd.f32 %v4163, %v3826
      %v4172 = vadd.f32 %v4164, %v3828
      %v4173 = vadd.f32 %v4165, %v3831
      %v4174 = vadd.f32 %v4166, %v3833
      %v4175 = vadd.f32 %v4167, %v3836
      %v4176 = vadd.f32 %v4168, %v3838
      %v4177 = vadd.f32 %v4169, %v3841
      %v4178 = vadd.f32 %v4170, %v3843
      %v4179 = vpack.c.bf16 %v4172, %v4171
      %v4180 = vpack.c.bf16 %v4174, %v4173
      %v4181 = vpack.c.bf16 %v4176, %v4175
      %v4182 = vpack.c.bf16 %v4178, %v4177
      %s4183 = scalar_lea.vmem %s12, 64
      %v4184 = vld [vmem:[%s4183] sm:$0xf]
      %v4185 = vld [vmem:[%s4183 + $0x4] sm:$0xf]
      %v4186 = vld [vmem:[%s4183 + $0x8] sm:$0xf]
      %v4187 = vld [vmem:[%s4183 + $0xc] sm:$0xf]
      %v4188 = vld [vmem:[%s4183 + $0x10] sm:$0xf]
      %v4189 = vld [vmem:[%s4183 + $0x14] sm:$0xf]
      %v4190 = vld [vmem:[%s4183 + $0x18] sm:$0xf]
      %v4191 = vld [vmem:[%s4183 + $0x1c] sm:$0xf]
      %v4192 = vld [vmem:[%s4183 + $0x20] sm:$0xf]
      %v4193 = vld [vmem:[%s4183 + $0x24] sm:$0xf]
      %v4194 = vld [vmem:[%s4183 + $0x28] sm:$0xf]
      %v4195 = vld [vmem:[%s4183 + $0x2c] sm:$0xf]
      %v4196 = vld [vmem:[%s4183 + $0x30] sm:$0xf]
      %v4197 = vld [vmem:[%s4183 + $0x34] sm:$0xf]
      %v4198 = vld [vmem:[%s4183 + $0x38] sm:$0xf]
      %v4199 = vld [vmem:[%s4183 + $0x3c] sm:$0xf]
      %s4200 = scalar_lea.vmem %s13, 128
      %v4201 = vld [vmem:[%s4200] sm:$0xff]
      %v4202 = vld [vmem:[%s4200 + $0x8] sm:$0xff]
      %v4203 = vld [vmem:[%s4200 + $0x10] sm:$0xff]
      %v4204 = vld [vmem:[%s4200 + $0x18] sm:$0xff]
      %v4205 = vld [vmem:[%s4200 + $0x20] sm:$0xff]
      %v4206 = vld [vmem:[%s4200 + $0x28] sm:$0xff]
      %v4207 = vld [vmem:[%s4200 + $0x30] sm:$0xff]
      %v4208 = vld [vmem:[%s4200 + $0x38] sm:$0xff]
      %v4209 = vld [vmem:[%s4200 + $0x40] sm:$0xff]
      %v4210 = vld [vmem:[%s4200 + $0x48] sm:$0xff]
      %v4211 = vld [vmem:[%s4200 + $0x50] sm:$0xff]
      %v4212 = vld [vmem:[%s4200 + $0x58] sm:$0xff]
      %v4213 = vld [vmem:[%s4200 + $0x60] sm:$0xff]
      %v4214 = vld [vmem:[%s4200 + $0x68] sm:$0xff]
      %v4215 = vld [vmem:[%s4200 + $0x70] sm:$0xff]
      %v4216 = vld [vmem:[%s4200 + $0x78] sm:$0xff]
      %4218 = vset.pattern.permute.xlu0 0
      %4219 = vperm.xlu0 %4218, %v4201
      %v4220 = vpop.permute.xlu0 %4219
      %4223 = vset.pattern.permute.xlu0 0
      %4224 = vperm.xlu0 %4223, %v4202
      %v4225 = vpop.permute.xlu0 %4224
      %4228 = vset.pattern.permute.xlu0 0
      %4229 = vperm.xlu0 %4228, %v4203
      %v4230 = vpop.permute.xlu0 %4229
      %4233 = vset.pattern.permute.xlu0 0
      %4234 = vperm.xlu0 %4233, %v4204
      %v4235 = vpop.permute.xlu0 %4234
      %4238 = vset.pattern.permute.xlu0 0
      %4239 = vperm.xlu0 %4238, %v4205
      %v4240 = vpop.permute.xlu0 %4239
      %4243 = vset.pattern.permute.xlu0 0
      %4244 = vperm.xlu0 %4243, %v4206
      %v4245 = vpop.permute.xlu0 %4244
      %4248 = vset.pattern.permute.xlu0 0
      %4249 = vperm.xlu0 %4248, %v4207
      %v4250 = vpop.permute.xlu0 %4249
      %4253 = vset.pattern.permute.xlu0 0
      %4254 = vperm.xlu0 %4253, %v4208
      %v4255 = vpop.permute.xlu0 %4254
      %4258 = vset.pattern.permute.xlu0 0
      %4259 = vperm.xlu0 %4258, %v4209
      %v4260 = vpop.permute.xlu0 %4259
      %4263 = vset.pattern.permute.xlu0 0
      %4264 = vperm.xlu0 %4263, %v4210
      %v4265 = vpop.permute.xlu0 %4264
      %4268 = vset.pattern.permute.xlu0 0
      %4269 = vperm.xlu0 %4268, %v4211
      %v4270 = vpop.permute.xlu0 %4269
      %4273 = vset.pattern.permute.xlu0 0
      %4274 = vperm.xlu0 %4273, %v4212
      %v4275 = vpop.permute.xlu0 %4274
      %4278 = vset.pattern.permute.xlu0 0
      %4279 = vperm.xlu0 %4278, %v4213
      %v4280 = vpop.permute.xlu0 %4279
      %4283 = vset.pattern.permute.xlu0 0
      %4284 = vperm.xlu0 %4283, %v4214
      %v4285 = vpop.permute.xlu0 %4284
      %4288 = vset.pattern.permute.xlu0 0
      %4289 = vperm.xlu0 %4288, %v4215
      %v4290 = vpop.permute.xlu0 %4289
      %4293 = vset.pattern.permute.xlu0 0
      %4294 = vperm.xlu0 %4293, %v4216
      %v4295 = vpop.permute.xlu0 %4294
      %v4313 = vunpack.c.l.b16 %v4184
      %v4314 = vunpack.c.l.b16 %v4185
      %v4315 = vunpack.c.l.b16 %v4186
      %v4316 = vunpack.c.l.b16 %v4187
      %v4317 = vunpack.c.l.b16 %v4188
      %v4318 = vunpack.c.l.b16 %v4189
      %v4319 = vunpack.c.l.b16 %v4190
      %v4320 = vunpack.c.l.b16 %v4191
      %v4321 = vunpack.c.l.b16 %v4192
      %v4322 = vunpack.c.l.b16 %v4193
      %v4323 = vunpack.c.l.b16 %v4194
      %v4324 = vunpack.c.l.b16 %v4195
      %v4325 = vunpack.c.l.b16 %v4196
      %v4326 = vunpack.c.l.b16 %v4197
      %v4327 = vunpack.c.l.b16 %v4198
      %v4328 = vunpack.c.l.b16 %v4199
      %v4329 = vpack.c.b16 %v4314, %v4313
      %v4330 = vpack.c.b16 %v4316, %v4315
      %v4331 = vpack.c.b16 %v4318, %v4317
      %v4332 = vpack.c.b16 %v4320, %v4319
      %v4333 = vpack.c.b16 %v4322, %v4321
      %v4334 = vpack.c.b16 %v4324, %v4323
      %v4335 = vpack.c.b16 %v4326, %v4325
      %v4336 = vpack.c.b16 %v4328, %v4327
      %v4338 = vsel %vm987, %v4329, 0
      %v4341 = vsel %vm987, %v4330, 0
      %v4344 = vsel %vm987, %v4331, 0
      %v4347 = vsel %vm987, %v4332, 0
      %v4350 = vsel %vm987, %v4333, 0
      %v4353 = vsel %vm987, %v4334, 0
      %v4356 = vsel %vm987, %v4335, 0
      %v4359 = vsel %vm987, %v4336, 0
      %v4362 = vsel %vm987, %v4179, 0
      %v4365 = vsel %vm987, %v4180, 0
      %v4368 = vsel %vm987, %v4181, 0
      %v4371 = vsel %vm987, %v4182, 0
      %4373 = vmatpush.bf16.xpose.msra.mxu0 0
      %4374 = vmatpush.bf16.xpose.msra.mxu0 0
      %4375 = vmatpush.bf16.xpose.msra.mxu0 0
      %4376 = vmatpush.bf16.xpose.msra.mxu0 0
      %4377 = vmatpush.bf16.xpose.msra.mxu0 %v4371
      %4378 = vmatpush.bf16.xpose.msra.mxu0 %v4368
      %4379 = vmatpush.bf16.xpose.msra.mxu0 %v4365
      %4380 = vmatpush.bf16.xpose.msra.mxu0 %v4362
      %4381 = vmatmul.bf16.gmra.mxu0 %v4338
      %v4382 = vpop.f32.mrf.mxu0
      %v4383 = vadd.f32 %v4220, %v4382
      %v4384 = vpop.f32.mrf.mxu0
      %v4385 = vadd.f32 %v4225, %v4384
      %4386 = vmatmul.bf16.gmra.mxu0 %v4341
      %v4387 = vpop.f32.mrf.mxu0
      %v4388 = vadd.f32 %v4230, %v4387
      %v4389 = vpop.f32.mrf.mxu0
      %v4390 = vadd.f32 %v4235, %v4389
      %4391 = vmatmul.bf16.gmra.mxu0 %v4344
      %v4392 = vpop.f32.mrf.mxu0
      %v4393 = vadd.f32 %v4240, %v4392
      %v4394 = vpop.f32.mrf.mxu0
      %v4395 = vadd.f32 %v4245, %v4394
      %4396 = vmatmul.bf16.gmra.mxu0 %v4347
      %v4397 = vpop.f32.mrf.mxu0
      %v4398 = vadd.f32 %v4250, %v4397
      %v4399 = vpop.f32.mrf.mxu0
      %v4400 = vadd.f32 %v4255, %v4399
      %4401 = vmatmul.bf16.gmra.mxu0 %v4350
      %v4402 = vpop.f32.mrf.mxu0
      %v4403 = vadd.f32 %v4260, %v4402
      %v4404 = vpop.f32.mrf.mxu0
      %v4405 = vadd.f32 %v4265, %v4404
      %4406 = vmatmul.bf16.gmra.mxu0 %v4353
      %v4407 = vpop.f32.mrf.mxu0
      %v4408 = vadd.f32 %v4270, %v4407
      %v4409 = vpop.f32.mrf.mxu0
      %v4410 = vadd.f32 %v4275, %v4409
      %4411 = vmatmul.bf16.gmra.mxu0 %v4356
      %v4412 = vpop.f32.mrf.mxu0
      %v4413 = vadd.f32 %v4280, %v4412
      %v4414 = vpop.f32.mrf.mxu0
      %v4415 = vadd.f32 %v4285, %v4414
      %4416 = vmatmul.bf16.gmra.mxu0 %v4359
      %v4417 = vpop.f32.mrf.mxu0
      %v4418 = vadd.f32 %v4290, %v4417
      %v4419 = vpop.f32.mrf.mxu0
      %v4420 = vadd.f32 %v4295, %v4419
      %4421 = vdwg.mxu0
      %v4422 = vpack.c.bf16 %v4383, %v4383
      %v4423 = vpack.c.bf16 %v4385, %v4385
      %v4424 = vpack.c.bf16 %v4388, %v4388
      %v4425 = vpack.c.bf16 %v4390, %v4390
      %v4426 = vpack.c.bf16 %v4393, %v4393
      %v4427 = vpack.c.bf16 %v4395, %v4395
      %v4428 = vpack.c.bf16 %v4398, %v4398
      %v4429 = vpack.c.bf16 %v4400, %v4400
      %v4430 = vpack.c.bf16 %v4403, %v4403
      %v4431 = vpack.c.bf16 %v4405, %v4405
      %v4432 = vpack.c.bf16 %v4408, %v4408
      %v4433 = vpack.c.bf16 %v4410, %v4410
      %v4434 = vpack.c.bf16 %v4413, %v4413
      %v4435 = vpack.c.bf16 %v4415, %v4415
      %v4436 = vpack.c.bf16 %v4418, %v4418
      %v4437 = vpack.c.bf16 %v4420, %v4420
      %v4440 = vunpack.c.l.b16 %v4422
      %v4441 = vunpack.c.l.b16 %v4423
      %v4442 = vpack.c.b16 %v4441, %v4440
      %4444 = vxpose.xlu0.c.b16.start [1/8] %v4442, 128
      %4445 = vxpose.xlu0.c.b16.cont [2/8] 0, 128
      %4446 = vxpose.xlu0.c.b16.cont [3/8] 0, 128
      %4447 = vxpose.xlu0.c.b16.cont [4/8] 0, 128
      %4448 = vxpose.xlu0.c.b16.cont [5/8] 0, 128
      %4449 = vxpose.xlu0.c.b16.cont [6/8] 0, 128
      %4450 = vxpose.xlu0.c.b16.cont [7/8] 0, 128
      %4451 = vxpose.xlu0.c.b16.end [8/8] 0, 128
      %v4452 = vpop.trf.xlu0
      %v4453 = vpop.trf.xlu0
      %v4454 = vpop.trf.xlu0
      %v4455 = vpop.trf.xlu0
      %v4456 = vpop.trf.xlu0
      %v4457 = vpop.trf.xlu0
      %v4458 = vpop.trf.xlu0
      %v4459 = vpop.trf.xlu0
      %v4462 = vunpack.c.l.b16 %v4430
      %v4463 = vunpack.c.l.b16 %v4431
      %v4464 = vpack.c.b16 %v4463, %v4462
      %v4467 = vsel %vm1052, %v4452, 0
      %v4470 = vsel %vm1052, %v4453, 0
      %v4473 = vsel %vm1052, %v4454, 0
      %v4476 = vsel %vm1052, %v4455, 0
      %4478 = vmatpush.bf16.msra.mxu0 0
      %4479 = vmatpush.bf16.msra.mxu0 0
      %4480 = vmatpush.bf16.msra.mxu0 0
      %4481 = vmatpush.bf16.msra.mxu0 0
      %4482 = vmatpush.bf16.msra.mxu0 0
      %4483 = vmatpush.bf16.msra.mxu0 0
      %4484 = vmatpush.bf16.msra.mxu0 0
      %4485 = vmatpush.bf16.msra.mxu0 %v4464
      %4486 = vmatmul.bf16.gmra.mxu0 %v4467
      %v4487 = vpop.f32.mrf.mxu0
      %v4488 = vadd.f32 0.0, %v4487
      %v4489 = vpop.f32.mrf.mxu0
      %v4490 = vadd.f32 0.0, %v4489
      %4491 = vmatmul.bf16.gmra.mxu0 %v4470
      %v4492 = vpop.f32.mrf.mxu0
      %v4493 = vadd.f32 0.0, %v4492
      %v4494 = vpop.f32.mrf.mxu0
      %v4495 = vadd.f32 0.0, %v4494
      %4496 = vmatmul.bf16.gmra.mxu0 %v4473
      %v4497 = vpop.f32.mrf.mxu0
      %v4498 = vadd.f32 0.0, %v4497
      %v4499 = vpop.f32.mrf.mxu0
      %v4500 = vadd.f32 0.0, %v4499
      %4501 = vmatmul.bf16.gmra.mxu0 %v4476
      %v4502 = vpop.f32.mrf.mxu0
      %v4503 = vadd.f32 0.0, %v4502
      %v4504 = vpop.f32.mrf.mxu0
      %v4505 = vadd.f32 0.0, %v4504
      %4506 = vdwg.mxu0
      %v4507 = vsel %vm987, %v4488, -inf
      %4508 = vmax.xlane.f32.xlu0 %v4507
      %v4509 = vpop.xlane.xlu0 %4508
      %v4510 = vsel %vm987, %v4490, -inf
      %4511 = vmax.xlane.f32.xlu0 %v4510
      %v4512 = vpop.xlane.xlu0 %4511
      %v4513 = vsel %vm987, %v4493, -inf
      %4514 = vmax.xlane.f32.xlu0 %v4513
      %v4515 = vpop.xlane.xlu0 %4514
      %v4516 = vsel %vm987, %v4495, -inf
      %4517 = vmax.xlane.f32.xlu0 %v4516
      %v4518 = vpop.xlane.xlu0 %4517
      %v4519 = vsel %vm987, %v4498, -inf
      %4520 = vmax.xlane.f32.xlu0 %v4519
      %v4521 = vpop.xlane.xlu0 %4520
      %v4522 = vsel %vm987, %v4500, -inf
      %4523 = vmax.xlane.f32.xlu0 %v4522
      %v4524 = vpop.xlane.xlu0 %4523
      %v4525 = vsel %vm987, %v4503, -inf
      %4526 = vmax.xlane.f32.xlu0 %v4525
      %v4527 = vpop.xlane.xlu0 %4526
      %v4528 = vsel %vm987, %v4505, -inf
      %4529 = vmax.xlane.f32.xlu0 %v4528
      %v4530 = vpop.xlane.xlu0 %4529
      %v4531 = vsub.f32 %v4488, %v4509
      %v4532 = vsub.f32 %v4490, %v4512
      %v4533 = vsub.f32 %v4493, %v4515
      %v4534 = vsub.f32 %v4495, %v4518
      %v4535 = vsub.f32 %v4498, %v4521
      %v4536 = vsub.f32 %v4500, %v4524
      %v4537 = vsub.f32 %v4503, %v4527
      %v4538 = vsub.f32 %v4505, %v4530
      %v4539 = vmul.f32 %v4531, 1.442695
      %v4540 = vpow.pop %v4539
      %v4541 = vmul.f32 %v4532, 1.442695
      %v4542 = vpow.pop %v4541
      %v4543 = vmul.f32 %v4533, 1.442695
      %v4544 = vpow.pop %v4543
      %v4545 = vmul.f32 %v4534, 1.442695
      %v4546 = vpow.pop %v4545
      %v4547 = vmul.f32 %v4535, 1.442695
      %v4548 = vpow.pop %v4547
      %v4549 = vmul.f32 %v4536, 1.442695
      %v4550 = vpow.pop %v4549
      %v4551 = vmul.f32 %v4537, 1.442695
      %v4552 = vpow.pop %v4551
      %v4553 = vmul.f32 %v4538, 1.442695
      %v4554 = vpow.pop %v4553
      %v4555 = vsel %vm987, %v4540, 0.0
      %4556 = vadd.xlane.f32.xlu0 %v4555
      %v4557 = vpop.xlane.xlu0 %4556
      %v4558 = vsel %vm987, %v4542, 0.0
      %4559 = vadd.xlane.f32.xlu0 %v4558
      %v4560 = vpop.xlane.xlu0 %4559
      %v4561 = vsel %vm987, %v4544, 0.0
      %4562 = vadd.xlane.f32.xlu0 %v4561
      %v4563 = vpop.xlane.xlu0 %4562
      %v4564 = vsel %vm987, %v4546, 0.0
      %4565 = vadd.xlane.f32.xlu0 %v4564
      %v4566 = vpop.xlane.xlu0 %4565
      %v4567 = vsel %vm987, %v4548, 0.0
      %4568 = vadd.xlane.f32.xlu0 %v4567
      %v4569 = vpop.xlane.xlu0 %4568
      %v4570 = vsel %vm987, %v4550, 0.0
      %4571 = vadd.xlane.f32.xlu0 %v4570
      %v4572 = vpop.xlane.xlu0 %4571
      %v4573 = vsel %vm987, %v4552, 0.0
      %4574 = vadd.xlane.f32.xlu0 %v4573
      %v4575 = vpop.xlane.xlu0 %4574
      %v4576 = vsel %vm987, %v4554, 0.0
      %4577 = vadd.xlane.f32.xlu0 %v4576
      %v4578 = vpop.xlane.xlu0 %4577
      %v4579 = vrcp.pop %v4557
      %v4580 = vrcp.pop %v4560
      %v4581 = vrcp.pop %v4563
      %v4582 = vrcp.pop %v4566
      %v4583 = vrcp.pop %v4569
      %v4584 = vrcp.pop %v4572
      %v4585 = vrcp.pop %v4575
      %v4586 = vrcp.pop %v4578
      %v4587 = vmul.f32 %v4540, %v4579
      %v4588 = vmul.f32 %v4542, %v4580
      %v4589 = vmul.f32 %v4544, %v4581
      %v4590 = vmul.f32 %v4546, %v4582
      %v4591 = vmul.f32 %v4548, %v4583
      %v4592 = vmul.f32 %v4550, %v4584
      %v4593 = vmul.f32 %v4552, %v4585
      %v4594 = vmul.f32 %v4554, %v4586
      %s4595 = scalar_lea.vmem %s14, 128
      %v4596 = vld [vmem:[%s4595] sm:$0xf]
      %v4597 = vld [vmem:[%s4595 + $0x4] sm:$0xf]
      %v4598 = vld [vmem:[%s4595 + $0x8] sm:$0xf]
      %v4599 = vld [vmem:[%s4595 + $0xc] sm:$0xf]
      %v4600 = vld [vmem:[%s4595 + $0x10] sm:$0xf]
      %v4601 = vld [vmem:[%s4595 + $0x14] sm:$0xf]
      %v4602 = vld [vmem:[%s4595 + $0x18] sm:$0xf]
      %v4603 = vld [vmem:[%s4595 + $0x1c] sm:$0xf]
      %v4612 = vunpack.c.l.b16 %v4596
      %v4613 = vunpack.c.l.b16 %v4597
      %v4614 = vunpack.c.l.b16 %v4598
      %v4615 = vunpack.c.l.b16 %v4599
      %v4616 = vunpack.c.l.b16 %v4600
      %v4617 = vunpack.c.l.b16 %v4601
      %v4618 = vunpack.c.l.b16 %v4602
      %v4619 = vunpack.c.l.b16 %v4603
      %v4620 = vpack.c.b16 %v4613, %v4612
      %v4621 = vpack.c.b16 %v4615, %v4614
      %v4622 = vpack.c.b16 %v4617, %v4616
      %v4623 = vpack.c.b16 %v4619, %v4618
      %4628 = vmatpush.bf16.msra.mxu0 0
      %4629 = vmatpush.bf16.msra.mxu0 0
      %4630 = vmatpush.bf16.msra.mxu0 0
      %4631 = vmatpush.bf16.msra.mxu0 0
      %4632 = vmatpush.bf16.msra.mxu0 %v4623
      %4633 = vmatpush.bf16.msra.mxu0 %v4622
      %4634 = vmatpush.bf16.msra.mxu0 %v4621
      %4635 = vmatpush.bf16.msra.mxu0 %v4620
      %4636 = vmatmul.bf16.gmra.mxu0 %v4362
      %v4637 = vpop.f32.mrf.mxu0
      %v4638 = vadd.f32 0.0, %v4637
      %v4639 = vpop.f32.mrf.mxu0
      %v4640 = vadd.f32 0.0, %v4639
      %4641 = vmatmul.bf16.gmra.mxu0 %v4365
      %v4642 = vpop.f32.mrf.mxu0
      %v4643 = vadd.f32 0.0, %v4642
      %v4644 = vpop.f32.mrf.mxu0
      %v4645 = vadd.f32 0.0, %v4644
      %4646 = vmatmul.bf16.gmra.mxu0 %v4368
      %v4647 = vpop.f32.mrf.mxu0
      %v4648 = vadd.f32 0.0, %v4647
      %v4649 = vpop.f32.mrf.mxu0
      %v4650 = vadd.f32 0.0, %v4649
      %4651 = vmatmul.bf16.gmra.mxu0 %v4371
      %v4652 = vpop.f32.mrf.mxu0
      %v4653 = vadd.f32 0.0, %v4652
      %v4654 = vpop.f32.mrf.mxu0
      %v4655 = vadd.f32 0.0, %v4654
      %4656 = vdwg.mxu0
      %v4657 = vpack.c.bf16 %v4640, %v4638
      %v4658 = vpack.c.bf16 %v4645, %v4643
      %v4659 = vpack.c.bf16 %v4650, %v4648
      %v4660 = vpack.c.bf16 %v4655, %v4653
      %v4661 = vpack.c.bf16 %v4588, %v4587
      %v4662 = vpack.c.bf16 %v4590, %v4589
      %v4663 = vpack.c.bf16 %v4592, %v4591
      %v4664 = vpack.c.bf16 %v4594, %v4593
      %v4667 = vunpack.c.l.b16 %v4424
      %v4668 = vunpack.c.l.b16 %v4425
      %v4669 = vpack.c.b16 %v4668, %v4667
      %4671 = vxpose.xlu0.c.b16.start [1/8] %v4669, 128
      %4672 = vxpose.xlu0.c.b16.cont [2/8] 0, 128
      %4673 = vxpose.xlu0.c.b16.cont [3/8] 0, 128
      %4674 = vxpose.xlu0.c.b16.cont [4/8] 0, 128
      %4675 = vxpose.xlu0.c.b16.cont [5/8] 0, 128
      %4676 = vxpose.xlu0.c.b16.cont [6/8] 0, 128
      %4677 = vxpose.xlu0.c.b16.cont [7/8] 0, 128
      %4678 = vxpose.xlu0.c.b16.end [8/8] 0, 128
      %v4679 = vpop.trf.xlu0
      %v4680 = vpop.trf.xlu0
      %v4681 = vpop.trf.xlu0
      %v4682 = vpop.trf.xlu0
      %v4683 = vpop.trf.xlu0
      %v4684 = vpop.trf.xlu0
      %v4685 = vpop.trf.xlu0
      %v4686 = vpop.trf.xlu0
      %v4689 = vunpack.c.l.b16 %v4432
      %v4690 = vunpack.c.l.b16 %v4433
      %v4691 = vpack.c.b16 %v4690, %v4689
      %v4694 = vsel %vm1052, %v4679, 0
      %v4697 = vsel %vm1052, %v4680, 0
      %v4700 = vsel %vm1052, %v4681, 0
      %v4703 = vsel %vm1052, %v4682, 0
      %4705 = vmatpush.bf16.msra.mxu0 0
      %4706 = vmatpush.bf16.msra.mxu0 0
      %4707 = vmatpush.bf16.msra.mxu0 0
      %4708 = vmatpush.bf16.msra.mxu0 0
      %4709 = vmatpush.bf16.msra.mxu0 0
      %4710 = vmatpush.bf16.msra.mxu0 0
      %4711 = vmatpush.bf16.msra.mxu0 0
      %4712 = vmatpush.bf16.msra.mxu0 %v4691
      %4713 = vmatmul.bf16.gmra.mxu0 %v4694
      %v4714 = vpop.f32.mrf.mxu0
      %v4715 = vadd.f32 0.0, %v4714
      %v4716 = vpop.f32.mrf.mxu0
      %v4717 = vadd.f32 0.0, %v4716
      %4718 = vmatmul.bf16.gmra.mxu0 %v4697
      %v4719 = vpop.f32.mrf.mxu0
      %v4720 = vadd.f32 0.0, %v4719
      %v4721 = vpop.f32.mrf.mxu0
      %v4722 = vadd.f32 0.0, %v4721
      %4723 = vmatmul.bf16.gmra.mxu0 %v4700
      %v4724 = vpop.f32.mrf.mxu0
      %v4725 = vadd.f32 0.0, %v4724
      %v4726 = vpop.f32.mrf.mxu0
      %v4727 = vadd.f32 0.0, %v4726
      %4728 = vmatmul.bf16.gmra.mxu0 %v4703
      %v4729 = vpop.f32.mrf.mxu0
      %v4730 = vadd.f32 0.0, %v4729
      %v4731 = vpop.f32.mrf.mxu0
      %v4732 = vadd.f32 0.0, %v4731
      %4733 = vdwg.mxu0
      %v4734 = vsel %vm987, %v4715, -inf
      %4735 = vmax.xlane.f32.xlu0 %v4734
      %v4736 = vpop.xlane.xlu0 %4735
      %v4737 = vsel %vm987, %v4717, -inf
      %4738 = vmax.xlane.f32.xlu0 %v4737
      %v4739 = vpop.xlane.xlu0 %4738
      %v4740 = vsel %vm987, %v4720, -inf
      %4741 = vmax.xlane.f32.xlu0 %v4740
      %v4742 = vpop.xlane.xlu0 %4741
      %v4743 = vsel %vm987, %v4722, -inf
      %4744 = vmax.xlane.f32.xlu0 %v4743
      %v4745 = vpop.xlane.xlu0 %4744
      %v4746 = vsel %vm987, %v4725, -inf
      %4747 = vmax.xlane.f32.xlu0 %v4746
      %v4748 = vpop.xlane.xlu0 %4747
      %v4749 = vsel %vm987, %v4727, -inf
      %4750 = vmax.xlane.f32.xlu0 %v4749
      %v4751 = vpop.xlane.xlu0 %4750
      %v4752 = vsel %vm987, %v4730, -inf
      %4753 = vmax.xlane.f32.xlu0 %v4752
      %v4754 = vpop.xlane.xlu0 %4753
      %v4755 = vsel %vm987, %v4732, -inf
      %4756 = vmax.xlane.f32.xlu0 %v4755
      %v4757 = vpop.xlane.xlu0 %4756
      %v4758 = vsub.f32 %v4715, %v4736
      %v4759 = vsub.f32 %v4717, %v4739
      %v4760 = vsub.f32 %v4720, %v4742
      %v4761 = vsub.f32 %v4722, %v4745
      %v4762 = vsub.f32 %v4725, %v4748
      %v4763 = vsub.f32 %v4727, %v4751
      %v4764 = vsub.f32 %v4730, %v4754
      %v4765 = vsub.f32 %v4732, %v4757
      %v4766 = vmul.f32 %v4758, 1.442695
      %v4767 = vpow.pop %v4766
      %v4768 = vmul.f32 %v4759, 1.442695
      %v4769 = vpow.pop %v4768
      %v4770 = vmul.f32 %v4760, 1.442695
      %v4771 = vpow.pop %v4770
      %v4772 = vmul.f32 %v4761, 1.442695
      %v4773 = vpow.pop %v4772
      %v4774 = vmul.f32 %v4762, 1.442695
      %v4775 = vpow.pop %v4774
      %v4776 = vmul.f32 %v4763, 1.442695
      %v4777 = vpow.pop %v4776
      %v4778 = vmul.f32 %v4764, 1.442695
      %v4779 = vpow.pop %v4778
      %v4780 = vmul.f32 %v4765, 1.442695
      %v4781 = vpow.pop %v4780
      %v4782 = vsel %vm987, %v4767, 0.0
      %4783 = vadd.xlane.f32.xlu0 %v4782
      %v4784 = vpop.xlane.xlu0 %4783
      %v4785 = vsel %vm987, %v4769, 0.0
      %4786 = vadd.xlane.f32.xlu0 %v4785
      %v4787 = vpop.xlane.xlu0 %4786
      %v4788 = vsel %vm987, %v4771, 0.0
      %4789 = vadd.xlane.f32.xlu0 %v4788
      %v4790 = vpop.xlane.xlu0 %4789
      %v4791 = vsel %vm987, %v4773, 0.0
      %4792 = vadd.xlane.f32.xlu0 %v4791
      %v4793 = vpop.xlane.xlu0 %4792
      %v4794 = vsel %vm987, %v4775, 0.0
      %4795 = vadd.xlane.f32.xlu0 %v4794
      %v4796 = vpop.xlane.xlu0 %4795
      %v4797 = vsel %vm987, %v4777, 0.0
      %4798 = vadd.xlane.f32.xlu0 %v4797
      %v4799 = vpop.xlane.xlu0 %4798
      %v4800 = vsel %vm987, %v4779, 0.0
      %4801 = vadd.xlane.f32.xlu0 %v4800
      %v4802 = vpop.xlane.xlu0 %4801
      %v4803 = vsel %vm987, %v4781, 0.0
      %4804 = vadd.xlane.f32.xlu0 %v4803
      %v4805 = vpop.xlane.xlu0 %4804
      %v4806 = vrcp.pop %v4784
      %v4807 = vrcp.pop %v4787
      %v4808 = vrcp.pop %v4790
      %v4809 = vrcp.pop %v4793
      %v4810 = vrcp.pop %v4796
      %v4811 = vrcp.pop %v4799
      %v4812 = vrcp.pop %v4802
      %v4813 = vrcp.pop %v4805
      %v4814 = vmul.f32 %v4767, %v4806
      %v4815 = vmul.f32 %v4769, %v4807
      %v4816 = vmul.f32 %v4771, %v4808
      %v4817 = vmul.f32 %v4773, %v4809
      %v4818 = vmul.f32 %v4775, %v4810
      %v4819 = vmul.f32 %v4777, %v4811
      %v4820 = vmul.f32 %v4779, %v4812
      %v4821 = vmul.f32 %v4781, %v4813
      %s4822 = scalar_lea.vmem %s14, 160
      %v4823 = vld [vmem:[%s4822] sm:$0xf]
      %v4824 = vld [vmem:[%s4822 + $0x4] sm:$0xf]
      %v4825 = vld [vmem:[%s4822 + $0x8] sm:$0xf]
      %v4826 = vld [vmem:[%s4822 + $0xc] sm:$0xf]
      %v4827 = vld [vmem:[%s4822 + $0x10] sm:$0xf]
      %v4828 = vld [vmem:[%s4822 + $0x14] sm:$0xf]
      %v4829 = vld [vmem:[%s4822 + $0x18] sm:$0xf]
      %v4830 = vld [vmem:[%s4822 + $0x1c] sm:$0xf]
      %v4839 = vunpack.c.l.b16 %v4823
      %v4840 = vunpack.c.l.b16 %v4824
      %v4841 = vunpack.c.l.b16 %v4825
      %v4842 = vunpack.c.l.b16 %v4826
      %v4843 = vunpack.c.l.b16 %v4827
      %v4844 = vunpack.c.l.b16 %v4828
      %v4845 = vunpack.c.l.b16 %v4829
      %v4846 = vunpack.c.l.b16 %v4830
      %v4847 = vpack.c.b16 %v4840, %v4839
      %v4848 = vpack.c.b16 %v4842, %v4841
      %v4849 = vpack.c.b16 %v4844, %v4843
      %v4850 = vpack.c.b16 %v4846, %v4845
      %4855 = vmatpush.bf16.msra.mxu0 0
      %4856 = vmatpush.bf16.msra.mxu0 0
      %4857 = vmatpush.bf16.msra.mxu0 0
      %4858 = vmatpush.bf16.msra.mxu0 0
      %4859 = vmatpush.bf16.msra.mxu0 %v4850
      %4860 = vmatpush.bf16.msra.mxu0 %v4849
      %4861 = vmatpush.bf16.msra.mxu0 %v4848
      %4862 = vmatpush.bf16.msra.mxu0 %v4847
      %4863 = vmatmul.bf16.gmra.mxu0 %v4362
      %v4864 = vpop.f32.mrf.mxu0
      %v4865 = vadd.f32 0.0, %v4864
      %v4866 = vpop.f32.mrf.mxu0
      %v4867 = vadd.f32 0.0, %v4866
      %4868 = vmatmul.bf16.gmra.mxu0 %v4365
      %v4869 = vpop.f32.mrf.mxu0
      %v4870 = vadd.f32 0.0, %v4869
      %v4871 = vpop.f32.mrf.mxu0
      %v4872 = vadd.f32 0.0, %v4871
      %4873 = vmatmul.bf16.gmra.mxu0 %v4368
      %v4874 = vpop.f32.mrf.mxu0
      %v4875 = vadd.f32 0.0, %v4874
      %v4876 = vpop.f32.mrf.mxu0
      %v4877 = vadd.f32 0.0, %v4876
      %4878 = vmatmul.bf16.gmra.mxu0 %v4371
      %v4879 = vpop.f32.mrf.mxu0
      %v4880 = vadd.f32 0.0, %v4879
      %v4881 = vpop.f32.mrf.mxu0
      %v4882 = vadd.f32 0.0, %v4881
      %4883 = vdwg.mxu0
      %v4884 = vpack.c.bf16 %v4867, %v4865
      %v4885 = vpack.c.bf16 %v4872, %v4870
      %v4886 = vpack.c.bf16 %v4877, %v4875
      %v4887 = vpack.c.bf16 %v4882, %v4880
      %v4888 = vpack.c.bf16 %v4815, %v4814
      %v4889 = vpack.c.bf16 %v4817, %v4816
      %v4890 = vpack.c.bf16 %v4819, %v4818
      %v4891 = vpack.c.bf16 %v4821, %v4820
      %v4893 = vsel %vm987, %v4888, 0
      %v4896 = vsel %vm987, %v4889, 0
      %v4899 = vsel %vm987, %v4890, 0
      %v4902 = vsel %vm987, %v4891, 0
      %4904 = vmatpush.bf16.msra.mxu0 0
      %4905 = vmatpush.bf16.msra.mxu0 0
      %4906 = vmatpush.bf16.msra.mxu0 0
      %4907 = vmatpush.bf16.msra.mxu0 0
      %4908 = vmatpush.bf16.msra.mxu0 %v4887
      %4909 = vmatpush.bf16.msra.mxu0 %v4886
      %4910 = vmatpush.bf16.msra.mxu0 %v4885
      %4911 = vmatpush.bf16.msra.mxu0 %v4884
      %4912 = vmatmul.bf16.gmra.mxu0 %v4893
      %v4913 = vpop.f32.mrf.mxu0
      %v4914 = vadd.f32 0.0, %v4913
      %v4915 = vpop.f32.mrf.mxu0
      %v4916 = vadd.f32 0.0, %v4915
      %4917 = vmatmul.bf16.gmra.mxu0 %v4896
      %v4918 = vpop.f32.mrf.mxu0
      %v4919 = vadd.f32 0.0, %v4918
      %v4920 = vpop.f32.mrf.mxu0
      %v4921 = vadd.f32 0.0, %v4920
      %4922 = vmatmul.bf16.gmra.mxu0 %v4899
      %v4923 = vpop.f32.mrf.mxu0
      %v4924 = vadd.f32 0.0, %v4923
      %v4925 = vpop.f32.mrf.mxu0
      %v4926 = vadd.f32 0.0, %v4925
      %4927 = vmatmul.bf16.gmra.mxu0 %v4902
      %v4928 = vpop.f32.mrf.mxu0
      %v4929 = vadd.f32 0.0, %v4928
      %v4930 = vpop.f32.mrf.mxu0
      %v4931 = vadd.f32 0.0, %v4930
      %4932 = vdwg.mxu0
      %v4934 = vsel %vm987, %v4661, 0
      %v4937 = vsel %vm987, %v4662, 0
      %v4940 = vsel %vm987, %v4663, 0
      %v4943 = vsel %vm987, %v4664, 0
      %4945 = vmatpush.bf16.msra.mxu0 0
      %4946 = vmatpush.bf16.msra.mxu0 0
      %4947 = vmatpush.bf16.msra.mxu0 0
      %4948 = vmatpush.bf16.msra.mxu0 0
      %4949 = vmatpush.bf16.msra.mxu0 %v4660
      %4950 = vmatpush.bf16.msra.mxu0 %v4659
      %4951 = vmatpush.bf16.msra.mxu0 %v4658
      %4952 = vmatpush.bf16.msra.mxu0 %v4657
      %4953 = vmatmul.bf16.gmra.mxu0 %v4934
      %v4954 = vpop.f32.mrf.mxu0
      %v4955 = vadd.f32 %v4914, %v4954
      %v4956 = vpop.f32.mrf.mxu0
      %v4957 = vadd.f32 %v4916, %v4956
      %4958 = vmatmul.bf16.gmra.mxu0 %v4937
      %v4959 = vpop.f32.mrf.mxu0
      %v4960 = vadd.f32 %v4919, %v4959
      %v4961 = vpop.f32.mrf.mxu0
      %v4962 = vadd.f32 %v4921, %v4961
      %4963 = vmatmul.bf16.gmra.mxu0 %v4940
      %v4964 = vpop.f32.mrf.mxu0
      %v4965 = vadd.f32 %v4924, %v4964
      %v4966 = vpop.f32.mrf.mxu0
      %v4967 = vadd.f32 %v4926, %v4966
      %4968 = vmatmul.bf16.gmra.mxu0 %v4943
      %v4969 = vpop.f32.mrf.mxu0
      %v4970 = vadd.f32 %v4929, %v4969
      %v4971 = vpop.f32.mrf.mxu0
      %v4972 = vadd.f32 %v4931, %v4971
      %4973 = vdwg.mxu0
      %v4976 = vunpack.c.l.b16 %v4426
      %v4977 = vunpack.c.l.b16 %v4427
      %v4978 = vpack.c.b16 %v4977, %v4976
      %4980 = vxpose.xlu0.c.b16.start [1/8] %v4978, 128
      %4981 = vxpose.xlu0.c.b16.cont [2/8] 0, 128
      %4982 = vxpose.xlu0.c.b16.cont [3/8] 0, 128
      %4983 = vxpose.xlu0.c.b16.cont [4/8] 0, 128
      %4984 = vxpose.xlu0.c.b16.cont [5/8] 0, 128
      %4985 = vxpose.xlu0.c.b16.cont [6/8] 0, 128
      %4986 = vxpose.xlu0.c.b16.cont [7/8] 0, 128
      %4987 = vxpose.xlu0.c.b16.end [8/8] 0, 128
      %v4988 = vpop.trf.xlu0
      %v4989 = vpop.trf.xlu0
      %v4990 = vpop.trf.xlu0
      %v4991 = vpop.trf.xlu0
      %v4992 = vpop.trf.xlu0
      %v4993 = vpop.trf.xlu0
      %v4994 = vpop.trf.xlu0
      %v4995 = vpop.trf.xlu0
      %v4998 = vunpack.c.l.b16 %v4434
      %v4999 = vunpack.c.l.b16 %v4435
      %v5000 = vpack.c.b16 %v4999, %v4998
      %v5003 = vsel %vm1052, %v4988, 0
      %v5006 = vsel %vm1052, %v4989, 0
      %v5009 = vsel %vm1052, %v4990, 0
      %v5012 = vsel %vm1052, %v4991, 0
      %5014 = vmatpush.bf16.msra.mxu0 0
      %5015 = vmatpush.bf16.msra.mxu0 0
      %5016 = vmatpush.bf16.msra.mxu0 0
      %5017 = vmatpush.bf16.msra.mxu0 0
      %5018 = vmatpush.bf16.msra.mxu0 0
      %5019 = vmatpush.bf16.msra.mxu0 0
      %5020 = vmatpush.bf16.msra.mxu0 0
      %5021 = vmatpush.bf16.msra.mxu0 %v5000
      %5022 = vmatmul.bf16.gmra.mxu0 %v5003
      %v5023 = vpop.f32.mrf.mxu0
      %v5024 = vadd.f32 0.0, %v5023
      %v5025 = vpop.f32.mrf.mxu0
      %v5026 = vadd.f32 0.0, %v5025
      %5027 = vmatmul.bf16.gmra.mxu0 %v5006
      %v5028 = vpop.f32.mrf.mxu0
      %v5029 = vadd.f32 0.0, %v5028
      %v5030 = vpop.f32.mrf.mxu0
      %v5031 = vadd.f32 0.0, %v5030
      %5032 = vmatmul.bf16.gmra.mxu0 %v5009
      %v5033 = vpop.f32.mrf.mxu0
      %v5034 = vadd.f32 0.0, %v5033
      %v5035 = vpop.f32.mrf.mxu0
      %v5036 = vadd.f32 0.0, %v5035
      %5037 = vmatmul.bf16.gmra.mxu0 %v5012
      %v5038 = vpop.f32.mrf.mxu0
      %v5039 = vadd.f32 0.0, %v5038
      %v5040 = vpop.f32.mrf.mxu0
      %v5041 = vadd.f32 0.0, %v5040
      %5042 = vdwg.mxu0
      %v5043 = vsel %vm987, %v5024, -inf
      %5044 = vmax.xlane.f32.xlu0 %v5043
      %v5045 = vpop.xlane.xlu0 %5044
      %v5046 = vsel %vm987, %v5026, -inf
      %5047 = vmax.xlane.f32.xlu0 %v5046
      %v5048 = vpop.xlane.xlu0 %5047
      %v5049 = vsel %vm987, %v5029, -inf
      %5050 = vmax.xlane.f32.xlu0 %v5049
      %v5051 = vpop.xlane.xlu0 %5050
      %v5052 = vsel %vm987, %v5031, -inf
      %5053 = vmax.xlane.f32.xlu0 %v5052
      %v5054 = vpop.xlane.xlu0 %5053
      %v5055 = vsel %vm987, %v5034, -inf
      %5056 = vmax.xlane.f32.xlu0 %v5055
      %v5057 = vpop.xlane.xlu0 %5056
      %v5058 = vsel %vm987, %v5036, -inf
      %5059 = vmax.xlane.f32.xlu0 %v5058
      %v5060 = vpop.xlane.xlu0 %5059
      %v5061 = vsel %vm987, %v5039, -inf
      %5062 = vmax.xlane.f32.xlu0 %v5061
      %v5063 = vpop.xlane.xlu0 %5062
      %v5064 = vsel %vm987, %v5041, -inf
      %5065 = vmax.xlane.f32.xlu0 %v5064
      %v5066 = vpop.xlane.xlu0 %5065
      %v5067 = vsub.f32 %v5024, %v5045
      %v5068 = vsub.f32 %v5026, %v5048
      %v5069 = vsub.f32 %v5029, %v5051
      %v5070 = vsub.f32 %v5031, %v5054
      %v5071 = vsub.f32 %v5034, %v5057
      %v5072 = vsub.f32 %v5036, %v5060
      %v5073 = vsub.f32 %v5039, %v5063
      %v5074 = vsub.f32 %v5041, %v5066
      %v5075 = vmul.f32 %v5067, 1.442695
      %v5076 = vpow.pop %v5075
      %v5077 = vmul.f32 %v5068, 1.442695
      %v5078 = vpow.pop %v5077
      %v5079 = vmul.f32 %v5069, 1.442695
      %v5080 = vpow.pop %v5079
      %v5081 = vmul.f32 %v5070, 1.442695
      %v5082 = vpow.pop %v5081
      %v5083 = vmul.f32 %v5071, 1.442695
      %v5084 = vpow.pop %v5083
      %v5085 = vmul.f32 %v5072, 1.442695
      %v5086 = vpow.pop %v5085
      %v5087 = vmul.f32 %v5073, 1.442695
      %v5088 = vpow.pop %v5087
      %v5089 = vmul.f32 %v5074, 1.442695
      %v5090 = vpow.pop %v5089
      %v5091 = vsel %vm987, %v5076, 0.0
      %5092 = vadd.xlane.f32.xlu0 %v5091
      %v5093 = vpop.xlane.xlu0 %5092
      %v5094 = vsel %vm987, %v5078, 0.0
      %5095 = vadd.xlane.f32.xlu0 %v5094
      %v5096 = vpop.xlane.xlu0 %5095
      %v5097 = vsel %vm987, %v5080, 0.0
      %5098 = vadd.xlane.f32.xlu0 %v5097
      %v5099 = vpop.xlane.xlu0 %5098
      %v5100 = vsel %vm987, %v5082, 0.0
      %5101 = vadd.xlane.f32.xlu0 %v5100
      %v5102 = vpop.xlane.xlu0 %5101
      %v5103 = vsel %vm987, %v5084, 0.0
      %5104 = vadd.xlane.f32.xlu0 %v5103
      %v5105 = vpop.xlane.xlu0 %5104
      %v5106 = vsel %vm987, %v5086, 0.0
      %5107 = vadd.xlane.f32.xlu0 %v5106
      %v5108 = vpop.xlane.xlu0 %5107
      %v5109 = vsel %vm987, %v5088, 0.0
      %5110 = vadd.xlane.f32.xlu0 %v5109
      %v5111 = vpop.xlane.xlu0 %5110
      %v5112 = vsel %vm987, %v5090, 0.0
      %5113 = vadd.xlane.f32.xlu0 %v5112
      %v5114 = vpop.xlane.xlu0 %5113
      %v5115 = vrcp.pop %v5093
      %v5116 = vrcp.pop %v5096
      %v5117 = vrcp.pop %v5099
      %v5118 = vrcp.pop %v5102
      %v5119 = vrcp.pop %v5105
      %v5120 = vrcp.pop %v5108
      %v5121 = vrcp.pop %v5111
      %v5122 = vrcp.pop %v5114
      %v5123 = vmul.f32 %v5076, %v5115
      %v5124 = vmul.f32 %v5078, %v5116
      %v5125 = vmul.f32 %v5080, %v5117
      %v5126 = vmul.f32 %v5082, %v5118
      %v5127 = vmul.f32 %v5084, %v5119
      %v5128 = vmul.f32 %v5086, %v5120
      %v5129 = vmul.f32 %v5088, %v5121
      %v5130 = vmul.f32 %v5090, %v5122
      %s5131 = scalar_lea.vmem %s14, 192
      %v5132 = vld [vmem:[%s5131] sm:$0xf]
      %v5133 = vld [vmem:[%s5131 + $0x4] sm:$0xf]
      %v5134 = vld [vmem:[%s5131 + $0x8] sm:$0xf]
      %v5135 = vld [vmem:[%s5131 + $0xc] sm:$0xf]
      %v5136 = vld [vmem:[%s5131 + $0x10] sm:$0xf]
      %v5137 = vld [vmem:[%s5131 + $0x14] sm:$0xf]
      %v5138 = vld [vmem:[%s5131 + $0x18] sm:$0xf]
      %v5139 = vld [vmem:[%s5131 + $0x1c] sm:$0xf]
      %v5148 = vunpack.c.l.b16 %v5132
      %v5149 = vunpack.c.l.b16 %v5133
      %v5150 = vunpack.c.l.b16 %v5134
      %v5151 = vunpack.c.l.b16 %v5135
      %v5152 = vunpack.c.l.b16 %v5136
      %v5153 = vunpack.c.l.b16 %v5137
      %v5154 = vunpack.c.l.b16 %v5138
      %v5155 = vunpack.c.l.b16 %v5139
      %v5156 = vpack.c.b16 %v5149, %v5148
      %v5157 = vpack.c.b16 %v5151, %v5150
      %v5158 = vpack.c.b16 %v5153, %v5152
      %v5159 = vpack.c.b16 %v5155, %v5154
      %5164 = vmatpush.bf16.msra.mxu0 0
      %5165 = vmatpush.bf16.msra.mxu0 0
      %5166 = vmatpush.bf16.msra.mxu0 0
      %5167 = vmatpush.bf16.msra.mxu0 0
      %5168 = vmatpush.bf16.msra.mxu0 %v5159
      %5169 = vmatpush.bf16.msra.mxu0 %v5158
      %5170 = vmatpush.bf16.msra.mxu0 %v5157
      %5171 = vmatpush.bf16.msra.mxu0 %v5156
      %5172 = vmatmul.bf16.gmra.mxu0 %v4362
      %v5173 = vpop.f32.mrf.mxu0
      %v5174 = vadd.f32 0.0, %v5173
      %v5175 = vpop.f32.mrf.mxu0
      %v5176 = vadd.f32 0.0, %v5175
      %5177 = vmatmul.bf16.gmra.mxu0 %v4365
      %v5178 = vpop.f32.mrf.mxu0
      %v5179 = vadd.f32 0.0, %v5178
      %v5180 = vpop.f32.mrf.mxu0
      %v5181 = vadd.f32 0.0, %v5180
      %5182 = vmatmul.bf16.gmra.mxu0 %v4368
      %v5183 = vpop.f32.mrf.mxu0
      %v5184 = vadd.f32 0.0, %v5183
      %v5185 = vpop.f32.mrf.mxu0
      %v5186 = vadd.f32 0.0, %v5185
      %5187 = vmatmul.bf16.gmra.mxu0 %v4371
      %v5188 = vpop.f32.mrf.mxu0
      %v5189 = vadd.f32 0.0, %v5188
      %v5190 = vpop.f32.mrf.mxu0
      %v5191 = vadd.f32 0.0, %v5190
      %5192 = vdwg.mxu0
      %v5193 = vpack.c.bf16 %v5176, %v5174
      %v5194 = vpack.c.bf16 %v5181, %v5179
      %v5195 = vpack.c.bf16 %v5186, %v5184
      %v5196 = vpack.c.bf16 %v5191, %v5189
      %v5197 = vpack.c.bf16 %v5124, %v5123
      %v5198 = vpack.c.bf16 %v5126, %v5125
      %v5199 = vpack.c.bf16 %v5128, %v5127
      %v5200 = vpack.c.bf16 %v5130, %v5129
      %v5202 = vsel %vm987, %v5197, 0
      %v5205 = vsel %vm987, %v5198, 0
      %v5208 = vsel %vm987, %v5199, 0
      %v5211 = vsel %vm987, %v5200, 0
      %5213 = vmatpush.bf16.msra.mxu0 0
      %5214 = vmatpush.bf16.msra.mxu0 0
      %5215 = vmatpush.bf16.msra.mxu0 0
      %5216 = vmatpush.bf16.msra.mxu0 0
      %5217 = vmatpush.bf16.msra.mxu0 %v5196
      %5218 = vmatpush.bf16.msra.mxu0 %v5195
      %5219 = vmatpush.bf16.msra.mxu0 %v5194
      %5220 = vmatpush.bf16.msra.mxu0 %v5193
      %5221 = vmatmul.bf16.gmra.mxu0 %v5202
      %v5222 = vpop.f32.mrf.mxu0
      %v5223 = vadd.f32 0.0, %v5222
      %v5224 = vpop.f32.mrf.mxu0
      %v5225 = vadd.f32 0.0, %v5224
      %5226 = vmatmul.bf16.gmra.mxu0 %v5205
      %v5227 = vpop.f32.mrf.mxu0
      %v5228 = vadd.f32 0.0, %v5227
      %v5229 = vpop.f32.mrf.mxu0
      %v5230 = vadd.f32 0.0, %v5229
      %5231 = vmatmul.bf16.gmra.mxu0 %v5208
      %v5232 = vpop.f32.mrf.mxu0
      %v5233 = vadd.f32 0.0, %v5232
      %v5234 = vpop.f32.mrf.mxu0
      %v5235 = vadd.f32 0.0, %v5234
      %5236 = vmatmul.bf16.gmra.mxu0 %v5211
      %v5237 = vpop.f32.mrf.mxu0
      %v5238 = vadd.f32 0.0, %v5237
      %v5239 = vpop.f32.mrf.mxu0
      %v5240 = vadd.f32 0.0, %v5239
      %5241 = vdwg.mxu0
      %v5242 = vadd.f32 %v4955, %v5223
      %v5243 = vadd.f32 %v4957, %v5225
      %v5244 = vadd.f32 %v4960, %v5228
      %v5245 = vadd.f32 %v4962, %v5230
      %v5246 = vadd.f32 %v4965, %v5233
      %v5247 = vadd.f32 %v4967, %v5235
      %v5248 = vadd.f32 %v4970, %v5238
      %v5249 = vadd.f32 %v4972, %v5240
      %v5252 = vunpack.c.l.b16 %v4428
      %v5253 = vunpack.c.l.b16 %v4429
      %v5254 = vpack.c.b16 %v5253, %v5252
      %5256 = vxpose.xlu0.c.b16.start [1/8] %v5254, 128
      %5257 = vxpose.xlu0.c.b16.cont [2/8] 0, 128
      %5258 = vxpose.xlu0.c.b16.cont [3/8] 0, 128
      %5259 = vxpose.xlu0.c.b16.cont [4/8] 0, 128
      %5260 = vxpose.xlu0.c.b16.cont [5/8] 0, 128
      %5261 = vxpose.xlu0.c.b16.cont [6/8] 0, 128
      %5262 = vxpose.xlu0.c.b16.cont [7/8] 0, 128
      %5263 = vxpose.xlu0.c.b16.end [8/8] 0, 128
      %v5264 = vpop.trf.xlu0
      %v5265 = vpop.trf.xlu0
      %v5266 = vpop.trf.xlu0
      %v5267 = vpop.trf.xlu0
      %v5268 = vpop.trf.xlu0
      %v5269 = vpop.trf.xlu0
      %v5270 = vpop.trf.xlu0
      %v5271 = vpop.trf.xlu0
      %v5274 = vunpack.c.l.b16 %v4436
      %v5275 = vunpack.c.l.b16 %v4437
      %v5276 = vpack.c.b16 %v5275, %v5274
      %v5279 = vsel %vm1052, %v5264, 0
      %v5282 = vsel %vm1052, %v5265, 0
      %v5285 = vsel %vm1052, %v5266, 0
      %v5288 = vsel %vm1052, %v5267, 0
      %5290 = vmatpush.bf16.msra.mxu0 0
      %5291 = vmatpush.bf16.msra.mxu0 0
      %5292 = vmatpush.bf16.msra.mxu0 0
      %5293 = vmatpush.bf16.msra.mxu0 0
      %5294 = vmatpush.bf16.msra.mxu0 0
      %5295 = vmatpush.bf16.msra.mxu0 0
      %5296 = vmatpush.bf16.msra.mxu0 0
      %5297 = vmatpush.bf16.msra.mxu0 %v5276
      %5298 = vmatmul.bf16.gmra.mxu0 %v5279
      %v5299 = vpop.f32.mrf.mxu0
      %v5300 = vadd.f32 0.0, %v5299
      %v5301 = vpop.f32.mrf.mxu0
      %v5302 = vadd.f32 0.0, %v5301
      %5303 = vmatmul.bf16.gmra.mxu0 %v5282
      %v5304 = vpop.f32.mrf.mxu0
      %v5305 = vadd.f32 0.0, %v5304
      %v5306 = vpop.f32.mrf.mxu0
      %v5307 = vadd.f32 0.0, %v5306
      %5308 = vmatmul.bf16.gmra.mxu0 %v5285
      %v5309 = vpop.f32.mrf.mxu0
      %v5310 = vadd.f32 0.0, %v5309
      %v5311 = vpop.f32.mrf.mxu0
      %v5312 = vadd.f32 0.0, %v5311
      %5313 = vmatmul.bf16.gmra.mxu0 %v5288
      %v5314 = vpop.f32.mrf.mxu0
      %v5315 = vadd.f32 0.0, %v5314
      %v5316 = vpop.f32.mrf.mxu0
      %v5317 = vadd.f32 0.0, %v5316
      %5318 = vdwg.mxu0
      %v5319 = vsel %vm987, %v5300, -inf
      %5320 = vmax.xlane.f32.xlu0 %v5319
      %v5321 = vpop.xlane.xlu0 %5320
      %v5322 = vsel %vm987, %v5302, -inf
      %5323 = vmax.xlane.f32.xlu0 %v5322
      %v5324 = vpop.xlane.xlu0 %5323
      %v5325 = vsel %vm987, %v5305, -inf
      %5326 = vmax.xlane.f32.xlu0 %v5325
      %v5327 = vpop.xlane.xlu0 %5326
      %v5328 = vsel %vm987, %v5307, -inf
      %5329 = vmax.xlane.f32.xlu0 %v5328
      %v5330 = vpop.xlane.xlu0 %5329
      %v5331 = vsel %vm987, %v5310, -inf
      %5332 = vmax.xlane.f32.xlu0 %v5331
      %v5333 = vpop.xlane.xlu0 %5332
      %v5334 = vsel %vm987, %v5312, -inf
      %5335 = vmax.xlane.f32.xlu0 %v5334
      %v5336 = vpop.xlane.xlu0 %5335
      %v5337 = vsel %vm987, %v5315, -inf
      %5338 = vmax.xlane.f32.xlu0 %v5337
      %v5339 = vpop.xlane.xlu0 %5338
      %v5340 = vsel %vm987, %v5317, -inf
      %5341 = vmax.xlane.f32.xlu0 %v5340
      %v5342 = vpop.xlane.xlu0 %5341
      %v5343 = vsub.f32 %v5300, %v5321
      %v5344 = vsub.f32 %v5302, %v5324
      %v5345 = vsub.f32 %v5305, %v5327
      %v5346 = vsub.f32 %v5307, %v5330
      %v5347 = vsub.f32 %v5310, %v5333
      %v5348 = vsub.f32 %v5312, %v5336
      %v5349 = vsub.f32 %v5315, %v5339
      %v5350 = vsub.f32 %v5317, %v5342
      %v5351 = vmul.f32 %v5343, 1.442695
      %v5352 = vpow.pop %v5351
      %v5353 = vmul.f32 %v5344, 1.442695
      %v5354 = vpow.pop %v5353
      %v5355 = vmul.f32 %v5345, 1.442695
      %v5356 = vpow.pop %v5355
      %v5357 = vmul.f32 %v5346, 1.442695
      %v5358 = vpow.pop %v5357
      %v5359 = vmul.f32 %v5347, 1.442695
      %v5360 = vpow.pop %v5359
      %v5361 = vmul.f32 %v5348, 1.442695
      %v5362 = vpow.pop %v5361
      %v5363 = vmul.f32 %v5349, 1.442695
      %v5364 = vpow.pop %v5363
      %v5365 = vmul.f32 %v5350, 1.442695
      %v5366 = vpow.pop %v5365
      %v5367 = vsel %vm987, %v5352, 0.0
      %5368 = vadd.xlane.f32.xlu0 %v5367
      %v5369 = vpop.xlane.xlu0 %5368
      %v5370 = vsel %vm987, %v5354, 0.0
      %5371 = vadd.xlane.f32.xlu0 %v5370
      %v5372 = vpop.xlane.xlu0 %5371
      %v5373 = vsel %vm987, %v5356, 0.0
      %5374 = vadd.xlane.f32.xlu0 %v5373
      %v5375 = vpop.xlane.xlu0 %5374
      %v5376 = vsel %vm987, %v5358, 0.0
      %5377 = vadd.xlane.f32.xlu0 %v5376
      %v5378 = vpop.xlane.xlu0 %5377
      %v5379 = vsel %vm987, %v5360, 0.0
      %5380 = vadd.xlane.f32.xlu0 %v5379
      %v5381 = vpop.xlane.xlu0 %5380
      %v5382 = vsel %vm987, %v5362, 0.0
      %5383 = vadd.xlane.f32.xlu0 %v5382
      %v5384 = vpop.xlane.xlu0 %5383
      %v5385 = vsel %vm987, %v5364, 0.0
      %5386 = vadd.xlane.f32.xlu0 %v5385
      %v5387 = vpop.xlane.xlu0 %5386
      %v5388 = vsel %vm987, %v5366, 0.0
      %5389 = vadd.xlane.f32.xlu0 %v5388
      %v5390 = vpop.xlane.xlu0 %5389
      %v5391 = vrcp.pop %v5369
      %v5392 = vrcp.pop %v5372
      %v5393 = vrcp.pop %v5375
      %v5394 = vrcp.pop %v5378
      %v5395 = vrcp.pop %v5381
      %v5396 = vrcp.pop %v5384
      %v5397 = vrcp.pop %v5387
      %v5398 = vrcp.pop %v5390
      %v5399 = vmul.f32 %v5352, %v5391
      %v5400 = vmul.f32 %v5354, %v5392
      %v5401 = vmul.f32 %v5356, %v5393
      %v5402 = vmul.f32 %v5358, %v5394
      %v5403 = vmul.f32 %v5360, %v5395
      %v5404 = vmul.f32 %v5362, %v5396
      %v5405 = vmul.f32 %v5364, %v5397
      %v5406 = vmul.f32 %v5366, %v5398
      %s5407 = scalar_lea.vmem %s14, 224
      %v5408 = vld [vmem:[%s5407] sm:$0xf]
      %v5409 = vld [vmem:[%s5407 + $0x4] sm:$0xf]
      %v5410 = vld [vmem:[%s5407 + $0x8] sm:$0xf]
      %v5411 = vld [vmem:[%s5407 + $0xc] sm:$0xf]
      %v5412 = vld [vmem:[%s5407 + $0x10] sm:$0xf]
      %v5413 = vld [vmem:[%s5407 + $0x14] sm:$0xf]
      %v5414 = vld [vmem:[%s5407 + $0x18] sm:$0xf]
      %v5415 = vld [vmem:[%s5407 + $0x1c] sm:$0xf]
      %v5424 = vunpack.c.l.b16 %v5408
      %v5425 = vunpack.c.l.b16 %v5409
      %v5426 = vunpack.c.l.b16 %v5410
      %v5427 = vunpack.c.l.b16 %v5411
      %v5428 = vunpack.c.l.b16 %v5412
      %v5429 = vunpack.c.l.b16 %v5413
      %v5430 = vunpack.c.l.b16 %v5414
      %v5431 = vunpack.c.l.b16 %v5415
      %v5432 = vpack.c.b16 %v5425, %v5424
      %v5433 = vpack.c.b16 %v5427, %v5426
      %v5434 = vpack.c.b16 %v5429, %v5428
      %v5435 = vpack.c.b16 %v5431, %v5430
      %5440 = vmatpush.bf16.msra.mxu0 0
      %5441 = vmatpush.bf16.msra.mxu0 0
      %5442 = vmatpush.bf16.msra.mxu0 0
      %5443 = vmatpush.bf16.msra.mxu0 0
      %5444 = vmatpush.bf16.msra.mxu0 %v5435
      %5445 = vmatpush.bf16.msra.mxu0 %v5434
      %5446 = vmatpush.bf16.msra.mxu0 %v5433
      %5447 = vmatpush.bf16.msra.mxu0 %v5432
      %5448 = vmatmul.bf16.gmra.mxu0 %v4362
      %v5449 = vpop.f32.mrf.mxu0
      %v5450 = vadd.f32 0.0, %v5449
      %v5451 = vpop.f32.mrf.mxu0
      %v5452 = vadd.f32 0.0, %v5451
      %5453 = vmatmul.bf16.gmra.mxu0 %v4365
      %v5454 = vpop.f32.mrf.mxu0
      %v5455 = vadd.f32 0.0, %v5454
      %v5456 = vpop.f32.mrf.mxu0
      %v5457 = vadd.f32 0.0, %v5456
      %5458 = vmatmul.bf16.gmra.mxu0 %v4368
      %v5459 = vpop.f32.mrf.mxu0
      %v5460 = vadd.f32 0.0, %v5459
      %v5461 = vpop.f32.mrf.mxu0
      %v5462 = vadd.f32 0.0, %v5461
      %5463 = vmatmul.bf16.gmra.mxu0 %v4371
      %v5464 = vpop.f32.mrf.mxu0
      %v5465 = vadd.f32 0.0, %v5464
      %v5466 = vpop.f32.mrf.mxu0
      %v5467 = vadd.f32 0.0, %v5466
      %5468 = vdwg.mxu0
      %v5469 = vpack.c.bf16 %v5452, %v5450
      %v5470 = vpack.c.bf16 %v5457, %v5455
      %v5471 = vpack.c.bf16 %v5462, %v5460
      %v5472 = vpack.c.bf16 %v5467, %v5465
      %v5473 = vpack.c.bf16 %v5400, %v5399
      %v5474 = vpack.c.bf16 %v5402, %v5401
      %v5475 = vpack.c.bf16 %v5404, %v5403
      %v5476 = vpack.c.bf16 %v5406, %v5405
      %v5478 = vsel %vm987, %v5473, 0
      %v5481 = vsel %vm987, %v5474, 0
      %v5484 = vsel %vm987, %v5475, 0
      %v5487 = vsel %vm987, %v5476, 0
      %5489 = vmatpush.bf16.msra.mxu0 0
      %5490 = vmatpush.bf16.msra.mxu0 0
      %5491 = vmatpush.bf16.msra.mxu0 0
      %5492 = vmatpush.bf16.msra.mxu0 0
      %5493 = vmatpush.bf16.msra.mxu0 %v5472
      %5494 = vmatpush.bf16.msra.mxu0 %v5471
      %5495 = vmatpush.bf16.msra.mxu0 %v5470
      %5496 = vmatpush.bf16.msra.mxu0 %v5469
      %5497 = vmatmul.bf16.gmra.mxu0 %v5478
      %v5498 = vpop.f32.mrf.mxu0
      %v5499 = vadd.f32 0.0, %v5498
      %v5500 = vpop.f32.mrf.mxu0
      %v5501 = vadd.f32 0.0, %v5500
      %5502 = vmatmul.bf16.gmra.mxu0 %v5481
      %v5503 = vpop.f32.mrf.mxu0
      %v5504 = vadd.f32 0.0, %v5503
      %v5505 = vpop.f32.mrf.mxu0
      %v5506 = vadd.f32 0.0, %v5505
      %5507 = vmatmul.bf16.gmra.mxu0 %v5484
      %v5508 = vpop.f32.mrf.mxu0
      %v5509 = vadd.f32 0.0, %v5508
      %v5510 = vpop.f32.mrf.mxu0
      %v5511 = vadd.f32 0.0, %v5510
      %5512 = vmatmul.bf16.gmra.mxu0 %v5487
      %v5513 = vpop.f32.mrf.mxu0
      %v5514 = vadd.f32 0.0, %v5513
      %v5515 = vpop.f32.mrf.mxu0
      %v5516 = vadd.f32 0.0, %v5515
      %5517 = vdwg.mxu0
      %v5518 = vadd.f32 %v5242, %v5499
      %v5519 = vadd.f32 %v5243, %v5501
      %v5520 = vadd.f32 %v5244, %v5504
      %v5521 = vadd.f32 %v5245, %v5506
      %v5522 = vadd.f32 %v5246, %v5509
      %v5523 = vadd.f32 %v5247, %v5511
      %v5524 = vadd.f32 %v5248, %v5514
      %v5525 = vadd.f32 %v5249, %v5516
      %s5526 = scalar_lea.vmem %s15, 1
      %v5527 = vld [vmem:[%s5526] sm:$0x1]
      %v5529 = vperm.slane %v5527, 0
      %v5531 = vadd.f32 %v5518, %v5529
      %v5532 = vadd.f32 %v5519, %v5529
      %v5533 = vadd.f32 %v5520, %v5529
      %v5534 = vadd.f32 %v5521, %v5529
      %v5535 = vadd.f32 %v5522, %v5529
      %v5536 = vadd.f32 %v5523, %v5529
      %v5537 = vadd.f32 %v5524, %v5529
      %v5538 = vadd.f32 %v5525, %v5529
      %v5539 = vmul.f32 %v3960, %v5531
      %v5540 = vmul.f32 %v3962, %v5532
      %v5541 = vmul.f32 %v3965, %v5533
      %v5542 = vmul.f32 %v3967, %v5534
      %v5543 = vmul.f32 %v3970, %v5535
      %v5544 = vmul.f32 %v3972, %v5536
      %v5545 = vmul.f32 %v3975, %v5537
      %v5546 = vmul.f32 %v3977, %v5538
      %v5547 = vadd.f32 %v3770, %v5539
      %v5548 = vadd.f32 %v3771, %v5540
      %v5549 = vadd.f32 %v3772, %v5541
      %v5550 = vadd.f32 %v3773, %v5542
      %v5551 = vadd.f32 %v3774, %v5543
      %v5552 = vadd.f32 %v3775, %v5544
      %v5553 = vadd.f32 %v3776, %v5545
      %v5554 = vadd.f32 %v3777, %v5546
      %s5555 = scalar_lea.vmem %s10, 288
      %v5556 = vld [vmem:[%s5555] sm:$0xf]
      %v5557 = vld [vmem:[%s5555 + $0x4] sm:$0xf]
      %v5558 = vld [vmem:[%s5555 + $0x8] sm:$0xf]
      %v5559 = vld [vmem:[%s5555 + $0xc] sm:$0xf]
      %v5560 = vld [vmem:[%s5555 + $0x10] sm:$0xf]
      %v5561 = vld [vmem:[%s5555 + $0x14] sm:$0xf]
      %v5562 = vld [vmem:[%s5555 + $0x18] sm:$0xf]
      %v5563 = vld [vmem:[%s5555 + $0x1c] sm:$0xf]
      %s5564 = scalar_lea.vmem %s11, 9
      %v5565 = vld [vmem:[%s5564] sm:$0x1]
      %v5567 = vperm.slane %v5565, 0
      %v5577 = vunpack.c.l.b16 %v5556
      %v5578 = vunpack.c.l.b16 %v5557
      %v5579 = vunpack.c.l.b16 %v5558
      %v5580 = vunpack.c.l.b16 %v5559
      %v5581 = vunpack.c.l.b16 %v5560
      %v5582 = vunpack.c.l.b16 %v5561
      %v5583 = vunpack.c.l.b16 %v5562
      %v5584 = vunpack.c.l.b16 %v5563
      %v5585 = vpack.c.b16 %v5578, %v5577
      %v5586 = vpack.c.b16 %v5580, %v5579
      %v5587 = vpack.c.b16 %v5582, %v5581
      %v5588 = vpack.c.b16 %v5584, %v5583
      %5593 = vmatpush.bf16.msra.mxu0 0
      %5594 = vmatpush.bf16.msra.mxu0 0
      %5595 = vmatpush.bf16.msra.mxu0 0
      %5596 = vmatpush.bf16.msra.mxu0 0
      %5597 = vmatpush.bf16.msra.mxu0 %v5588
      %5598 = vmatpush.bf16.msra.mxu0 %v5587
      %5599 = vmatpush.bf16.msra.mxu0 %v5586
      %5600 = vmatpush.bf16.msra.mxu0 %v5585
      %5601 = vmatmul.bf16.gmra.mxu0 %v1147
      %v5602 = vpop.f32.mrf.mxu0
      %v5603 = vadd.f32 %v5567, %v5602
      %v5604 = vpop.f32.mrf.mxu0
      %v5605 = vadd.f32 %v5567, %v5604
      %5606 = vmatmul.bf16.gmra.mxu0 %v1147
      %v5607 = vpop.f32.mrf.mxu0
      %v5608 = vadd.f32 %v5567, %v5607
      %v5609 = vpop.f32.mrf.mxu0
      %v5610 = vadd.f32 %v5567, %v5609
      %5611 = vmatmul.bf16.gmra.mxu0 %v1147
      %v5612 = vpop.f32.mrf.mxu0
      %v5613 = vadd.f32 %v5567, %v5612
      %v5614 = vpop.f32.mrf.mxu0
      %v5615 = vadd.f32 %v5567, %v5614
      %5616 = vmatmul.bf16.gmra.mxu0 %v1147
      %v5617 = vpop.f32.mrf.mxu0
      %v5618 = vadd.f32 %v5567, %v5617
      %v5619 = vpop.f32.mrf.mxu0
      %v5620 = vadd.f32 %v5567, %v5619
      %5621 = vdwg.mxu0
      %s5622 = scalar_lea.vmem %s10, 320
      %v5623 = vld [vmem:[%s5622] sm:$0xf]
      %v5624 = vld [vmem:[%s5622 + $0x4] sm:$0xf]
      %v5625 = vld [vmem:[%s5622 + $0x8] sm:$0xf]
      %v5626 = vld [vmem:[%s5622 + $0xc] sm:$0xf]
      %v5627 = vld [vmem:[%s5622 + $0x10] sm:$0xf]
      %v5628 = vld [vmem:[%s5622 + $0x14] sm:$0xf]
      %v5629 = vld [vmem:[%s5622 + $0x18] sm:$0xf]
      %v5630 = vld [vmem:[%s5622 + $0x1c] sm:$0xf]
      %s5631 = scalar_lea.vmem %s11, 10
      %v5632 = vld [vmem:[%s5631] sm:$0x1]
      %v5634 = vperm.slane %v5632, 0
      %v5644 = vunpack.c.l.b16 %v5623
      %v5645 = vunpack.c.l.b16 %v5624
      %v5646 = vunpack.c.l.b16 %v5625
      %v5647 = vunpack.c.l.b16 %v5626
      %v5648 = vunpack.c.l.b16 %v5627
      %v5649 = vunpack.c.l.b16 %v5628
      %v5650 = vunpack.c.l.b16 %v5629
      %v5651 = vunpack.c.l.b16 %v5630
      %v5652 = vpack.c.b16 %v5645, %v5644
      %v5653 = vpack.c.b16 %v5647, %v5646
      %v5654 = vpack.c.b16 %v5649, %v5648
      %v5655 = vpack.c.b16 %v5651, %v5650
      %5660 = vmatpush.bf16.msra.mxu0 0
      %5661 = vmatpush.bf16.msra.mxu0 0
      %5662 = vmatpush.bf16.msra.mxu0 0
      %5663 = vmatpush.bf16.msra.mxu0 0
      %5664 = vmatpush.bf16.msra.mxu0 %v5655
      %5665 = vmatpush.bf16.msra.mxu0 %v5654
      %5666 = vmatpush.bf16.msra.mxu0 %v5653
      %5667 = vmatpush.bf16.msra.mxu0 %v5652
      %5668 = vmatmul.bf16.gmra.mxu0 %v1147
      %v5669 = vpop.f32.mrf.mxu0
      %v5670 = vadd.f32 %v5634, %v5669
      %v5671 = vpop.f32.mrf.mxu0
      %v5672 = vadd.f32 %v5634, %v5671
      %5673 = vmatmul.bf16.gmra.mxu0 %v1147
      %v5674 = vpop.f32.mrf.mxu0
      %v5675 = vadd.f32 %v5634, %v5674
      %v5676 = vpop.f32.mrf.mxu0
      %v5677 = vadd.f32 %v5634, %v5676
      %5678 = vmatmul.bf16.gmra.mxu0 %v1147
      %v5679 = vpop.f32.mrf.mxu0
      %v5680 = vadd.f32 %v5634, %v5679
      %v5681 = vpop.f32.mrf.mxu0
      %v5682 = vadd.f32 %v5634, %v5681
      %5683 = vmatmul.bf16.gmra.mxu0 %v1147
      %v5684 = vpop.f32.mrf.mxu0
      %v5685 = vadd.f32 %v5634, %v5684
      %v5686 = vpop.f32.mrf.mxu0
      %v5687 = vadd.f32 %v5634, %v5686
      %5688 = vdwg.mxu0
      %s5689 = scalar_lea.vmem %s10, 352
      %v5690 = vld [vmem:[%s5689] sm:$0xf]
      %v5691 = vld [vmem:[%s5689 + $0x4] sm:$0xf]
      %v5692 = vld [vmem:[%s5689 + $0x8] sm:$0xf]
      %v5693 = vld [vmem:[%s5689 + $0xc] sm:$0xf]
      %v5694 = vld [vmem:[%s5689 + $0x10] sm:$0xf]
      %v5695 = vld [vmem:[%s5689 + $0x14] sm:$0xf]
      %v5696 = vld [vmem:[%s5689 + $0x18] sm:$0xf]
      %v5697 = vld [vmem:[%s5689 + $0x1c] sm:$0xf]
      %s5698 = scalar_lea.vmem %s11, 11
      %v5699 = vld [vmem:[%s5698] sm:$0x1]
      %v5701 = vperm.slane %v5699, 0
      %v5711 = vunpack.c.l.b16 %v5690
      %v5712 = vunpack.c.l.b16 %v5691
      %v5713 = vunpack.c.l.b16 %v5692
      %v5714 = vunpack.c.l.b16 %v5693
      %v5715 = vunpack.c.l.b16 %v5694
      %v5716 = vunpack.c.l.b16 %v5695
      %v5717 = vunpack.c.l.b16 %v5696
      %v5718 = vunpack.c.l.b16 %v5697
      %v5719 = vpack.c.b16 %v5712, %v5711
      %v5720 = vpack.c.b16 %v5714, %v5713
      %v5721 = vpack.c.b16 %v5716, %v5715
      %v5722 = vpack.c.b16 %v5718, %v5717
      %5727 = vmatpush.bf16.msra.mxu0 0
      %5728 = vmatpush.bf16.msra.mxu0 0
      %5729 = vmatpush.bf16.msra.mxu0 0
      %5730 = vmatpush.bf16.msra.mxu0 0
      %5731 = vmatpush.bf16.msra.mxu0 %v5722
      %5732 = vmatpush.bf16.msra.mxu0 %v5721
      %5733 = vmatpush.bf16.msra.mxu0 %v5720
      %5734 = vmatpush.bf16.msra.mxu0 %v5719
      %5735 = vmatmul.bf16.gmra.mxu0 %v1147
      %v5736 = vpop.f32.mrf.mxu0
      %v5737 = vadd.f32 %v5701, %v5736
      %v5738 = vpop.f32.mrf.mxu0
      %v5739 = vadd.f32 %v5701, %v5738
      %5740 = vmatmul.bf16.gmra.mxu0 %v1147
      %v5741 = vpop.f32.mrf.mxu0
      %v5742 = vadd.f32 %v5701, %v5741
      %v5743 = vpop.f32.mrf.mxu0
      %v5744 = vadd.f32 %v5701, %v5743
      %5745 = vmatmul.bf16.gmra.mxu0 %v1147
      %v5746 = vpop.f32.mrf.mxu0
      %v5747 = vadd.f32 %v5701, %v5746
      %v5748 = vpop.f32.mrf.mxu0
      %v5749 = vadd.f32 %v5701, %v5748
      %5750 = vmatmul.bf16.gmra.mxu0 %v1147
      %v5751 = vpop.f32.mrf.mxu0
      %v5752 = vadd.f32 %v5701, %v5751
      %v5753 = vpop.f32.mrf.mxu0
      %v5754 = vadd.f32 %v5701, %v5753
      %5755 = vdwg.mxu0
      %v5756 = vsel %vm987, %v5547, 0.0
      %5757 = vadd.xlane.f32.xlu0 %v5756
      %v5758 = vpop.xlane.xlu0 %5757
      %v5759 = vsel %vm987, %v5548, 0.0
      %5760 = vadd.xlane.f32.xlu0 %v5759
      %v5761 = vpop.xlane.xlu0 %5760
      %v5762 = vsel %vm987, %v5549, 0.0
      %5763 = vadd.xlane.f32.xlu0 %v5762
      %v5764 = vpop.xlane.xlu0 %5763
      %v5765 = vsel %vm987, %v5550, 0.0
      %5766 = vadd.xlane.f32.xlu0 %v5765
      %v5767 = vpop.xlane.xlu0 %5766
      %v5768 = vsel %vm987, %v5551, 0.0
      %5769 = vadd.xlane.f32.xlu0 %v5768
      %v5770 = vpop.xlane.xlu0 %5769
      %v5771 = vsel %vm987, %v5552, 0.0
      %5772 = vadd.xlane.f32.xlu0 %v5771
      %v5773 = vpop.xlane.xlu0 %5772
      %v5774 = vsel %vm987, %v5553, 0.0
      %5775 = vadd.xlane.f32.xlu0 %v5774
      %v5776 = vpop.xlane.xlu0 %5775
      %v5777 = vsel %vm987, %v5554, 0.0
      %5778 = vadd.xlane.f32.xlu0 %v5777
      %v5779 = vpop.xlane.xlu0 %5778
      %v5780 = vmul.f32 %v5758, %v1342
      %v5781 = vmul.f32 %v5761, %v1342
      %v5782 = vmul.f32 %v5764, %v1342
      %v5783 = vmul.f32 %v5767, %v1342
      %v5784 = vmul.f32 %v5770, %v1342
      %v5785 = vmul.f32 %v5773, %v1342
      %v5786 = vmul.f32 %v5776, %v1342
      %v5787 = vmul.f32 %v5779, %v1342
      %v5788 = vsub.f32 %v5547, %v5780
      %v5789 = vsub.f32 %v5548, %v5781
      %v5790 = vsub.f32 %v5549, %v5782
      %v5791 = vsub.f32 %v5550, %v5783
      %v5792 = vsub.f32 %v5551, %v5784
      %v5793 = vsub.f32 %v5552, %v5785
      %v5794 = vsub.f32 %v5553, %v5786
      %v5795 = vsub.f32 %v5554, %v5787
      %v5796 = vmul.f32 %v5788, %v5788
      %v5797 = vmul.f32 %v5789, %v5789
      %v5798 = vmul.f32 %v5790, %v5790
      %v5799 = vmul.f32 %v5791, %v5791
      %v5800 = vmul.f32 %v5792, %v5792
      %v5801 = vmul.f32 %v5793, %v5793
      %v5802 = vmul.f32 %v5794, %v5794
      %v5803 = vmul.f32 %v5795, %v5795
      %v5804 = vsel %vm987, %v5796, 0.0
      %5805 = vadd.xlane.f32.xlu0 %v5804
      %v5806 = vpop.xlane.xlu0 %5805
      %v5807 = vsel %vm987, %v5797, 0.0
      %5808 = vadd.xlane.f32.xlu0 %v5807
      %v5809 = vpop.xlane.xlu0 %5808
      %v5810 = vsel %vm987, %v5798, 0.0
      %5811 = vadd.xlane.f32.xlu0 %v5810
      %v5812 = vpop.xlane.xlu0 %5811
      %v5813 = vsel %vm987, %v5799, 0.0
      %5814 = vadd.xlane.f32.xlu0 %v5813
      %v5815 = vpop.xlane.xlu0 %5814
      %v5816 = vsel %vm987, %v5800, 0.0
      %5817 = vadd.xlane.f32.xlu0 %v5816
      %v5818 = vpop.xlane.xlu0 %5817
      %v5819 = vsel %vm987, %v5801, 0.0
      %5820 = vadd.xlane.f32.xlu0 %v5819
      %v5821 = vpop.xlane.xlu0 %5820
      %v5822 = vsel %vm987, %v5802, 0.0
      %5823 = vadd.xlane.f32.xlu0 %v5822
      %v5824 = vpop.xlane.xlu0 %5823
      %v5825 = vsel %vm987, %v5803, 0.0
      %5826 = vadd.xlane.f32.xlu0 %v5825
      %v5827 = vpop.xlane.xlu0 %5826
      %v5828 = vmul.f32 %v5806, %v1342
      %v5829 = vmul.f32 %v5809, %v1342
      %v5830 = vmul.f32 %v5812, %v1342
      %v5831 = vmul.f32 %v5815, %v1342
      %v5832 = vmul.f32 %v5818, %v1342
      %v5833 = vmul.f32 %v5821, %v1342
      %v5834 = vmul.f32 %v5824, %v1342
      %v5835 = vmul.f32 %v5827, %v1342
      %v5836 = vadd.f32 %v5828, 1e-06
      %v5837 = vadd.f32 %v5829, 1e-06
      %v5838 = vadd.f32 %v5830, 1e-06
      %v5839 = vadd.f32 %v5831, 1e-06
      %v5840 = vadd.f32 %v5832, 1e-06
      %v5841 = vadd.f32 %v5833, 1e-06
      %v5842 = vadd.f32 %v5834, 1e-06
      %v5843 = vadd.f32 %v5835, 1e-06
      %v5844 = vrsqrt.pop %v5836
      %v5845 = vmul.f32 %v5844, %v5836
      %v5846 = vmul.f32 %v5845, %v5844
      %v5847 = vmul.f32 0.5, %v5846
      %v5848 = vsub.f32 1.5, %v5847
      %v5849 = vmul.f32 %v5844, %v5848
      %vm5850 = vweird.f32 %v5836
      %vm5851 = vweird.f32 %v5844
      %vm5852 = vmor %vm5850, %vm5851
      %v5853 = vsel %vm5852, %v5844, %v5849
      %v5854 = vrsqrt.pop %v5837
      %v5855 = vmul.f32 %v5854, %v5837
      %v5856 = vmul.f32 %v5855, %v5854
      %v5857 = vmul.f32 0.5, %v5856
      %v5858 = vsub.f32 1.5, %v5857
      %v5859 = vmul.f32 %v5854, %v5858
      %vm5860 = vweird.f32 %v5837
      %vm5861 = vweird.f32 %v5854
      %vm5862 = vmor %vm5860, %vm5861
      %v5863 = vsel %vm5862, %v5854, %v5859
      %v5864 = vrsqrt.pop %v5838
      %v5865 = vmul.f32 %v5864, %v5838
      %v5866 = vmul.f32 %v5865, %v5864
      %v5867 = vmul.f32 0.5, %v5866
      %v5868 = vsub.f32 1.5, %v5867
      %v5869 = vmul.f32 %v5864, %v5868
      %vm5870 = vweird.f32 %v5838
      %vm5871 = vweird.f32 %v5864
      %vm5872 = vmor %vm5870, %vm5871
      %v5873 = vsel %vm5872, %v5864, %v5869
      %v5874 = vrsqrt.pop %v5839
      %v5875 = vmul.f32 %v5874, %v5839
      %v5876 = vmul.f32 %v5875, %v5874
      %v5877 = vmul.f32 0.5, %v5876
      %v5878 = vsub.f32 1.5, %v5877
      %v5879 = vmul.f32 %v5874, %v5878
      %vm5880 = vweird.f32 %v5839
      %vm5881 = vweird.f32 %v5874
      %vm5882 = vmor %vm5880, %vm5881
      %v5883 = vsel %vm5882, %v5874, %v5879
      %v5884 = vrsqrt.pop %v5840
      %v5885 = vmul.f32 %v5884, %v5840
      %v5886 = vmul.f32 %v5885, %v5884
      %v5887 = vmul.f32 0.5, %v5886
      %v5888 = vsub.f32 1.5, %v5887
      %v5889 = vmul.f32 %v5884, %v5888
      %vm5890 = vweird.f32 %v5840
      %vm5891 = vweird.f32 %v5884
      %vm5892 = vmor %vm5890, %vm5891
      %v5893 = vsel %vm5892, %v5884, %v5889
      %v5894 = vrsqrt.pop %v5841
      %v5895 = vmul.f32 %v5894, %v5841
      %v5896 = vmul.f32 %v5895, %v5894
      %v5897 = vmul.f32 0.5, %v5896
      %v5898 = vsub.f32 1.5, %v5897
      %v5899 = vmul.f32 %v5894, %v5898
      %vm5900 = vweird.f32 %v5841
      %vm5901 = vweird.f32 %v5894
      %vm5902 = vmor %vm5900, %vm5901
      %v5903 = vsel %vm5902, %v5894, %v5899
      %v5904 = vrsqrt.pop %v5842
      %v5905 = vmul.f32 %v5904, %v5842
      %v5906 = vmul.f32 %v5905, %v5904
      %v5907 = vmul.f32 0.5, %v5906
      %v5908 = vsub.f32 1.5, %v5907
      %v5909 = vmul.f32 %v5904, %v5908
      %vm5910 = vweird.f32 %v5842
      %vm5911 = vweird.f32 %v5904
      %vm5912 = vmor %vm5910, %vm5911
      %v5913 = vsel %vm5912, %v5904, %v5909
      %v5914 = vrsqrt.pop %v5843
      %v5915 = vmul.f32 %v5914, %v5843
      %v5916 = vmul.f32 %v5915, %v5914
      %v5917 = vmul.f32 0.5, %v5916
      %v5918 = vsub.f32 1.5, %v5917
      %v5919 = vmul.f32 %v5914, %v5918
      %vm5920 = vweird.f32 %v5843
      %vm5921 = vweird.f32 %v5914
      %vm5922 = vmor %vm5920, %vm5921
      %v5923 = vsel %vm5922, %v5914, %v5919
      %v5924 = vmul.f32 %v5788, %v5853
      %v5925 = vmul.f32 %v5789, %v5863
      %v5926 = vmul.f32 %v5790, %v5873
      %v5927 = vmul.f32 %v5791, %v5883
      %v5928 = vmul.f32 %v5792, %v5893
      %v5929 = vmul.f32 %v5793, %v5903
      %v5930 = vmul.f32 %v5794, %v5913
      %v5931 = vmul.f32 %v5795, %v5923
      %v5932 = vadd.f32 %v5670, 1.0
      %v5933 = vadd.f32 %v5672, 1.0
      %v5934 = vadd.f32 %v5675, 1.0
      %v5935 = vadd.f32 %v5677, 1.0
      %v5936 = vadd.f32 %v5680, 1.0
      %v5937 = vadd.f32 %v5682, 1.0
      %v5938 = vadd.f32 %v5685, 1.0
      %v5939 = vadd.f32 %v5687, 1.0
      %v5940 = vmul.f32 %v5924, %v5932
      %v5941 = vmul.f32 %v5925, %v5933
      %v5942 = vmul.f32 %v5926, %v5934
      %v5943 = vmul.f32 %v5927, %v5935
      %v5944 = vmul.f32 %v5928, %v5936
      %v5945 = vmul.f32 %v5929, %v5937
      %v5946 = vmul.f32 %v5930, %v5938
      %v5947 = vmul.f32 %v5931, %v5939
      %v5948 = vadd.f32 %v5940, %v5603
      %v5949 = vadd.f32 %v5941, %v5605
      %v5950 = vadd.f32 %v5942, %v5608
      %v5951 = vadd.f32 %v5943, %v5610
      %v5952 = vadd.f32 %v5944, %v5613
      %v5953 = vadd.f32 %v5945, %v5615
      %v5954 = vadd.f32 %v5946, %v5618
      %v5955 = vadd.f32 %v5947, %v5620
      %v5956 = vpack.c.bf16 %v5949, %v5948
      %v5957 = vpack.c.bf16 %v5951, %v5950
      %v5958 = vpack.c.bf16 %v5953, %v5952
      %v5959 = vpack.c.bf16 %v5955, %v5954
      %s5960 = scalar_lea.vmem %s16, 64
      %v5961 = vld [vmem:[%s5960] sm:$0xff]
      %v5962 = vld [vmem:[%s5960 + $0x8] sm:$0xff]
      %v5963 = vld [vmem:[%s5960 + $0x10] sm:$0xff]
      %v5964 = vld [vmem:[%s5960 + $0x18] sm:$0xff]
      %v5965 = vld [vmem:[%s5960 + $0x20] sm:$0xff]
      %v5966 = vld [vmem:[%s5960 + $0x28] sm:$0xff]
      %v5967 = vld [vmem:[%s5960 + $0x30] sm:$0xff]
      %v5968 = vld [vmem:[%s5960 + $0x38] sm:$0xff]
      %s5969 = scalar_lea.vmem %s17, 2
      %v5970 = vld [vmem:[%s5969] sm:$0x3]
      %v5972 = vperm.slane %v5970, 0
      %v5973 = vperm.slane %v5970, 1
      %v5984 = vunpack.c.l.b16 %v5961
      %v5985 = vunpack.c.h.b16 %v5961
      %v5986 = vunpack.c.l.b16 %v5962
      %v5987 = vunpack.c.h.b16 %v5962
      %v5988 = vunpack.c.l.b16 %v5963
      %v5989 = vunpack.c.h.b16 %v5963
      %v5990 = vunpack.c.l.b16 %v5964
      %v5991 = vunpack.c.h.b16 %v5964
      %v5992 = vunpack.c.l.b16 %v5965
      %v5993 = vunpack.c.h.b16 %v5965
      %v5994 = vunpack.c.l.b16 %v5966
      %v5995 = vunpack.c.h.b16 %v5966
      %v5996 = vunpack.c.l.b16 %v5967
      %v5997 = vunpack.c.h.b16 %v5967
      %v5998 = vunpack.c.l.b16 %v5968
      %v5999 = vunpack.c.h.b16 %v5968
      %v6000 = vpack.c.b16 %v5986, %v5984
      %v6001 = vpack.c.b16 %v5987, %v5985
      %v6002 = vpack.c.b16 %v5990, %v5988
      %v6003 = vpack.c.b16 %v5991, %v5989
      %v6004 = vpack.c.b16 %v5994, %v5992
      %v6005 = vpack.c.b16 %v5995, %v5993
      %v6006 = vpack.c.b16 %v5998, %v5996
      %v6007 = vpack.c.b16 %v5999, %v5997
      %v6017 = vsel %vm987, %v5956, 0
      %v6020 = vsel %vm987, %v5957, 0
      %v6023 = vsel %vm987, %v5958, 0
      %v6026 = vsel %vm987, %v5959, 0
      %6028 = vmatpush.bf16.msra.mxu0 0
      %6029 = vmatpush.bf16.msra.mxu0 0
      %6030 = vmatpush.bf16.msra.mxu0 0
      %6031 = vmatpush.bf16.msra.mxu0 0
      %6032 = vmatpush.bf16.msra.mxu0 %v6006
      %6033 = vmatpush.bf16.msra.mxu0 %v6004
      %6034 = vmatpush.bf16.msra.mxu0 %v6002
      %6035 = vmatpush.bf16.msra.mxu0 %v6000
      %6036 = vmatmul.bf16.gmra.mxu0 %v6017
      %v6037 = vpop.f32.mrf.mxu0
      %v6038 = vadd.f32 %v5972, %v6037
      %v6039 = vpop.f32.mrf.mxu0
      %v6040 = vadd.f32 %v5972, %v6039
      %6041 = vmatmul.bf16.gmra.mxu0 %v6020
      %v6042 = vpop.f32.mrf.mxu0
      %v6043 = vadd.f32 %v5972, %v6042
      %v6044 = vpop.f32.mrf.mxu0
      %v6045 = vadd.f32 %v5972, %v6044
      %6046 = vmatmul.bf16.gmra.mxu0 %v6023
      %v6047 = vpop.f32.mrf.mxu0
      %v6048 = vadd.f32 %v5972, %v6047
      %v6049 = vpop.f32.mrf.mxu0
      %v6050 = vadd.f32 %v5972, %v6049
      %6051 = vmatmul.bf16.gmra.mxu0 %v6026
      %v6052 = vpop.f32.mrf.mxu0
      %v6053 = vadd.f32 %v5972, %v6052
      %v6054 = vpop.f32.mrf.mxu0
      %v6055 = vadd.f32 %v5972, %v6054
      %6056 = vdwg.mxu0
      %6057 = vmatpush.bf16.msra.mxu0 0
      %6058 = vmatpush.bf16.msra.mxu0 0
      %6059 = vmatpush.bf16.msra.mxu0 0
      %6060 = vmatpush.bf16.msra.mxu0 0
      %6061 = vmatpush.bf16.msra.mxu0 %v6007
      %6062 = vmatpush.bf16.msra.mxu0 %v6005
      %6063 = vmatpush.bf16.msra.mxu0 %v6003
      %6064 = vmatpush.bf16.msra.mxu0 %v6001
      %6065 = vmatmul.bf16.gmra.mxu0 %v6017
      %v6066 = vpop.f32.mrf.mxu0
      %v6067 = vadd.f32 %v5973, %v6066
      %v6068 = vpop.f32.mrf.mxu0
      %v6069 = vadd.f32 %v5973, %v6068
      %6070 = vmatmul.bf16.gmra.mxu0 %v6020
      %v6071 = vpop.f32.mrf.mxu0
      %v6072 = vadd.f32 %v5973, %v6071
      %v6073 = vpop.f32.mrf.mxu0
      %v6074 = vadd.f32 %v5973, %v6073
      %6075 = vmatmul.bf16.gmra.mxu0 %v6023
      %v6076 = vpop.f32.mrf.mxu0
      %v6077 = vadd.f32 %v5973, %v6076
      %v6078 = vpop.f32.mrf.mxu0
      %v6079 = vadd.f32 %v5973, %v6078
      %6080 = vmatmul.bf16.gmra.mxu0 %v6026
      %v6081 = vpop.f32.mrf.mxu0
      %v6082 = vadd.f32 %v5973, %v6081
      %v6083 = vpop.f32.mrf.mxu0
      %v6084 = vadd.f32 %v5973, %v6083
      %6085 = vdwg.mxu0
      %v6086 = vmul.f32 %v6038, 0.5
      %v6087 = vmul.f32 %v6067, 0.5
      %v6088 = vmul.f32 %v6040, 0.5
      %v6089 = vmul.f32 %v6069, 0.5
      %v6090 = vmul.f32 %v6043, 0.5
      %v6091 = vmul.f32 %v6072, 0.5
      %v6092 = vmul.f32 %v6045, 0.5
      %v6093 = vmul.f32 %v6074, 0.5
      %v6094 = vmul.f32 %v6048, 0.5
      %v6095 = vmul.f32 %v6077, 0.5
      %v6096 = vmul.f32 %v6050, 0.5
      %v6097 = vmul.f32 %v6079, 0.5
      %v6098 = vmul.f32 %v6053, 0.5
      %v6099 = vmul.f32 %v6082, 0.5
      %v6100 = vmul.f32 %v6055, 0.5
      %v6101 = vmul.f32 %v6084, 0.5
      %v6102 = vmul.f32 %v6038, 0.044715
      %v6103 = vmul.f32 %v6067, 0.044715
      %v6104 = vmul.f32 %v6040, 0.044715
      %v6105 = vmul.f32 %v6069, 0.044715
      %v6106 = vmul.f32 %v6043, 0.044715
      %v6107 = vmul.f32 %v6072, 0.044715
      %v6108 = vmul.f32 %v6045, 0.044715
      %v6109 = vmul.f32 %v6074, 0.044715
      %v6110 = vmul.f32 %v6048, 0.044715
      %v6111 = vmul.f32 %v6077, 0.044715
      %v6112 = vmul.f32 %v6050, 0.044715
      %v6113 = vmul.f32 %v6079, 0.044715
      %v6114 = vmul.f32 %v6053, 0.044715
      %v6115 = vmul.f32 %v6082, 0.044715
      %v6116 = vmul.f32 %v6055, 0.044715
      %v6117 = vmul.f32 %v6084, 0.044715
      %v6118 = vmul.f32 %v6102, %v6038
      %v6119 = vmul.f32 %v6103, %v6067
      %v6120 = vmul.f32 %v6104, %v6040
      %v6121 = vmul.f32 %v6105, %v6069
      %v6122 = vmul.f32 %v6106, %v6043
      %v6123 = vmul.f32 %v6107, %v6072
      %v6124 = vmul.f32 %v6108, %v6045
      %v6125 = vmul.f32 %v6109, %v6074
      %v6126 = vmul.f32 %v6110, %v6048
      %v6127 = vmul.f32 %v6111, %v6077
      %v6128 = vmul.f32 %v6112, %v6050
      %v6129 = vmul.f32 %v6113, %v6079
      %v6130 = vmul.f32 %v6114, %v6053
      %v6131 = vmul.f32 %v6115, %v6082
      %v6132 = vmul.f32 %v6116, %v6055
      %v6133 = vmul.f32 %v6117, %v6084
      %v6134 = vmul.f32 %v6118, %v6038
      %v6135 = vmul.f32 %v6119, %v6067
      %v6136 = vmul.f32 %v6120, %v6040
      %v6137 = vmul.f32 %v6121, %v6069
      %v6138 = vmul.f32 %v6122, %v6043
      %v6139 = vmul.f32 %v6123, %v6072
      %v6140 = vmul.f32 %v6124, %v6045
      %v6141 = vmul.f32 %v6125, %v6074
      %v6142 = vmul.f32 %v6126, %v6048
      %v6143 = vmul.f32 %v6127, %v6077
      %v6144 = vmul.f32 %v6128, %v6050
      %v6145 = vmul.f32 %v6129, %v6079
      %v6146 = vmul.f32 %v6130, %v6053
      %v6147 = vmul.f32 %v6131, %v6082
      %v6148 = vmul.f32 %v6132, %v6055
      %v6149 = vmul.f32 %v6133, %v6084
      %v6150 = vadd.f32 %v6038, %v6134
      %v6151 = vadd.f32 %v6067, %v6135
      %v6152 = vadd.f32 %v6040, %v6136
      %v6153 = vadd.f32 %v6069, %v6137
      %v6154 = vadd.f32 %v6043, %v6138
      %v6155 = vadd.f32 %v6072, %v6139
      %v6156 = vadd.f32 %v6045, %v6140
      %v6157 = vadd.f32 %v6074, %v6141
      %v6158 = vadd.f32 %v6048, %v6142
      %v6159 = vadd.f32 %v6077, %v6143
      %v6160 = vadd.f32 %v6050, %v6144
      %v6161 = vadd.f32 %v6079, %v6145
      %v6162 = vadd.f32 %v6053, %v6146
      %v6163 = vadd.f32 %v6082, %v6147
      %v6164 = vadd.f32 %v6055, %v6148
      %v6165 = vadd.f32 %v6084, %v6149
      %v6166 = vmul.f32 %v6150, 0.7978846
      %v6167 = vmul.f32 %v6151, 0.7978846
      %v6168 = vmul.f32 %v6152, 0.7978846
      %v6169 = vmul.f32 %v6153, 0.7978846
      %v6170 = vmul.f32 %v6154, 0.7978846
      %v6171 = vmul.f32 %v6155, 0.7978846
      %v6172 = vmul.f32 %v6156, 0.7978846
      %v6173 = vmul.f32 %v6157, 0.7978846
      %v6174 = vmul.f32 %v6158, 0.7978846
      %v6175 = vmul.f32 %v6159, 0.7978846
      %v6176 = vmul.f32 %v6160, 0.7978846
      %v6177 = vmul.f32 %v6161, 0.7978846
      %v6178 = vmul.f32 %v6162, 0.7978846
      %v6179 = vmul.f32 %v6163, 0.7978846
      %v6180 = vmul.f32 %v6164, 0.7978846
      %v6181 = vmul.f32 %v6165, 0.7978846
      %v6182 = vtanh.pop %v6166
      %v6183 = vtanh.pop %v6167
      %v6184 = vtanh.pop %v6168
      %v6185 = vtanh.pop %v6169
      %v6186 = vtanh.pop %v6170
      %v6187 = vtanh.pop %v6171
      %v6188 = vtanh.pop %v6172
      %v6189 = vtanh.pop %v6173
      %v6190 = vtanh.pop %v6174
      %v6191 = vtanh.pop %v6175
      %v6192 = vtanh.pop %v6176
      %v6193 = vtanh.pop %v6177
      %v6194 = vtanh.pop %v6178
      %v6195 = vtanh.pop %v6179
      %v6196 = vtanh.pop %v6180
      %v6197 = vtanh.pop %v6181
      %v6198 = vadd.f32 %v6182, 1.0
      %v6199 = vadd.f32 %v6183, 1.0
      %v6200 = vadd.f32 %v6184, 1.0
      %v6201 = vadd.f32 %v6185, 1.0
      %v6202 = vadd.f32 %v6186, 1.0
      %v6203 = vadd.f32 %v6187, 1.0
      %v6204 = vadd.f32 %v6188, 1.0
      %v6205 = vadd.f32 %v6189, 1.0
      %v6206 = vadd.f32 %v6190, 1.0
      %v6207 = vadd.f32 %v6191, 1.0
      %v6208 = vadd.f32 %v6192, 1.0
      %v6209 = vadd.f32 %v6193, 1.0
      %v6210 = vadd.f32 %v6194, 1.0
      %v6211 = vadd.f32 %v6195, 1.0
      %v6212 = vadd.f32 %v6196, 1.0
      %v6213 = vadd.f32 %v6197, 1.0
      %v6214 = vmul.f32 %v6086, %v6198
      %v6215 = vmul.f32 %v6087, %v6199
      %v6216 = vmul.f32 %v6088, %v6200
      %v6217 = vmul.f32 %v6089, %v6201
      %v6218 = vmul.f32 %v6090, %v6202
      %v6219 = vmul.f32 %v6091, %v6203
      %v6220 = vmul.f32 %v6092, %v6204
      %v6221 = vmul.f32 %v6093, %v6205
      %v6222 = vmul.f32 %v6094, %v6206
      %v6223 = vmul.f32 %v6095, %v6207
      %v6224 = vmul.f32 %v6096, %v6208
      %v6225 = vmul.f32 %v6097, %v6209
      %v6226 = vmul.f32 %v6098, %v6210
      %v6227 = vmul.f32 %v6099, %v6211
      %v6228 = vmul.f32 %v6100, %v6212
      %v6229 = vmul.f32 %v6101, %v6213
      %v6230 = vpack.c.bf16 %v6216, %v6214
      %v6231 = vpack.c.bf16 %v6217, %v6215
      %v6232 = vpack.c.bf16 %v6220, %v6218
      %v6233 = vpack.c.bf16 %v6221, %v6219
      %v6234 = vpack.c.bf16 %v6224, %v6222
      %v6235 = vpack.c.bf16 %v6225, %v6223
      %v6236 = vpack.c.bf16 %v6228, %v6226
      %v6237 = vpack.c.bf16 %v6229, %v6227
      %s6238 = scalar_lea.vmem %s18, 128
      %v6239 = vld [vmem:[%s6238] sm:$0xf]
      %v6240 = vld [vmem:[%s6238 + $0x4] sm:$0xf]
      %v6241 = vld [vmem:[%s6238 + $0x8] sm:$0xf]
      %v6242 = vld [vmem:[%s6238 + $0xc] sm:$0xf]
      %v6243 = vld [vmem:[%s6238 + $0x10] sm:$0xf]
      %v6244 = vld [vmem:[%s6238 + $0x14] sm:$0xf]
      %v6245 = vld [vmem:[%s6238 + $0x18] sm:$0xf]
      %v6246 = vld [vmem:[%s6238 + $0x1c] sm:$0xf]
      %v6247 = vld [vmem:[%s6238 + $0x20] sm:$0xf]
      %v6248 = vld [vmem:[%s6238 + $0x24] sm:$0xf]
      %v6249 = vld [vmem:[%s6238 + $0x28] sm:$0xf]
      %v6250 = vld [vmem:[%s6238 + $0x2c] sm:$0xf]
      %v6251 = vld [vmem:[%s6238 + $0x30] sm:$0xf]
      %v6252 = vld [vmem:[%s6238 + $0x34] sm:$0xf]
      %v6253 = vld [vmem:[%s6238 + $0x38] sm:$0xf]
      %v6254 = vld [vmem:[%s6238 + $0x3c] sm:$0xf]
      %v6255 = vld [vmem:[%s6238 + $0x40] sm:$0xf]
      %v6256 = vld [vmem:[%s6238 + $0x44] sm:$0xf]
      %v6257 = vld [vmem:[%s6238 + $0x48] sm:$0xf]
      %v6258 = vld [vmem:[%s6238 + $0x4c] sm:$0xf]
      %v6259 = vld [vmem:[%s6238 + $0x50] sm:$0xf]
      %v6260 = vld [vmem:[%s6238 + $0x54] sm:$0xf]
      %v6261 = vld [vmem:[%s6238 + $0x58] sm:$0xf]
      %v6262 = vld [vmem:[%s6238 + $0x5c] sm:$0xf]
      %v6263 = vld [vmem:[%s6238 + $0x60] sm:$0xf]
      %v6264 = vld [vmem:[%s6238 + $0x64] sm:$0xf]
      %v6265 = vld [vmem:[%s6238 + $0x68] sm:$0xf]
      %v6266 = vld [vmem:[%s6238 + $0x6c] sm:$0xf]
      %v6267 = vld [vmem:[%s6238 + $0x70] sm:$0xf]
      %v6268 = vld [vmem:[%s6238 + $0x74] sm:$0xf]
      %v6269 = vld [vmem:[%s6238 + $0x78] sm:$0xf]
      %v6270 = vld [vmem:[%s6238 + $0x7c] sm:$0xf]
      %s6271 = scalar_lea.vmem %s19, 1
      %v6272 = vld [vmem:[%s6271] sm:$0x1]
      %v6274 = vperm.slane %v6272, 0
      %v6308 = vunpack.c.l.b16 %v6239
      %v6309 = vunpack.c.l.b16 %v6240
      %v6310 = vunpack.c.l.b16 %v6241
      %v6311 = vunpack.c.l.b16 %v6242
      %v6312 = vunpack.c.l.b16 %v6243
      %v6313 = vunpack.c.l.b16 %v6244
      %v6314 = vunpack.c.l.b16 %v6245
      %v6315 = vunpack.c.l.b16 %v6246
      %v6316 = vunpack.c.l.b16 %v6247
      %v6317 = vunpack.c.l.b16 %v6248
      %v6318 = vunpack.c.l.b16 %v6249
      %v6319 = vunpack.c.l.b16 %v6250
      %v6320 = vunpack.c.l.b16 %v6251
      %v6321 = vunpack.c.l.b16 %v6252
      %v6322 = vunpack.c.l.b16 %v6253
      %v6323 = vunpack.c.l.b16 %v6254
      %v6324 = vunpack.c.l.b16 %v6255
      %v6325 = vunpack.c.l.b16 %v6256
      %v6326 = vunpack.c.l.b16 %v6257
      %v6327 = vunpack.c.l.b16 %v6258
      %v6328 = vunpack.c.l.b16 %v6259
      %v6329 = vunpack.c.l.b16 %v6260
      %v6330 = vunpack.c.l.b16 %v6261
      %v6331 = vunpack.c.l.b16 %v6262
      %v6332 = vunpack.c.l.b16 %v6263
      %v6333 = vunpack.c.l.b16 %v6264
      %v6334 = vunpack.c.l.b16 %v6265
      %v6335 = vunpack.c.l.b16 %v6266
      %v6336 = vunpack.c.l.b16 %v6267
      %v6337 = vunpack.c.l.b16 %v6268
      %v6338 = vunpack.c.l.b16 %v6269
      %v6339 = vunpack.c.l.b16 %v6270
      %v6340 = vpack.c.b16 %v6309, %v6308
      %v6341 = vpack.c.b16 %v6311, %v6310
      %v6342 = vpack.c.b16 %v6313, %v6312
      %v6343 = vpack.c.b16 %v6315, %v6314
      %v6344 = vpack.c.b16 %v6317, %v6316
      %v6345 = vpack.c.b16 %v6319, %v6318
      %v6346 = vpack.c.b16 %v6321, %v6320
      %v6347 = vpack.c.b16 %v6323, %v6322
      %v6348 = vpack.c.b16 %v6325, %v6324
      %v6349 = vpack.c.b16 %v6327, %v6326
      %v6350 = vpack.c.b16 %v6329, %v6328
      %v6351 = vpack.c.b16 %v6331, %v6330
      %v6352 = vpack.c.b16 %v6333, %v6332
      %v6353 = vpack.c.b16 %v6335, %v6334
      %v6354 = vpack.c.b16 %v6337, %v6336
      %v6355 = vpack.c.b16 %v6339, %v6338
      %6372 = vmatpush.bf16.msra.mxu0 %v6347
      %6373 = vmatpush.bf16.msra.mxu0 %v6346
      %6374 = vmatpush.bf16.msra.mxu0 %v6345
      %6375 = vmatpush.bf16.msra.mxu0 %v6344
      %6376 = vmatpush.bf16.msra.mxu0 %v6343
      %6377 = vmatpush.bf16.msra.mxu0 %v6342
      %6378 = vmatpush.bf16.msra.mxu0 %v6341
      %6379 = vmatpush.bf16.msra.mxu0 %v6340
      %6380 = vmatmul.bf16.gmra.mxu0 %v6230
      %v6381 = vpop.f32.mrf.mxu0
      %v6382 = vadd.f32 %v6274, %v6381
      %v6383 = vpop.f32.mrf.mxu0
      %v6384 = vadd.f32 %v6274, %v6383
      %6385 = vmatmul.bf16.gmra.mxu0 %v6232
      %v6386 = vpop.f32.mrf.mxu0
      %v6387 = vadd.f32 %v6274, %v6386
      %v6388 = vpop.f32.mrf.mxu0
      %v6389 = vadd.f32 %v6274, %v6388
      %6390 = vmatmul.bf16.gmra.mxu0 %v6234
      %v6391 = vpop.f32.mrf.mxu0
      %v6392 = vadd.f32 %v6274, %v6391
      %v6393 = vpop.f32.mrf.mxu0
      %v6394 = vadd.f32 %v6274, %v6393
      %6395 = vmatmul.bf16.gmra.mxu0 %v6236
      %v6396 = vpop.f32.mrf.mxu0
      %v6397 = vadd.f32 %v6274, %v6396
      %v6398 = vpop.f32.mrf.mxu0
      %v6399 = vadd.f32 %v6274, %v6398
      %6400 = vdwg.mxu0
      %6401 = vmatpush.bf16.msra.mxu0 %v6355
      %6402 = vmatpush.bf16.msra.mxu0 %v6354
      %6403 = vmatpush.bf16.msra.mxu0 %v6353
      %6404 = vmatpush.bf16.msra.mxu0 %v6352
      %6405 = vmatpush.bf16.msra.mxu0 %v6351
      %6406 = vmatpush.bf16.msra.mxu0 %v6350
      %6407 = vmatpush.bf16.msra.mxu0 %v6349
      %6408 = vmatpush.bf16.msra.mxu0 %v6348
      %6409 = vmatmul.bf16.gmra.mxu0 %v6231
      %v6410 = vpop.f32.mrf.mxu0
      %v6411 = vadd.f32 %v6382, %v6410
      %v6412 = vpop.f32.mrf.mxu0
      %v6413 = vadd.f32 %v6384, %v6412
      %6414 = vmatmul.bf16.gmra.mxu0 %v6233
      %v6415 = vpop.f32.mrf.mxu0
      %v6416 = vadd.f32 %v6387, %v6415
      %v6417 = vpop.f32.mrf.mxu0
      %v6418 = vadd.f32 %v6389, %v6417
      %6419 = vmatmul.bf16.gmra.mxu0 %v6235
      %v6420 = vpop.f32.mrf.mxu0
      %v6421 = vadd.f32 %v6392, %v6420
      %v6422 = vpop.f32.mrf.mxu0
      %v6423 = vadd.f32 %v6394, %v6422
      %6424 = vmatmul.bf16.gmra.mxu0 %v6237
      %v6425 = vpop.f32.mrf.mxu0
      %v6426 = vadd.f32 %v6397, %v6425
      %v6427 = vpop.f32.mrf.mxu0
      %v6428 = vadd.f32 %v6399, %v6427
      %6429 = vdwg.mxu0
      %v6430 = vmul.f32 %v5737, %v6411
      %v6431 = vmul.f32 %v5739, %v6413
      %v6432 = vmul.f32 %v5742, %v6416
      %v6433 = vmul.f32 %v5744, %v6418
      %v6434 = vmul.f32 %v5747, %v6421
      %v6435 = vmul.f32 %v5749, %v6423
      %v6436 = vmul.f32 %v5752, %v6426
      %v6437 = vmul.f32 %v5754, %v6428
      %v6438 = vadd.f32 %v5547, %v6430
      %v6439 = vadd.f32 %v5548, %v6431
      %v6440 = vadd.f32 %v5549, %v6432
      %v6441 = vadd.f32 %v5550, %v6433
      %v6442 = vadd.f32 %v5551, %v6434
      %v6443 = vadd.f32 %v5552, %v6435
      %v6444 = vadd.f32 %v5553, %v6436
      %v6445 = vadd.f32 %v5554, %v6437
      %v6446 = vld [vmem:[%s20] sm:$0xf]
      %v6447 = vld [vmem:[%s20 + $0x4] sm:$0xf]
      %v6448 = vld [vmem:[%s20 + $0x8] sm:$0xf]
      %v6449 = vld [vmem:[%s20 + $0xc] sm:$0xf]
      %v6450 = vld [vmem:[%s20 + $0x10] sm:$0xf]
      %v6451 = vld [vmem:[%s20 + $0x14] sm:$0xf]
      %v6452 = vld [vmem:[%s20 + $0x18] sm:$0xf]
      %v6453 = vld [vmem:[%s20 + $0x1c] sm:$0xf]
      %v6454 = vld [vmem:[%s21] sm:$0x1]
      %v6456 = vperm.slane %v6454, 0
      %v6466 = vunpack.c.l.b16 %v6446
      %v6467 = vunpack.c.l.b16 %v6447
      %v6468 = vunpack.c.l.b16 %v6448
      %v6469 = vunpack.c.l.b16 %v6449
      %v6470 = vunpack.c.l.b16 %v6450
      %v6471 = vunpack.c.l.b16 %v6451
      %v6472 = vunpack.c.l.b16 %v6452
      %v6473 = vunpack.c.l.b16 %v6453
      %v6474 = vpack.c.b16 %v6467, %v6466
      %v6475 = vpack.c.b16 %v6469, %v6468
      %v6476 = vpack.c.b16 %v6471, %v6470
      %v6477 = vpack.c.b16 %v6473, %v6472
      %6482 = vmatpush.bf16.msra.mxu0 0
      %6483 = vmatpush.bf16.msra.mxu0 0
      %6484 = vmatpush.bf16.msra.mxu0 0
      %6485 = vmatpush.bf16.msra.mxu0 0
      %6486 = vmatpush.bf16.msra.mxu0 %v6477
      %6487 = vmatpush.bf16.msra.mxu0 %v6476
      %6488 = vmatpush.bf16.msra.mxu0 %v6475
      %6489 = vmatpush.bf16.msra.mxu0 %v6474
      %6490 = vmatmul.bf16.gmra.mxu0 %v1147
      %v6491 = vpop.f32.mrf.mxu0
      %v6492 = vadd.f32 %v6456, %v6491
      %v6493 = vpop.f32.mrf.mxu0
      %v6494 = vadd.f32 %v6456, %v6493
      %6495 = vmatmul.bf16.gmra.mxu0 %v1147
      %v6496 = vpop.f32.mrf.mxu0
      %v6497 = vadd.f32 %v6456, %v6496
      %v6498 = vpop.f32.mrf.mxu0
      %v6499 = vadd.f32 %v6456, %v6498
      %6500 = vmatmul.bf16.gmra.mxu0 %v1147
      %v6501 = vpop.f32.mrf.mxu0
      %v6502 = vadd.f32 %v6456, %v6501
      %v6503 = vpop.f32.mrf.mxu0
      %v6504 = vadd.f32 %v6456, %v6503
      %6505 = vmatmul.bf16.gmra.mxu0 %v1147
      %v6506 = vpop.f32.mrf.mxu0
      %v6507 = vadd.f32 %v6456, %v6506
      %v6508 = vpop.f32.mrf.mxu0
      %v6509 = vadd.f32 %v6456, %v6508
      %6510 = vdwg.mxu0
      %s6511 = scalar_lea.vmem %s20, 32
      %v6512 = vld [vmem:[%s6511] sm:$0xf]
      %v6513 = vld [vmem:[%s6511 + $0x4] sm:$0xf]
      %v6514 = vld [vmem:[%s6511 + $0x8] sm:$0xf]
      %v6515 = vld [vmem:[%s6511 + $0xc] sm:$0xf]
      %v6516 = vld [vmem:[%s6511 + $0x10] sm:$0xf]
      %v6517 = vld [vmem:[%s6511 + $0x14] sm:$0xf]
      %v6518 = vld [vmem:[%s6511 + $0x18] sm:$0xf]
      %v6519 = vld [vmem:[%s6511 + $0x1c] sm:$0xf]
      %s6520 = scalar_lea.vmem %s21, 1
      %v6521 = vld [vmem:[%s6520] sm:$0x1]
      %v6523 = vperm.slane %v6521, 0
      %v6533 = vunpack.c.l.b16 %v6512
      %v6534 = vunpack.c.l.b16 %v6513
      %v6535 = vunpack.c.l.b16 %v6514
      %v6536 = vunpack.c.l.b16 %v6515
      %v6537 = vunpack.c.l.b16 %v6516
      %v6538 = vunpack.c.l.b16 %v6517
      %v6539 = vunpack.c.l.b16 %v6518
      %v6540 = vunpack.c.l.b16 %v6519
      %v6541 = vpack.c.b16 %v6534, %v6533
      %v6542 = vpack.c.b16 %v6536, %v6535
      %v6543 = vpack.c.b16 %v6538, %v6537
      %v6544 = vpack.c.b16 %v6540, %v6539
      %6549 = vmatpush.bf16.msra.mxu0 0
      %6550 = vmatpush.bf16.msra.mxu0 0
      %6551 = vmatpush.bf16.msra.mxu0 0
      %6552 = vmatpush.bf16.msra.mxu0 0
      %6553 = vmatpush.bf16.msra.mxu0 %v6544
      %6554 = vmatpush.bf16.msra.mxu0 %v6543
      %6555 = vmatpush.bf16.msra.mxu0 %v6542
      %6556 = vmatpush.bf16.msra.mxu0 %v6541
      %6557 = vmatmul.bf16.gmra.mxu0 %v1147
      %v6558 = vpop.f32.mrf.mxu0
      %v6559 = vadd.f32 %v6523, %v6558
      %v6560 = vpop.f32.mrf.mxu0
      %v6561 = vadd.f32 %v6523, %v6560
      %6562 = vmatmul.bf16.gmra.mxu0 %v1147
      %v6563 = vpop.f32.mrf.mxu0
      %v6564 = vadd.f32 %v6523, %v6563
      %v6565 = vpop.f32.mrf.mxu0
      %v6566 = vadd.f32 %v6523, %v6565
      %6567 = vmatmul.bf16.gmra.mxu0 %v1147
      %v6568 = vpop.f32.mrf.mxu0
      %v6569 = vadd.f32 %v6523, %v6568
      %v6570 = vpop.f32.mrf.mxu0
      %v6571 = vadd.f32 %v6523, %v6570
      %6572 = vmatmul.bf16.gmra.mxu0 %v1147
      %v6573 = vpop.f32.mrf.mxu0
      %v6574 = vadd.f32 %v6523, %v6573
      %v6575 = vpop.f32.mrf.mxu0
      %v6576 = vadd.f32 %v6523, %v6575
      %6577 = vdwg.mxu0
      %v6578 = vsel %vm987, %v6438, 0.0
      %6579 = vadd.xlane.f32.xlu0 %v6578
      %v6580 = vpop.xlane.xlu0 %6579
      %v6581 = vsel %vm987, %v6439, 0.0
      %6582 = vadd.xlane.f32.xlu0 %v6581
      %v6583 = vpop.xlane.xlu0 %6582
      %v6584 = vsel %vm987, %v6440, 0.0
      %6585 = vadd.xlane.f32.xlu0 %v6584
      %v6586 = vpop.xlane.xlu0 %6585
      %v6587 = vsel %vm987, %v6441, 0.0
      %6588 = vadd.xlane.f32.xlu0 %v6587
      %v6589 = vpop.xlane.xlu0 %6588
      %v6590 = vsel %vm987, %v6442, 0.0
      %6591 = vadd.xlane.f32.xlu0 %v6590
      %v6592 = vpop.xlane.xlu0 %6591
      %v6593 = vsel %vm987, %v6443, 0.0
      %6594 = vadd.xlane.f32.xlu0 %v6593
      %v6595 = vpop.xlane.xlu0 %6594
      %v6596 = vsel %vm987, %v6444, 0.0
      %6597 = vadd.xlane.f32.xlu0 %v6596
      %v6598 = vpop.xlane.xlu0 %6597
      %v6599 = vsel %vm987, %v6445, 0.0
      %6600 = vadd.xlane.f32.xlu0 %v6599
      %v6601 = vpop.xlane.xlu0 %6600
      %v6602 = vmul.f32 %v6580, %v1342
      %v6603 = vmul.f32 %v6583, %v1342
      %v6604 = vmul.f32 %v6586, %v1342
      %v6605 = vmul.f32 %v6589, %v1342
      %v6606 = vmul.f32 %v6592, %v1342
      %v6607 = vmul.f32 %v6595, %v1342
      %v6608 = vmul.f32 %v6598, %v1342
      %v6609 = vmul.f32 %v6601, %v1342
      %v6610 = vsub.f32 %v6438, %v6602
      %v6611 = vsub.f32 %v6439, %v6603
      %v6612 = vsub.f32 %v6440, %v6604
      %v6613 = vsub.f32 %v6441, %v6605
      %v6614 = vsub.f32 %v6442, %v6606
      %v6615 = vsub.f32 %v6443, %v6607
      %v6616 = vsub.f32 %v6444, %v6608
      %v6617 = vsub.f32 %v6445, %v6609
      %v6618 = vmul.f32 %v6610, %v6610
      %v6619 = vmul.f32 %v6611, %v6611
      %v6620 = vmul.f32 %v6612, %v6612
      %v6621 = vmul.f32 %v6613, %v6613
      %v6622 = vmul.f32 %v6614, %v6614
      %v6623 = vmul.f32 %v6615, %v6615
      %v6624 = vmul.f32 %v6616, %v6616
      %v6625 = vmul.f32 %v6617, %v6617
      %v6626 = vsel %vm987, %v6618, 0.0
      %6627 = vadd.xlane.f32.xlu0 %v6626
      %v6628 = vpop.xlane.xlu0 %6627
      %v6629 = vsel %vm987, %v6619, 0.0
      %6630 = vadd.xlane.f32.xlu0 %v6629
      %v6631 = vpop.xlane.xlu0 %6630
      %v6632 = vsel %vm987, %v6620, 0.0
      %6633 = vadd.xlane.f32.xlu0 %v6632
      %v6634 = vpop.xlane.xlu0 %6633
      %v6635 = vsel %vm987, %v6621, 0.0
      %6636 = vadd.xlane.f32.xlu0 %v6635
      %v6637 = vpop.xlane.xlu0 %6636
      %v6638 = vsel %vm987, %v6622, 0.0
      %6639 = vadd.xlane.f32.xlu0 %v6638
      %v6640 = vpop.xlane.xlu0 %6639
      %v6641 = vsel %vm987, %v6623, 0.0
      %6642 = vadd.xlane.f32.xlu0 %v6641
      %v6643 = vpop.xlane.xlu0 %6642
      %v6644 = vsel %vm987, %v6624, 0.0
      %6645 = vadd.xlane.f32.xlu0 %v6644
      %v6646 = vpop.xlane.xlu0 %6645
      %v6647 = vsel %vm987, %v6625, 0.0
      %6648 = vadd.xlane.f32.xlu0 %v6647
      %v6649 = vpop.xlane.xlu0 %6648
      %v6650 = vmul.f32 %v6628, %v1342
      %v6651 = vmul.f32 %v6631, %v1342
      %v6652 = vmul.f32 %v6634, %v1342
      %v6653 = vmul.f32 %v6637, %v1342
      %v6654 = vmul.f32 %v6640, %v1342
      %v6655 = vmul.f32 %v6643, %v1342
      %v6656 = vmul.f32 %v6646, %v1342
      %v6657 = vmul.f32 %v6649, %v1342
      %v6658 = vadd.f32 %v6650, 1e-06
      %v6659 = vadd.f32 %v6651, 1e-06
      %v6660 = vadd.f32 %v6652, 1e-06
      %v6661 = vadd.f32 %v6653, 1e-06
      %v6662 = vadd.f32 %v6654, 1e-06
      %v6663 = vadd.f32 %v6655, 1e-06
      %v6664 = vadd.f32 %v6656, 1e-06
      %v6665 = vadd.f32 %v6657, 1e-06
      %v6666 = vrsqrt.pop %v6658
      %v6667 = vmul.f32 %v6666, %v6658
      %v6668 = vmul.f32 %v6667, %v6666
      %v6669 = vmul.f32 0.5, %v6668
      %v6670 = vsub.f32 1.5, %v6669
      %v6671 = vmul.f32 %v6666, %v6670
      %vm6672 = vweird.f32 %v6658
      %vm6673 = vweird.f32 %v6666
      %vm6674 = vmor %vm6672, %vm6673
      %v6675 = vsel %vm6674, %v6666, %v6671
      %v6676 = vrsqrt.pop %v6659
      %v6677 = vmul.f32 %v6676, %v6659
      %v6678 = vmul.f32 %v6677, %v6676
      %v6679 = vmul.f32 0.5, %v6678
      %v6680 = vsub.f32 1.5, %v6679
      %v6681 = vmul.f32 %v6676, %v6680
      %vm6682 = vweird.f32 %v6659
      %vm6683 = vweird.f32 %v6676
      %vm6684 = vmor %vm6682, %vm6683
      %v6685 = vsel %vm6684, %v6676, %v6681
      %v6686 = vrsqrt.pop %v6660
      %v6687 = vmul.f32 %v6686, %v6660
      %v6688 = vmul.f32 %v6687, %v6686
      %v6689 = vmul.f32 0.5, %v6688
      %v6690 = vsub.f32 1.5, %v6689
      %v6691 = vmul.f32 %v6686, %v6690
      %vm6692 = vweird.f32 %v6660
      %vm6693 = vweird.f32 %v6686
      %vm6694 = vmor %vm6692, %vm6693
      %v6695 = vsel %vm6694, %v6686, %v6691
      %v6696 = vrsqrt.pop %v6661
      %v6697 = vmul.f32 %v6696, %v6661
      %v6698 = vmul.f32 %v6697, %v6696
      %v6699 = vmul.f32 0.5, %v6698
      %v6700 = vsub.f32 1.5, %v6699
      %v6701 = vmul.f32 %v6696, %v6700
      %vm6702 = vweird.f32 %v6661
      %vm6703 = vweird.f32 %v6696
      %vm6704 = vmor %vm6702, %vm6703
      %v6705 = vsel %vm6704, %v6696, %v6701
      %v6706 = vrsqrt.pop %v6662
      %v6707 = vmul.f32 %v6706, %v6662
      %v6708 = vmul.f32 %v6707, %v6706
      %v6709 = vmul.f32 0.5, %v6708
      %v6710 = vsub.f32 1.5, %v6709
      %v6711 = vmul.f32 %v6706, %v6710
      %vm6712 = vweird.f32 %v6662
      %vm6713 = vweird.f32 %v6706
      %vm6714 = vmor %vm6712, %vm6713
      %v6715 = vsel %vm6714, %v6706, %v6711
      %v6716 = vrsqrt.pop %v6663
      %v6717 = vmul.f32 %v6716, %v6663
      %v6718 = vmul.f32 %v6717, %v6716
      %v6719 = vmul.f32 0.5, %v6718
      %v6720 = vsub.f32 1.5, %v6719
      %v6721 = vmul.f32 %v6716, %v6720
      %vm6722 = vweird.f32 %v6663
      %vm6723 = vweird.f32 %v6716
      %vm6724 = vmor %vm6722, %vm6723
      %v6725 = vsel %vm6724, %v6716, %v6721
      %v6726 = vrsqrt.pop %v6664
      %v6727 = vmul.f32 %v6726, %v6664
      %v6728 = vmul.f32 %v6727, %v6726
      %v6729 = vmul.f32 0.5, %v6728
      %v6730 = vsub.f32 1.5, %v6729
      %v6731 = vmul.f32 %v6726, %v6730
      %vm6732 = vweird.f32 %v6664
      %vm6733 = vweird.f32 %v6726
      %vm6734 = vmor %vm6732, %vm6733
      %v6735 = vsel %vm6734, %v6726, %v6731
      %v6736 = vrsqrt.pop %v6665
      %v6737 = vmul.f32 %v6736, %v6665
      %v6738 = vmul.f32 %v6737, %v6736
      %v6739 = vmul.f32 0.5, %v6738
      %v6740 = vsub.f32 1.5, %v6739
      %v6741 = vmul.f32 %v6736, %v6740
      %vm6742 = vweird.f32 %v6665
      %vm6743 = vweird.f32 %v6736
      %vm6744 = vmor %vm6742, %vm6743
      %v6745 = vsel %vm6744, %v6736, %v6741
      %v6746 = vmul.f32 %v6610, %v6675
      %v6747 = vmul.f32 %v6611, %v6685
      %v6748 = vmul.f32 %v6612, %v6695
      %v6749 = vmul.f32 %v6613, %v6705
      %v6750 = vmul.f32 %v6614, %v6715
      %v6751 = vmul.f32 %v6615, %v6725
      %v6752 = vmul.f32 %v6616, %v6735
      %v6753 = vmul.f32 %v6617, %v6745
      %v6754 = vadd.f32 %v6559, 1.0
      %v6755 = vadd.f32 %v6561, 1.0
      %v6756 = vadd.f32 %v6564, 1.0
      %v6757 = vadd.f32 %v6566, 1.0
      %v6758 = vadd.f32 %v6569, 1.0
      %v6759 = vadd.f32 %v6571, 1.0
      %v6760 = vadd.f32 %v6574, 1.0
      %v6761 = vadd.f32 %v6576, 1.0
      %v6762 = vmul.f32 %v6746, %v6754
      %v6763 = vmul.f32 %v6747, %v6755
      %v6764 = vmul.f32 %v6748, %v6756
      %v6765 = vmul.f32 %v6749, %v6757
      %v6766 = vmul.f32 %v6750, %v6758
      %v6767 = vmul.f32 %v6751, %v6759
      %v6768 = vmul.f32 %v6752, %v6760
      %v6769 = vmul.f32 %v6753, %v6761
      %v6770 = vadd.f32 %v6762, %v6492
      %v6771 = vadd.f32 %v6763, %v6494
      %v6772 = vadd.f32 %v6764, %v6497
      %v6773 = vadd.f32 %v6765, %v6499
      %v6774 = vadd.f32 %v6766, %v6502
      %v6775 = vadd.f32 %v6767, %v6504
      %v6776 = vadd.f32 %v6768, %v6507
      %v6777 = vadd.f32 %v6769, %v6509
      %v6778 = vpack.c.bf16 %v6771, %v6770
      %v6779 = vpack.c.bf16 %v6773, %v6772
      %v6780 = vpack.c.bf16 %v6775, %v6774
      %v6781 = vpack.c.bf16 %v6777, %v6776
      %v6782 = vld [vmem:[%s22] sm:$0xf]
      %v6783 = vld [vmem:[%s22 + $0x4] sm:$0xf]
      %v6784 = vld [vmem:[%s22 + $0x8] sm:$0xf]
      %v6785 = vld [vmem:[%s22 + $0xc] sm:$0xf]
      %v6786 = vld [vmem:[%s22 + $0x10] sm:$0xf]
      %v6787 = vld [vmem:[%s22 + $0x14] sm:$0xf]
      %v6788 = vld [vmem:[%s22 + $0x18] sm:$0xf]
      %v6789 = vld [vmem:[%s22 + $0x1c] sm:$0xf]
      %v6790 = vld [vmem:[%s23] sm:$0x1]
      %v6792 = vperm.slane %v6790, 0
      %v6802 = vunpack.c.l.b16 %v6782
      %v6803 = vunpack.c.l.b16 %v6783
      %v6804 = vunpack.c.l.b16 %v6784
      %v6805 = vunpack.c.l.b16 %v6785
      %v6806 = vunpack.c.l.b16 %v6786
      %v6807 = vunpack.c.l.b16 %v6787
      %v6808 = vunpack.c.l.b16 %v6788
      %v6809 = vunpack.c.l.b16 %v6789
      %v6810 = vpack.c.b16 %v6803, %v6802
      %v6811 = vpack.c.b16 %v6805, %v6804
      %v6812 = vpack.c.b16 %v6807, %v6806
      %v6813 = vpack.c.b16 %v6809, %v6808
      %v6819 = vsel %vm987, %v6778, 0
      %v6822 = vsel %vm987, %v6779, 0
      %v6825 = vsel %vm987, %v6780, 0
      %v6828 = vsel %vm987, %v6781, 0
      %6830 = vmatpush.bf16.msra.mxu0 0
      %6831 = vmatpush.bf16.msra.mxu0 0
      %6832 = vmatpush.bf16.msra.mxu0 0
      %6833 = vmatpush.bf16.msra.mxu0 0
      %6834 = vmatpush.bf16.msra.mxu0 %v6813
      %6835 = vmatpush.bf16.msra.mxu0 %v6812
      %6836 = vmatpush.bf16.msra.mxu0 %v6811
      %6837 = vmatpush.bf16.msra.mxu0 %v6810
      %6838 = vmatmul.bf16.gmra.mxu0 %v6819
      %v6839 = vpop.f32.mrf.mxu0
      %v6840 = vadd.f32 %v6792, %v6839
      %v6841 = vpop.f32.mrf.mxu0
      %v6842 = vadd.f32 %v6792, %v6841
      %6843 = vmatmul.bf16.gmra.mxu0 %v6822
      %v6844 = vpop.f32.mrf.mxu0
      %v6845 = vadd.f32 %v6792, %v6844
      %v6846 = vpop.f32.mrf.mxu0
      %v6847 = vadd.f32 %v6792, %v6846
      %6848 = vmatmul.bf16.gmra.mxu0 %v6825
      %v6849 = vpop.f32.mrf.mxu0
      %v6850 = vadd.f32 %v6792, %v6849
      %v6851 = vpop.f32.mrf.mxu0
      %v6852 = vadd.f32 %v6792, %v6851
      %6853 = vmatmul.bf16.gmra.mxu0 %v6828
      %v6854 = vpop.f32.mrf.mxu0
      %v6855 = vadd.f32 %v6792, %v6854
      %v6856 = vpop.f32.mrf.mxu0
      %v6857 = vadd.f32 %v6792, %v6856
      %6858 = vdwg.mxu0
      %6859 = vst [vmem:[%s768] sm:$0xff] %v6840
      %6860 = vst [vmem:[%s768 + $0x8] sm:$0xff] %v6842
      %6861 = vst [vmem:[%s768 + $0x10] sm:$0xff] %v6845
      %6862 = vst [vmem:[%s768 + $0x18] sm:$0xff] %v6847
      %6863 = vst [vmem:[%s768 + $0x20] sm:$0xff] %v6850
      %6864 = vst [vmem:[%s768 + $0x28] sm:$0xff] %v6852
      %6865 = vst [vmem:[%s768 + $0x30] sm:$0xff] %v6855
      %6866 = vst [vmem:[%s768 + $0x38] sm:$0xff] %v6857
      %p6867 = scmp.lt.s32.totalorder %s35, 1
      %s6868 = scalar_select %p6867, %s35, 1
      %s6869 = smul.addr %s6868, 8
      %s6870 = smul.addr %s6869, 8
      %s6871 = scalar_lea.vmem %s24, %s6870
      // Predicated region
      $region117: #{_lambda_.1} parent=115 // pred_check
        %p6872 = pneg %p572
      $region118: #{_lambda_.1} parent=115 // pred_check_branch
        %6874 = sbr.rel (%p6872) target = $region120
      $region119: #{_lambda_.1} parent=115 // pred_region
        _
      $region120: #{_lambda_.1} parent=115 // pred_fallthru
        _
    $region116: #{_lambda_.1} parent=5 // pred_fallthru
      _
    %p6875 = scmp.le.s32.totalorder 2, %s30
    // Predicated region
    $region121: #{_lambda_.1} parent=5 // pred_check
      %p6876 = pneg %p6875
    $region122: #{_lambda_.1} parent=5 // pred_check_branch
      %6878 = sbr.rel (%p6876) target = $region124
    $region123: #{_lambda_.1} parent=5 // pred_region
      %s6879 = ssub.s32 %s30, 2
      // Predicated region
      $region125: #{_lambda_.1} parent=123 // pred_check
        %p6880 = pneg %p578
      $region126: #{_lambda_.1} parent=123 // pred_check_branch
        %6882 = sbr.rel (%p6880) target = $region128
      $region127: #{_lambda_.1} parent=123 // pred_region
        %p6883 = scmp.lt.s32.totalorder %s36, 1
        %s6884 = scalar_select %p6883, %s36, 1
        %s6885 = smul.addr %s6884, 8
        %s6886 = smul.addr %s6885, 8
        %s6887 = scalar_lea.vmem %s24, %s6886
      $region128: #{_lambda_.1} parent=123 // pred_fallthru
        _
    $region124: #{_lambda_.1} parent=5 // pred_fallthru
      _
  $region6: #{_lambda_.1} parent=0 // loop_footer
    %s34 = sadd.s32 1, %s30
  $region7: #{_lambda_.1} parent=0 // loop_footer_branch
    %29 = sbr.rel target = $region3
  $region8: #{_lambda_.1} parent=0 // loop_exit
    _

</llo_original>
